<compile_context>
chip_gen: v7x
topology: tpu7x:2x2x1
jax: 0.10.0
libtpu: 0.0.40
codegen_flags: <defaults>
</compile_context>

<pallas_src>
import jax
import jax.numpy as jnp
from jax import lax
from jax.experimental import pallas as pl
from jax.experimental.pallas import tpu as pltpu

KH = KW = 3                  # kernel_size=3, stride=1 -> SAME padding of 1
MXU_DTYPE = jnp.bfloat16     # MXU operand dtype (accumulation stays f32)


# --------------------------------- fused kernel ---------------------------------
def _resblock_kernel(x_ref, w0_ref, b0_ref, w1_ref, b1_ref, out_ref,
                     h0_pad, h1_pad):
    # x_ref : (BT, H, W, C)      f32    input block (unpadded)
    # w*_ref: (9*C, C)           bf16   HWIO weights reshaped to im2col order
    # b*_ref: (1, C)             f32
    # out   : (BT, H, W, C)      f32
    # h*_pad: (BT, H+2, W+2, C)  bf16   VMEM scratch with zero halo
    BT, H, W, C = x_ref.shape
    M = BT * H * W

    def conv3x3(pad_ref, w_ref, b_ref):
        # im2col: 9 shifted taps concatenated on the channel (lane) axis ->
        # a single MXU matmul with K = 9*C instead of 9 matmuls with K = C.
        cols = jnp.concatenate(
            [pad_ref[:, dy:dy + H, dx:dx + W, :]
             for dy in range(KH) for dx in range(KW)],
            axis=-1).reshape(M, KH * KW * C)
        acc = jnp.dot(cols, w_ref[...], preferred_element_type=jnp.float32)
        return acc + b_ref[...]                              # (M, C) f32

    # ---- pre-activation ReLU -> zero-padded halo scratch (bf16 MXU feed) ----
    # The scratch is re-zeroed every grid step (not gated on program_id) so the
    # halo stays valid even when the "parallel" batch axis is split across cores.
    h0_pad[...] = jnp.zeros_like(h0_pad)
    h0_pad[:, 1:H + 1, 1:W + 1, :] = jnp.maximum(x_ref[...], 0.0).astype(MXU_DTYPE)

    # ---- conv0 + ReLU -> second halo scratch (intermediate never leaves VMEM) ----
    h = conv3x3(h0_pad, w0_ref, b0_ref)
    h1_pad[...] = jnp.zeros_like(h1_pad)
    h1_pad[:, 1:H + 1, 1:W + 1, :] = (
        jnp.maximum(h, 0.0).astype(MXU_DTYPE).reshape(BT, H, W, C))

    # ---- conv1 + residual add ----
    y = conv3x3(h1_pad, w1_ref, b1_ref)
    res = x_ref[...].reshape(M, C)
    out_ref[...] = (y + res).reshape(BT, H, W, C).astype(out_ref.dtype)


# ------------------------------- wrapper / tiling --------------------------------
def _pick_block_batch(B, H, W, C):
    """Largest batch tile BT dividing B with BT*H*W <= 1024 and block <= 4 MiB,
    preferring >= 2 grid steps (pipeline overlap + megacore split on v7x)."""
    cands = [d for d in range(1, B + 1)
             if B % d == 0 and d * H * W <= 1024 and d * H * W * C * 4 <= (4 << 20)]
    if not cands:
        return 1
    pref = [d for d in cands if B // d >= 2]
    return max(pref) if pref else max(cands)


def residual_block_custom(x_nchw, params, *, block_batch=None):
    """Forward pass of ResidualBlockCustom (defaults: ReLU, no BN, no SE).

    x_nchw: (B, C, H, W). params: w0/w1 in HWIO (3,3,C,C), b0/b1 shape (C,)."""
    x = jnp.transpose(x_nchw, (0, 2, 3, 1)).astype(jnp.float32)     # NCHW -> NHWC
    B, H, W, C = x.shape
    BT = block_batch if block_batch is not None else _pick_block_batch(B, H, W, C)
    assert B % BT == 0, (B, BT)

    # weights reshaped to im2col order (kh, kw, cin) x cout, cast for the MXU
    w0 = params["w0"].reshape(KH * KW * C, C).astype(MXU_DTYPE)
    w1 = params["w1"].reshape(KH * KW * C, C).astype(MXU_DTYPE)
    b0 = params["b0"].reshape(1, C).astype(jnp.float32)
    b1 = params["b1"].reshape(1, C).astype(jnp.float32)

    out = pl.pallas_call(
        _resblock_kernel,
        out_shape=jax.ShapeDtypeStruct((B, H, W, C), jnp.float32),
        grid_spec=pltpu.PrefetchScalarGridSpec(
            num_scalar_prefetch=0,
            grid=(B // BT,),
            in_specs=[
                pl.BlockSpec((BT, H, W, C), lambda b: (b, 0, 0, 0)),
                pl.BlockSpec((KH * KW * C, C), lambda b: (0, 0)),
                pl.BlockSpec((1, C), lambda b: (0, 0)),
                pl.BlockSpec((KH * KW * C, C), lambda b: (0, 0)),
                pl.BlockSpec((1, C), lambda b: (0, 0)),
            ],
            out_specs=pl.BlockSpec((BT, H, W, C), lambda b: (b, 0, 0, 0)),
            scratch_shapes=[
                pltpu.VMEM((BT, H + 2, W + 2, C), MXU_DTYPE),   # halo for conv0 input
                pltpu.VMEM((BT, H + 2, W + 2, C), MXU_DTYPE),   # halo for conv1 input
            ],
        ),
        compiler_params=pltpu.CompilerParams(dimension_semantics=("parallel",)),
    )(x, w0, b0, w1, b1)

    return jnp.transpose(out, (0, 3, 1, 2)).astype(x_nchw.dtype)


# ------------------- pure-JAX reference (same bf16 MXU feed) -------------------
def _reference_nchw(x_nchw, params):
    x = jnp.transpose(x_nchw, (0, 2, 3, 1)).astype(jnp.float32)
    dn = ("NHWC", "HWIO", "NHWC")
    h = jnp.maximum(x, 0.0).astype(MXU_DTYPE)
    h = lax.conv_general_dilated(h, params["w0"].astype(MXU_DTYPE), (1, 1), "SAME",
                                 dimension_numbers=dn,
                                 preferred_element_type=jnp.float32)
    h = h + params["b0"].reshape(1, 1, 1, -1)
    h = jnp.maximum(h, 0.0).astype(MXU_DTYPE)
    y = lax.conv_general_dilated(h, params["w1"].astype(MXU_DTYPE), (1, 1), "SAME",
                                 dimension_numbers=dn,
                                 preferred_element_type=jnp.float32)
    y = y + params["b1"].reshape(1, 1, 1, -1) + x
    return jnp.transpose(y, (0, 3, 1, 2))


if __name__ == "__main__":
    # small, TPU-friendly shapes: channels a multiple of 128 (lane-dense), B/BT even
    B, C, H, W = 4, 128, 16, 16
    key = jax.random.PRNGKey(0)
    ks = jax.random.split(key, 5)

    # deterministic synthetic parameters; HWIO = torch Conv2d weight.permute(2,3,1,0)
    params = {
        "w0": jax.random.normal(ks[0], (KH, KW, C, C), jnp.float32) * 0.05,
        "b0": jax.random.normal(ks[1], (C,), jnp.float32) * 0.05,
        "w1": jax.random.normal(ks[2], (KH, KW, C, C), jnp.float32) * 0.05,
        "b1": jax.random.normal(ks[3], (C,), jnp.float32) * 0.05,
    }
    x_nchw = jax.random.normal(ks[4], (B, C, H, W), jnp.float32)

    out = jax.block_until_ready(residual_block_custom(x_nchw, params))

    ref = _reference_nchw(x_nchw, params)
    max_err = float(jnp.max(jnp.abs(out - ref)))
    assert jnp.allclose(out, ref, atol=5e-3, rtol=5e-3), max_err

    print("KERNEL_OK")
</pallas_src>

<mosaic_0001>
module attributes {stable_mosaic.version = 11 : i64} {
  func.func @_resblock_kernel(%arg0: i32, %arg1: memref<2x16x16x128xf32, #tpu.memory_space<vmem>>, %arg2: memref<1152x128xbf16, #tpu.memory_space<vmem>>, %arg3: memref<1x128xf32, #tpu.memory_space<vmem>>, %arg4: memref<1152x128xbf16, #tpu.memory_space<vmem>>, %arg5: memref<1x128xf32, #tpu.memory_space<vmem>>, %arg6: memref<2x16x16x128xf32, #tpu.memory_space<vmem>>, %arg7: memref<2x18x18x128xbf16, #tpu.memory_space<vmem>>, %arg8: memref<2x18x18x128xbf16, #tpu.memory_space<vmem>>) attributes {dimension_semantics = [#tpu.dimension_semantics<parallel>], iteration_bounds = array<i64: 2>, scalar_prefetch = 0 : i64, scratch_operands = 2 : i64, tpu.core_type = #tpu.core_type<tc>, window_params = [{transform_indices = @transform_0, window_bounds = array<i64: 2, 16, 16, 128>}, {pipeline_mode = #tpu.pipeline_mode<synchronous>, transform_indices = @transform_1, window_bounds = array<i64: 1152, 128>}, {pipeline_mode = #tpu.pipeline_mode<synchronous>, transform_indices = @transform_2, window_bounds = array<i64: 1, 128>}, {pipeline_mode = #tpu.pipeline_mode<synchronous>, transform_indices = @transform_3, window_bounds = array<i64: 1152, 128>}, {pipeline_mode = #tpu.pipeline_mode<synchronous>, transform_indices = @transform_4, window_bounds = array<i64: 1, 128>}, {transform_indices = @transform_5, window_bounds = array<i64: 2, 16, 16, 128>}]} {
    %cst = arith.constant 0.000000e+00 : bf16
    %0 = vector.broadcast %cst : bf16 to vector<2x18x18x128xbf16>
    %c0 = arith.constant 0 : index
    %c0_0 = arith.constant 0 : index
    %c0_1 = arith.constant 0 : index
    %c0_2 = arith.constant 0 : index
    %1 = vector.load %arg7[%c0, %c0_0, %c0_1, %c0_2] : memref<2x18x18x128xbf16, #tpu.memory_space<vmem>>, vector<2x18x18x128xbf16>
    tpu.vector_store %arg7[%c0, %c0_0, %c0_1, %c0_2], %0 {strides = array<i32>} : memref<2x18x18x128xbf16, #tpu.memory_space<vmem>>, vector<2x18x18x128xbf16>,
    %c0_3 = arith.constant 0 : index
    %c0_4 = arith.constant 0 : index
    %c0_5 = arith.constant 0 : index
    %c0_6 = arith.constant 0 : index
    %2 = vector.load %arg1[%c0_3, %c0_4, %c0_5, %c0_6] : memref<2x16x16x128xf32, #tpu.memory_space<vmem>>, vector<2x16x16x128xf32>
    %cst_7 = arith.constant 0.000000e+00 : f32
    %3 = vector.broadcast %cst_7 : f32 to vector<2x16x16x128xf32>
    %4 = arith.maximumf %2, %3 : vector<2x16x16x128xf32>
    %5 = arith.truncf %4 : vector<2x16x16x128xf32> to vector<2x16x16x128xbf16>
    %c0_8 = arith.constant 0 : index
    %c1 = arith.constant 1 : index
    %c1_9 = arith.constant 1 : index
    %c0_10 = arith.constant 0 : index
    %6 = vector.load %arg7[%c0_8, %c1, %c1_9, %c0_10] : memref<2x18x18x128xbf16, #tpu.memory_space<vmem>>, vector<2x16x16x128xbf16>
    tpu.vector_store %arg7[%c0_8, %c1, %c1_9, %c0_10], %5 {strides = array<i32>} : memref<2x18x18x128xbf16, #tpu.memory_space<vmem>>, vector<2x16x16x128xbf16>,
    %c0_11 = arith.constant 0 : index
    %c0_12 = arith.constant 0 : index
    %c0_13 = arith.constant 0 : index
    %c0_14 = arith.constant 0 : index
    %7 = vector.load %arg7[%c0_11, %c0_12, %c0_13, %c0_14] : memref<2x18x18x128xbf16, #tpu.memory_space<vmem>>, vector<2x16x16x128xbf16>
    %c0_15 = arith.constant 0 : index
    %c0_16 = arith.constant 0 : index
    %c1_17 = arith.constant 1 : index
    %c0_18 = arith.constant 0 : index
    %8 = vector.load %arg7[%c0_15, %c0_16, %c1_17, %c0_18] : memref<2x18x18x128xbf16, #tpu.memory_space<vmem>>, vector<2x16x16x128xbf16>
    %c0_19 = arith.constant 0 : index
    %c0_20 = arith.constant 0 : index
    %c2 = arith.constant 2 : index
    %c0_21 = arith.constant 0 : index
    %9 = vector.load %arg7[%c0_19, %c0_20, %c2, %c0_21] : memref<2x18x18x128xbf16, #tpu.memory_space<vmem>>, vector<2x16x16x128xbf16>
    %c0_22 = arith.constant 0 : index
    %c1_23 = arith.constant 1 : index
    %c0_24 = arith.constant 0 : index
    %c0_25 = arith.constant 0 : index
    %10 = vector.load %arg7[%c0_22, %c1_23, %c0_24, %c0_25] : memref<2x18x18x128xbf16, #tpu.memory_space<vmem>>, vector<2x16x16x128xbf16>
    %c0_26 = arith.constant 0 : index
    %c1_27 = arith.constant 1 : index
    %c1_28 = arith.constant 1 : index
    %c0_29 = arith.constant 0 : index
    %11 = vector.load %arg7[%c0_26, %c1_27, %c1_28, %c0_29] : memref<2x18x18x128xbf16, #tpu.memory_space<vmem>>, vector<2x16x16x128xbf16>
    %c0_30 = arith.constant 0 : index
    %c1_31 = arith.constant 1 : index
    %c2_32 = arith.constant 2 : index
    %c0_33 = arith.constant 0 : index
    %12 = vector.load %arg7[%c0_30, %c1_31, %c2_32, %c0_33] : memref<2x18x18x128xbf16, #tpu.memory_space<vmem>>, vector<2x16x16x128xbf16>
    %c0_34 = arith.constant 0 : index
    %c2_35 = arith.constant 2 : index
    %c0_36 = arith.constant 0 : index
    %c0_37 = arith.constant 0 : index
    %13 = vector.load %arg7[%c0_34, %c2_35, %c0_36, %c0_37] : memref<2x18x18x128xbf16, #tpu.memory_space<vmem>>, vector<2x16x16x128xbf16>
    %c0_38 = arith.constant 0 : index
    %c2_39 = arith.constant 2 : index
    %c1_40 = arith.constant 1 : index
    %c0_41 = arith.constant 0 : index
    %14 = vector.load %arg7[%c0_38, %c2_39, %c1_40, %c0_41] : memref<2x18x18x128xbf16, #tpu.memory_space<vmem>>, vector<2x16x16x128xbf16>
    %c0_42 = arith.constant 0 : index
    %c2_43 = arith.constant 2 : index
    %c2_44 = arith.constant 2 : index
    %c0_45 = arith.constant 0 : index
    %15 = vector.load %arg7[%c0_42, %c2_43, %c2_44, %c0_45] : memref<2x18x18x128xbf16, #tpu.memory_space<vmem>>, vector<2x16x16x128xbf16>
    %16 = tpu.concatenate %7, %8, %9, %10, %11, %12, %13, %14, %15 in 3 : vector<2x16x16x128xbf16>, vector<2x16x16x128xbf16>, vector<2x16x16x128xbf16>, vector<2x16x16x128xbf16>, vector<2x16x16x128xbf16>, vector<2x16x16x128xbf16>, vector<2x16x16x128xbf16>, vector<2x16x16x128xbf16>, vector<2x16x16x128xbf16> -> vector<2x16x16x1152xbf16>
    %17 = vector.shape_cast %16 : vector<2x16x16x1152xbf16> to vector<512x1152xbf16>
    %c0_46 = arith.constant 0 : index
    %c0_47 = arith.constant 0 : index
    %18 = vector.load %arg2[%c0_46, %c0_47] : memref<1152x128xbf16, #tpu.memory_space<vmem>>, vector<1152x128xbf16>
    %cst_48 = arith.constant dense<0.000000e+00> : vector<512x128xf32>
    %19 = tpu.matmul %17, %18, %cst_48 {dimension_numbers = #tpu.dot_dimension_numbers<[1], [0], [0], [1], [0, 0, 1, 1], [], []>} : vector<512x1152xbf16>, vector<1152x128xbf16>, vector<512x128xf32> -> vector<512x128xf32>
    %c0_49 = arith.constant 0 : index
    %c0_50 = arith.constant 0 : index
    %20 = vector.load %arg3[%c0_49, %c0_50] : memref<1x128xf32, #tpu.memory_space<vmem>>, vector<1x128xf32>
    %21 = vector.broadcast %20 : vector<1x128xf32> to vector<512x128xf32>
    %22 = arith.addf %19, %21 : vector<512x128xf32>
    %cst_51 = arith.constant 0.000000e+00 : bf16
    %23 = vector.broadcast %cst_51 : bf16 to vector<2x18x18x128xbf16>
    %c0_52 = arith.constant 0 : index
    %c0_53 = arith.constant 0 : index
    %c0_54 = arith.constant 0 : index
    %c0_55 = arith.constant 0 : index
    %24 = vector.load %arg8[%c0_52, %c0_53, %c0_54, %c0_55] : memref<2x18x18x128xbf16, #tpu.memory_space<vmem>>, vector<2x18x18x128xbf16>
    tpu.vector_store %arg8[%c0_52, %c0_53, %c0_54, %c0_55], %23 {strides = array<i32>} : memref<2x18x18x128xbf16, #tpu.memory_space<vmem>>, vector<2x18x18x128xbf16>,
    %cst_56 = arith.constant 0.000000e+00 : f32
    %25 = vector.broadcast %cst_56 : f32 to vector<512x128xf32>
    %26 = arith.maximumf %22, %25 : vector<512x128xf32>
    %27 = arith.truncf %26 : vector<512x128xf32> to vector<512x128xbf16>
    %28 = vector.shape_cast %27 : vector<512x128xbf16> to vector<2x16x16x128xbf16>
    %c0_57 = arith.constant 0 : index
    %c1_58 = arith.constant 1 : index
    %c1_59 = arith.constant 1 : index
    %c0_60 = arith.constant 0 : index
    %29 = vector.load %arg8[%c0_57, %c1_58, %c1_59, %c0_60] : memref<2x18x18x128xbf16, #tpu.memory_space<vmem>>, vector<2x16x16x128xbf16>
    tpu.vector_store %arg8[%c0_57, %c1_58, %c1_59, %c0_60], %28 {strides = array<i32>} : memref<2x18x18x128xbf16, #tpu.memory_space<vmem>>, vector<2x16x16x128xbf16>,
    %c0_61 = arith.constant 0 : index
    %c0_62 = arith.constant 0 : index
    %c0_63 = arith.constant 0 : index
    %c0_64 = arith.constant 0 : index
    %30 = vector.load %arg8[%c0_61, %c0_62, %c0_63, %c0_64] : memref<2x18x18x128xbf16, #tpu.memory_space<vmem>>, vector<2x16x16x128xbf16>
    %c0_65 = arith.constant 0 : index
    %c0_66 = arith.constant 0 : index
    %c1_67 = arith.constant 1 : index
    %c0_68 = arith.constant 0 : index
    %31 = vector.load %arg8[%c0_65, %c0_66, %c1_67, %c0_68] : memref<2x18x18x128xbf16, #tpu.memory_space<vmem>>, vector<2x16x16x128xbf16>
    %c0_69 = arith.constant 0 : index
    %c0_70 = arith.constant 0 : index
    %c2_71 = arith.constant 2 : index
    %c0_72 = arith.constant 0 : index
    %32 = vector.load %arg8[%c0_69, %c0_70, %c2_71, %c0_72] : memref<2x18x18x128xbf16, #tpu.memory_space<vmem>>, vector<2x16x16x128xbf16>
    %c0_73 = arith.constant 0 : index
    %c1_74 = arith.constant 1 : index
    %c0_75 = arith.constant 0 : index
    %c0_76 = arith.constant 0 : index
    %33 = vector.load %arg8[%c0_73, %c1_74, %c0_75, %c0_76] : memref<2x18x18x128xbf16, #tpu.memory_space<vmem>>, vector<2x16x16x128xbf16>
    %c0_77 = arith.constant 0 : index
    %c1_78 = arith.constant 1 : index
    %c1_79 = arith.constant 1 : index
    %c0_80 = arith.constant 0 : index
    %34 = vector.load %arg8[%c0_77, %c1_78, %c1_79, %c0_80] : memref<2x18x18x128xbf16, #tpu.memory_space<vmem>>, vector<2x16x16x128xbf16>
    %c0_81 = arith.constant 0 : index
    %c1_82 = arith.constant 1 : index
    %c2_83 = arith.constant 2 : index
    %c0_84 = arith.constant 0 : index
    %35 = vector.load %arg8[%c0_81, %c1_82, %c2_83, %c0_84] : memref<2x18x18x128xbf16, #tpu.memory_space<vmem>>, vector<2x16x16x128xbf16>
    %c0_85 = arith.constant 0 : index
    %c2_86 = arith.constant 2 : index
    %c0_87 = arith.constant 0 : index
    %c0_88 = arith.constant 0 : index
    %36 = vector.load %arg8[%c0_85, %c2_86, %c0_87, %c0_88] : memref<2x18x18x128xbf16, #tpu.memory_space<vmem>>, vector<2x16x16x128xbf16>
    %c0_89 = arith.constant 0 : index
    %c2_90 = arith.constant 2 : index
    %c1_91 = arith.constant 1 : index
    %c0_92 = arith.constant 0 : index
    %37 = vector.load %arg8[%c0_89, %c2_90, %c1_91, %c0_92] : memref<2x18x18x128xbf16, #tpu.memory_space<vmem>>, vector<2x16x16x128xbf16>
    %c0_93 = arith.constant 0 : index
    %c2_94 = arith.constant 2 : index
    %c2_95 = arith.constant 2 : index
    %c0_96 = arith.constant 0 : index
    %38 = vector.load %arg8[%c0_93, %c2_94, %c2_95, %c0_96] : memref<2x18x18x128xbf16, #tpu.memory_space<vmem>>, vector<2x16x16x128xbf16>
    %39 = tpu.concatenate %30, %31, %32, %33, %34, %35, %36, %37, %38 in 3 : vector<2x16x16x128xbf16>, vector<2x16x16x128xbf16>, vector<2x16x16x128xbf16>, vector<2x16x16x128xbf16>, vector<2x16x16x128xbf16>, vector<2x16x16x128xbf16>, vector<2x16x16x128xbf16>, vector<2x16x16x128xbf16>, vector<2x16x16x128xbf16> -> vector<2x16x16x1152xbf16>
    %40 = vector.shape_cast %39 : vector<2x16x16x1152xbf16> to vector<512x1152xbf16>
    %c0_97 = arith.constant 0 : index
    %c0_98 = arith.constant 0 : index
    %41 = vector.load %arg4[%c0_97, %c0_98] : memref<1152x128xbf16, #tpu.memory_space<vmem>>, vector<1152x128xbf16>
    %cst_99 = arith.constant dense<0.000000e+00> : vector<512x128xf32>
    %42 = tpu.matmul %40, %41, %cst_99 {dimension_numbers = #tpu.dot_dimension_numbers<[1], [0], [0], [1], [0, 0, 1, 1], [], []>} : vector<512x1152xbf16>, vector<1152x128xbf16>, vector<512x128xf32> -> vector<512x128xf32>
    %c0_100 = arith.constant 0 : index
    %c0_101 = arith.constant 0 : index
    %43 = vector.load %arg5[%c0_100, %c0_101] : memref<1x128xf32, #tpu.memory_space<vmem>>, vector<1x128xf32>
    %44 = vector.broadcast %43 : vector<1x128xf32> to vector<512x128xf32>
    %45 = arith.addf %42, %44 : vector<512x128xf32>
    %c0_102 = arith.constant 0 : index
    %c0_103 = arith.constant 0 : index
    %c0_104 = arith.constant 0 : index
    %c0_105 = arith.constant 0 : index
    %46 = vector.load %arg1[%c0_102, %c0_103, %c0_104, %c0_105] : memref<2x16x16x128xf32, #tpu.memory_space<vmem>>, vector<2x16x16x128xf32>
    %47 = vector.shape_cast %46 : vector<2x16x16x128xf32> to vector<512x128xf32>
    %48 = arith.addf %45, %47 : vector<512x128xf32>
    %49 = vector.shape_cast %48 : vector<512x128xf32> to vector<2x16x16x128xf32>
    %c0_106 = arith.constant 0 : index
    %c0_107 = arith.constant 0 : index
    %c0_108 = arith.constant 0 : index
    %c0_109 = arith.constant 0 : index
    %50 = vector.load %arg6[%c0_106, %c0_107, %c0_108, %c0_109] : memref<2x16x16x128xf32, #tpu.memory_space<vmem>>, vector<2x16x16x128xf32>
    tpu.vector_store %arg6[%c0_106, %c0_107, %c0_108, %c0_109], %49 {strides = array<i32>} : memref<2x16x16x128xf32, #tpu.memory_space<vmem>>, vector<2x16x16x128xf32>,
    return
  }
  func.func @transform_0(%arg0: i32) -> (i32, i32, i32, i32) {
    %c0_i32 = arith.constant 0 : i32
    %c0_i32_0 = arith.constant 0 : i32
    %c0_i32_1 = arith.constant 0 : i32
    %c0_i32_2 = arith.constant 0 : i32
    return %arg0, %c0_i32, %c0_i32_0, %c0_i32_1 : i32, i32, i32, i32
  }
  func.func @transform_1(%arg0: i32) -> (i32, i32) {
    %c0_i32 = arith.constant 0 : i32
    %c0_i32_0 = arith.constant 0 : i32
    %c0_i32_1 = arith.constant 0 : i32
    return %c0_i32, %c0_i32_0 : i32, i32
  }
  func.func @transform_2(%arg0: i32) -> (i32, i32) {
    %c0_i32 = arith.constant 0 : i32
    %c0_i32_0 = arith.constant 0 : i32
    %c0_i32_1 = arith.constant 0 : i32
    return %c0_i32, %c0_i32_0 : i32, i32
  }
  func.func @transform_3(%arg0: i32) -> (i32, i32) {
    %c0_i32 = arith.constant 0 : i32
    %c0_i32_0 = arith.constant 0 : i32
    %c0_i32_1 = arith.constant 0 : i32
    return %c0_i32, %c0_i32_0 : i32, i32
  }
  func.func @transform_4(%arg0: i32) -> (i32, i32) {
    %c0_i32 = arith.constant 0 : i32
    %c0_i32_0 = arith.constant 0 : i32
    %c0_i32_1 = arith.constant 0 : i32
    return %c0_i32, %c0_i32_0 : i32, i32
  }
  func.func @transform_5(%arg0: i32) -> (i32, i32, i32, i32) {
    %c0_i32 = arith.constant 0 : i32
    %c0_i32_0 = arith.constant 0 : i32
    %c0_i32_1 = arith.constant 0 : i32
    %c0_i32_2 = arith.constant 0 : i32
    return %arg0, %c0_i32, %c0_i32_0, %c0_i32_1 : i32, i32, i32, i32
  }
}

</mosaic_0001>

<llo_original>
// kernel: tpu_custom_call.1
$region0: #{tpu_custom_call.1}
  #allocation0 [shape = 'u32[]', space=smem, size = 0x4, offset = 0x4, fixed_abs, tag = 'smem constant byte address 0x4 - core index']
  #allocation1 [shape = 'u32[144,128]{1,0:T(1,128)}', space=vmem, size = 0x12000, scoped, tag = 'internal scratch']
  #allocation2 [shape = 'bf16[2,18,18,128]{3,2,1,0:T(8,128)(2,1)}', space=vmem, size = 0x36000, scoped, tag = 'scratch operand']
  #allocation3 [shape = 'bf16[2,18,18,128]{3,2,1,0:T(8,128)(2,1)}', space=vmem, size = 0x36000, scoped, tag = 'scratch operand']
  %s0 = inlined_call_operand.hbm [shape: f32[4,16,16,128], index: 0, kind: input, shape index: {}]
  %s1 = inlined_call_operand.hbm [shape: bf16[1152,128], index: 1, kind: input, shape index: {}]
  %s2 = inlined_call_operand.vmem [shape: f32[1,128], index: 2, kind: input, shape index: {}]
  %s3 = inlined_call_operand.hbm [shape: bf16[1152,128], index: 3, kind: input, shape index: {}]
  %s4 = inlined_call_operand.vmem [shape: f32[1,128], index: 4, kind: input, shape index: {}]
  %s5 = inlined_call_operand.hbm [shape: f32[4,16,16,128], index: 5, kind: output, shape index: {}]
  %s6 = sld [smem:[#allocation0]]
  $region65: #{tpu_custom_call.1} parent=0
    _
  %s8 = ssub.s32 1, %s6
  %s9 = scalar_select 0, %s8, %s6
  $region1: #{tpu_custom_call.1} parent=0
    #allocation4 [shape = 'u8[524288]{0}', space=vmem, size = 0x80000, scoped, tag = 'input window, operand 0']
    #allocation5 [shape = 's32[2]{0}', space=sflag, size = 0x8, scoped, tag = 'scoped memory for tpu_custom_call.1']
    #allocation6 [shape = 's32[2]{0}', space=sflag, size = 0x8, scoped, tag = 'scoped memory for tpu_custom_call.1']
    #allocation7 [shape = 'u8[294912]{0}', space=vmem, size = 0x48000, scoped, tag = 'input window, operand 1, single buffered']
    #allocation8 [shape = 's32[1]{0}', space=sflag, size = 0x4, scoped, tag = 'scoped memory for tpu_custom_call.1']
    #allocation9 [shape = 'u8[294912]{0}', space=vmem, size = 0x48000, scoped, tag = 'input window, operand 3, single buffered']
    #allocation10 [shape = 'u8[524288]{0}', space=vmem, size = 0x80000, scoped, tag = 'output window, operand 0']
    %10 = vsyncpa [#allocation5], 0
    %s11 = scalar_lea.sflag [#allocation5], 1
    %12 = vsyncpa %s11, 0
    %13 = vsyncpa [#allocation8], 0
    %14 = vsyncpa [#allocation6], 0
    %s15 = scalar_lea.sflag [#allocation6], 1
    %16 = vsyncpa %s15, 0
    loop: start=0, step=1, limit=4
    $region2: #{tpu_custom_call.1} parent=1 // loop_pre_header
      _
    $region3: #{tpu_custom_call.1} parent=1 // loop_header
      %s18 = sphi 0, %s22
      %p19 = scmp.ge.s32.totalorder %s18, 4
      %s28 = sphi 0, %s30
      %s31 = sphi 0, %s28
      %s32 = sphi 0, %s31
      %s48 = sphi 0, %s32
      %s52 = sphi 0, %s52
      %s54 = sphi 0, %s52
      %s55 = sphi 0, %s54
      %s69 = sphi 0, %s55
      %s73 = sphi 0, %s73
      %s75 = sphi 0, %s73
      %s76 = sphi 0, %s75
      %s90 = sphi 0, %s76
      %s94 = sphi 0, %s94
      %s96 = sphi 0, %s94
      %s97 = sphi 0, %s96
      %s111 = sphi 0, %s97
      %s115 = sphi 0, %s115
      %s117 = sphi 0, %s115
      %s118 = sphi 0, %s117
      %s132 = sphi 0, %s118
      %s138 = sphi 0, %s140
      %s141 = sphi 0, %s138
      %s142 = sphi 0, %s141
      %s158 = sphi 0, %s142
    $region4: #{tpu_custom_call.1} parent=1 // loop_header_branch
      %21 = sbr.rel (%p19) target = $region8
    $region5: #{tpu_custom_call.1} parent=1 // loop_body
      %s23 = ssub.s32 %s18, 1
      %s24 = ssub.s32 %s18, 2
      %s25 = sadd.s32 %s18, 1
      %s26 = ssub.s32 %s18, %s25
      %p27 = scmp.eq.s32.totalorder %s26, 0
      %s29 = sadd.s32 %s28, 1
      %s30 = scalar_select %p27, %s28, %s29
      %p33 = pneg %p27
      %p34 = scmp.eq.s32.totalorder %s18, 1
      %p35 = por %p33, %p34
      %p36 = scmp.ne.s32.totalorder %s28, %s31
      %p37 = scmp.eq.s32.totalorder %s18, 0
      %p38 = por %p36, %p37
      %p39 = scmp.ne.s32.totalorder %s28, %s31
      %p40 = scmp.eq.s32.totalorder %s23, 1
      %p41 = por %p39, %p40
      %p42 = scmp.ne.s32.totalorder %s31, %s32
      %p43 = scmp.eq.s32.totalorder %s23, 0
      %p44 = por %p42, %p43
      %p45 = scmp.ne.s32.totalorder %s31, %s32
      %p46 = scmp.eq.s32.totalorder %s24, 1
      %p47 = por %p45, %p46
      %p49 = scmp.ne.s32.totalorder %s32, %s48
      %p50 = scmp.eq.s32.totalorder %s24, 0
      %p51 = por %p49, %p50
      %s53 = sadd.s32 %s52, 1
      %p56 = scmp.eq.s32.totalorder %s18, 1
      %p57 = scmp.ne.s32.totalorder %s52, %s54
      %p58 = scmp.eq.s32.totalorder %s18, 0
      %p59 = por %p57, %p58
      %p60 = scmp.ne.s32.totalorder %s52, %s54
      %p61 = scmp.eq.s32.totalorder %s23, 1
      %p62 = por %p60, %p61
      %p63 = scmp.ne.s32.totalorder %s54, %s55
      %p64 = scmp.eq.s32.totalorder %s23, 0
      %p65 = por %p63, %p64
      %p66 = scmp.ne.s32.totalorder %s54, %s55
      %p67 = scmp.eq.s32.totalorder %s24, 1
      %p68 = por %p66, %p67
      %p70 = scmp.ne.s32.totalorder %s55, %s69
      %p71 = scmp.eq.s32.totalorder %s24, 0
      %p72 = por %p70, %p71
      %s74 = sadd.s32 %s73, 1
      %p77 = scmp.eq.s32.totalorder %s18, 1
      %p78 = scmp.ne.s32.totalorder %s73, %s75
      %p79 = scmp.eq.s32.totalorder %s18, 0
      %p80 = por %p78, %p79
      %p81 = scmp.ne.s32.totalorder %s73, %s75
      %p82 = scmp.eq.s32.totalorder %s23, 1
      %p83 = por %p81, %p82
      %p84 = scmp.ne.s32.totalorder %s75, %s76
      %p85 = scmp.eq.s32.totalorder %s23, 0
      %p86 = por %p84, %p85
      %p87 = scmp.ne.s32.totalorder %s75, %s76
      %p88 = scmp.eq.s32.totalorder %s24, 1
      %p89 = por %p87, %p88
      %p91 = scmp.ne.s32.totalorder %s76, %s90
      %p92 = scmp.eq.s32.totalorder %s24, 0
      %p93 = por %p91, %p92
      %s95 = sadd.s32 %s94, 1
      %p98 = scmp.eq.s32.totalorder %s18, 1
      %p99 = scmp.ne.s32.totalorder %s94, %s96
      %p100 = scmp.eq.s32.totalorder %s18, 0
      %p101 = por %p99, %p100
      %p102 = scmp.ne.s32.totalorder %s94, %s96
      %p103 = scmp.eq.s32.totalorder %s23, 1
      %p104 = por %p102, %p103
      %p105 = scmp.ne.s32.totalorder %s96, %s97
      %p106 = scmp.eq.s32.totalorder %s23, 0
      %p107 = por %p105, %p106
      %p108 = scmp.ne.s32.totalorder %s96, %s97
      %p109 = scmp.eq.s32.totalorder %s24, 1
      %p110 = por %p108, %p109
      %p112 = scmp.ne.s32.totalorder %s97, %s111
      %p113 = scmp.eq.s32.totalorder %s24, 0
      %p114 = por %p112, %p113
      %s116 = sadd.s32 %s115, 1
      %p119 = scmp.eq.s32.totalorder %s18, 1
      %p120 = scmp.ne.s32.totalorder %s115, %s117
      %p121 = scmp.eq.s32.totalorder %s18, 0
      %p122 = por %p120, %p121
      %p123 = scmp.ne.s32.totalorder %s115, %s117
      %p124 = scmp.eq.s32.totalorder %s23, 1
      %p125 = por %p123, %p124
      %p126 = scmp.ne.s32.totalorder %s117, %s118
      %p127 = scmp.eq.s32.totalorder %s23, 0
      %p128 = por %p126, %p127
      %p129 = scmp.ne.s32.totalorder %s117, %s118
      %p130 = scmp.eq.s32.totalorder %s24, 1
      %p131 = por %p129, %p130
      %p133 = scmp.ne.s32.totalorder %s118, %s132
      %p134 = scmp.eq.s32.totalorder %s24, 0
      %p135 = por %p133, %p134
      %s136 = ssub.s32 %s18, %s25
      %p137 = scmp.eq.s32.totalorder %s136, 0
      %s139 = sadd.s32 %s138, 1
      %s140 = scalar_select %p137, %s138, %s139
      %p143 = pneg %p137
      %p144 = scmp.eq.s32.totalorder %s18, 1
      %p145 = por %p143, %p144
      %p146 = scmp.ne.s32.totalorder %s138, %s141
      %p147 = scmp.eq.s32.totalorder %s18, 0
      %p148 = por %p146, %p147
      %p149 = scmp.ne.s32.totalorder %s138, %s141
      %p150 = scmp.eq.s32.totalorder %s23, 1
      %p151 = por %p149, %p150
      %p152 = scmp.ne.s32.totalorder %s141, %s142
      %p153 = scmp.eq.s32.totalorder %s23, 0
      %p154 = por %p152, %p153
      %p155 = scmp.ne.s32.totalorder %s141, %s142
      %p156 = scmp.eq.s32.totalorder %s24, 1
      %p157 = por %p155, %p156
      %p159 = scmp.ne.s32.totalorder %s142, %s158
      %p160 = scmp.eq.s32.totalorder %s24, 0
      %p161 = por %p159, %p160
      %p162 = scmp.le.s32.totalorder 1, %s18
      %p163 = scmp.lt.s32.totalorder %s18, 3
      %p164 = pnand %p162, %p163
      %p165 = pneg %p164
      // Predicated region
      $region9: #{tpu_custom_call.1} parent=5 // pred_check
        _
      $region10: #{tpu_custom_call.1} parent=5 // pred_check_branch
        %167 = sbr.rel (%p164) target = $region12
      $region11: #{tpu_custom_call.1} parent=5 // pred_region
        %s168 = ssub.s32 %s18, 1
        // Predicated region
        $region13: #{tpu_custom_call.1} parent=11 // pred_check
          %p169 = pneg %p65
        $region14: #{tpu_custom_call.1} parent=11 // pred_check_branch
          %171 = sbr.rel (%p169) target = $region16
        $region15: #{tpu_custom_call.1} parent=11 // pred_region
          %s173 = ssub.s32 9216, 9216
          %174 = vsyncadd [#allocation8], %s173
          %s175 = sshll.u32 [#allocation7], 4
          %s176 = int_to_ptr.vmem [resolvable:$true] %s175
          %181 = dma.hbm_to_vmem [thread:$0]  %s1, 9216, %s176, [#allocation8], 64, 64, 4
        $region16: #{tpu_custom_call.1} parent=11 // pred_fallthru
          _
        // Predicated region
        $region17: #{tpu_custom_call.1} parent=11 // pred_check
          %p182 = pneg %p86
        $region18: #{tpu_custom_call.1} parent=11 // pred_check_branch
          %184 = sbr.rel (%p182) target = $region20
        $region19: #{tpu_custom_call.1} parent=11 // pred_region
          _
        $region20: #{tpu_custom_call.1} parent=11 // pred_fallthru
          _
        // Predicated region
        $region21: #{tpu_custom_call.1} parent=11 // pred_check
          %p185 = pneg %p107
        $region22: #{tpu_custom_call.1} parent=11 // pred_check_branch
          %187 = sbr.rel (%p185) target = $region24
        $region23: #{tpu_custom_call.1} parent=11 // pred_region
          %s189 = ssub.s32 9216, 9216
          %190 = vsyncadd [#allocation8], %s189
          %s191 = sshll.u32 [#allocation9], 4
          %s192 = int_to_ptr.vmem [resolvable:$true] %s191
          %197 = dma.hbm_to_vmem [thread:$0]  %s3, 9216, %s192, [#allocation8], 64, 64, 4
        $region24: #{tpu_custom_call.1} parent=11 // pred_fallthru
          _
        // Predicated region
        $region25: #{tpu_custom_call.1} parent=11 // pred_check
          %p198 = pneg %p128
        $region26: #{tpu_custom_call.1} parent=11 // pred_check_branch
          %200 = sbr.rel (%p198) target = $region28
        $region27: #{tpu_custom_call.1} parent=11 // pred_region
          _
        $region28: #{tpu_custom_call.1} parent=11 // pred_fallthru
          _
      $region12: #{tpu_custom_call.1} parent=5 // pred_fallthru
        _
      %p201 = scmp.lt.s32.totalorder %s18, 2
      // Predicated region
      $region29: #{tpu_custom_call.1} parent=5 // pred_check
        %p202 = pneg %p201
      $region30: #{tpu_custom_call.1} parent=5 // pred_check_branch
        %204 = sbr.rel (%p202) target = $region32
      $region31: #{tpu_custom_call.1} parent=5 // pred_region
        // Predicated region
        $region33: #{tpu_custom_call.1} parent=31 // pred_check
          %p205 = pneg %p38
        $region34: #{tpu_custom_call.1} parent=31 // pred_check_branch
          %207 = sbr.rel (%p205) target = $region36
        $region35: #{tpu_custom_call.1} parent=31 // pred_region
          %s208 = sand.u32 %s28, 1
          %s209 = scalar_lea.sflag [#allocation5], %s208
          %s210 = sand.u32 %s28, 1
          %s211 = smul.addr %s210, 512
          %s212 = scalar_lea.vmem [#allocation4], %s211
          %s213 = smul.u32 2, %s18
          %s215 = ssub.s32 8192, 8192
          %216 = vsyncadd %s209, %s215
          %s217 = smul.addr %s213, 32
          %s218 = smul.addr %s217, 128
          %s219 = scalar_lea.hbm %s0, %s218
          %s220 = sshll.u32 %s212, 4
          %s221 = int_to_ptr.vmem [resolvable:$true] %s220
          %226 = dma.hbm_to_vmem [thread:$0]  %s219, 8192, %s221, %s209, 128, 128, 8
        $region36: #{tpu_custom_call.1} parent=31 // pred_fallthru
          _
      $region32: #{tpu_custom_call.1} parent=5 // pred_fallthru
        _
      %p227 = scmp.le.s32.totalorder 1, %s18
      %p228 = scmp.lt.s32.totalorder %s18, 3
      %p229 = pnand %p227, %p228
      %p230 = pneg %p229
      // Predicated region
      $region37: #{tpu_custom_call.1} parent=5 // pred_check
        _
      $region38: #{tpu_custom_call.1} parent=5 // pred_check_branch
        %232 = sbr.rel (%p229) target = $region40
      $region39: #{tpu_custom_call.1} parent=5 // pred_region
        %s233 = ssub.s32 %s18, 1
        %s234 = sand.u32 %s31, 1
        %s235 = scalar_lea.sflag [#allocation5], %s234
        %s236 = sand.u32 %s31, 1
        %s237 = smul.addr %s236, 512
        %s238 = scalar_lea.vmem [#allocation4], %s237
        // Predicated region
        $region41: #{tpu_custom_call.1} parent=39 // pred_check
          %p239 = pneg %p44
        $region42: #{tpu_custom_call.1} parent=39 // pred_check_branch
          %241 = sbr.rel (%p239) target = $region44
        $region43: #{tpu_custom_call.1} parent=39 // pred_region
          %242 = dma.done %s235, 8192
        $region44: #{tpu_custom_call.1} parent=39 // pred_fallthru
          _
        // Predicated region
        $region45: #{tpu_custom_call.1} parent=39 // pred_check
          %p243 = pneg %p65
        $region46: #{tpu_custom_call.1} parent=39 // pred_check_branch
          %245 = sbr.rel (%p243) target = $region48
        $region47: #{tpu_custom_call.1} parent=39 // pred_region
          %246 = dma.done [#allocation8], 9216
        $region48: #{tpu_custom_call.1} parent=39 // pred_fallthru
          _
        // Predicated region
        $region49: #{tpu_custom_call.1} parent=39 // pred_check
          %p247 = pneg %p107
        $region50: #{tpu_custom_call.1} parent=39 // pred_check_branch
          %249 = sbr.rel (%p247) target = $region52
        $region51: #{tpu_custom_call.1} parent=39 // pred_region
          %250 = dma.done [#allocation8], 9216
        $region52: #{tpu_custom_call.1} parent=39 // pred_fallthru
          _
        %s251 = sand.u32 %s31, 1
        %s252 = scalar_lea.sflag [#allocation5], %s251
        %s253 = sand.u32 %s31, 1
        %s254 = smul.addr %s253, 512
        %s255 = scalar_lea.vmem [#allocation4], %s254
        %p256 = pneg %p44
        %p257 = pneg %p41
        %p258 = pneg %p65
        %p259 = pneg %p62
        %p260 = pneg %p86
        %p261 = pneg %p83
        %p262 = pneg %p107
        %p263 = pneg %p104
        %p264 = pneg %p128
        %p265 = pneg %p125
        %p266 = pneg %p154
        %p267 = pneg %p151
        %s268 = sand.u32 %s141, 1
        %s269 = scalar_lea.sflag [#allocation6], %s268
        %s270 = sand.u32 %s141, 1
        %s271 = smul.addr %s270, 512
        %s272 = scalar_lea.vmem [#allocation10], %s271
        %s273 = smul.u32 2, %s23
        %s274 = smul.u32 2, %s23
        %276 = vst [vmem:[#allocation2] sm:$0xf] 0
        %277 = vst [vmem:[#allocation2 + $0x4] sm:$0xf] 0
        %278 = vst [vmem:[#allocation2 + $0x8] sm:$0x1] 0
        %279 = vst [vmem:[#allocation2 + $0xc] sm:$0xf] 0
        %280 = vst [vmem:[#allocation2 + $0x10] sm:$0xf] 0
        %281 = vst [vmem:[#allocation2 + $0x14] sm:$0x1] 0
        %282 = vst [vmem:[#allocation2 + $0x18] sm:$0xf] 0
        %283 = vst [vmem:[#allocation2 + $0x1c] sm:$0xf] 0
        %284 = vst [vmem:[#allocation2 + $0x20] sm:$0x1] 0
        %285 = vst [vmem:[#allocation2 + $0x24] sm:$0xf] 0
        %286 = vst [vmem:[#allocation2 + $0x28] sm:$0xf] 0
        %287 = vst [vmem:[#allocation2 + $0x2c] sm:$0x1] 0
        %288 = vst [vmem:[#allocation2 + $0x30] sm:$0xf] 0
        %289 = vst [vmem:[#allocation2 + $0x34] sm:$0xf] 0
        %290 = vst [vmem:[#allocation2 + $0x38] sm:$0x1] 0
        %291 = vst [vmem:[#allocation2 + $0x3c] sm:$0xf] 0
        %292 = vst [vmem:[#allocation2 + $0x40] sm:$0xf] 0
        %293 = vst [vmem:[#allocation2 + $0x44] sm:$0x1] 0
        %294 = vst [vmem:[#allocation2 + $0x48] sm:$0xf] 0
        %295 = vst [vmem:[#allocation2 + $0x4c] sm:$0xf] 0
        %296 = vst [vmem:[#allocation2 + $0x50] sm:$0x1] 0
        %297 = vst [vmem:[#allocation2 + $0x54] sm:$0xf] 0
        %298 = vst [vmem:[#allocation2 + $0x58] sm:$0xf] 0
        %299 = vst [vmem:[#allocation2 + $0x5c] sm:$0x1] 0
        %300 = vst [vmem:[#allocation2 + $0x60] sm:$0xf] 0
        %301 = vst [vmem:[#allocation2 + $0x64] sm:$0xf] 0
        %302 = vst [vmem:[#allocation2 + $0x68] sm:$0x1] 0
        %303 = vst [vmem:[#allocation2 + $0x6c] sm:$0xf] 0
        %304 = vst [vmem:[#allocation2 + $0x70] sm:$0xf] 0
        %305 = vst [vmem:[#allocation2 + $0x74] sm:$0x1] 0
        %306 = vst [vmem:[#allocation2 + $0x78] sm:$0xf] 0
        %307 = vst [vmem:[#allocation2 + $0x7c] sm:$0xf] 0
        %308 = vst [vmem:[#allocation2 + $0x80] sm:$0x1] 0
        %309 = vst [vmem:[#allocation2 + $0x84] sm:$0xf] 0
        %310 = vst [vmem:[#allocation2 + $0x88] sm:$0xf] 0
        %311 = vst [vmem:[#allocation2 + $0x8c] sm:$0x1] 0
        %312 = vst [vmem:[#allocation2 + $0x90] sm:$0xf] 0
        %313 = vst [vmem:[#allocation2 + $0x94] sm:$0xf] 0
        %314 = vst [vmem:[#allocation2 + $0x98] sm:$0x1] 0
        %315 = vst [vmem:[#allocation2 + $0x9c] sm:$0xf] 0
        %316 = vst [vmem:[#allocation2 + $0xa0] sm:$0xf] 0
        %317 = vst [vmem:[#allocation2 + $0xa4] sm:$0x1] 0
        %318 = vst [vmem:[#allocation2 + $0xa8] sm:$0xf] 0
        %319 = vst [vmem:[#allocation2 + $0xac] sm:$0xf] 0
        %320 = vst [vmem:[#allocation2 + $0xb0] sm:$0x1] 0
        %321 = vst [vmem:[#allocation2 + $0xb4] sm:$0xf] 0
        %322 = vst [vmem:[#allocation2 + $0xb8] sm:$0xf] 0
        %323 = vst [vmem:[#allocation2 + $0xbc] sm:$0x1] 0
        %324 = vst [vmem:[#allocation2 + $0xc0] sm:$0xf] 0
        %325 = vst [vmem:[#allocation2 + $0xc4] sm:$0xf] 0
        %326 = vst [vmem:[#allocation2 + $0xc8] sm:$0x1] 0
        %327 = vst [vmem:[#allocation2 + $0xcc] sm:$0xf] 0
        %328 = vst [vmem:[#allocation2 + $0xd0] sm:$0xf] 0
        %329 = vst [vmem:[#allocation2 + $0xd4] sm:$0x1] 0
        %330 = vst [vmem:[#allocation2 + $0xd8] sm:$0xf] 0
        %331 = vst [vmem:[#allocation2 + $0xdc] sm:$0xf] 0
        %332 = vst [vmem:[#allocation2 + $0xe0] sm:$0x1] 0
        %333 = vst [vmem:[#allocation2 + $0xe4] sm:$0xf] 0
        %334 = vst [vmem:[#allocation2 + $0xe8] sm:$0xf] 0
        %335 = vst [vmem:[#allocation2 + $0xec] sm:$0x1] 0
        %336 = vst [vmem:[#allocation2 + $0xf0] sm:$0xf] 0
        %337 = vst [vmem:[#allocation2 + $0xf4] sm:$0xf] 0
        %338 = vst [vmem:[#allocation2 + $0xf8] sm:$0x1] 0
        %339 = vst [vmem:[#allocation2 + $0xfc] sm:$0xf] 0
        %340 = vst [vmem:[#allocation2 + $0x100] sm:$0xf] 0
        %341 = vst [vmem:[#allocation2 + $0x104] sm:$0x1] 0
        %342 = vst [vmem:[#allocation2 + $0x108] sm:$0xf] 0
        %343 = vst [vmem:[#allocation2 + $0x10c] sm:$0xf] 0
        %344 = vst [vmem:[#allocation2 + $0x110] sm:$0x1] 0
        %345 = vst [vmem:[#allocation2 + $0x114] sm:$0xf] 0
        %346 = vst [vmem:[#allocation2 + $0x118] sm:$0xf] 0
        %347 = vst [vmem:[#allocation2 + $0x11c] sm:$0x1] 0
        %348 = vst [vmem:[#allocation2 + $0x120] sm:$0xf] 0
        %349 = vst [vmem:[#allocation2 + $0x124] sm:$0xf] 0
        %350 = vst [vmem:[#allocation2 + $0x128] sm:$0x1] 0
        %351 = vst [vmem:[#allocation2 + $0x12c] sm:$0xf] 0
        %352 = vst [vmem:[#allocation2 + $0x130] sm:$0xf] 0
        %353 = vst [vmem:[#allocation2 + $0x134] sm:$0x1] 0
        %354 = vst [vmem:[#allocation2 + $0x138] sm:$0xf] 0
        %355 = vst [vmem:[#allocation2 + $0x13c] sm:$0xf] 0
        %356 = vst [vmem:[#allocation2 + $0x140] sm:$0x1] 0
        %357 = vst [vmem:[#allocation2 + $0x144] sm:$0xf] 0
        %358 = vst [vmem:[#allocation2 + $0x148] sm:$0xf] 0
        %359 = vst [vmem:[#allocation2 + $0x14c] sm:$0x1] 0
        %360 = vst [vmem:[#allocation2 + $0x150] sm:$0xf] 0
        %361 = vst [vmem:[#allocation2 + $0x154] sm:$0xf] 0
        %362 = vst [vmem:[#allocation2 + $0x158] sm:$0x1] 0
        %363 = vst [vmem:[#allocation2 + $0x15c] sm:$0xf] 0
        %364 = vst [vmem:[#allocation2 + $0x160] sm:$0xf] 0
        %365 = vst [vmem:[#allocation2 + $0x164] sm:$0x1] 0
        %366 = vst [vmem:[#allocation2 + $0x168] sm:$0xf] 0
        %367 = vst [vmem:[#allocation2 + $0x16c] sm:$0xf] 0
        %368 = vst [vmem:[#allocation2 + $0x170] sm:$0x1] 0
        %369 = vst [vmem:[#allocation2 + $0x174] sm:$0xf] 0
        %370 = vst [vmem:[#allocation2 + $0x178] sm:$0xf] 0
        %371 = vst [vmem:[#allocation2 + $0x17c] sm:$0x1] 0
        %372 = vst [vmem:[#allocation2 + $0x180] sm:$0xf] 0
        %373 = vst [vmem:[#allocation2 + $0x184] sm:$0xf] 0
        %374 = vst [vmem:[#allocation2 + $0x188] sm:$0x1] 0
        %375 = vst [vmem:[#allocation2 + $0x18c] sm:$0xf] 0
        %376 = vst [vmem:[#allocation2 + $0x190] sm:$0xf] 0
        %377 = vst [vmem:[#allocation2 + $0x194] sm:$0x1] 0
        %378 = vst [vmem:[#allocation2 + $0x198] sm:$0xf] 0
        %379 = vst [vmem:[#allocation2 + $0x19c] sm:$0xf] 0
        %380 = vst [vmem:[#allocation2 + $0x1a0] sm:$0x1] 0
        %381 = vst [vmem:[#allocation2 + $0x1a4] sm:$0xf] 0
        %382 = vst [vmem:[#allocation2 + $0x1a8] sm:$0xf] 0
        %383 = vst [vmem:[#allocation2 + $0x1ac] sm:$0x1] 0
        %v384 = vld [vmem:[%s238] sm:$0xff]
        %v385 = vld [vmem:[%s238 + $0x8] sm:$0xff]
        %v386 = vld [vmem:[%s238 + $0x10] sm:$0xff]
        %v387 = vld [vmem:[%s238 + $0x18] sm:$0xff]
        %v388 = vld [vmem:[%s238 + $0x20] sm:$0xff]
        %v389 = vld [vmem:[%s238 + $0x28] sm:$0xff]
        %v390 = vld [vmem:[%s238 + $0x30] sm:$0xff]
        %v391 = vld [vmem:[%s238 + $0x38] sm:$0xff]
        %v392 = vld [vmem:[%s238 + $0x40] sm:$0xff]
        %v393 = vld [vmem:[%s238 + $0x48] sm:$0xff]
        %v394 = vld [vmem:[%s238 + $0x50] sm:$0xff]
        %v395 = vld [vmem:[%s238 + $0x58] sm:$0xff]
        %v396 = vld [vmem:[%s238 + $0x60] sm:$0xff]
        %v397 = vld [vmem:[%s238 + $0x68] sm:$0xff]
        %v398 = vld [vmem:[%s238 + $0x70] sm:$0xff]
        %v399 = vld [vmem:[%s238 + $0x78] sm:$0xff]
        %v400 = vld [vmem:[%s238 + $0x80] sm:$0xff]
        %v401 = vld [vmem:[%s238 + $0x88] sm:$0xff]
        %v402 = vld [vmem:[%s238 + $0x90] sm:$0xff]
        %v403 = vld [vmem:[%s238 + $0x98] sm:$0xff]
        %v404 = vld [vmem:[%s238 + $0xa0] sm:$0xff]
        %v405 = vld [vmem:[%s238 + $0xa8] sm:$0xff]
        %v406 = vld [vmem:[%s238 + $0xb0] sm:$0xff]
        %v407 = vld [vmem:[%s238 + $0xb8] sm:$0xff]
        %v408 = vld [vmem:[%s238 + $0xc0] sm:$0xff]
        %v409 = vld [vmem:[%s238 + $0xc8] sm:$0xff]
        %v410 = vld [vmem:[%s238 + $0xd0] sm:$0xff]
        %v411 = vld [vmem:[%s238 + $0xd8] sm:$0xff]
        %v412 = vld [vmem:[%s238 + $0xe0] sm:$0xff]
        %v413 = vld [vmem:[%s238 + $0xe8] sm:$0xff]
        %v414 = vld [vmem:[%s238 + $0xf0] sm:$0xff]
        %v415 = vld [vmem:[%s238 + $0xf8] sm:$0xff]
        %v416 = vld [vmem:[%s238 + $0x100] sm:$0xff]
        %v417 = vld [vmem:[%s238 + $0x108] sm:$0xff]
        %v418 = vld [vmem:[%s238 + $0x110] sm:$0xff]
        %v419 = vld [vmem:[%s238 + $0x118] sm:$0xff]
        %v420 = vld [vmem:[%s238 + $0x120] sm:$0xff]
        %v421 = vld [vmem:[%s238 + $0x128] sm:$0xff]
        %v422 = vld [vmem:[%s238 + $0x130] sm:$0xff]
        %v423 = vld [vmem:[%s238 + $0x138] sm:$0xff]
        %v424 = vld [vmem:[%s238 + $0x140] sm:$0xff]
        %v425 = vld [vmem:[%s238 + $0x148] sm:$0xff]
        %v426 = vld [vmem:[%s238 + $0x150] sm:$0xff]
        %v427 = vld [vmem:[%s238 + $0x158] sm:$0xff]
        %v428 = vld [vmem:[%s238 + $0x160] sm:$0xff]
        %v429 = vld [vmem:[%s238 + $0x168] sm:$0xff]
        %v430 = vld [vmem:[%s238 + $0x170] sm:$0xff]
        %v431 = vld [vmem:[%s238 + $0x178] sm:$0xff]
        %v432 = vld [vmem:[%s238 + $0x180] sm:$0xff]
        %v433 = vld [vmem:[%s238 + $0x188] sm:$0xff]
        %v434 = vld [vmem:[%s238 + $0x190] sm:$0xff]
        %v435 = vld [vmem:[%s238 + $0x198] sm:$0xff]
        %v436 = vld [vmem:[%s238 + $0x1a0] sm:$0xff]
        %v437 = vld [vmem:[%s238 + $0x1a8] sm:$0xff]
        %v438 = vld [vmem:[%s238 + $0x1b0] sm:$0xff]
        %v439 = vld [vmem:[%s238 + $0x1b8] sm:$0xff]
        %v440 = vld [vmem:[%s238 + $0x1c0] sm:$0xff]
        %v441 = vld [vmem:[%s238 + $0x1c8] sm:$0xff]
        %v442 = vld [vmem:[%s238 + $0x1d0] sm:$0xff]
        %v443 = vld [vmem:[%s238 + $0x1d8] sm:$0xff]
        %v444 = vld [vmem:[%s238 + $0x1e0] sm:$0xff]
        %v445 = vld [vmem:[%s238 + $0x1e8] sm:$0xff]
        %v446 = vld [vmem:[%s238 + $0x1f0] sm:$0xff]
        %v447 = vld [vmem:[%s238 + $0x1f8] sm:$0xff]
        %v448 = vmax.f32 %v384, 0.0
        %v449 = vmax.f32 %v385, 0.0
        %v450 = vmax.f32 %v386, 0.0
        %v451 = vmax.f32 %v387, 0.0
        %v452 = vmax.f32 %v388, 0.0
        %v453 = vmax.f32 %v389, 0.0
        %v454 = vmax.f32 %v390, 0.0
        %v455 = vmax.f32 %v391, 0.0
        %v456 = vmax.f32 %v392, 0.0
        %v457 = vmax.f32 %v393, 0.0
        %v458 = vmax.f32 %v394, 0.0
        %v459 = vmax.f32 %v395, 0.0
        %v460 = vmax.f32 %v396, 0.0
        %v461 = vmax.f32 %v397, 0.0
        %v462 = vmax.f32 %v398, 0.0
        %v463 = vmax.f32 %v399, 0.0
        %v464 = vmax.f32 %v400, 0.0
        %v465 = vmax.f32 %v401, 0.0
        %v466 = vmax.f32 %v402, 0.0
        %v467 = vmax.f32 %v403, 0.0
        %v468 = vmax.f32 %v404, 0.0
        %v469 = vmax.f32 %v405, 0.0
        %v470 = vmax.f32 %v406, 0.0
        %v471 = vmax.f32 %v407, 0.0
        %v472 = vmax.f32 %v408, 0.0
        %v473 = vmax.f32 %v409, 0.0
        %v474 = vmax.f32 %v410, 0.0
        %v475 = vmax.f32 %v411, 0.0
        %v476 = vmax.f32 %v412, 0.0
        %v477 = vmax.f32 %v413, 0.0
        %v478 = vmax.f32 %v414, 0.0
        %v479 = vmax.f32 %v415, 0.0
        %v480 = vmax.f32 %v416, 0.0
        %v481 = vmax.f32 %v417, 0.0
        %v482 = vmax.f32 %v418, 0.0
        %v483 = vmax.f32 %v419, 0.0
        %v484 = vmax.f32 %v420, 0.0
        %v485 = vmax.f32 %v421, 0.0
        %v486 = vmax.f32 %v422, 0.0
        %v487 = vmax.f32 %v423, 0.0
        %v488 = vmax.f32 %v424, 0.0
        %v489 = vmax.f32 %v425, 0.0
        %v490 = vmax.f32 %v426, 0.0
        %v491 = vmax.f32 %v427, 0.0
        %v492 = vmax.f32 %v428, 0.0
        %v493 = vmax.f32 %v429, 0.0
        %v494 = vmax.f32 %v430, 0.0
        %v495 = vmax.f32 %v431, 0.0
        %v496 = vmax.f32 %v432, 0.0
        %v497 = vmax.f32 %v433, 0.0
        %v498 = vmax.f32 %v434, 0.0
        %v499 = vmax.f32 %v435, 0.0
        %v500 = vmax.f32 %v436, 0.0
        %v501 = vmax.f32 %v437, 0.0
        %v502 = vmax.f32 %v438, 0.0
        %v503 = vmax.f32 %v439, 0.0
        %v504 = vmax.f32 %v440, 0.0
        %v505 = vmax.f32 %v441, 0.0
        %v506 = vmax.f32 %v442, 0.0
        %v507 = vmax.f32 %v443, 0.0
        %v508 = vmax.f32 %v444, 0.0
        %v509 = vmax.f32 %v445, 0.0
        %v510 = vmax.f32 %v446, 0.0
        %v511 = vmax.f32 %v447, 0.0
        %v512 = vpack.c.bf16 %v449, %v448
        %v513 = vpack.c.bf16 %v451, %v450
        %v514 = vpack.c.bf16 %v453, %v452
        %v515 = vpack.c.bf16 %v455, %v454
        %v516 = vpack.c.bf16 %v457, %v456
        %v517 = vpack.c.bf16 %v459, %v458
        %v518 = vpack.c.bf16 %v461, %v460
        %v519 = vpack.c.bf16 %v463, %v462
        %v520 = vpack.c.bf16 %v465, %v464
        %v521 = vpack.c.bf16 %v467, %v466
        %v522 = vpack.c.bf16 %v469, %v468
        %v523 = vpack.c.bf16 %v471, %v470
        %v524 = vpack.c.bf16 %v473, %v472
        %v525 = vpack.c.bf16 %v475, %v474
        %v526 = vpack.c.bf16 %v477, %v476
        %v527 = vpack.c.bf16 %v479, %v478
        %v528 = vpack.c.bf16 %v481, %v480
        %v529 = vpack.c.bf16 %v483, %v482
        %v530 = vpack.c.bf16 %v485, %v484
        %v531 = vpack.c.bf16 %v487, %v486
        %v532 = vpack.c.bf16 %v489, %v488
        %v533 = vpack.c.bf16 %v491, %v490
        %v534 = vpack.c.bf16 %v493, %v492
        %v535 = vpack.c.bf16 %v495, %v494
        %v536 = vpack.c.bf16 %v497, %v496
        %v537 = vpack.c.bf16 %v499, %v498
        %v538 = vpack.c.bf16 %v501, %v500
        %v539 = vpack.c.bf16 %v503, %v502
        %v540 = vpack.c.bf16 %v505, %v504
        %v541 = vpack.c.bf16 %v507, %v506
        %v542 = vpack.c.bf16 %v509, %v508
        %v543 = vpack.c.bf16 %v511, %v510
        %v576 = vunpack.c.l.b16 %v512
        %v577 = vunpack.c.h.b16 %v512
        %v578 = vunpack.c.l.b16 %v513
        %v579 = vunpack.c.h.b16 %v513
        %v580 = vunpack.c.l.b16 %v514
        %v581 = vunpack.c.h.b16 %v514
        %v582 = vunpack.c.l.b16 %v515
        %v583 = vunpack.c.h.b16 %v515
        %v584 = vunpack.c.l.b16 %v516
        %v585 = vunpack.c.h.b16 %v516
        %v586 = vunpack.c.l.b16 %v517
        %v587 = vunpack.c.h.b16 %v517
        %v588 = vunpack.c.l.b16 %v518
        %v589 = vunpack.c.h.b16 %v518
        %v590 = vunpack.c.l.b16 %v519
        %v591 = vunpack.c.h.b16 %v519
        %v592 = vunpack.c.l.b16 %v520
        %v593 = vunpack.c.h.b16 %v520
        %v594 = vunpack.c.l.b16 %v521
        %v595 = vunpack.c.h.b16 %v521
        %v596 = vunpack.c.l.b16 %v522
        %v597 = vunpack.c.h.b16 %v522
        %v598 = vunpack.c.l.b16 %v523
        %v599 = vunpack.c.h.b16 %v523
        %v600 = vunpack.c.l.b16 %v524
        %v601 = vunpack.c.h.b16 %v524
        %v602 = vunpack.c.l.b16 %v525
        %v603 = vunpack.c.h.b16 %v525
        %v604 = vunpack.c.l.b16 %v526
        %v605 = vunpack.c.h.b16 %v526
        %v606 = vunpack.c.l.b16 %v527
        %v607 = vunpack.c.h.b16 %v527
        %v608 = vunpack.c.l.b16 %v528
        %v609 = vunpack.c.h.b16 %v528
        %v610 = vunpack.c.l.b16 %v529
        %v611 = vunpack.c.h.b16 %v529
        %v612 = vunpack.c.l.b16 %v530
        %v613 = vunpack.c.h.b16 %v530
        %v614 = vunpack.c.l.b16 %v531
        %v615 = vunpack.c.h.b16 %v531
        %v616 = vunpack.c.l.b16 %v532
        %v617 = vunpack.c.h.b16 %v532
        %v618 = vunpack.c.l.b16 %v533
        %v619 = vunpack.c.h.b16 %v533
        %v620 = vunpack.c.l.b16 %v534
        %v621 = vunpack.c.h.b16 %v534
        %v622 = vunpack.c.l.b16 %v535
        %v623 = vunpack.c.h.b16 %v535
        %v624 = vunpack.c.l.b16 %v536
        %v625 = vunpack.c.h.b16 %v536
        %v626 = vunpack.c.l.b16 %v537
        %v627 = vunpack.c.h.b16 %v537
        %v628 = vunpack.c.l.b16 %v538
        %v629 = vunpack.c.h.b16 %v538
        %v630 = vunpack.c.l.b16 %v539
        %v631 = vunpack.c.h.b16 %v539
        %v632 = vunpack.c.l.b16 %v540
        %v633 = vunpack.c.h.b16 %v540
        %v634 = vunpack.c.l.b16 %v541
        %v635 = vunpack.c.h.b16 %v541
        %v636 = vunpack.c.l.b16 %v542
        %v637 = vunpack.c.h.b16 %v542
        %v638 = vunpack.c.l.b16 %v543
        %v639 = vunpack.c.h.b16 %v543
        %v640 = vpack.c.b16 %v576, %v576
        %v641 = vpack.c.b16 %v577, %v577
        %v642 = vpack.c.b16 %v578, %v578
        %v643 = vpack.c.b16 %v579, %v579
        %v644 = vpack.c.b16 %v580, %v580
        %v645 = vpack.c.b16 %v581, %v581
        %v646 = vpack.c.b16 %v582, %v582
        %v647 = vpack.c.b16 %v583, %v583
        %v648 = vpack.c.b16 %v584, %v584
        %v649 = vpack.c.b16 %v585, %v585
        %v650 = vpack.c.b16 %v586, %v586
        %v651 = vpack.c.b16 %v587, %v587
        %v652 = vpack.c.b16 %v588, %v588
        %v653 = vpack.c.b16 %v589, %v589
        %v654 = vpack.c.b16 %v590, %v590
        %v655 = vpack.c.b16 %v591, %v591
        %v656 = vpack.c.b16 %v592, %v592
        %v657 = vpack.c.b16 %v593, %v593
        %v658 = vpack.c.b16 %v594, %v594
        %v659 = vpack.c.b16 %v595, %v595
        %v660 = vpack.c.b16 %v596, %v596
        %v661 = vpack.c.b16 %v597, %v597
        %v662 = vpack.c.b16 %v598, %v598
        %v663 = vpack.c.b16 %v599, %v599
        %v664 = vpack.c.b16 %v600, %v600
        %v665 = vpack.c.b16 %v601, %v601
        %v666 = vpack.c.b16 %v602, %v602
        %v667 = vpack.c.b16 %v603, %v603
        %v668 = vpack.c.b16 %v604, %v604
        %v669 = vpack.c.b16 %v605, %v605
        %v670 = vpack.c.b16 %v606, %v606
        %v671 = vpack.c.b16 %v607, %v607
        %v672 = vpack.c.b16 %v608, %v608
        %v673 = vpack.c.b16 %v609, %v609
        %v674 = vpack.c.b16 %v610, %v610
        %v675 = vpack.c.b16 %v611, %v611
        %v676 = vpack.c.b16 %v612, %v612
        %v677 = vpack.c.b16 %v613, %v613
        %v678 = vpack.c.b16 %v614, %v614
        %v679 = vpack.c.b16 %v615, %v615
        %v680 = vpack.c.b16 %v616, %v616
        %v681 = vpack.c.b16 %v617, %v617
        %v682 = vpack.c.b16 %v618, %v618
        %v683 = vpack.c.b16 %v619, %v619
        %v684 = vpack.c.b16 %v620, %v620
        %v685 = vpack.c.b16 %v621, %v621
        %v686 = vpack.c.b16 %v622, %v622
        %v687 = vpack.c.b16 %v623, %v623
        %v688 = vpack.c.b16 %v624, %v624
        %v689 = vpack.c.b16 %v625, %v625
        %v690 = vpack.c.b16 %v626, %v626
        %v691 = vpack.c.b16 %v627, %v627
        %v692 = vpack.c.b16 %v628, %v628
        %v693 = vpack.c.b16 %v629, %v629
        %v694 = vpack.c.b16 %v630, %v630
        %v695 = vpack.c.b16 %v631, %v631
        %v696 = vpack.c.b16 %v632, %v632
        %v697 = vpack.c.b16 %v633, %v633
        %v698 = vpack.c.b16 %v634, %v634
        %v699 = vpack.c.b16 %v635, %v635
        %v700 = vpack.c.b16 %v636, %v636
        %v701 = vpack.c.b16 %v637, %v637
        %v702 = vpack.c.b16 %v638, %v638
        %v703 = vpack.c.b16 %v639, %v639
        %vm704 = vsmask.f32 256
        %vm705 = vsmask.f32 4368
        %vm706 = vmor %vm704, %vm705
        %v708 = vshrl.u32 %v640, 16
        %v710 = vrot.slane %v708, 7
        %v711 = vshll.u32 %v640, 16
        %v713 = vor.u32 %v710, %v711
        %v714 = vrot.slane %v710, 4
        %v716 = vshrl.u32 %v641, 16
        %v718 = vrot.slane %v716, 7
        %v719 = vshll.u32 %v641, 16
        %v721 = vor.u32 %v718, %v719
        %v722 = vsel %vm706, %v714, %v721
        %v723 = vrot.slane %v718, 4
        %v725 = vshrl.u32 %v642, 16
        %v727 = vrot.slane %v725, 7
        %v728 = vshll.u32 %v642, 16
        %v730 = vor.u32 %v727, %v728
        %v731 = vrot.slane %v727, 4
        %v733 = vshrl.u32 %v643, 16
        %v735 = vrot.slane %v733, 7
        %v736 = vshll.u32 %v643, 16
        %v738 = vor.u32 %v735, %v736
        %v739 = vsel %vm706, %v731, %v738
        %v740 = vrot.slane %v735, 4
        %v742 = vshrl.u32 %v644, 16
        %v744 = vrot.slane %v742, 7
        %v745 = vshll.u32 %v644, 16
        %v747 = vor.u32 %v744, %v745
        %v748 = vrot.slane %v744, 4
        %v750 = vshrl.u32 %v645, 16
        %v752 = vrot.slane %v750, 7
        %v753 = vshll.u32 %v645, 16
        %v755 = vor.u32 %v752, %v753
        %v756 = vsel %vm706, %v748, %v755
        %v757 = vrot.slane %v752, 4
        %v759 = vshrl.u32 %v646, 16
        %v761 = vrot.slane %v759, 7
        %v762 = vshll.u32 %v646, 16
        %v764 = vor.u32 %v761, %v762
        %v765 = vrot.slane %v761, 4
        %v767 = vshrl.u32 %v647, 16
        %v769 = vrot.slane %v767, 7
        %v770 = vshll.u32 %v647, 16
        %v772 = vor.u32 %v769, %v770
        %v773 = vsel %vm706, %v765, %v772
        %v774 = vrot.slane %v769, 4
        %v776 = vshrl.u32 %v648, 16
        %v778 = vrot.slane %v776, 7
        %v779 = vshll.u32 %v648, 16
        %v781 = vor.u32 %v778, %v779
        %v782 = vrot.slane %v778, 4
        %v784 = vshrl.u32 %v649, 16
        %v786 = vrot.slane %v784, 7
        %v787 = vshll.u32 %v649, 16
        %v789 = vor.u32 %v786, %v787
        %v790 = vsel %vm706, %v782, %v789
        %v791 = vrot.slane %v786, 4
        %v793 = vshrl.u32 %v650, 16
        %v795 = vrot.slane %v793, 7
        %v796 = vshll.u32 %v650, 16
        %v798 = vor.u32 %v795, %v796
        %v799 = vrot.slane %v795, 4
        %v801 = vshrl.u32 %v651, 16
        %v803 = vrot.slane %v801, 7
        %v804 = vshll.u32 %v651, 16
        %v806 = vor.u32 %v803, %v804
        %v807 = vsel %vm706, %v799, %v806
        %v808 = vrot.slane %v803, 4
        %v810 = vshrl.u32 %v652, 16
        %v812 = vrot.slane %v810, 7
        %v813 = vshll.u32 %v652, 16
        %v815 = vor.u32 %v812, %v813
        %v816 = vrot.slane %v812, 4
        %v818 = vshrl.u32 %v653, 16
        %v820 = vrot.slane %v818, 7
        %v821 = vshll.u32 %v653, 16
        %v823 = vor.u32 %v820, %v821
        %v824 = vsel %vm706, %v816, %v823
        %v825 = vrot.slane %v820, 4
        %v827 = vshrl.u32 %v654, 16
        %v829 = vrot.slane %v827, 7
        %v830 = vshll.u32 %v654, 16
        %v832 = vor.u32 %v829, %v830
        %v833 = vrot.slane %v829, 4
        %v835 = vshrl.u32 %v655, 16
        %v837 = vrot.slane %v835, 7
        %v838 = vshll.u32 %v655, 16
        %v840 = vor.u32 %v837, %v838
        %v841 = vsel %vm706, %v833, %v840
        %v842 = vrot.slane %v837, 4
        %v844 = vshrl.u32 %v656, 16
        %v846 = vrot.slane %v844, 7
        %v847 = vshll.u32 %v656, 16
        %v849 = vor.u32 %v846, %v847
        %v850 = vrot.slane %v846, 4
        %v852 = vshrl.u32 %v657, 16
        %v854 = vrot.slane %v852, 7
        %v855 = vshll.u32 %v657, 16
        %v857 = vor.u32 %v854, %v855
        %v858 = vsel %vm706, %v850, %v857
        %v859 = vrot.slane %v854, 4
        %v861 = vshrl.u32 %v658, 16
        %v863 = vrot.slane %v861, 7
        %v864 = vshll.u32 %v658, 16
        %v866 = vor.u32 %v863, %v864
        %v867 = vrot.slane %v863, 4
        %v869 = vshrl.u32 %v659, 16
        %v871 = vrot.slane %v869, 7
        %v872 = vshll.u32 %v659, 16
        %v874 = vor.u32 %v871, %v872
        %v875 = vsel %vm706, %v867, %v874
        %v876 = vrot.slane %v871, 4
        %v878 = vshrl.u32 %v660, 16
        %v880 = vrot.slane %v878, 7
        %v881 = vshll.u32 %v660, 16
        %v883 = vor.u32 %v880, %v881
        %v884 = vrot.slane %v880, 4
        %v886 = vshrl.u32 %v661, 16
        %v888 = vrot.slane %v886, 7
        %v889 = vshll.u32 %v661, 16
        %v891 = vor.u32 %v888, %v889
        %v892 = vsel %vm706, %v884, %v891
        %v893 = vrot.slane %v888, 4
        %v895 = vshrl.u32 %v662, 16
        %v897 = vrot.slane %v895, 7
        %v898 = vshll.u32 %v662, 16
        %v900 = vor.u32 %v897, %v898
        %v901 = vrot.slane %v897, 4
        %v903 = vshrl.u32 %v663, 16
        %v905 = vrot.slane %v903, 7
        %v906 = vshll.u32 %v663, 16
        %v908 = vor.u32 %v905, %v906
        %v909 = vsel %vm706, %v901, %v908
        %v910 = vrot.slane %v905, 4
        %v912 = vshrl.u32 %v664, 16
        %v914 = vrot.slane %v912, 7
        %v915 = vshll.u32 %v664, 16
        %v917 = vor.u32 %v914, %v915
        %v918 = vrot.slane %v914, 4
        %v920 = vshrl.u32 %v665, 16
        %v922 = vrot.slane %v920, 7
        %v923 = vshll.u32 %v665, 16
        %v925 = vor.u32 %v922, %v923
        %v926 = vsel %vm706, %v918, %v925
        %v927 = vrot.slane %v922, 4
        %v929 = vshrl.u32 %v666, 16
        %v931 = vrot.slane %v929, 7
        %v932 = vshll.u32 %v666, 16
        %v934 = vor.u32 %v931, %v932
        %v935 = vrot.slane %v931, 4
        %v937 = vshrl.u32 %v667, 16
        %v939 = vrot.slane %v937, 7
        %v940 = vshll.u32 %v667, 16
        %v942 = vor.u32 %v939, %v940
        %v943 = vsel %vm706, %v935, %v942
        %v944 = vrot.slane %v939, 4
        %v946 = vshrl.u32 %v668, 16
        %v948 = vrot.slane %v946, 7
        %v949 = vshll.u32 %v668, 16
        %v951 = vor.u32 %v948, %v949
        %v952 = vrot.slane %v948, 4
        %v954 = vshrl.u32 %v669, 16
        %v956 = vrot.slane %v954, 7
        %v957 = vshll.u32 %v669, 16
        %v959 = vor.u32 %v956, %v957
        %v960 = vsel %vm706, %v952, %v959
        %v961 = vrot.slane %v956, 4
        %v963 = vshrl.u32 %v670, 16
        %v965 = vrot.slane %v963, 7
        %v966 = vshll.u32 %v670, 16
        %v968 = vor.u32 %v965, %v966
        %v969 = vrot.slane %v965, 4
        %v971 = vshrl.u32 %v671, 16
        %v973 = vrot.slane %v971, 7
        %v974 = vshll.u32 %v671, 16
        %v976 = vor.u32 %v973, %v974
        %v977 = vsel %vm706, %v969, %v976
        %v978 = vrot.slane %v973, 4
        %v980 = vshrl.u32 %v672, 16
        %v982 = vrot.slane %v980, 7
        %v983 = vshll.u32 %v672, 16
        %v985 = vor.u32 %v982, %v983
        %v986 = vrot.slane %v982, 4
        %v988 = vshrl.u32 %v673, 16
        %v990 = vrot.slane %v988, 7
        %v991 = vshll.u32 %v673, 16
        %v993 = vor.u32 %v990, %v991
        %v994 = vsel %vm706, %v986, %v993
        %v995 = vrot.slane %v990, 4
        %v997 = vshrl.u32 %v674, 16
        %v999 = vrot.slane %v997, 7
        %v1000 = vshll.u32 %v674, 16
        %v1002 = vor.u32 %v999, %v1000
        %v1003 = vrot.slane %v999, 4
        %v1005 = vshrl.u32 %v675, 16
        %v1007 = vrot.slane %v1005, 7
        %v1008 = vshll.u32 %v675, 16
        %v1010 = vor.u32 %v1007, %v1008
        %v1011 = vsel %vm706, %v1003, %v1010
        %v1012 = vrot.slane %v1007, 4
        %v1014 = vshrl.u32 %v676, 16
        %v1016 = vrot.slane %v1014, 7
        %v1017 = vshll.u32 %v676, 16
        %v1019 = vor.u32 %v1016, %v1017
        %v1020 = vrot.slane %v1016, 4
        %v1022 = vshrl.u32 %v677, 16
        %v1024 = vrot.slane %v1022, 7
        %v1025 = vshll.u32 %v677, 16
        %v1027 = vor.u32 %v1024, %v1025
        %v1028 = vsel %vm706, %v1020, %v1027
        %v1029 = vrot.slane %v1024, 4
        %v1031 = vshrl.u32 %v678, 16
        %v1033 = vrot.slane %v1031, 7
        %v1034 = vshll.u32 %v678, 16
        %v1036 = vor.u32 %v1033, %v1034
        %v1037 = vrot.slane %v1033, 4
        %v1039 = vshrl.u32 %v679, 16
        %v1041 = vrot.slane %v1039, 7
        %v1042 = vshll.u32 %v679, 16
        %v1044 = vor.u32 %v1041, %v1042
        %v1045 = vsel %vm706, %v1037, %v1044
        %v1046 = vrot.slane %v1041, 4
        %v1048 = vshrl.u32 %v680, 16
        %v1050 = vrot.slane %v1048, 7
        %v1051 = vshll.u32 %v680, 16
        %v1053 = vor.u32 %v1050, %v1051
        %v1054 = vrot.slane %v1050, 4
        %v1056 = vshrl.u32 %v681, 16
        %v1058 = vrot.slane %v1056, 7
        %v1059 = vshll.u32 %v681, 16
        %v1061 = vor.u32 %v1058, %v1059
        %v1062 = vsel %vm706, %v1054, %v1061
        %v1063 = vrot.slane %v1058, 4
        %v1065 = vshrl.u32 %v682, 16
        %v1067 = vrot.slane %v1065, 7
        %v1068 = vshll.u32 %v682, 16
        %v1070 = vor.u32 %v1067, %v1068
        %v1071 = vrot.slane %v1067, 4
        %v1073 = vshrl.u32 %v683, 16
        %v1075 = vrot.slane %v1073, 7
        %v1076 = vshll.u32 %v683, 16
        %v1078 = vor.u32 %v1075, %v1076
        %v1079 = vsel %vm706, %v1071, %v1078
        %v1080 = vrot.slane %v1075, 4
        %v1082 = vshrl.u32 %v684, 16
        %v1084 = vrot.slane %v1082, 7
        %v1085 = vshll.u32 %v684, 16
        %v1087 = vor.u32 %v1084, %v1085
        %v1088 = vrot.slane %v1084, 4
        %v1090 = vshrl.u32 %v685, 16
        %v1092 = vrot.slane %v1090, 7
        %v1093 = vshll.u32 %v685, 16
        %v1095 = vor.u32 %v1092, %v1093
        %v1096 = vsel %vm706, %v1088, %v1095
        %v1097 = vrot.slane %v1092, 4
        %v1099 = vshrl.u32 %v686, 16
        %v1101 = vrot.slane %v1099, 7
        %v1102 = vshll.u32 %v686, 16
        %v1104 = vor.u32 %v1101, %v1102
        %v1105 = vrot.slane %v1101, 4
        %v1107 = vshrl.u32 %v687, 16
        %v1109 = vrot.slane %v1107, 7
        %v1110 = vshll.u32 %v687, 16
        %v1112 = vor.u32 %v1109, %v1110
        %v1113 = vsel %vm706, %v1105, %v1112
        %v1114 = vrot.slane %v1109, 4
        %v1116 = vshrl.u32 %v688, 16
        %v1118 = vrot.slane %v1116, 7
        %v1119 = vshll.u32 %v688, 16
        %v1121 = vor.u32 %v1118, %v1119
        %v1122 = vrot.slane %v1118, 4
        %v1124 = vshrl.u32 %v689, 16
        %v1126 = vrot.slane %v1124, 7
        %v1127 = vshll.u32 %v689, 16
        %v1129 = vor.u32 %v1126, %v1127
        %v1130 = vsel %vm706, %v1122, %v1129
        %v1131 = vrot.slane %v1126, 4
        %v1133 = vshrl.u32 %v690, 16
        %v1135 = vrot.slane %v1133, 7
        %v1136 = vshll.u32 %v690, 16
        %v1138 = vor.u32 %v1135, %v1136
        %v1139 = vrot.slane %v1135, 4
        %v1141 = vshrl.u32 %v691, 16
        %v1143 = vrot.slane %v1141, 7
        %v1144 = vshll.u32 %v691, 16
        %v1146 = vor.u32 %v1143, %v1144
        %v1147 = vsel %vm706, %v1139, %v1146
        %v1148 = vrot.slane %v1143, 4
        %v1150 = vshrl.u32 %v692, 16
        %v1152 = vrot.slane %v1150, 7
        %v1153 = vshll.u32 %v692, 16
        %v1155 = vor.u32 %v1152, %v1153
        %v1156 = vrot.slane %v1152, 4
        %v1158 = vshrl.u32 %v693, 16
        %v1160 = vrot.slane %v1158, 7
        %v1161 = vshll.u32 %v693, 16
        %v1163 = vor.u32 %v1160, %v1161
        %v1164 = vsel %vm706, %v1156, %v1163
        %v1165 = vrot.slane %v1160, 4
        %v1167 = vshrl.u32 %v694, 16
        %v1169 = vrot.slane %v1167, 7
        %v1170 = vshll.u32 %v694, 16
        %v1172 = vor.u32 %v1169, %v1170
        %v1173 = vrot.slane %v1169, 4
        %v1175 = vshrl.u32 %v695, 16
        %v1177 = vrot.slane %v1175, 7
        %v1178 = vshll.u32 %v695, 16
        %v1180 = vor.u32 %v1177, %v1178
        %v1181 = vsel %vm706, %v1173, %v1180
        %v1182 = vrot.slane %v1177, 4
        %v1184 = vshrl.u32 %v696, 16
        %v1186 = vrot.slane %v1184, 7
        %v1187 = vshll.u32 %v696, 16
        %v1189 = vor.u32 %v1186, %v1187
        %v1190 = vrot.slane %v1186, 4
        %v1192 = vshrl.u32 %v697, 16
        %v1194 = vrot.slane %v1192, 7
        %v1195 = vshll.u32 %v697, 16
        %v1197 = vor.u32 %v1194, %v1195
        %v1198 = vsel %vm706, %v1190, %v1197
        %v1199 = vrot.slane %v1194, 4
        %v1201 = vshrl.u32 %v698, 16
        %v1203 = vrot.slane %v1201, 7
        %v1204 = vshll.u32 %v698, 16
        %v1206 = vor.u32 %v1203, %v1204
        %v1207 = vrot.slane %v1203, 4
        %v1209 = vshrl.u32 %v699, 16
        %v1211 = vrot.slane %v1209, 7
        %v1212 = vshll.u32 %v699, 16
        %v1214 = vor.u32 %v1211, %v1212
        %v1215 = vsel %vm706, %v1207, %v1214
        %v1216 = vrot.slane %v1211, 4
        %v1218 = vshrl.u32 %v700, 16
        %v1220 = vrot.slane %v1218, 7
        %v1221 = vshll.u32 %v700, 16
        %v1223 = vor.u32 %v1220, %v1221
        %v1224 = vrot.slane %v1220, 4
        %v1226 = vshrl.u32 %v701, 16
        %v1228 = vrot.slane %v1226, 7
        %v1229 = vshll.u32 %v701, 16
        %v1231 = vor.u32 %v1228, %v1229
        %v1232 = vsel %vm706, %v1224, %v1231
        %v1233 = vrot.slane %v1228, 4
        %v1235 = vshrl.u32 %v702, 16
        %v1237 = vrot.slane %v1235, 7
        %v1238 = vshll.u32 %v702, 16
        %v1240 = vor.u32 %v1237, %v1238
        %v1241 = vrot.slane %v1237, 4
        %v1243 = vshrl.u32 %v703, 16
        %v1245 = vrot.slane %v1243, 7
        %v1246 = vshll.u32 %v703, 16
        %v1248 = vor.u32 %v1245, %v1246
        %v1249 = vsel %vm706, %v1241, %v1248
        %v1250 = vrot.slane %v1245, 4
        %s1347 = scalar_lea.vmem [#allocation2], 12
        %vm1348 = vcmask 1043456
        %vm1349 = vsmask.f32 7938
        %vm1350 = vmand %vm1348, %vm1349
        %v1351 = vld [vmem:[%s1347] sm:$0xf]
        %v1352 = vsel %vm1350, %v713, %v1351
        %1353 = vst [vmem:[%s1347] sm:$0xf] %v1352
        %1354 = vst [vmem:[%s1347 + $0x4] sm:$0xf] %v722
        %vm1355 = vcmask 1040384
        %vm1356 = vmand %vm1355, %vm704
        %v1357 = vld [vmem:[%s1347 + $0x8] sm:$0x1]
        %v1358 = vsel %vm1356, %v723, %v1357
        %1359 = vst [vmem:[%s1347 + $0x8] sm:$0x1] %v1358
        %v1360 = vld [vmem:[%s1347 + $0xc] sm:$0xf]
        %v1361 = vsel %vm1350, %v730, %v1360
        %1362 = vst [vmem:[%s1347 + $0xc] sm:$0xf] %v1361
        %1363 = vst [vmem:[%s1347 + $0x10] sm:$0xf] %v739
        %v1364 = vld [vmem:[%s1347 + $0x14] sm:$0x1]
        %v1365 = vsel %vm1356, %v740, %v1364
        %1366 = vst [vmem:[%s1347 + $0x14] sm:$0x1] %v1365
        %v1367 = vld [vmem:[%s1347 + $0x18] sm:$0xf]
        %v1368 = vsel %vm1350, %v747, %v1367
        %1369 = vst [vmem:[%s1347 + $0x18] sm:$0xf] %v1368
        %1370 = vst [vmem:[%s1347 + $0x1c] sm:$0xf] %v756
        %v1371 = vld [vmem:[%s1347 + $0x20] sm:$0x1]
        %v1372 = vsel %vm1356, %v757, %v1371
        %1373 = vst [vmem:[%s1347 + $0x20] sm:$0x1] %v1372
        %v1374 = vld [vmem:[%s1347 + $0x24] sm:$0xf]
        %v1375 = vsel %vm1350, %v764, %v1374
        %1376 = vst [vmem:[%s1347 + $0x24] sm:$0xf] %v1375
        %1377 = vst [vmem:[%s1347 + $0x28] sm:$0xf] %v773
        %v1378 = vld [vmem:[%s1347 + $0x2c] sm:$0x1]
        %v1379 = vsel %vm1356, %v774, %v1378
        %1380 = vst [vmem:[%s1347 + $0x2c] sm:$0x1] %v1379
        %v1381 = vld [vmem:[%s1347 + $0x30] sm:$0xf]
        %v1382 = vsel %vm1350, %v781, %v1381
        %1383 = vst [vmem:[%s1347 + $0x30] sm:$0xf] %v1382
        %1384 = vst [vmem:[%s1347 + $0x34] sm:$0xf] %v790
        %v1385 = vld [vmem:[%s1347 + $0x38] sm:$0x1]
        %v1386 = vsel %vm1356, %v791, %v1385
        %1387 = vst [vmem:[%s1347 + $0x38] sm:$0x1] %v1386
        %v1388 = vld [vmem:[%s1347 + $0x3c] sm:$0xf]
        %v1389 = vsel %vm1350, %v798, %v1388
        %1390 = vst [vmem:[%s1347 + $0x3c] sm:$0xf] %v1389
        %1391 = vst [vmem:[%s1347 + $0x40] sm:$0xf] %v807
        %v1392 = vld [vmem:[%s1347 + $0x44] sm:$0x1]
        %v1393 = vsel %vm1356, %v808, %v1392
        %1394 = vst [vmem:[%s1347 + $0x44] sm:$0x1] %v1393
        %v1395 = vld [vmem:[%s1347 + $0x48] sm:$0xf]
        %v1396 = vsel %vm1350, %v815, %v1395
        %1397 = vst [vmem:[%s1347 + $0x48] sm:$0xf] %v1396
        %1398 = vst [vmem:[%s1347 + $0x4c] sm:$0xf] %v824
        %v1399 = vld [vmem:[%s1347 + $0x50] sm:$0x1]
        %v1400 = vsel %vm1356, %v825, %v1399
        %1401 = vst [vmem:[%s1347 + $0x50] sm:$0x1] %v1400
        %v1402 = vld [vmem:[%s1347 + $0x54] sm:$0xf]
        %v1403 = vsel %vm1350, %v832, %v1402
        %1404 = vst [vmem:[%s1347 + $0x54] sm:$0xf] %v1403
        %1405 = vst [vmem:[%s1347 + $0x58] sm:$0xf] %v841
        %v1406 = vld [vmem:[%s1347 + $0x5c] sm:$0x1]
        %v1407 = vsel %vm1356, %v842, %v1406
        %1408 = vst [vmem:[%s1347 + $0x5c] sm:$0x1] %v1407
        %v1409 = vld [vmem:[%s1347 + $0x60] sm:$0xf]
        %v1410 = vsel %vm1350, %v849, %v1409
        %1411 = vst [vmem:[%s1347 + $0x60] sm:$0xf] %v1410
        %1412 = vst [vmem:[%s1347 + $0x64] sm:$0xf] %v858
        %v1413 = vld [vmem:[%s1347 + $0x68] sm:$0x1]
        %v1414 = vsel %vm1356, %v859, %v1413
        %1415 = vst [vmem:[%s1347 + $0x68] sm:$0x1] %v1414
        %v1416 = vld [vmem:[%s1347 + $0x6c] sm:$0xf]
        %v1417 = vsel %vm1350, %v866, %v1416
        %1418 = vst [vmem:[%s1347 + $0x6c] sm:$0xf] %v1417
        %1419 = vst [vmem:[%s1347 + $0x70] sm:$0xf] %v875
        %v1420 = vld [vmem:[%s1347 + $0x74] sm:$0x1]
        %v1421 = vsel %vm1356, %v876, %v1420
        %1422 = vst [vmem:[%s1347 + $0x74] sm:$0x1] %v1421
        %v1423 = vld [vmem:[%s1347 + $0x78] sm:$0xf]
        %v1424 = vsel %vm1350, %v883, %v1423
        %1425 = vst [vmem:[%s1347 + $0x78] sm:$0xf] %v1424
        %1426 = vst [vmem:[%s1347 + $0x7c] sm:$0xf] %v892
        %v1427 = vld [vmem:[%s1347 + $0x80] sm:$0x1]
        %v1428 = vsel %vm1356, %v893, %v1427
        %1429 = vst [vmem:[%s1347 + $0x80] sm:$0x1] %v1428
        %v1430 = vld [vmem:[%s1347 + $0x84] sm:$0xf]
        %v1431 = vsel %vm1350, %v900, %v1430
        %1432 = vst [vmem:[%s1347 + $0x84] sm:$0xf] %v1431
        %1433 = vst [vmem:[%s1347 + $0x88] sm:$0xf] %v909
        %v1434 = vld [vmem:[%s1347 + $0x8c] sm:$0x1]
        %v1435 = vsel %vm1356, %v910, %v1434
        %1436 = vst [vmem:[%s1347 + $0x8c] sm:$0x1] %v1435
        %v1437 = vld [vmem:[%s1347 + $0x90] sm:$0xf]
        %v1438 = vsel %vm1350, %v917, %v1437
        %1439 = vst [vmem:[%s1347 + $0x90] sm:$0xf] %v1438
        %1440 = vst [vmem:[%s1347 + $0x94] sm:$0xf] %v926
        %v1441 = vld [vmem:[%s1347 + $0x98] sm:$0x1]
        %v1442 = vsel %vm1356, %v927, %v1441
        %1443 = vst [vmem:[%s1347 + $0x98] sm:$0x1] %v1442
        %v1444 = vld [vmem:[%s1347 + $0x9c] sm:$0xf]
        %v1445 = vsel %vm1350, %v934, %v1444
        %1446 = vst [vmem:[%s1347 + $0x9c] sm:$0xf] %v1445
        %1447 = vst [vmem:[%s1347 + $0xa0] sm:$0xf] %v943
        %v1448 = vld [vmem:[%s1347 + $0xa4] sm:$0x1]
        %v1449 = vsel %vm1356, %v944, %v1448
        %1450 = vst [vmem:[%s1347 + $0xa4] sm:$0x1] %v1449
        %v1451 = vld [vmem:[%s1347 + $0xa8] sm:$0xf]
        %v1452 = vsel %vm1350, %v951, %v1451
        %1453 = vst [vmem:[%s1347 + $0xa8] sm:$0xf] %v1452
        %1454 = vst [vmem:[%s1347 + $0xac] sm:$0xf] %v960
        %v1455 = vld [vmem:[%s1347 + $0xb0] sm:$0x1]
        %v1456 = vsel %vm1356, %v961, %v1455
        %1457 = vst [vmem:[%s1347 + $0xb0] sm:$0x1] %v1456
        %v1458 = vld [vmem:[%s1347 + $0xb4] sm:$0xf]
        %v1459 = vsel %vm1350, %v968, %v1458
        %1460 = vst [vmem:[%s1347 + $0xb4] sm:$0xf] %v1459
        %1461 = vst [vmem:[%s1347 + $0xb8] sm:$0xf] %v977
        %v1462 = vld [vmem:[%s1347 + $0xbc] sm:$0x1]
        %v1463 = vsel %vm1356, %v978, %v1462
        %1464 = vst [vmem:[%s1347 + $0xbc] sm:$0x1] %v1463
        %v1465 = vld [vmem:[%s1347 + $0xd8] sm:$0xf]
        %v1466 = vsel %vm1350, %v985, %v1465
        %1467 = vst [vmem:[%s1347 + $0xd8] sm:$0xf] %v1466
        %1468 = vst [vmem:[%s1347 + $0xdc] sm:$0xf] %v994
        %v1469 = vld [vmem:[%s1347 + $0xe0] sm:$0x1]
        %v1470 = vsel %vm1356, %v995, %v1469
        %1471 = vst [vmem:[%s1347 + $0xe0] sm:$0x1] %v1470
        %v1472 = vld [vmem:[%s1347 + $0xe4] sm:$0xf]
        %v1473 = vsel %vm1350, %v1002, %v1472
        %1474 = vst [vmem:[%s1347 + $0xe4] sm:$0xf] %v1473
        %1475 = vst [vmem:[%s1347 + $0xe8] sm:$0xf] %v1011
        %v1476 = vld [vmem:[%s1347 + $0xec] sm:$0x1]
        %v1477 = vsel %vm1356, %v1012, %v1476
        %1478 = vst [vmem:[%s1347 + $0xec] sm:$0x1] %v1477
        %v1479 = vld [vmem:[%s1347 + $0xf0] sm:$0xf]
        %v1480 = vsel %vm1350, %v1019, %v1479
        %1481 = vst [vmem:[%s1347 + $0xf0] sm:$0xf] %v1480
        %1482 = vst [vmem:[%s1347 + $0xf4] sm:$0xf] %v1028
        %v1483 = vld [vmem:[%s1347 + $0xf8] sm:$0x1]
        %v1484 = vsel %vm1356, %v1029, %v1483
        %1485 = vst [vmem:[%s1347 + $0xf8] sm:$0x1] %v1484
        %v1486 = vld [vmem:[%s1347 + $0xfc] sm:$0xf]
        %v1487 = vsel %vm1350, %v1036, %v1486
        %1488 = vst [vmem:[%s1347 + $0xfc] sm:$0xf] %v1487
        %1489 = vst [vmem:[%s1347 + $0x100] sm:$0xf] %v1045
        %v1490 = vld [vmem:[%s1347 + $0x104] sm:$0x1]
        %v1491 = vsel %vm1356, %v1046, %v1490
        %1492 = vst [vmem:[%s1347 + $0x104] sm:$0x1] %v1491
        %v1493 = vld [vmem:[%s1347 + $0x108] sm:$0xf]
        %v1494 = vsel %vm1350, %v1053, %v1493
        %1495 = vst [vmem:[%s1347 + $0x108] sm:$0xf] %v1494
        %1496 = vst [vmem:[%s1347 + $0x10c] sm:$0xf] %v1062
        %v1497 = vld [vmem:[%s1347 + $0x110] sm:$0x1]
        %v1498 = vsel %vm1356, %v1063, %v1497
        %1499 = vst [vmem:[%s1347 + $0x110] sm:$0x1] %v1498
        %v1500 = vld [vmem:[%s1347 + $0x114] sm:$0xf]
        %v1501 = vsel %vm1350, %v1070, %v1500
        %1502 = vst [vmem:[%s1347 + $0x114] sm:$0xf] %v1501
        %1503 = vst [vmem:[%s1347 + $0x118] sm:$0xf] %v1079
        %v1504 = vld [vmem:[%s1347 + $0x11c] sm:$0x1]
        %v1505 = vsel %vm1356, %v1080, %v1504
        %1506 = vst [vmem:[%s1347 + $0x11c] sm:$0x1] %v1505
        %v1507 = vld [vmem:[%s1347 + $0x120] sm:$0xf]
        %v1508 = vsel %vm1350, %v1087, %v1507
        %1509 = vst [vmem:[%s1347 + $0x120] sm:$0xf] %v1508
        %1510 = vst [vmem:[%s1347 + $0x124] sm:$0xf] %v1096
        %v1511 = vld [vmem:[%s1347 + $0x128] sm:$0x1]
        %v1512 = vsel %vm1356, %v1097, %v1511
        %1513 = vst [vmem:[%s1347 + $0x128] sm:$0x1] %v1512
        %v1514 = vld [vmem:[%s1347 + $0x12c] sm:$0xf]
        %v1515 = vsel %vm1350, %v1104, %v1514
        %1516 = vst [vmem:[%s1347 + $0x12c] sm:$0xf] %v1515
        %1517 = vst [vmem:[%s1347 + $0x130] sm:$0xf] %v1113
        %v1518 = vld [vmem:[%s1347 + $0x134] sm:$0x1]
        %v1519 = vsel %vm1356, %v1114, %v1518
        %1520 = vst [vmem:[%s1347 + $0x134] sm:$0x1] %v1519
        %v1521 = vld [vmem:[%s1347 + $0x138] sm:$0xf]
        %v1522 = vsel %vm1350, %v1121, %v1521
        %1523 = vst [vmem:[%s1347 + $0x138] sm:$0xf] %v1522
        %1524 = vst [vmem:[%s1347 + $0x13c] sm:$0xf] %v1130
        %v1525 = vld [vmem:[%s1347 + $0x140] sm:$0x1]
        %v1526 = vsel %vm1356, %v1131, %v1525
        %1527 = vst [vmem:[%s1347 + $0x140] sm:$0x1] %v1526
        %v1528 = vld [vmem:[%s1347 + $0x144] sm:$0xf]
        %v1529 = vsel %vm1350, %v1138, %v1528
        %1530 = vst [vmem:[%s1347 + $0x144] sm:$0xf] %v1529
        %1531 = vst [vmem:[%s1347 + $0x148] sm:$0xf] %v1147
        %v1532 = vld [vmem:[%s1347 + $0x14c] sm:$0x1]
        %v1533 = vsel %vm1356, %v1148, %v1532
        %1534 = vst [vmem:[%s1347 + $0x14c] sm:$0x1] %v1533
        %v1535 = vld [vmem:[%s1347 + $0x150] sm:$0xf]
        %v1536 = vsel %vm1350, %v1155, %v1535
        %1537 = vst [vmem:[%s1347 + $0x150] sm:$0xf] %v1536
        %1538 = vst [vmem:[%s1347 + $0x154] sm:$0xf] %v1164
        %v1539 = vld [vmem:[%s1347 + $0x158] sm:$0x1]
        %v1540 = vsel %vm1356, %v1165, %v1539
        %1541 = vst [vmem:[%s1347 + $0x158] sm:$0x1] %v1540
        %v1542 = vld [vmem:[%s1347 + $0x15c] sm:$0xf]
        %v1543 = vsel %vm1350, %v1172, %v1542
        %1544 = vst [vmem:[%s1347 + $0x15c] sm:$0xf] %v1543
        %1545 = vst [vmem:[%s1347 + $0x160] sm:$0xf] %v1181
        %v1546 = vld [vmem:[%s1347 + $0x164] sm:$0x1]
        %v1547 = vsel %vm1356, %v1182, %v1546
        %1548 = vst [vmem:[%s1347 + $0x164] sm:$0x1] %v1547
        %v1549 = vld [vmem:[%s1347 + $0x168] sm:$0xf]
        %v1550 = vsel %vm1350, %v1189, %v1549
        %1551 = vst [vmem:[%s1347 + $0x168] sm:$0xf] %v1550
        %1552 = vst [vmem:[%s1347 + $0x16c] sm:$0xf] %v1198
        %v1553 = vld [vmem:[%s1347 + $0x170] sm:$0x1]
        %v1554 = vsel %vm1356, %v1199, %v1553
        %1555 = vst [vmem:[%s1347 + $0x170] sm:$0x1] %v1554
        %v1556 = vld [vmem:[%s1347 + $0x174] sm:$0xf]
        %v1557 = vsel %vm1350, %v1206, %v1556
        %1558 = vst [vmem:[%s1347 + $0x174] sm:$0xf] %v1557
        %1559 = vst [vmem:[%s1347 + $0x178] sm:$0xf] %v1215
        %v1560 = vld [vmem:[%s1347 + $0x17c] sm:$0x1]
        %v1561 = vsel %vm1356, %v1216, %v1560
        %1562 = vst [vmem:[%s1347 + $0x17c] sm:$0x1] %v1561
        %v1563 = vld [vmem:[%s1347 + $0x180] sm:$0xf]
        %v1564 = vsel %vm1350, %v1223, %v1563
        %1565 = vst [vmem:[%s1347 + $0x180] sm:$0xf] %v1564
        %1566 = vst [vmem:[%s1347 + $0x184] sm:$0xf] %v1232
        %v1567 = vld [vmem:[%s1347 + $0x188] sm:$0x1]
        %v1568 = vsel %vm1356, %v1233, %v1567
        %1569 = vst [vmem:[%s1347 + $0x188] sm:$0x1] %v1568
        %v1570 = vld [vmem:[%s1347 + $0x18c] sm:$0xf]
        %v1571 = vsel %vm1350, %v1240, %v1570
        %1572 = vst [vmem:[%s1347 + $0x18c] sm:$0xf] %v1571
        %1573 = vst [vmem:[%s1347 + $0x190] sm:$0xf] %v1249
        %v1574 = vld [vmem:[%s1347 + $0x194] sm:$0x1]
        %v1575 = vsel %vm1356, %v1250, %v1574
        %1576 = vst [vmem:[%s1347 + $0x194] sm:$0x1] %v1575
        %v1577 = vld [vmem:[#allocation2] sm:$0xf]
        %v1578 = vld [vmem:[#allocation2 + $0x4] sm:$0xf]
        %v1579 = vld [vmem:[#allocation2 + $0xc] sm:$0xf]
        %v1580 = vld [vmem:[#allocation2 + $0x10] sm:$0xf]
        %v1581 = vld [vmem:[#allocation2 + $0x18] sm:$0xf]
        %v1582 = vld [vmem:[#allocation2 + $0x1c] sm:$0xf]
        %v1583 = vld [vmem:[#allocation2 + $0x24] sm:$0xf]
        %v1584 = vld [vmem:[#allocation2 + $0x28] sm:$0xf]
        %v1585 = vld [vmem:[#allocation2 + $0x30] sm:$0xf]
        %v1586 = vld [vmem:[#allocation2 + $0x34] sm:$0xf]
        %v1587 = vld [vmem:[#allocation2 + $0x3c] sm:$0xf]
        %v1588 = vld [vmem:[#allocation2 + $0x40] sm:$0xf]
        %v1589 = vld [vmem:[#allocation2 + $0x48] sm:$0xf]
        %v1590 = vld [vmem:[#allocation2 + $0x4c] sm:$0xf]
        %v1591 = vld [vmem:[#allocation2 + $0x54] sm:$0xf]
        %v1592 = vld [vmem:[#allocation2 + $0x58] sm:$0xf]
        %v1593 = vld [vmem:[#allocation2 + $0x60] sm:$0xf]
        %v1594 = vld [vmem:[#allocation2 + $0x64] sm:$0xf]
        %v1595 = vld [vmem:[#allocation2 + $0x6c] sm:$0xf]
        %v1596 = vld [vmem:[#allocation2 + $0x70] sm:$0xf]
        %v1597 = vld [vmem:[#allocation2 + $0x78] sm:$0xf]
        %v1598 = vld [vmem:[#allocation2 + $0x7c] sm:$0xf]
        %v1599 = vld [vmem:[#allocation2 + $0x84] sm:$0xf]
        %v1600 = vld [vmem:[#allocation2 + $0x88] sm:$0xf]
        %v1601 = vld [vmem:[#allocation2 + $0x90] sm:$0xf]
        %v1602 = vld [vmem:[#allocation2 + $0x94] sm:$0xf]
        %v1603 = vld [vmem:[#allocation2 + $0x9c] sm:$0xf]
        %v1604 = vld [vmem:[#allocation2 + $0xa0] sm:$0xf]
        %v1605 = vld [vmem:[#allocation2 + $0xa8] sm:$0xf]
        %v1606 = vld [vmem:[#allocation2 + $0xac] sm:$0xf]
        %v1607 = vld [vmem:[#allocation2 + $0xb4] sm:$0xf]
        %v1608 = vld [vmem:[#allocation2 + $0xb8] sm:$0xf]
        %v1609 = vld [vmem:[#allocation2 + $0xd8] sm:$0xf]
        %v1610 = vld [vmem:[#allocation2 + $0xdc] sm:$0xf]
        %v1611 = vld [vmem:[#allocation2 + $0xe4] sm:$0xf]
        %v1612 = vld [vmem:[#allocation2 + $0xe8] sm:$0xf]
        %v1613 = vld [vmem:[#allocation2 + $0xf0] sm:$0xf]
        %v1614 = vld [vmem:[#allocation2 + $0xf4] sm:$0xf]
        %v1615 = vld [vmem:[#allocation2 + $0xfc] sm:$0xf]
        %v1616 = vld [vmem:[#allocation2 + $0x100] sm:$0xf]
        %v1617 = vld [vmem:[#allocation2 + $0x108] sm:$0xf]
        %v1618 = vld [vmem:[#allocation2 + $0x10c] sm:$0xf]
        %v1619 = vld [vmem:[#allocation2 + $0x114] sm:$0xf]
        %v1620 = vld [vmem:[#allocation2 + $0x118] sm:$0xf]
        %v1621 = vld [vmem:[#allocation2 + $0x120] sm:$0xf]
        %v1622 = vld [vmem:[#allocation2 + $0x124] sm:$0xf]
        %v1623 = vld [vmem:[#allocation2 + $0x12c] sm:$0xf]
        %v1624 = vld [vmem:[#allocation2 + $0x130] sm:$0xf]
        %v1625 = vld [vmem:[#allocation2 + $0x138] sm:$0xf]
        %v1626 = vld [vmem:[#allocation2 + $0x13c] sm:$0xf]
        %v1627 = vld [vmem:[#allocation2 + $0x144] sm:$0xf]
        %v1628 = vld [vmem:[#allocation2 + $0x148] sm:$0xf]
        %v1629 = vld [vmem:[#allocation2 + $0x150] sm:$0xf]
        %v1630 = vld [vmem:[#allocation2 + $0x154] sm:$0xf]
        %v1631 = vld [vmem:[#allocation2 + $0x15c] sm:$0xf]
        %v1632 = vld [vmem:[#allocation2 + $0x160] sm:$0xf]
        %v1633 = vld [vmem:[#allocation2 + $0x168] sm:$0xf]
        %v1634 = vld [vmem:[#allocation2 + $0x16c] sm:$0xf]
        %v1635 = vld [vmem:[#allocation2 + $0x174] sm:$0xf]
        %v1636 = vld [vmem:[#allocation2 + $0x178] sm:$0xf]
        %v1637 = vld [vmem:[#allocation2 + $0x180] sm:$0xf]
        %v1638 = vld [vmem:[#allocation2 + $0x184] sm:$0xf]
        %v1639 = vld [vmem:[#allocation2 + $0x18c] sm:$0xf]
        %v1640 = vld [vmem:[#allocation2 + $0x190] sm:$0xf]
        %v1641 = vld [vmem:[#allocation2 + $0x8] sm:$0x1]
        %v1642 = vld [vmem:[#allocation2 + $0x14] sm:$0x1]
        %v1643 = vld [vmem:[#allocation2 + $0x20] sm:$0x1]
        %v1644 = vld [vmem:[#allocation2 + $0x2c] sm:$0x1]
        %v1645 = vld [vmem:[#allocation2 + $0x38] sm:$0x1]
        %v1646 = vld [vmem:[#allocation2 + $0x44] sm:$0x1]
        %v1647 = vld [vmem:[#allocation2 + $0x50] sm:$0x1]
        %v1648 = vld [vmem:[#allocation2 + $0x5c] sm:$0x1]
        %v1649 = vld [vmem:[#allocation2 + $0x68] sm:$0x1]
        %v1650 = vld [vmem:[#allocation2 + $0x74] sm:$0x1]
        %v1651 = vld [vmem:[#allocation2 + $0x80] sm:$0x1]
        %v1652 = vld [vmem:[#allocation2 + $0x8c] sm:$0x1]
        %v1653 = vld [vmem:[#allocation2 + $0x98] sm:$0x1]
        %v1654 = vld [vmem:[#allocation2 + $0xa4] sm:$0x1]
        %v1655 = vld [vmem:[#allocation2 + $0xb0] sm:$0x1]
        %v1656 = vld [vmem:[#allocation2 + $0xbc] sm:$0x1]
        %v1657 = vld [vmem:[#allocation2 + $0xe0] sm:$0x1]
        %v1658 = vld [vmem:[#allocation2 + $0xec] sm:$0x1]
        %v1659 = vld [vmem:[#allocation2 + $0xf8] sm:$0x1]
        %v1660 = vld [vmem:[#allocation2 + $0x104] sm:$0x1]
        %v1661 = vld [vmem:[#allocation2 + $0x110] sm:$0x1]
        %v1662 = vld [vmem:[#allocation2 + $0x11c] sm:$0x1]
        %v1663 = vld [vmem:[#allocation2 + $0x128] sm:$0x1]
        %v1664 = vld [vmem:[#allocation2 + $0x134] sm:$0x1]
        %v1665 = vld [vmem:[#allocation2 + $0x140] sm:$0x1]
        %v1666 = vld [vmem:[#allocation2 + $0x14c] sm:$0x1]
        %v1667 = vld [vmem:[#allocation2 + $0x158] sm:$0x1]
        %v1668 = vld [vmem:[#allocation2 + $0x164] sm:$0x1]
        %v1669 = vld [vmem:[#allocation2 + $0x170] sm:$0x1]
        %v1670 = vld [vmem:[#allocation2 + $0x17c] sm:$0x1]
        %v1671 = vld [vmem:[#allocation2 + $0x188] sm:$0x1]
        %v1672 = vld [vmem:[#allocation2 + $0x194] sm:$0x1]
        %v1673 = vld [vmem:[#allocation2] sm:$0xe]
        %v1674 = vld [vmem:[#allocation2 + $0xc] sm:$0xe]
        %v1675 = vld [vmem:[#allocation2 + $0x18] sm:$0xe]
        %v1676 = vld [vmem:[#allocation2 + $0x24] sm:$0xe]
        %v1677 = vld [vmem:[#allocation2 + $0x30] sm:$0xe]
        %v1678 = vld [vmem:[#allocation2 + $0x3c] sm:$0xe]
        %v1679 = vld [vmem:[#allocation2 + $0x48] sm:$0xe]
        %v1680 = vld [vmem:[#allocation2 + $0x54] sm:$0xe]
        %v1681 = vld [vmem:[#allocation2 + $0x60] sm:$0xe]
        %v1682 = vld [vmem:[#allocation2 + $0x6c] sm:$0xe]
        %v1683 = vld [vmem:[#allocation2 + $0x78] sm:$0xe]
        %v1684 = vld [vmem:[#allocation2 + $0x84] sm:$0xe]
        %v1685 = vld [vmem:[#allocation2 + $0x90] sm:$0xe]
        %v1686 = vld [vmem:[#allocation2 + $0x9c] sm:$0xe]
        %v1687 = vld [vmem:[#allocation2 + $0xa8] sm:$0xe]
        %v1688 = vld [vmem:[#allocation2 + $0xb4] sm:$0xe]
        %v1689 = vld [vmem:[#allocation2 + $0xd8] sm:$0xe]
        %v1690 = vld [vmem:[#allocation2 + $0xe4] sm:$0xe]
        %v1691 = vld [vmem:[#allocation2 + $0xf0] sm:$0xe]
        %v1692 = vld [vmem:[#allocation2 + $0xfc] sm:$0xe]
        %v1693 = vld [vmem:[#allocation2 + $0x108] sm:$0xe]
        %v1694 = vld [vmem:[#allocation2 + $0x114] sm:$0xe]
        %v1695 = vld [vmem:[#allocation2 + $0x120] sm:$0xe]
        %v1696 = vld [vmem:[#allocation2 + $0x12c] sm:$0xe]
        %v1697 = vld [vmem:[#allocation2 + $0x138] sm:$0xe]
        %v1698 = vld [vmem:[#allocation2 + $0x144] sm:$0xe]
        %v1699 = vld [vmem:[#allocation2 + $0x150] sm:$0xe]
        %v1700 = vld [vmem:[#allocation2 + $0x15c] sm:$0xe]
        %v1701 = vld [vmem:[#allocation2 + $0x168] sm:$0xe]
        %v1702 = vld [vmem:[#allocation2 + $0x174] sm:$0xe]
        %v1703 = vld [vmem:[#allocation2 + $0x180] sm:$0xe]
        %v1704 = vld [vmem:[#allocation2 + $0x18c] sm:$0xe]
        %v1705 = vld [vmem:[%s1347] sm:$0xf]
        %v1706 = vld [vmem:[%s1347 + $0x4] sm:$0xf]
        %v1707 = vld [vmem:[%s1347 + $0xc] sm:$0xf]
        %v1708 = vld [vmem:[%s1347 + $0x10] sm:$0xf]
        %v1709 = vld [vmem:[%s1347 + $0x18] sm:$0xf]
        %v1710 = vld [vmem:[%s1347 + $0x1c] sm:$0xf]
        %v1711 = vld [vmem:[%s1347 + $0x24] sm:$0xf]
        %v1712 = vld [vmem:[%s1347 + $0x28] sm:$0xf]
        %v1713 = vld [vmem:[%s1347 + $0x30] sm:$0xf]
        %v1714 = vld [vmem:[%s1347 + $0x34] sm:$0xf]
        %v1715 = vld [vmem:[%s1347 + $0x3c] sm:$0xf]
        %v1716 = vld [vmem:[%s1347 + $0x40] sm:$0xf]
        %v1717 = vld [vmem:[%s1347 + $0x48] sm:$0xf]
        %v1718 = vld [vmem:[%s1347 + $0x4c] sm:$0xf]
        %v1719 = vld [vmem:[%s1347 + $0x54] sm:$0xf]
        %v1720 = vld [vmem:[%s1347 + $0x58] sm:$0xf]
        %v1721 = vld [vmem:[%s1347 + $0x60] sm:$0xf]
        %v1722 = vld [vmem:[%s1347 + $0x64] sm:$0xf]
        %v1723 = vld [vmem:[%s1347 + $0x6c] sm:$0xf]
        %v1724 = vld [vmem:[%s1347 + $0x70] sm:$0xf]
        %v1725 = vld [vmem:[%s1347 + $0x78] sm:$0xf]
        %v1726 = vld [vmem:[%s1347 + $0x7c] sm:$0xf]
        %v1727 = vld [vmem:[%s1347 + $0x84] sm:$0xf]
        %v1728 = vld [vmem:[%s1347 + $0x88] sm:$0xf]
        %v1729 = vld [vmem:[%s1347 + $0x90] sm:$0xf]
        %v1730 = vld [vmem:[%s1347 + $0x94] sm:$0xf]
        %v1731 = vld [vmem:[%s1347 + $0x9c] sm:$0xf]
        %v1732 = vld [vmem:[%s1347 + $0xa0] sm:$0xf]
        %v1733 = vld [vmem:[%s1347 + $0xa8] sm:$0xf]
        %v1734 = vld [vmem:[%s1347 + $0xac] sm:$0xf]
        %v1735 = vld [vmem:[%s1347 + $0xb4] sm:$0xf]
        %v1736 = vld [vmem:[%s1347 + $0xb8] sm:$0xf]
        %v1737 = vld [vmem:[%s1347 + $0xd8] sm:$0xf]
        %v1738 = vld [vmem:[%s1347 + $0xdc] sm:$0xf]
        %v1739 = vld [vmem:[%s1347 + $0xe4] sm:$0xf]
        %v1740 = vld [vmem:[%s1347 + $0xe8] sm:$0xf]
        %v1741 = vld [vmem:[%s1347 + $0xf0] sm:$0xf]
        %v1742 = vld [vmem:[%s1347 + $0xf4] sm:$0xf]
        %v1743 = vld [vmem:[%s1347 + $0xfc] sm:$0xf]
        %v1744 = vld [vmem:[%s1347 + $0x100] sm:$0xf]
        %v1745 = vld [vmem:[%s1347 + $0x108] sm:$0xf]
        %v1746 = vld [vmem:[%s1347 + $0x10c] sm:$0xf]
        %v1747 = vld [vmem:[%s1347 + $0x114] sm:$0xf]
        %v1748 = vld [vmem:[%s1347 + $0x118] sm:$0xf]
        %v1749 = vld [vmem:[%s1347 + $0x120] sm:$0xf]
        %v1750 = vld [vmem:[%s1347 + $0x124] sm:$0xf]
        %v1751 = vld [vmem:[%s1347 + $0x12c] sm:$0xf]
        %v1752 = vld [vmem:[%s1347 + $0x130] sm:$0xf]
        %v1753 = vld [vmem:[%s1347 + $0x138] sm:$0xf]
        %v1754 = vld [vmem:[%s1347 + $0x13c] sm:$0xf]
        %v1755 = vld [vmem:[%s1347 + $0x144] sm:$0xf]
        %v1756 = vld [vmem:[%s1347 + $0x148] sm:$0xf]
        %v1757 = vld [vmem:[%s1347 + $0x150] sm:$0xf]
        %v1758 = vld [vmem:[%s1347 + $0x154] sm:$0xf]
        %v1759 = vld [vmem:[%s1347 + $0x15c] sm:$0xf]
        %v1760 = vld [vmem:[%s1347 + $0x160] sm:$0xf]
        %v1761 = vld [vmem:[%s1347 + $0x168] sm:$0xf]
        %v1762 = vld [vmem:[%s1347 + $0x16c] sm:$0xf]
        %v1763 = vld [vmem:[%s1347 + $0x174] sm:$0xf]
        %v1764 = vld [vmem:[%s1347 + $0x178] sm:$0xf]
        %v1765 = vld [vmem:[%s1347 + $0x180] sm:$0xf]
        %v1766 = vld [vmem:[%s1347 + $0x184] sm:$0xf]
        %v1767 = vld [vmem:[%s1347 + $0x18c] sm:$0xf]
        %v1768 = vld [vmem:[%s1347 + $0x190] sm:$0xf]
        %v1769 = vld [vmem:[%s1347 + $0x8] sm:$0x1]
        %v1770 = vld [vmem:[%s1347 + $0x14] sm:$0x1]
        %v1771 = vld [vmem:[%s1347 + $0x20] sm:$0x1]
        %v1772 = vld [vmem:[%s1347 + $0x2c] sm:$0x1]
        %v1773 = vld [vmem:[%s1347 + $0x38] sm:$0x1]
        %v1774 = vld [vmem:[%s1347 + $0x44] sm:$0x1]
        %v1775 = vld [vmem:[%s1347 + $0x50] sm:$0x1]
        %v1776 = vld [vmem:[%s1347 + $0x5c] sm:$0x1]
        %v1777 = vld [vmem:[%s1347 + $0x68] sm:$0x1]
        %v1778 = vld [vmem:[%s1347 + $0x74] sm:$0x1]
        %v1779 = vld [vmem:[%s1347 + $0x80] sm:$0x1]
        %v1780 = vld [vmem:[%s1347 + $0x8c] sm:$0x1]
        %v1781 = vld [vmem:[%s1347 + $0x98] sm:$0x1]
        %v1782 = vld [vmem:[%s1347 + $0xa4] sm:$0x1]
        %v1783 = vld [vmem:[%s1347 + $0xb0] sm:$0x1]
        %v1784 = vld [vmem:[%s1347 + $0xbc] sm:$0x1]
        %v1785 = vld [vmem:[%s1347 + $0xe0] sm:$0x1]
        %v1786 = vld [vmem:[%s1347 + $0xec] sm:$0x1]
        %v1787 = vld [vmem:[%s1347 + $0xf8] sm:$0x1]
        %v1788 = vld [vmem:[%s1347 + $0x104] sm:$0x1]
        %v1789 = vld [vmem:[%s1347 + $0x110] sm:$0x1]
        %v1790 = vld [vmem:[%s1347 + $0x11c] sm:$0x1]
        %v1791 = vld [vmem:[%s1347 + $0x128] sm:$0x1]
        %v1792 = vld [vmem:[%s1347 + $0x134] sm:$0x1]
        %v1793 = vld [vmem:[%s1347 + $0x140] sm:$0x1]
        %v1794 = vld [vmem:[%s1347 + $0x14c] sm:$0x1]
        %v1795 = vld [vmem:[%s1347 + $0x158] sm:$0x1]
        %v1796 = vld [vmem:[%s1347 + $0x164] sm:$0x1]
        %v1797 = vld [vmem:[%s1347 + $0x170] sm:$0x1]
        %v1798 = vld [vmem:[%s1347 + $0x17c] sm:$0x1]
        %v1799 = vld [vmem:[%s1347 + $0x188] sm:$0x1]
        %v1800 = vld [vmem:[%s1347 + $0x194] sm:$0x1]
        %v1801 = vld [vmem:[%s1347] sm:$0xe]
        %v1802 = vld [vmem:[%s1347 + $0xc] sm:$0xe]
        %v1803 = vld [vmem:[%s1347 + $0x18] sm:$0xe]
        %v1804 = vld [vmem:[%s1347 + $0x24] sm:$0xe]
        %v1805 = vld [vmem:[%s1347 + $0x30] sm:$0xe]
        %v1806 = vld [vmem:[%s1347 + $0x3c] sm:$0xe]
        %v1807 = vld [vmem:[%s1347 + $0x48] sm:$0xe]
        %v1808 = vld [vmem:[%s1347 + $0x54] sm:$0xe]
        %v1809 = vld [vmem:[%s1347 + $0x60] sm:$0xe]
        %v1810 = vld [vmem:[%s1347 + $0x6c] sm:$0xe]
        %v1811 = vld [vmem:[%s1347 + $0x78] sm:$0xe]
        %v1812 = vld [vmem:[%s1347 + $0x84] sm:$0xe]
        %v1813 = vld [vmem:[%s1347 + $0x90] sm:$0xe]
        %v1814 = vld [vmem:[%s1347 + $0x9c] sm:$0xe]
        %v1815 = vld [vmem:[%s1347 + $0xa8] sm:$0xe]
        %v1816 = vld [vmem:[%s1347 + $0xb4] sm:$0xe]
        %v1817 = vld [vmem:[%s1347 + $0xd8] sm:$0xe]
        %v1818 = vld [vmem:[%s1347 + $0xe4] sm:$0xe]
        %v1819 = vld [vmem:[%s1347 + $0xf0] sm:$0xe]
        %v1820 = vld [vmem:[%s1347 + $0xfc] sm:$0xe]
        %v1821 = vld [vmem:[%s1347 + $0x108] sm:$0xe]
        %v1822 = vld [vmem:[%s1347 + $0x114] sm:$0xe]
        %v1823 = vld [vmem:[%s1347 + $0x120] sm:$0xe]
        %v1824 = vld [vmem:[%s1347 + $0x12c] sm:$0xe]
        %v1825 = vld [vmem:[%s1347 + $0x138] sm:$0xe]
        %v1826 = vld [vmem:[%s1347 + $0x144] sm:$0xe]
        %v1827 = vld [vmem:[%s1347 + $0x150] sm:$0xe]
        %v1828 = vld [vmem:[%s1347 + $0x15c] sm:$0xe]
        %v1829 = vld [vmem:[%s1347 + $0x168] sm:$0xe]
        %v1830 = vld [vmem:[%s1347 + $0x174] sm:$0xe]
        %v1831 = vld [vmem:[%s1347 + $0x180] sm:$0xe]
        %v1832 = vld [vmem:[%s1347 + $0x18c] sm:$0xe]
        %s1833 = scalar_lea.vmem [#allocation2], 24
        %v1834 = vld [vmem:[%s1833] sm:$0xf]
        %v1835 = vld [vmem:[%s1833 + $0x4] sm:$0xf]
        %v1836 = vld [vmem:[%s1833 + $0xc] sm:$0xf]
        %v1837 = vld [vmem:[%s1833 + $0x10] sm:$0xf]
        %v1838 = vld [vmem:[%s1833 + $0x18] sm:$0xf]
        %v1839 = vld [vmem:[%s1833 + $0x1c] sm:$0xf]
        %v1840 = vld [vmem:[%s1833 + $0x24] sm:$0xf]
        %v1841 = vld [vmem:[%s1833 + $0x28] sm:$0xf]
        %v1842 = vld [vmem:[%s1833 + $0x30] sm:$0xf]
        %v1843 = vld [vmem:[%s1833 + $0x34] sm:$0xf]
        %v1844 = vld [vmem:[%s1833 + $0x3c] sm:$0xf]
        %v1845 = vld [vmem:[%s1833 + $0x40] sm:$0xf]
        %v1846 = vld [vmem:[%s1833 + $0x48] sm:$0xf]
        %v1847 = vld [vmem:[%s1833 + $0x4c] sm:$0xf]
        %v1848 = vld [vmem:[%s1833 + $0x54] sm:$0xf]
        %v1849 = vld [vmem:[%s1833 + $0x58] sm:$0xf]
        %v1850 = vld [vmem:[%s1833 + $0x60] sm:$0xf]
        %v1851 = vld [vmem:[%s1833 + $0x64] sm:$0xf]
        %v1852 = vld [vmem:[%s1833 + $0x6c] sm:$0xf]
        %v1853 = vld [vmem:[%s1833 + $0x70] sm:$0xf]
        %v1854 = vld [vmem:[%s1833 + $0x78] sm:$0xf]
        %v1855 = vld [vmem:[%s1833 + $0x7c] sm:$0xf]
        %v1856 = vld [vmem:[%s1833 + $0x84] sm:$0xf]
        %v1857 = vld [vmem:[%s1833 + $0x88] sm:$0xf]
        %v1858 = vld [vmem:[%s1833 + $0x90] sm:$0xf]
        %v1859 = vld [vmem:[%s1833 + $0x94] sm:$0xf]
        %v1860 = vld [vmem:[%s1833 + $0x9c] sm:$0xf]
        %v1861 = vld [vmem:[%s1833 + $0xa0] sm:$0xf]
        %v1862 = vld [vmem:[%s1833 + $0xa8] sm:$0xf]
        %v1863 = vld [vmem:[%s1833 + $0xac] sm:$0xf]
        %v1864 = vld [vmem:[%s1833 + $0xb4] sm:$0xf]
        %v1865 = vld [vmem:[%s1833 + $0xb8] sm:$0xf]
        %v1866 = vld [vmem:[%s1833 + $0xd8] sm:$0xf]
        %v1867 = vld [vmem:[%s1833 + $0xdc] sm:$0xf]
        %v1868 = vld [vmem:[%s1833 + $0xe4] sm:$0xf]
        %v1869 = vld [vmem:[%s1833 + $0xe8] sm:$0xf]
        %v1870 = vld [vmem:[%s1833 + $0xf0] sm:$0xf]
        %v1871 = vld [vmem:[%s1833 + $0xf4] sm:$0xf]
        %v1872 = vld [vmem:[%s1833 + $0xfc] sm:$0xf]
        %v1873 = vld [vmem:[%s1833 + $0x100] sm:$0xf]
        %v1874 = vld [vmem:[%s1833 + $0x108] sm:$0xf]
        %v1875 = vld [vmem:[%s1833 + $0x10c] sm:$0xf]
        %v1876 = vld [vmem:[%s1833 + $0x114] sm:$0xf]
        %v1877 = vld [vmem:[%s1833 + $0x118] sm:$0xf]
        %v1878 = vld [vmem:[%s1833 + $0x120] sm:$0xf]
        %v1879 = vld [vmem:[%s1833 + $0x124] sm:$0xf]
        %v1880 = vld [vmem:[%s1833 + $0x12c] sm:$0xf]
        %v1881 = vld [vmem:[%s1833 + $0x130] sm:$0xf]
        %v1882 = vld [vmem:[%s1833 + $0x138] sm:$0xf]
        %v1883 = vld [vmem:[%s1833 + $0x13c] sm:$0xf]
        %v1884 = vld [vmem:[%s1833 + $0x144] sm:$0xf]
        %v1885 = vld [vmem:[%s1833 + $0x148] sm:$0xf]
        %v1886 = vld [vmem:[%s1833 + $0x150] sm:$0xf]
        %v1887 = vld [vmem:[%s1833 + $0x154] sm:$0xf]
        %v1888 = vld [vmem:[%s1833 + $0x15c] sm:$0xf]
        %v1889 = vld [vmem:[%s1833 + $0x160] sm:$0xf]
        %v1890 = vld [vmem:[%s1833 + $0x168] sm:$0xf]
        %v1891 = vld [vmem:[%s1833 + $0x16c] sm:$0xf]
        %v1892 = vld [vmem:[%s1833 + $0x174] sm:$0xf]
        %v1893 = vld [vmem:[%s1833 + $0x178] sm:$0xf]
        %v1894 = vld [vmem:[%s1833 + $0x180] sm:$0xf]
        %v1895 = vld [vmem:[%s1833 + $0x184] sm:$0xf]
        %v1896 = vld [vmem:[%s1833 + $0x18c] sm:$0xf]
        %v1897 = vld [vmem:[%s1833 + $0x190] sm:$0xf]
        %v1898 = vld [vmem:[%s1833 + $0x8] sm:$0x1]
        %v1899 = vld [vmem:[%s1833 + $0x14] sm:$0x1]
        %v1900 = vld [vmem:[%s1833 + $0x20] sm:$0x1]
        %v1901 = vld [vmem:[%s1833 + $0x2c] sm:$0x1]
        %v1902 = vld [vmem:[%s1833 + $0x38] sm:$0x1]
        %v1903 = vld [vmem:[%s1833 + $0x44] sm:$0x1]
        %v1904 = vld [vmem:[%s1833 + $0x50] sm:$0x1]
        %v1905 = vld [vmem:[%s1833 + $0x5c] sm:$0x1]
        %v1906 = vld [vmem:[%s1833 + $0x68] sm:$0x1]
        %v1907 = vld [vmem:[%s1833 + $0x74] sm:$0x1]
        %v1908 = vld [vmem:[%s1833 + $0x80] sm:$0x1]
        %v1909 = vld [vmem:[%s1833 + $0x8c] sm:$0x1]
        %v1910 = vld [vmem:[%s1833 + $0x98] sm:$0x1]
        %v1911 = vld [vmem:[%s1833 + $0xa4] sm:$0x1]
        %v1912 = vld [vmem:[%s1833 + $0xb0] sm:$0x1]
        %v1913 = vld [vmem:[%s1833 + $0xbc] sm:$0x1]
        %v1914 = vld [vmem:[%s1833 + $0xe0] sm:$0x1]
        %v1915 = vld [vmem:[%s1833 + $0xec] sm:$0x1]
        %v1916 = vld [vmem:[%s1833 + $0xf8] sm:$0x1]
        %v1917 = vld [vmem:[%s1833 + $0x104] sm:$0x1]
        %v1918 = vld [vmem:[%s1833 + $0x110] sm:$0x1]
        %v1919 = vld [vmem:[%s1833 + $0x11c] sm:$0x1]
        %v1920 = vld [vmem:[%s1833 + $0x128] sm:$0x1]
        %v1921 = vld [vmem:[%s1833 + $0x134] sm:$0x1]
        %v1922 = vld [vmem:[%s1833 + $0x140] sm:$0x1]
        %v1923 = vld [vmem:[%s1833 + $0x14c] sm:$0x1]
        %v1924 = vld [vmem:[%s1833 + $0x158] sm:$0x1]
        %v1925 = vld [vmem:[%s1833 + $0x164] sm:$0x1]
        %v1926 = vld [vmem:[%s1833 + $0x170] sm:$0x1]
        %v1927 = vld [vmem:[%s1833 + $0x17c] sm:$0x1]
        %v1928 = vld [vmem:[%s1833 + $0x188] sm:$0x1]
        %v1929 = vld [vmem:[%s1833 + $0x194] sm:$0x1]
        %v1930 = vld [vmem:[%s1833] sm:$0xe]
        %v1931 = vld [vmem:[%s1833 + $0xc] sm:$0xe]
        %v1932 = vld [vmem:[%s1833 + $0x18] sm:$0xe]
        %v1933 = vld [vmem:[%s1833 + $0x24] sm:$0xe]
        %v1934 = vld [vmem:[%s1833 + $0x30] sm:$0xe]
        %v1935 = vld [vmem:[%s1833 + $0x3c] sm:$0xe]
        %v1936 = vld [vmem:[%s1833 + $0x48] sm:$0xe]
        %v1937 = vld [vmem:[%s1833 + $0x54] sm:$0xe]
        %v1938 = vld [vmem:[%s1833 + $0x60] sm:$0xe]
        %v1939 = vld [vmem:[%s1833 + $0x6c] sm:$0xe]
        %v1940 = vld [vmem:[%s1833 + $0x78] sm:$0xe]
        %v1941 = vld [vmem:[%s1833 + $0x84] sm:$0xe]
        %v1942 = vld [vmem:[%s1833 + $0x90] sm:$0xe]
        %v1943 = vld [vmem:[%s1833 + $0x9c] sm:$0xe]
        %v1944 = vld [vmem:[%s1833 + $0xa8] sm:$0xe]
        %v1945 = vld [vmem:[%s1833 + $0xb4] sm:$0xe]
        %v1946 = vld [vmem:[%s1833 + $0xd8] sm:$0xe]
        %v1947 = vld [vmem:[%s1833 + $0xe4] sm:$0xe]
        %v1948 = vld [vmem:[%s1833 + $0xf0] sm:$0xe]
        %v1949 = vld [vmem:[%s1833 + $0xfc] sm:$0xe]
        %v1950 = vld [vmem:[%s1833 + $0x108] sm:$0xe]
        %v1951 = vld [vmem:[%s1833 + $0x114] sm:$0xe]
        %v1952 = vld [vmem:[%s1833 + $0x120] sm:$0xe]
        %v1953 = vld [vmem:[%s1833 + $0x12c] sm:$0xe]
        %v1954 = vld [vmem:[%s1833 + $0x138] sm:$0xe]
        %v1955 = vld [vmem:[%s1833 + $0x144] sm:$0xe]
        %v1956 = vld [vmem:[%s1833 + $0x150] sm:$0xe]
        %v1957 = vld [vmem:[%s1833 + $0x15c] sm:$0xe]
        %v1958 = vld [vmem:[%s1833 + $0x168] sm:$0xe]
        %v1959 = vld [vmem:[%s1833 + $0x174] sm:$0xe]
        %v1960 = vld [vmem:[%s1833 + $0x180] sm:$0xe]
        %v1961 = vld [vmem:[%s1833 + $0x18c] sm:$0xe]
        %v2026 = vunpack.c.l.b16 %v1577
        %v2027 = vunpack.c.l.b16 %v1578
        %v2028 = vunpack.c.l.b16 %v1579
        %v2029 = vunpack.c.l.b16 %v1580
        %v2030 = vunpack.c.l.b16 %v1581
        %v2031 = vunpack.c.l.b16 %v1582
        %v2032 = vunpack.c.l.b16 %v1583
        %v2033 = vunpack.c.l.b16 %v1584
        %v2034 = vunpack.c.l.b16 %v1585
        %v2035 = vunpack.c.l.b16 %v1586
        %v2036 = vunpack.c.l.b16 %v1587
        %v2037 = vunpack.c.l.b16 %v1588
        %v2038 = vunpack.c.l.b16 %v1589
        %v2039 = vunpack.c.l.b16 %v1590
        %v2040 = vunpack.c.l.b16 %v1591
        %v2041 = vunpack.c.l.b16 %v1592
        %v2042 = vunpack.c.l.b16 %v1593
        %v2043 = vunpack.c.l.b16 %v1594
        %v2044 = vunpack.c.l.b16 %v1595
        %v2045 = vunpack.c.l.b16 %v1596
        %v2046 = vunpack.c.l.b16 %v1597
        %v2047 = vunpack.c.l.b16 %v1598
        %v2048 = vunpack.c.l.b16 %v1599
        %v2049 = vunpack.c.l.b16 %v1600
        %v2050 = vunpack.c.l.b16 %v1601
        %v2051 = vunpack.c.l.b16 %v1602
        %v2052 = vunpack.c.l.b16 %v1603
        %v2053 = vunpack.c.l.b16 %v1604
        %v2054 = vunpack.c.l.b16 %v1605
        %v2055 = vunpack.c.l.b16 %v1606
        %v2056 = vunpack.c.l.b16 %v1607
        %v2057 = vunpack.c.l.b16 %v1608
        %v2058 = vunpack.c.l.b16 %v1609
        %v2059 = vunpack.c.l.b16 %v1610
        %v2060 = vunpack.c.l.b16 %v1611
        %v2061 = vunpack.c.l.b16 %v1612
        %v2062 = vunpack.c.l.b16 %v1613
        %v2063 = vunpack.c.l.b16 %v1614
        %v2064 = vunpack.c.l.b16 %v1615
        %v2065 = vunpack.c.l.b16 %v1616
        %v2066 = vunpack.c.l.b16 %v1617
        %v2067 = vunpack.c.l.b16 %v1618
        %v2068 = vunpack.c.l.b16 %v1619
        %v2069 = vunpack.c.l.b16 %v1620
        %v2070 = vunpack.c.l.b16 %v1621
        %v2071 = vunpack.c.l.b16 %v1622
        %v2072 = vunpack.c.l.b16 %v1623
        %v2073 = vunpack.c.l.b16 %v1624
        %v2074 = vunpack.c.l.b16 %v1625
        %v2075 = vunpack.c.l.b16 %v1626
        %v2076 = vunpack.c.l.b16 %v1627
        %v2077 = vunpack.c.l.b16 %v1628
        %v2078 = vunpack.c.l.b16 %v1629
        %v2079 = vunpack.c.l.b16 %v1630
        %v2080 = vunpack.c.l.b16 %v1631
        %v2081 = vunpack.c.l.b16 %v1632
        %v2082 = vunpack.c.l.b16 %v1633
        %v2083 = vunpack.c.l.b16 %v1634
        %v2084 = vunpack.c.l.b16 %v1635
        %v2085 = vunpack.c.l.b16 %v1636
        %v2086 = vunpack.c.l.b16 %v1637
        %v2087 = vunpack.c.l.b16 %v1638
        %v2088 = vunpack.c.l.b16 %v1639
        %v2089 = vunpack.c.l.b16 %v1640
        %v2090 = vpack.c.b16 %v2027, %v2026
        %v2091 = vpack.c.b16 %v2029, %v2028
        %v2092 = vpack.c.b16 %v2031, %v2030
        %v2093 = vpack.c.b16 %v2033, %v2032
        %v2094 = vpack.c.b16 %v2035, %v2034
        %v2095 = vpack.c.b16 %v2037, %v2036
        %v2096 = vpack.c.b16 %v2039, %v2038
        %v2097 = vpack.c.b16 %v2041, %v2040
        %v2098 = vpack.c.b16 %v2043, %v2042
        %v2099 = vpack.c.b16 %v2045, %v2044
        %v2100 = vpack.c.b16 %v2047, %v2046
        %v2101 = vpack.c.b16 %v2049, %v2048
        %v2102 = vpack.c.b16 %v2051, %v2050
        %v2103 = vpack.c.b16 %v2053, %v2052
        %v2104 = vpack.c.b16 %v2055, %v2054
        %v2105 = vpack.c.b16 %v2057, %v2056
        %v2106 = vpack.c.b16 %v2059, %v2058
        %v2107 = vpack.c.b16 %v2061, %v2060
        %v2108 = vpack.c.b16 %v2063, %v2062
        %v2109 = vpack.c.b16 %v2065, %v2064
        %v2110 = vpack.c.b16 %v2067, %v2066
        %v2111 = vpack.c.b16 %v2069, %v2068
        %v2112 = vpack.c.b16 %v2071, %v2070
        %v2113 = vpack.c.b16 %v2073, %v2072
        %v2114 = vpack.c.b16 %v2075, %v2074
        %v2115 = vpack.c.b16 %v2077, %v2076
        %v2116 = vpack.c.b16 %v2079, %v2078
        %v2117 = vpack.c.b16 %v2081, %v2080
        %v2118 = vpack.c.b16 %v2083, %v2082
        %v2119 = vpack.c.b16 %v2085, %v2084
        %v2120 = vpack.c.b16 %v2087, %v2086
        %v2121 = vpack.c.b16 %v2089, %v2088
        %v2186 = vunpack.c.l.b16 %v1641
        %v2187 = vunpack.c.l.b16 %v1642
        %v2188 = vunpack.c.l.b16 %v1643
        %v2189 = vunpack.c.l.b16 %v1644
        %v2190 = vunpack.c.l.b16 %v1645
        %v2191 = vunpack.c.l.b16 %v1646
        %v2192 = vunpack.c.l.b16 %v1647
        %v2193 = vunpack.c.l.b16 %v1648
        %v2194 = vunpack.c.l.b16 %v1649
        %v2195 = vunpack.c.l.b16 %v1650
        %v2196 = vunpack.c.l.b16 %v1651
        %v2197 = vunpack.c.l.b16 %v1652
        %v2198 = vunpack.c.l.b16 %v1653
        %v2199 = vunpack.c.l.b16 %v1654
        %v2200 = vunpack.c.l.b16 %v1655
        %v2201 = vunpack.c.l.b16 %v1656
        %v2202 = vunpack.c.l.b16 %v1657
        %v2203 = vunpack.c.l.b16 %v1658
        %v2204 = vunpack.c.l.b16 %v1659
        %v2205 = vunpack.c.l.b16 %v1660
        %v2206 = vunpack.c.l.b16 %v1661
        %v2207 = vunpack.c.l.b16 %v1662
        %v2208 = vunpack.c.l.b16 %v1663
        %v2209 = vunpack.c.l.b16 %v1664
        %v2210 = vunpack.c.l.b16 %v1665
        %v2211 = vunpack.c.l.b16 %v1666
        %v2212 = vunpack.c.l.b16 %v1667
        %v2213 = vunpack.c.l.b16 %v1668
        %v2214 = vunpack.c.l.b16 %v1669
        %v2215 = vunpack.c.l.b16 %v1670
        %v2216 = vunpack.c.l.b16 %v1671
        %v2217 = vunpack.c.l.b16 %v1672
        %v2218 = vpack.c.b16 %v2186, %v2186
        %v2219 = vpack.c.b16 %v2187, %v2187
        %v2220 = vpack.c.b16 %v2188, %v2188
        %v2221 = vpack.c.b16 %v2189, %v2189
        %v2222 = vpack.c.b16 %v2190, %v2190
        %v2223 = vpack.c.b16 %v2191, %v2191
        %v2224 = vpack.c.b16 %v2192, %v2192
        %v2225 = vpack.c.b16 %v2193, %v2193
        %v2226 = vpack.c.b16 %v2194, %v2194
        %v2227 = vpack.c.b16 %v2195, %v2195
        %v2228 = vpack.c.b16 %v2196, %v2196
        %v2229 = vpack.c.b16 %v2197, %v2197
        %v2230 = vpack.c.b16 %v2198, %v2198
        %v2231 = vpack.c.b16 %v2199, %v2199
        %v2232 = vpack.c.b16 %v2200, %v2200
        %v2233 = vpack.c.b16 %v2201, %v2201
        %v2234 = vpack.c.b16 %v2202, %v2202
        %v2235 = vpack.c.b16 %v2203, %v2203
        %v2236 = vpack.c.b16 %v2204, %v2204
        %v2237 = vpack.c.b16 %v2205, %v2205
        %v2238 = vpack.c.b16 %v2206, %v2206
        %v2239 = vpack.c.b16 %v2207, %v2207
        %v2240 = vpack.c.b16 %v2208, %v2208
        %v2241 = vpack.c.b16 %v2209, %v2209
        %v2242 = vpack.c.b16 %v2210, %v2210
        %v2243 = vpack.c.b16 %v2211, %v2211
        %v2244 = vpack.c.b16 %v2212, %v2212
        %v2245 = vpack.c.b16 %v2213, %v2213
        %v2246 = vpack.c.b16 %v2214, %v2214
        %v2247 = vpack.c.b16 %v2215, %v2215
        %v2248 = vpack.c.b16 %v2216, %v2216
        %v2249 = vpack.c.b16 %v2217, %v2217
        %vm2250 = vsmask.f32 7424
        %v2252 = vshrl.u32 %v2090, 16
        %v2254 = vshll.u32 %v2090, 16
        %v2256 = vrot.slane %v2254, 1
        %v2257 = vor.u32 %v2252, %v2256
        %v2259 = vshll.u32 %v2218, 16
        %v2261 = vrot.slane %v2259, 1
        %v2262 = vsel %vm2250, %v2257, %v2261
        %v2264 = vshrl.u32 %v2091, 16
        %v2266 = vshll.u32 %v2091, 16
        %v2268 = vrot.slane %v2266, 1
        %v2269 = vor.u32 %v2264, %v2268
        %v2271 = vshll.u32 %v2219, 16
        %v2273 = vrot.slane %v2271, 1
        %v2274 = vsel %vm2250, %v2269, %v2273
        %v2276 = vshrl.u32 %v2092, 16
        %v2278 = vshll.u32 %v2092, 16
        %v2280 = vrot.slane %v2278, 1
        %v2281 = vor.u32 %v2276, %v2280
        %v2283 = vshll.u32 %v2220, 16
        %v2285 = vrot.slane %v2283, 1
        %v2286 = vsel %vm2250, %v2281, %v2285
        %v2288 = vshrl.u32 %v2093, 16
        %v2290 = vshll.u32 %v2093, 16
        %v2292 = vrot.slane %v2290, 1
        %v2293 = vor.u32 %v2288, %v2292
        %v2295 = vshll.u32 %v2221, 16
        %v2297 = vrot.slane %v2295, 1
        %v2298 = vsel %vm2250, %v2293, %v2297
        %v2300 = vshrl.u32 %v2094, 16
        %v2302 = vshll.u32 %v2094, 16
        %v2304 = vrot.slane %v2302, 1
        %v2305 = vor.u32 %v2300, %v2304
        %v2307 = vshll.u32 %v2222, 16
        %v2309 = vrot.slane %v2307, 1
        %v2310 = vsel %vm2250, %v2305, %v2309
        %v2312 = vshrl.u32 %v2095, 16
        %v2314 = vshll.u32 %v2095, 16
        %v2316 = vrot.slane %v2314, 1
        %v2317 = vor.u32 %v2312, %v2316
        %v2319 = vshll.u32 %v2223, 16
        %v2321 = vrot.slane %v2319, 1
        %v2322 = vsel %vm2250, %v2317, %v2321
        %v2324 = vshrl.u32 %v2096, 16
        %v2326 = vshll.u32 %v2096, 16
        %v2328 = vrot.slane %v2326, 1
        %v2329 = vor.u32 %v2324, %v2328
        %v2331 = vshll.u32 %v2224, 16
        %v2333 = vrot.slane %v2331, 1
        %v2334 = vsel %vm2250, %v2329, %v2333
        %v2336 = vshrl.u32 %v2097, 16
        %v2338 = vshll.u32 %v2097, 16
        %v2340 = vrot.slane %v2338, 1
        %v2341 = vor.u32 %v2336, %v2340
        %v2343 = vshll.u32 %v2225, 16
        %v2345 = vrot.slane %v2343, 1
        %v2346 = vsel %vm2250, %v2341, %v2345
        %v2348 = vshrl.u32 %v2098, 16
        %v2350 = vshll.u32 %v2098, 16
        %v2352 = vrot.slane %v2350, 1
        %v2353 = vor.u32 %v2348, %v2352
        %v2355 = vshll.u32 %v2226, 16
        %v2357 = vrot.slane %v2355, 1
        %v2358 = vsel %vm2250, %v2353, %v2357
        %v2360 = vshrl.u32 %v2099, 16
        %v2362 = vshll.u32 %v2099, 16
        %v2364 = vrot.slane %v2362, 1
        %v2365 = vor.u32 %v2360, %v2364
        %v2367 = vshll.u32 %v2227, 16
        %v2369 = vrot.slane %v2367, 1
        %v2370 = vsel %vm2250, %v2365, %v2369
        %v2372 = vshrl.u32 %v2100, 16
        %v2374 = vshll.u32 %v2100, 16
        %v2376 = vrot.slane %v2374, 1
        %v2377 = vor.u32 %v2372, %v2376
        %v2379 = vshll.u32 %v2228, 16
        %v2381 = vrot.slane %v2379, 1
        %v2382 = vsel %vm2250, %v2377, %v2381
        %v2384 = vshrl.u32 %v2101, 16
        %v2386 = vshll.u32 %v2101, 16
        %v2388 = vrot.slane %v2386, 1
        %v2389 = vor.u32 %v2384, %v2388
        %v2391 = vshll.u32 %v2229, 16
        %v2393 = vrot.slane %v2391, 1
        %v2394 = vsel %vm2250, %v2389, %v2393
        %v2396 = vshrl.u32 %v2102, 16
        %v2398 = vshll.u32 %v2102, 16
        %v2400 = vrot.slane %v2398, 1
        %v2401 = vor.u32 %v2396, %v2400
        %v2403 = vshll.u32 %v2230, 16
        %v2405 = vrot.slane %v2403, 1
        %v2406 = vsel %vm2250, %v2401, %v2405
        %v2408 = vshrl.u32 %v2103, 16
        %v2410 = vshll.u32 %v2103, 16
        %v2412 = vrot.slane %v2410, 1
        %v2413 = vor.u32 %v2408, %v2412
        %v2415 = vshll.u32 %v2231, 16
        %v2417 = vrot.slane %v2415, 1
        %v2418 = vsel %vm2250, %v2413, %v2417
        %v2420 = vshrl.u32 %v2104, 16
        %v2422 = vshll.u32 %v2104, 16
        %v2424 = vrot.slane %v2422, 1
        %v2425 = vor.u32 %v2420, %v2424
        %v2427 = vshll.u32 %v2232, 16
        %v2429 = vrot.slane %v2427, 1
        %v2430 = vsel %vm2250, %v2425, %v2429
        %v2432 = vshrl.u32 %v2105, 16
        %v2434 = vshll.u32 %v2105, 16
        %v2436 = vrot.slane %v2434, 1
        %v2437 = vor.u32 %v2432, %v2436
        %v2439 = vshll.u32 %v2233, 16
        %v2441 = vrot.slane %v2439, 1
        %v2442 = vsel %vm2250, %v2437, %v2441
        %v2444 = vshrl.u32 %v2106, 16
        %v2446 = vshll.u32 %v2106, 16
        %v2448 = vrot.slane %v2446, 1
        %v2449 = vor.u32 %v2444, %v2448
        %v2451 = vshll.u32 %v2234, 16
        %v2453 = vrot.slane %v2451, 1
        %v2454 = vsel %vm2250, %v2449, %v2453
        %v2456 = vshrl.u32 %v2107, 16
        %v2458 = vshll.u32 %v2107, 16
        %v2460 = vrot.slane %v2458, 1
        %v2461 = vor.u32 %v2456, %v2460
        %v2463 = vshll.u32 %v2235, 16
        %v2465 = vrot.slane %v2463, 1
        %v2466 = vsel %vm2250, %v2461, %v2465
        %v2468 = vshrl.u32 %v2108, 16
        %v2470 = vshll.u32 %v2108, 16
        %v2472 = vrot.slane %v2470, 1
        %v2473 = vor.u32 %v2468, %v2472
        %v2475 = vshll.u32 %v2236, 16
        %v2477 = vrot.slane %v2475, 1
        %v2478 = vsel %vm2250, %v2473, %v2477
        %v2480 = vshrl.u32 %v2109, 16
        %v2482 = vshll.u32 %v2109, 16
        %v2484 = vrot.slane %v2482, 1
        %v2485 = vor.u32 %v2480, %v2484
        %v2487 = vshll.u32 %v2237, 16
        %v2489 = vrot.slane %v2487, 1
        %v2490 = vsel %vm2250, %v2485, %v2489
        %v2492 = vshrl.u32 %v2110, 16
        %v2494 = vshll.u32 %v2110, 16
        %v2496 = vrot.slane %v2494, 1
        %v2497 = vor.u32 %v2492, %v2496
        %v2499 = vshll.u32 %v2238, 16
        %v2501 = vrot.slane %v2499, 1
        %v2502 = vsel %vm2250, %v2497, %v2501
        %v2504 = vshrl.u32 %v2111, 16
        %v2506 = vshll.u32 %v2111, 16
        %v2508 = vrot.slane %v2506, 1
        %v2509 = vor.u32 %v2504, %v2508
        %v2511 = vshll.u32 %v2239, 16
        %v2513 = vrot.slane %v2511, 1
        %v2514 = vsel %vm2250, %v2509, %v2513
        %v2516 = vshrl.u32 %v2112, 16
        %v2518 = vshll.u32 %v2112, 16
        %v2520 = vrot.slane %v2518, 1
        %v2521 = vor.u32 %v2516, %v2520
        %v2523 = vshll.u32 %v2240, 16
        %v2525 = vrot.slane %v2523, 1
        %v2526 = vsel %vm2250, %v2521, %v2525
        %v2528 = vshrl.u32 %v2113, 16
        %v2530 = vshll.u32 %v2113, 16
        %v2532 = vrot.slane %v2530, 1
        %v2533 = vor.u32 %v2528, %v2532
        %v2535 = vshll.u32 %v2241, 16
        %v2537 = vrot.slane %v2535, 1
        %v2538 = vsel %vm2250, %v2533, %v2537
        %v2540 = vshrl.u32 %v2114, 16
        %v2542 = vshll.u32 %v2114, 16
        %v2544 = vrot.slane %v2542, 1
        %v2545 = vor.u32 %v2540, %v2544
        %v2547 = vshll.u32 %v2242, 16
        %v2549 = vrot.slane %v2547, 1
        %v2550 = vsel %vm2250, %v2545, %v2549
        %v2552 = vshrl.u32 %v2115, 16
        %v2554 = vshll.u32 %v2115, 16
        %v2556 = vrot.slane %v2554, 1
        %v2557 = vor.u32 %v2552, %v2556
        %v2559 = vshll.u32 %v2243, 16
        %v2561 = vrot.slane %v2559, 1
        %v2562 = vsel %vm2250, %v2557, %v2561
        %v2564 = vshrl.u32 %v2116, 16
        %v2566 = vshll.u32 %v2116, 16
        %v2568 = vrot.slane %v2566, 1
        %v2569 = vor.u32 %v2564, %v2568
        %v2571 = vshll.u32 %v2244, 16
        %v2573 = vrot.slane %v2571, 1
        %v2574 = vsel %vm2250, %v2569, %v2573
        %v2576 = vshrl.u32 %v2117, 16
        %v2578 = vshll.u32 %v2117, 16
        %v2580 = vrot.slane %v2578, 1
        %v2581 = vor.u32 %v2576, %v2580
        %v2583 = vshll.u32 %v2245, 16
        %v2585 = vrot.slane %v2583, 1
        %v2586 = vsel %vm2250, %v2581, %v2585
        %v2588 = vshrl.u32 %v2118, 16
        %v2590 = vshll.u32 %v2118, 16
        %v2592 = vrot.slane %v2590, 1
        %v2593 = vor.u32 %v2588, %v2592
        %v2595 = vshll.u32 %v2246, 16
        %v2597 = vrot.slane %v2595, 1
        %v2598 = vsel %vm2250, %v2593, %v2597
        %v2600 = vshrl.u32 %v2119, 16
        %v2602 = vshll.u32 %v2119, 16
        %v2604 = vrot.slane %v2602, 1
        %v2605 = vor.u32 %v2600, %v2604
        %v2607 = vshll.u32 %v2247, 16
        %v2609 = vrot.slane %v2607, 1
        %v2610 = vsel %vm2250, %v2605, %v2609
        %v2612 = vshrl.u32 %v2120, 16
        %v2614 = vshll.u32 %v2120, 16
        %v2616 = vrot.slane %v2614, 1
        %v2617 = vor.u32 %v2612, %v2616
        %v2619 = vshll.u32 %v2248, 16
        %v2621 = vrot.slane %v2619, 1
        %v2622 = vsel %vm2250, %v2617, %v2621
        %v2624 = vshrl.u32 %v2121, 16
        %v2626 = vshll.u32 %v2121, 16
        %v2628 = vrot.slane %v2626, 1
        %v2629 = vor.u32 %v2624, %v2628
        %v2631 = vshll.u32 %v2249, 16
        %v2633 = vrot.slane %v2631, 1
        %v2634 = vsel %vm2250, %v2629, %v2633
        %v2699 = vunpack.c.l.b16 %v1673
        %v2700 = vunpack.c.l.b16 %v1674
        %v2701 = vunpack.c.l.b16 %v1675
        %v2702 = vunpack.c.l.b16 %v1676
        %v2703 = vunpack.c.l.b16 %v1677
        %v2704 = vunpack.c.l.b16 %v1678
        %v2705 = vunpack.c.l.b16 %v1679
        %v2706 = vunpack.c.l.b16 %v1680
        %v2707 = vunpack.c.l.b16 %v1681
        %v2708 = vunpack.c.l.b16 %v1682
        %v2709 = vunpack.c.l.b16 %v1683
        %v2710 = vunpack.c.l.b16 %v1684
        %v2711 = vunpack.c.l.b16 %v1685
        %v2712 = vunpack.c.l.b16 %v1686
        %v2713 = vunpack.c.l.b16 %v1687
        %v2714 = vunpack.c.l.b16 %v1688
        %v2715 = vunpack.c.l.b16 %v1689
        %v2716 = vunpack.c.l.b16 %v1690
        %v2717 = vunpack.c.l.b16 %v1691
        %v2718 = vunpack.c.l.b16 %v1692
        %v2719 = vunpack.c.l.b16 %v1693
        %v2720 = vunpack.c.l.b16 %v1694
        %v2721 = vunpack.c.l.b16 %v1695
        %v2722 = vunpack.c.l.b16 %v1696
        %v2723 = vunpack.c.l.b16 %v1697
        %v2724 = vunpack.c.l.b16 %v1698
        %v2725 = vunpack.c.l.b16 %v1699
        %v2726 = vunpack.c.l.b16 %v1700
        %v2727 = vunpack.c.l.b16 %v1701
        %v2728 = vunpack.c.l.b16 %v1702
        %v2729 = vunpack.c.l.b16 %v1703
        %v2730 = vunpack.c.l.b16 %v1704
        %v2731 = vpack.c.b16 %v2027, %v2699
        %v2732 = vpack.c.b16 %v2029, %v2700
        %v2733 = vpack.c.b16 %v2031, %v2701
        %v2734 = vpack.c.b16 %v2033, %v2702
        %v2735 = vpack.c.b16 %v2035, %v2703
        %v2736 = vpack.c.b16 %v2037, %v2704
        %v2737 = vpack.c.b16 %v2039, %v2705
        %v2738 = vpack.c.b16 %v2041, %v2706
        %v2739 = vpack.c.b16 %v2043, %v2707
        %v2740 = vpack.c.b16 %v2045, %v2708
        %v2741 = vpack.c.b16 %v2047, %v2709
        %v2742 = vpack.c.b16 %v2049, %v2710
        %v2743 = vpack.c.b16 %v2051, %v2711
        %v2744 = vpack.c.b16 %v2053, %v2712
        %v2745 = vpack.c.b16 %v2055, %v2713
        %v2746 = vpack.c.b16 %v2057, %v2714
        %v2747 = vpack.c.b16 %v2059, %v2715
        %v2748 = vpack.c.b16 %v2061, %v2716
        %v2749 = vpack.c.b16 %v2063, %v2717
        %v2750 = vpack.c.b16 %v2065, %v2718
        %v2751 = vpack.c.b16 %v2067, %v2719
        %v2752 = vpack.c.b16 %v2069, %v2720
        %v2753 = vpack.c.b16 %v2071, %v2721
        %v2754 = vpack.c.b16 %v2073, %v2722
        %v2755 = vpack.c.b16 %v2075, %v2723
        %v2756 = vpack.c.b16 %v2077, %v2724
        %v2757 = vpack.c.b16 %v2079, %v2725
        %v2758 = vpack.c.b16 %v2081, %v2726
        %v2759 = vpack.c.b16 %v2083, %v2727
        %v2760 = vpack.c.b16 %v2085, %v2728
        %v2761 = vpack.c.b16 %v2087, %v2729
        %v2762 = vpack.c.b16 %v2089, %v2730
        %vm2763 = vcmask 1046528
        %v2764 = vrot.slane %v2731, 1
        %v2765 = vrot.slane %v2218, 1
        %v2766 = vsel %vm2763, %v2764, %v2765
        %v2767 = vrot.slane %v2732, 1
        %v2768 = vrot.slane %v2219, 1
        %v2769 = vsel %vm2763, %v2767, %v2768
        %v2770 = vrot.slane %v2733, 1
        %v2771 = vrot.slane %v2220, 1
        %v2772 = vsel %vm2763, %v2770, %v2771
        %v2773 = vrot.slane %v2734, 1
        %v2774 = vrot.slane %v2221, 1
        %v2775 = vsel %vm2763, %v2773, %v2774
        %v2776 = vrot.slane %v2735, 1
        %v2777 = vrot.slane %v2222, 1
        %v2778 = vsel %vm2763, %v2776, %v2777
        %v2779 = vrot.slane %v2736, 1
        %v2780 = vrot.slane %v2223, 1
        %v2781 = vsel %vm2763, %v2779, %v2780
        %v2782 = vrot.slane %v2737, 1
        %v2783 = vrot.slane %v2224, 1
        %v2784 = vsel %vm2763, %v2782, %v2783
        %v2785 = vrot.slane %v2738, 1
        %v2786 = vrot.slane %v2225, 1
        %v2787 = vsel %vm2763, %v2785, %v2786
        %v2788 = vrot.slane %v2739, 1
        %v2789 = vrot.slane %v2226, 1
        %v2790 = vsel %vm2763, %v2788, %v2789
        %v2791 = vrot.slane %v2740, 1
        %v2792 = vrot.slane %v2227, 1
        %v2793 = vsel %vm2763, %v2791, %v2792
        %v2794 = vrot.slane %v2741, 1
        %v2795 = vrot.slane %v2228, 1
        %v2796 = vsel %vm2763, %v2794, %v2795
        %v2797 = vrot.slane %v2742, 1
        %v2798 = vrot.slane %v2229, 1
        %v2799 = vsel %vm2763, %v2797, %v2798
        %v2800 = vrot.slane %v2743, 1
        %v2801 = vrot.slane %v2230, 1
        %v2802 = vsel %vm2763, %v2800, %v2801
        %v2803 = vrot.slane %v2744, 1
        %v2804 = vrot.slane %v2231, 1
        %v2805 = vsel %vm2763, %v2803, %v2804
        %v2806 = vrot.slane %v2745, 1
        %v2807 = vrot.slane %v2232, 1
        %v2808 = vsel %vm2763, %v2806, %v2807
        %v2809 = vrot.slane %v2746, 1
        %v2810 = vrot.slane %v2233, 1
        %v2811 = vsel %vm2763, %v2809, %v2810
        %v2812 = vrot.slane %v2747, 1
        %v2813 = vrot.slane %v2234, 1
        %v2814 = vsel %vm2763, %v2812, %v2813
        %v2815 = vrot.slane %v2748, 1
        %v2816 = vrot.slane %v2235, 1
        %v2817 = vsel %vm2763, %v2815, %v2816
        %v2818 = vrot.slane %v2749, 1
        %v2819 = vrot.slane %v2236, 1
        %v2820 = vsel %vm2763, %v2818, %v2819
        %v2821 = vrot.slane %v2750, 1
        %v2822 = vrot.slane %v2237, 1
        %v2823 = vsel %vm2763, %v2821, %v2822
        %v2824 = vrot.slane %v2751, 1
        %v2825 = vrot.slane %v2238, 1
        %v2826 = vsel %vm2763, %v2824, %v2825
        %v2827 = vrot.slane %v2752, 1
        %v2828 = vrot.slane %v2239, 1
        %v2829 = vsel %vm2763, %v2827, %v2828
        %v2830 = vrot.slane %v2753, 1
        %v2831 = vrot.slane %v2240, 1
        %v2832 = vsel %vm2763, %v2830, %v2831
        %v2833 = vrot.slane %v2754, 1
        %v2834 = vrot.slane %v2241, 1
        %v2835 = vsel %vm2763, %v2833, %v2834
        %v2836 = vrot.slane %v2755, 1
        %v2837 = vrot.slane %v2242, 1
        %v2838 = vsel %vm2763, %v2836, %v2837
        %v2839 = vrot.slane %v2756, 1
        %v2840 = vrot.slane %v2243, 1
        %v2841 = vsel %vm2763, %v2839, %v2840
        %v2842 = vrot.slane %v2757, 1
        %v2843 = vrot.slane %v2244, 1
        %v2844 = vsel %vm2763, %v2842, %v2843
        %v2845 = vrot.slane %v2758, 1
        %v2846 = vrot.slane %v2245, 1
        %v2847 = vsel %vm2763, %v2845, %v2846
        %v2848 = vrot.slane %v2759, 1
        %v2849 = vrot.slane %v2246, 1
        %v2850 = vsel %vm2763, %v2848, %v2849
        %v2851 = vrot.slane %v2760, 1
        %v2852 = vrot.slane %v2247, 1
        %v2853 = vsel %vm2763, %v2851, %v2852
        %v2854 = vrot.slane %v2761, 1
        %v2855 = vrot.slane %v2248, 1
        %v2856 = vsel %vm2763, %v2854, %v2855
        %v2857 = vrot.slane %v2762, 1
        %v2858 = vrot.slane %v2249, 1
        %v2859 = vsel %vm2763, %v2857, %v2858
        %v2956 = vunpack.c.l.b16 %v1705
        %v2957 = vunpack.c.l.b16 %v1706
        %v2958 = vunpack.c.l.b16 %v1707
        %v2959 = vunpack.c.l.b16 %v1708
        %v2960 = vunpack.c.l.b16 %v1709
        %v2961 = vunpack.c.l.b16 %v1710
        %v2962 = vunpack.c.l.b16 %v1711
        %v2963 = vunpack.c.l.b16 %v1712
        %v2964 = vunpack.c.l.b16 %v1713
        %v2965 = vunpack.c.l.b16 %v1714
        %v2966 = vunpack.c.l.b16 %v1715
        %v2967 = vunpack.c.l.b16 %v1716
        %v2968 = vunpack.c.l.b16 %v1717
        %v2969 = vunpack.c.l.b16 %v1718
        %v2970 = vunpack.c.l.b16 %v1719
        %v2971 = vunpack.c.l.b16 %v1720
        %v2972 = vunpack.c.l.b16 %v1721
        %v2973 = vunpack.c.l.b16 %v1722
        %v2974 = vunpack.c.l.b16 %v1723
        %v2975 = vunpack.c.l.b16 %v1724
        %v2976 = vunpack.c.l.b16 %v1725
        %v2977 = vunpack.c.l.b16 %v1726
        %v2978 = vunpack.c.l.b16 %v1727
        %v2979 = vunpack.c.l.b16 %v1728
        %v2980 = vunpack.c.l.b16 %v1729
        %v2981 = vunpack.c.l.b16 %v1730
        %v2982 = vunpack.c.l.b16 %v1731
        %v2983 = vunpack.c.l.b16 %v1732
        %v2984 = vunpack.c.l.b16 %v1733
        %v2985 = vunpack.c.l.b16 %v1734
        %v2986 = vunpack.c.l.b16 %v1735
        %v2987 = vunpack.c.l.b16 %v1736
        %v2988 = vunpack.c.l.b16 %v1737
        %v2989 = vunpack.c.l.b16 %v1738
        %v2990 = vunpack.c.l.b16 %v1739
        %v2991 = vunpack.c.l.b16 %v1740
        %v2992 = vunpack.c.l.b16 %v1741
        %v2993 = vunpack.c.l.b16 %v1742
        %v2994 = vunpack.c.l.b16 %v1743
        %v2995 = vunpack.c.l.b16 %v1744
        %v2996 = vunpack.c.l.b16 %v1745
        %v2997 = vunpack.c.l.b16 %v1746
        %v2998 = vunpack.c.l.b16 %v1747
        %v2999 = vunpack.c.l.b16 %v1748
        %v3000 = vunpack.c.l.b16 %v1749
        %v3001 = vunpack.c.l.b16 %v1750
        %v3002 = vunpack.c.l.b16 %v1751
        %v3003 = vunpack.c.l.b16 %v1752
        %v3004 = vunpack.c.l.b16 %v1753
        %v3005 = vunpack.c.l.b16 %v1754
        %v3006 = vunpack.c.l.b16 %v1755
        %v3007 = vunpack.c.l.b16 %v1756
        %v3008 = vunpack.c.l.b16 %v1757
        %v3009 = vunpack.c.l.b16 %v1758
        %v3010 = vunpack.c.l.b16 %v1759
        %v3011 = vunpack.c.l.b16 %v1760
        %v3012 = vunpack.c.l.b16 %v1761
        %v3013 = vunpack.c.l.b16 %v1762
        %v3014 = vunpack.c.l.b16 %v1763
        %v3015 = vunpack.c.l.b16 %v1764
        %v3016 = vunpack.c.l.b16 %v1765
        %v3017 = vunpack.c.l.b16 %v1766
        %v3018 = vunpack.c.l.b16 %v1767
        %v3019 = vunpack.c.l.b16 %v1768
        %v3020 = vpack.c.b16 %v2957, %v2956
        %v3021 = vpack.c.b16 %v2959, %v2958
        %v3022 = vpack.c.b16 %v2961, %v2960
        %v3023 = vpack.c.b16 %v2963, %v2962
        %v3024 = vpack.c.b16 %v2965, %v2964
        %v3025 = vpack.c.b16 %v2967, %v2966
        %v3026 = vpack.c.b16 %v2969, %v2968
        %v3027 = vpack.c.b16 %v2971, %v2970
        %v3028 = vpack.c.b16 %v2973, %v2972
        %v3029 = vpack.c.b16 %v2975, %v2974
        %v3030 = vpack.c.b16 %v2977, %v2976
        %v3031 = vpack.c.b16 %v2979, %v2978
        %v3032 = vpack.c.b16 %v2981, %v2980
        %v3033 = vpack.c.b16 %v2983, %v2982
        %v3034 = vpack.c.b16 %v2985, %v2984
        %v3035 = vpack.c.b16 %v2987, %v2986
        %v3036 = vpack.c.b16 %v2989, %v2988
        %v3037 = vpack.c.b16 %v2991, %v2990
        %v3038 = vpack.c.b16 %v2993, %v2992
        %v3039 = vpack.c.b16 %v2995, %v2994
        %v3040 = vpack.c.b16 %v2997, %v2996
        %v3041 = vpack.c.b16 %v2999, %v2998
        %v3042 = vpack.c.b16 %v3001, %v3000
        %v3043 = vpack.c.b16 %v3003, %v3002
        %v3044 = vpack.c.b16 %v3005, %v3004
        %v3045 = vpack.c.b16 %v3007, %v3006
        %v3046 = vpack.c.b16 %v3009, %v3008
        %v3047 = vpack.c.b16 %v3011, %v3010
        %v3048 = vpack.c.b16 %v3013, %v3012
        %v3049 = vpack.c.b16 %v3015, %v3014
        %v3050 = vpack.c.b16 %v3017, %v3016
        %v3051 = vpack.c.b16 %v3019, %v3018
        %v3116 = vunpack.c.l.b16 %v1769
        %v3117 = vunpack.c.l.b16 %v1770
        %v3118 = vunpack.c.l.b16 %v1771
        %v3119 = vunpack.c.l.b16 %v1772
        %v3120 = vunpack.c.l.b16 %v1773
        %v3121 = vunpack.c.l.b16 %v1774
        %v3122 = vunpack.c.l.b16 %v1775
        %v3123 = vunpack.c.l.b16 %v1776
        %v3124 = vunpack.c.l.b16 %v1777
        %v3125 = vunpack.c.l.b16 %v1778
        %v3126 = vunpack.c.l.b16 %v1779
        %v3127 = vunpack.c.l.b16 %v1780
        %v3128 = vunpack.c.l.b16 %v1781
        %v3129 = vunpack.c.l.b16 %v1782
        %v3130 = vunpack.c.l.b16 %v1783
        %v3131 = vunpack.c.l.b16 %v1784
        %v3132 = vunpack.c.l.b16 %v1785
        %v3133 = vunpack.c.l.b16 %v1786
        %v3134 = vunpack.c.l.b16 %v1787
        %v3135 = vunpack.c.l.b16 %v1788
        %v3136 = vunpack.c.l.b16 %v1789
        %v3137 = vunpack.c.l.b16 %v1790
        %v3138 = vunpack.c.l.b16 %v1791
        %v3139 = vunpack.c.l.b16 %v1792
        %v3140 = vunpack.c.l.b16 %v1793
        %v3141 = vunpack.c.l.b16 %v1794
        %v3142 = vunpack.c.l.b16 %v1795
        %v3143 = vunpack.c.l.b16 %v1796
        %v3144 = vunpack.c.l.b16 %v1797
        %v3145 = vunpack.c.l.b16 %v1798
        %v3146 = vunpack.c.l.b16 %v1799
        %v3147 = vunpack.c.l.b16 %v1800
        %v3148 = vpack.c.b16 %v3116, %v3116
        %v3149 = vpack.c.b16 %v3117, %v3117
        %v3150 = vpack.c.b16 %v3118, %v3118
        %v3151 = vpack.c.b16 %v3119, %v3119
        %v3152 = vpack.c.b16 %v3120, %v3120
        %v3153 = vpack.c.b16 %v3121, %v3121
        %v3154 = vpack.c.b16 %v3122, %v3122
        %v3155 = vpack.c.b16 %v3123, %v3123
        %v3156 = vpack.c.b16 %v3124, %v3124
        %v3157 = vpack.c.b16 %v3125, %v3125
        %v3158 = vpack.c.b16 %v3126, %v3126
        %v3159 = vpack.c.b16 %v3127, %v3127
        %v3160 = vpack.c.b16 %v3128, %v3128
        %v3161 = vpack.c.b16 %v3129, %v3129
        %v3162 = vpack.c.b16 %v3130, %v3130
        %v3163 = vpack.c.b16 %v3131, %v3131
        %v3164 = vpack.c.b16 %v3132, %v3132
        %v3165 = vpack.c.b16 %v3133, %v3133
        %v3166 = vpack.c.b16 %v3134, %v3134
        %v3167 = vpack.c.b16 %v3135, %v3135
        %v3168 = vpack.c.b16 %v3136, %v3136
        %v3169 = vpack.c.b16 %v3137, %v3137
        %v3170 = vpack.c.b16 %v3138, %v3138
        %v3171 = vpack.c.b16 %v3139, %v3139
        %v3172 = vpack.c.b16 %v3140, %v3140
        %v3173 = vpack.c.b16 %v3141, %v3141
        %v3174 = vpack.c.b16 %v3142, %v3142
        %v3175 = vpack.c.b16 %v3143, %v3143
        %v3176 = vpack.c.b16 %v3144, %v3144
        %v3177 = vpack.c.b16 %v3145, %v3145
        %v3178 = vpack.c.b16 %v3146, %v3146
        %v3179 = vpack.c.b16 %v3147, %v3147
        %v3181 = vshrl.u32 %v3020, 16
        %v3183 = vshll.u32 %v3020, 16
        %v3185 = vrot.slane %v3183, 1
        %v3186 = vor.u32 %v3181, %v3185
        %v3188 = vshll.u32 %v3148, 16
        %v3190 = vrot.slane %v3188, 1
        %v3191 = vsel %vm2250, %v3186, %v3190
        %v3193 = vshrl.u32 %v3021, 16
        %v3195 = vshll.u32 %v3021, 16
        %v3197 = vrot.slane %v3195, 1
        %v3198 = vor.u32 %v3193, %v3197
        %v3200 = vshll.u32 %v3149, 16
        %v3202 = vrot.slane %v3200, 1
        %v3203 = vsel %vm2250, %v3198, %v3202
        %v3205 = vshrl.u32 %v3022, 16
        %v3207 = vshll.u32 %v3022, 16
        %v3209 = vrot.slane %v3207, 1
        %v3210 = vor.u32 %v3205, %v3209
        %v3212 = vshll.u32 %v3150, 16
        %v3214 = vrot.slane %v3212, 1
        %v3215 = vsel %vm2250, %v3210, %v3214
        %v3217 = vshrl.u32 %v3023, 16
        %v3219 = vshll.u32 %v3023, 16
        %v3221 = vrot.slane %v3219, 1
        %v3222 = vor.u32 %v3217, %v3221
        %v3224 = vshll.u32 %v3151, 16
        %v3226 = vrot.slane %v3224, 1
        %v3227 = vsel %vm2250, %v3222, %v3226
        %v3229 = vshrl.u32 %v3024, 16
        %v3231 = vshll.u32 %v3024, 16
        %v3233 = vrot.slane %v3231, 1
        %v3234 = vor.u32 %v3229, %v3233
        %v3236 = vshll.u32 %v3152, 16
        %v3238 = vrot.slane %v3236, 1
        %v3239 = vsel %vm2250, %v3234, %v3238
        %v3241 = vshrl.u32 %v3025, 16
        %v3243 = vshll.u32 %v3025, 16
        %v3245 = vrot.slane %v3243, 1
        %v3246 = vor.u32 %v3241, %v3245
        %v3248 = vshll.u32 %v3153, 16
        %v3250 = vrot.slane %v3248, 1
        %v3251 = vsel %vm2250, %v3246, %v3250
        %v3253 = vshrl.u32 %v3026, 16
        %v3255 = vshll.u32 %v3026, 16
        %v3257 = vrot.slane %v3255, 1
        %v3258 = vor.u32 %v3253, %v3257
        %v3260 = vshll.u32 %v3154, 16
        %v3262 = vrot.slane %v3260, 1
        %v3263 = vsel %vm2250, %v3258, %v3262
        %v3265 = vshrl.u32 %v3027, 16
        %v3267 = vshll.u32 %v3027, 16
        %v3269 = vrot.slane %v3267, 1
        %v3270 = vor.u32 %v3265, %v3269
        %v3272 = vshll.u32 %v3155, 16
        %v3274 = vrot.slane %v3272, 1
        %v3275 = vsel %vm2250, %v3270, %v3274
        %v3277 = vshrl.u32 %v3028, 16
        %v3279 = vshll.u32 %v3028, 16
        %v3281 = vrot.slane %v3279, 1
        %v3282 = vor.u32 %v3277, %v3281
        %v3284 = vshll.u32 %v3156, 16
        %v3286 = vrot.slane %v3284, 1
        %v3287 = vsel %vm2250, %v3282, %v3286
        %v3289 = vshrl.u32 %v3029, 16
        %v3291 = vshll.u32 %v3029, 16
        %v3293 = vrot.slane %v3291, 1
        %v3294 = vor.u32 %v3289, %v3293
        %v3296 = vshll.u32 %v3157, 16
        %v3298 = vrot.slane %v3296, 1
        %v3299 = vsel %vm2250, %v3294, %v3298
        %v3301 = vshrl.u32 %v3030, 16
        %v3303 = vshll.u32 %v3030, 16
        %v3305 = vrot.slane %v3303, 1
        %v3306 = vor.u32 %v3301, %v3305
        %v3308 = vshll.u32 %v3158, 16
        %v3310 = vrot.slane %v3308, 1
        %v3311 = vsel %vm2250, %v3306, %v3310
        %v3313 = vshrl.u32 %v3031, 16
        %v3315 = vshll.u32 %v3031, 16
        %v3317 = vrot.slane %v3315, 1
        %v3318 = vor.u32 %v3313, %v3317
        %v3320 = vshll.u32 %v3159, 16
        %v3322 = vrot.slane %v3320, 1
        %v3323 = vsel %vm2250, %v3318, %v3322
        %v3325 = vshrl.u32 %v3032, 16
        %v3327 = vshll.u32 %v3032, 16
        %v3329 = vrot.slane %v3327, 1
        %v3330 = vor.u32 %v3325, %v3329
        %v3332 = vshll.u32 %v3160, 16
        %v3334 = vrot.slane %v3332, 1
        %v3335 = vsel %vm2250, %v3330, %v3334
        %v3337 = vshrl.u32 %v3033, 16
        %v3339 = vshll.u32 %v3033, 16
        %v3341 = vrot.slane %v3339, 1
        %v3342 = vor.u32 %v3337, %v3341
        %v3344 = vshll.u32 %v3161, 16
        %v3346 = vrot.slane %v3344, 1
        %v3347 = vsel %vm2250, %v3342, %v3346
        %v3349 = vshrl.u32 %v3034, 16
        %v3351 = vshll.u32 %v3034, 16
        %v3353 = vrot.slane %v3351, 1
        %v3354 = vor.u32 %v3349, %v3353
        %v3356 = vshll.u32 %v3162, 16
        %v3358 = vrot.slane %v3356, 1
        %v3359 = vsel %vm2250, %v3354, %v3358
        %v3361 = vshrl.u32 %v3035, 16
        %v3363 = vshll.u32 %v3035, 16
        %v3365 = vrot.slane %v3363, 1
        %v3366 = vor.u32 %v3361, %v3365
        %v3368 = vshll.u32 %v3163, 16
        %v3370 = vrot.slane %v3368, 1
        %v3371 = vsel %vm2250, %v3366, %v3370
        %v3373 = vshrl.u32 %v3036, 16
        %v3375 = vshll.u32 %v3036, 16
        %v3377 = vrot.slane %v3375, 1
        %v3378 = vor.u32 %v3373, %v3377
        %v3380 = vshll.u32 %v3164, 16
        %v3382 = vrot.slane %v3380, 1
        %v3383 = vsel %vm2250, %v3378, %v3382
        %v3385 = vshrl.u32 %v3037, 16
        %v3387 = vshll.u32 %v3037, 16
        %v3389 = vrot.slane %v3387, 1
        %v3390 = vor.u32 %v3385, %v3389
        %v3392 = vshll.u32 %v3165, 16
        %v3394 = vrot.slane %v3392, 1
        %v3395 = vsel %vm2250, %v3390, %v3394
        %v3397 = vshrl.u32 %v3038, 16
        %v3399 = vshll.u32 %v3038, 16
        %v3401 = vrot.slane %v3399, 1
        %v3402 = vor.u32 %v3397, %v3401
        %v3404 = vshll.u32 %v3166, 16
        %v3406 = vrot.slane %v3404, 1
        %v3407 = vsel %vm2250, %v3402, %v3406
        %v3409 = vshrl.u32 %v3039, 16
        %v3411 = vshll.u32 %v3039, 16
        %v3413 = vrot.slane %v3411, 1
        %v3414 = vor.u32 %v3409, %v3413
        %v3416 = vshll.u32 %v3167, 16
        %v3418 = vrot.slane %v3416, 1
        %v3419 = vsel %vm2250, %v3414, %v3418
        %v3421 = vshrl.u32 %v3040, 16
        %v3423 = vshll.u32 %v3040, 16
        %v3425 = vrot.slane %v3423, 1
        %v3426 = vor.u32 %v3421, %v3425
        %v3428 = vshll.u32 %v3168, 16
        %v3430 = vrot.slane %v3428, 1
        %v3431 = vsel %vm2250, %v3426, %v3430
        %v3433 = vshrl.u32 %v3041, 16
        %v3435 = vshll.u32 %v3041, 16
        %v3437 = vrot.slane %v3435, 1
        %v3438 = vor.u32 %v3433, %v3437
        %v3440 = vshll.u32 %v3169, 16
        %v3442 = vrot.slane %v3440, 1
        %v3443 = vsel %vm2250, %v3438, %v3442
        %v3445 = vshrl.u32 %v3042, 16
        %v3447 = vshll.u32 %v3042, 16
        %v3449 = vrot.slane %v3447, 1
        %v3450 = vor.u32 %v3445, %v3449
        %v3452 = vshll.u32 %v3170, 16
        %v3454 = vrot.slane %v3452, 1
        %v3455 = vsel %vm2250, %v3450, %v3454
        %v3457 = vshrl.u32 %v3043, 16
        %v3459 = vshll.u32 %v3043, 16
        %v3461 = vrot.slane %v3459, 1
        %v3462 = vor.u32 %v3457, %v3461
        %v3464 = vshll.u32 %v3171, 16
        %v3466 = vrot.slane %v3464, 1
        %v3467 = vsel %vm2250, %v3462, %v3466
        %v3469 = vshrl.u32 %v3044, 16
        %v3471 = vshll.u32 %v3044, 16
        %v3473 = vrot.slane %v3471, 1
        %v3474 = vor.u32 %v3469, %v3473
        %v3476 = vshll.u32 %v3172, 16
        %v3478 = vrot.slane %v3476, 1
        %v3479 = vsel %vm2250, %v3474, %v3478
        %v3481 = vshrl.u32 %v3045, 16
        %v3483 = vshll.u32 %v3045, 16
        %v3485 = vrot.slane %v3483, 1
        %v3486 = vor.u32 %v3481, %v3485
        %v3488 = vshll.u32 %v3173, 16
        %v3490 = vrot.slane %v3488, 1
        %v3491 = vsel %vm2250, %v3486, %v3490
        %v3493 = vshrl.u32 %v3046, 16
        %v3495 = vshll.u32 %v3046, 16
        %v3497 = vrot.slane %v3495, 1
        %v3498 = vor.u32 %v3493, %v3497
        %v3500 = vshll.u32 %v3174, 16
        %v3502 = vrot.slane %v3500, 1
        %v3503 = vsel %vm2250, %v3498, %v3502
        %v3505 = vshrl.u32 %v3047, 16
        %v3507 = vshll.u32 %v3047, 16
        %v3509 = vrot.slane %v3507, 1
        %v3510 = vor.u32 %v3505, %v3509
        %v3512 = vshll.u32 %v3175, 16
        %v3514 = vrot.slane %v3512, 1
        %v3515 = vsel %vm2250, %v3510, %v3514
        %v3517 = vshrl.u32 %v3048, 16
        %v3519 = vshll.u32 %v3048, 16
        %v3521 = vrot.slane %v3519, 1
        %v3522 = vor.u32 %v3517, %v3521
        %v3524 = vshll.u32 %v3176, 16
        %v3526 = vrot.slane %v3524, 1
        %v3527 = vsel %vm2250, %v3522, %v3526
        %v3529 = vshrl.u32 %v3049, 16
        %v3531 = vshll.u32 %v3049, 16
        %v3533 = vrot.slane %v3531, 1
        %v3534 = vor.u32 %v3529, %v3533
        %v3536 = vshll.u32 %v3177, 16
        %v3538 = vrot.slane %v3536, 1
        %v3539 = vsel %vm2250, %v3534, %v3538
        %v3541 = vshrl.u32 %v3050, 16
        %v3543 = vshll.u32 %v3050, 16
        %v3545 = vrot.slane %v3543, 1
        %v3546 = vor.u32 %v3541, %v3545
        %v3548 = vshll.u32 %v3178, 16
        %v3550 = vrot.slane %v3548, 1
        %v3551 = vsel %vm2250, %v3546, %v3550
        %v3553 = vshrl.u32 %v3051, 16
        %v3555 = vshll.u32 %v3051, 16
        %v3557 = vrot.slane %v3555, 1
        %v3558 = vor.u32 %v3553, %v3557
        %v3560 = vshll.u32 %v3179, 16
        %v3562 = vrot.slane %v3560, 1
        %v3563 = vsel %vm2250, %v3558, %v3562
        %v3628 = vunpack.c.l.b16 %v1801
        %v3629 = vunpack.c.l.b16 %v1802
        %v3630 = vunpack.c.l.b16 %v1803
        %v3631 = vunpack.c.l.b16 %v1804
        %v3632 = vunpack.c.l.b16 %v1805
        %v3633 = vunpack.c.l.b16 %v1806
        %v3634 = vunpack.c.l.b16 %v1807
        %v3635 = vunpack.c.l.b16 %v1808
        %v3636 = vunpack.c.l.b16 %v1809
        %v3637 = vunpack.c.l.b16 %v1810
        %v3638 = vunpack.c.l.b16 %v1811
        %v3639 = vunpack.c.l.b16 %v1812
        %v3640 = vunpack.c.l.b16 %v1813
        %v3641 = vunpack.c.l.b16 %v1814
        %v3642 = vunpack.c.l.b16 %v1815
        %v3643 = vunpack.c.l.b16 %v1816
        %v3644 = vunpack.c.l.b16 %v1817
        %v3645 = vunpack.c.l.b16 %v1818
        %v3646 = vunpack.c.l.b16 %v1819
        %v3647 = vunpack.c.l.b16 %v1820
        %v3648 = vunpack.c.l.b16 %v1821
        %v3649 = vunpack.c.l.b16 %v1822
        %v3650 = vunpack.c.l.b16 %v1823
        %v3651 = vunpack.c.l.b16 %v1824
        %v3652 = vunpack.c.l.b16 %v1825
        %v3653 = vunpack.c.l.b16 %v1826
        %v3654 = vunpack.c.l.b16 %v1827
        %v3655 = vunpack.c.l.b16 %v1828
        %v3656 = vunpack.c.l.b16 %v1829
        %v3657 = vunpack.c.l.b16 %v1830
        %v3658 = vunpack.c.l.b16 %v1831
        %v3659 = vunpack.c.l.b16 %v1832
        %v3660 = vpack.c.b16 %v2957, %v3628
        %v3661 = vpack.c.b16 %v2959, %v3629
        %v3662 = vpack.c.b16 %v2961, %v3630
        %v3663 = vpack.c.b16 %v2963, %v3631
        %v3664 = vpack.c.b16 %v2965, %v3632
        %v3665 = vpack.c.b16 %v2967, %v3633
        %v3666 = vpack.c.b16 %v2969, %v3634
        %v3667 = vpack.c.b16 %v2971, %v3635
        %v3668 = vpack.c.b16 %v2973, %v3636
        %v3669 = vpack.c.b16 %v2975, %v3637
        %v3670 = vpack.c.b16 %v2977, %v3638
        %v3671 = vpack.c.b16 %v2979, %v3639
        %v3672 = vpack.c.b16 %v2981, %v3640
        %v3673 = vpack.c.b16 %v2983, %v3641
        %v3674 = vpack.c.b16 %v2985, %v3642
        %v3675 = vpack.c.b16 %v2987, %v3643
        %v3676 = vpack.c.b16 %v2989, %v3644
        %v3677 = vpack.c.b16 %v2991, %v3645
        %v3678 = vpack.c.b16 %v2993, %v3646
        %v3679 = vpack.c.b16 %v2995, %v3647
        %v3680 = vpack.c.b16 %v2997, %v3648
        %v3681 = vpack.c.b16 %v2999, %v3649
        %v3682 = vpack.c.b16 %v3001, %v3650
        %v3683 = vpack.c.b16 %v3003, %v3651
        %v3684 = vpack.c.b16 %v3005, %v3652
        %v3685 = vpack.c.b16 %v3007, %v3653
        %v3686 = vpack.c.b16 %v3009, %v3654
        %v3687 = vpack.c.b16 %v3011, %v3655
        %v3688 = vpack.c.b16 %v3013, %v3656
        %v3689 = vpack.c.b16 %v3015, %v3657
        %v3690 = vpack.c.b16 %v3017, %v3658
        %v3691 = vpack.c.b16 %v3019, %v3659
        %v3692 = vrot.slane %v3660, 1
        %v3693 = vrot.slane %v3148, 1
        %v3694 = vsel %vm2763, %v3692, %v3693
        %v3695 = vrot.slane %v3661, 1
        %v3696 = vrot.slane %v3149, 1
        %v3697 = vsel %vm2763, %v3695, %v3696
        %v3698 = vrot.slane %v3662, 1
        %v3699 = vrot.slane %v3150, 1
        %v3700 = vsel %vm2763, %v3698, %v3699
        %v3701 = vrot.slane %v3663, 1
        %v3702 = vrot.slane %v3151, 1
        %v3703 = vsel %vm2763, %v3701, %v3702
        %v3704 = vrot.slane %v3664, 1
        %v3705 = vrot.slane %v3152, 1
        %v3706 = vsel %vm2763, %v3704, %v3705
        %v3707 = vrot.slane %v3665, 1
        %v3708 = vrot.slane %v3153, 1
        %v3709 = vsel %vm2763, %v3707, %v3708
        %v3710 = vrot.slane %v3666, 1
        %v3711 = vrot.slane %v3154, 1
        %v3712 = vsel %vm2763, %v3710, %v3711
        %v3713 = vrot.slane %v3667, 1
        %v3714 = vrot.slane %v3155, 1
        %v3715 = vsel %vm2763, %v3713, %v3714
        %v3716 = vrot.slane %v3668, 1
        %v3717 = vrot.slane %v3156, 1
        %v3718 = vsel %vm2763, %v3716, %v3717
        %v3719 = vrot.slane %v3669, 1
        %v3720 = vrot.slane %v3157, 1
        %v3721 = vsel %vm2763, %v3719, %v3720
        %v3722 = vrot.slane %v3670, 1
        %v3723 = vrot.slane %v3158, 1
        %v3724 = vsel %vm2763, %v3722, %v3723
        %v3725 = vrot.slane %v3671, 1
        %v3726 = vrot.slane %v3159, 1
        %v3727 = vsel %vm2763, %v3725, %v3726
        %v3728 = vrot.slane %v3672, 1
        %v3729 = vrot.slane %v3160, 1
        %v3730 = vsel %vm2763, %v3728, %v3729
        %v3731 = vrot.slane %v3673, 1
        %v3732 = vrot.slane %v3161, 1
        %v3733 = vsel %vm2763, %v3731, %v3732
        %v3734 = vrot.slane %v3674, 1
        %v3735 = vrot.slane %v3162, 1
        %v3736 = vsel %vm2763, %v3734, %v3735
        %v3737 = vrot.slane %v3675, 1
        %v3738 = vrot.slane %v3163, 1
        %v3739 = vsel %vm2763, %v3737, %v3738
        %v3740 = vrot.slane %v3676, 1
        %v3741 = vrot.slane %v3164, 1
        %v3742 = vsel %vm2763, %v3740, %v3741
        %v3743 = vrot.slane %v3677, 1
        %v3744 = vrot.slane %v3165, 1
        %v3745 = vsel %vm2763, %v3743, %v3744
        %v3746 = vrot.slane %v3678, 1
        %v3747 = vrot.slane %v3166, 1
        %v3748 = vsel %vm2763, %v3746, %v3747
        %v3749 = vrot.slane %v3679, 1
        %v3750 = vrot.slane %v3167, 1
        %v3751 = vsel %vm2763, %v3749, %v3750
        %v3752 = vrot.slane %v3680, 1
        %v3753 = vrot.slane %v3168, 1
        %v3754 = vsel %vm2763, %v3752, %v3753
        %v3755 = vrot.slane %v3681, 1
        %v3756 = vrot.slane %v3169, 1
        %v3757 = vsel %vm2763, %v3755, %v3756
        %v3758 = vrot.slane %v3682, 1
        %v3759 = vrot.slane %v3170, 1
        %v3760 = vsel %vm2763, %v3758, %v3759
        %v3761 = vrot.slane %v3683, 1
        %v3762 = vrot.slane %v3171, 1
        %v3763 = vsel %vm2763, %v3761, %v3762
        %v3764 = vrot.slane %v3684, 1
        %v3765 = vrot.slane %v3172, 1
        %v3766 = vsel %vm2763, %v3764, %v3765
        %v3767 = vrot.slane %v3685, 1
        %v3768 = vrot.slane %v3173, 1
        %v3769 = vsel %vm2763, %v3767, %v3768
        %v3770 = vrot.slane %v3686, 1
        %v3771 = vrot.slane %v3174, 1
        %v3772 = vsel %vm2763, %v3770, %v3771
        %v3773 = vrot.slane %v3687, 1
        %v3774 = vrot.slane %v3175, 1
        %v3775 = vsel %vm2763, %v3773, %v3774
        %v3776 = vrot.slane %v3688, 1
        %v3777 = vrot.slane %v3176, 1
        %v3778 = vsel %vm2763, %v3776, %v3777
        %v3779 = vrot.slane %v3689, 1
        %v3780 = vrot.slane %v3177, 1
        %v3781 = vsel %vm2763, %v3779, %v3780
        %v3782 = vrot.slane %v3690, 1
        %v3783 = vrot.slane %v3178, 1
        %v3784 = vsel %vm2763, %v3782, %v3783
        %v3785 = vrot.slane %v3691, 1
        %v3786 = vrot.slane %v3179, 1
        %v3787 = vsel %vm2763, %v3785, %v3786
        %v3884 = vunpack.c.l.b16 %v1834
        %v3885 = vunpack.c.l.b16 %v1835
        %v3886 = vunpack.c.l.b16 %v1836
        %v3887 = vunpack.c.l.b16 %v1837
        %v3888 = vunpack.c.l.b16 %v1838
        %v3889 = vunpack.c.l.b16 %v1839
        %v3890 = vunpack.c.l.b16 %v1840
        %v3891 = vunpack.c.l.b16 %v1841
        %v3892 = vunpack.c.l.b16 %v1842
        %v3893 = vunpack.c.l.b16 %v1843
        %v3894 = vunpack.c.l.b16 %v1844
        %v3895 = vunpack.c.l.b16 %v1845
        %v3896 = vunpack.c.l.b16 %v1846
        %v3897 = vunpack.c.l.b16 %v1847
        %v3898 = vunpack.c.l.b16 %v1848
        %v3899 = vunpack.c.l.b16 %v1849
        %v3900 = vunpack.c.l.b16 %v1850
        %v3901 = vunpack.c.l.b16 %v1851
        %v3902 = vunpack.c.l.b16 %v1852
        %v3903 = vunpack.c.l.b16 %v1853
        %v3904 = vunpack.c.l.b16 %v1854
        %v3905 = vunpack.c.l.b16 %v1855
        %v3906 = vunpack.c.l.b16 %v1856
        %v3907 = vunpack.c.l.b16 %v1857
        %v3908 = vunpack.c.l.b16 %v1858
        %v3909 = vunpack.c.l.b16 %v1859
        %v3910 = vunpack.c.l.b16 %v1860
        %v3911 = vunpack.c.l.b16 %v1861
        %v3912 = vunpack.c.l.b16 %v1862
        %v3913 = vunpack.c.l.b16 %v1863
        %v3914 = vunpack.c.l.b16 %v1864
        %v3915 = vunpack.c.l.b16 %v1865
        %v3916 = vunpack.c.l.b16 %v1866
        %v3917 = vunpack.c.l.b16 %v1867
        %v3918 = vunpack.c.l.b16 %v1868
        %v3919 = vunpack.c.l.b16 %v1869
        %v3920 = vunpack.c.l.b16 %v1870
        %v3921 = vunpack.c.l.b16 %v1871
        %v3922 = vunpack.c.l.b16 %v1872
        %v3923 = vunpack.c.l.b16 %v1873
        %v3924 = vunpack.c.l.b16 %v1874
        %v3925 = vunpack.c.l.b16 %v1875
        %v3926 = vunpack.c.l.b16 %v1876
        %v3927 = vunpack.c.l.b16 %v1877
        %v3928 = vunpack.c.l.b16 %v1878
        %v3929 = vunpack.c.l.b16 %v1879
        %v3930 = vunpack.c.l.b16 %v1880
        %v3931 = vunpack.c.l.b16 %v1881
        %v3932 = vunpack.c.l.b16 %v1882
        %v3933 = vunpack.c.l.b16 %v1883
        %v3934 = vunpack.c.l.b16 %v1884
        %v3935 = vunpack.c.l.b16 %v1885
        %v3936 = vunpack.c.l.b16 %v1886
        %v3937 = vunpack.c.l.b16 %v1887
        %v3938 = vunpack.c.l.b16 %v1888
        %v3939 = vunpack.c.l.b16 %v1889
        %v3940 = vunpack.c.l.b16 %v1890
        %v3941 = vunpack.c.l.b16 %v1891
        %v3942 = vunpack.c.l.b16 %v1892
        %v3943 = vunpack.c.l.b16 %v1893
        %v3944 = vunpack.c.l.b16 %v1894
        %v3945 = vunpack.c.l.b16 %v1895
        %v3946 = vunpack.c.l.b16 %v1896
        %v3947 = vunpack.c.l.b16 %v1897
        %v3948 = vpack.c.b16 %v3885, %v3884
        %v3949 = vpack.c.b16 %v3887, %v3886
        %v3950 = vpack.c.b16 %v3889, %v3888
        %v3951 = vpack.c.b16 %v3891, %v3890
        %v3952 = vpack.c.b16 %v3893, %v3892
        %v3953 = vpack.c.b16 %v3895, %v3894
        %v3954 = vpack.c.b16 %v3897, %v3896
        %v3955 = vpack.c.b16 %v3899, %v3898
        %v3956 = vpack.c.b16 %v3901, %v3900
        %v3957 = vpack.c.b16 %v3903, %v3902
        %v3958 = vpack.c.b16 %v3905, %v3904
        %v3959 = vpack.c.b16 %v3907, %v3906
        %v3960 = vpack.c.b16 %v3909, %v3908
        %v3961 = vpack.c.b16 %v3911, %v3910
        %v3962 = vpack.c.b16 %v3913, %v3912
        %v3963 = vpack.c.b16 %v3915, %v3914
        %v3964 = vpack.c.b16 %v3917, %v3916
        %v3965 = vpack.c.b16 %v3919, %v3918
        %v3966 = vpack.c.b16 %v3921, %v3920
        %v3967 = vpack.c.b16 %v3923, %v3922
        %v3968 = vpack.c.b16 %v3925, %v3924
        %v3969 = vpack.c.b16 %v3927, %v3926
        %v3970 = vpack.c.b16 %v3929, %v3928
        %v3971 = vpack.c.b16 %v3931, %v3930
        %v3972 = vpack.c.b16 %v3933, %v3932
        %v3973 = vpack.c.b16 %v3935, %v3934
        %v3974 = vpack.c.b16 %v3937, %v3936
        %v3975 = vpack.c.b16 %v3939, %v3938
        %v3976 = vpack.c.b16 %v3941, %v3940
        %v3977 = vpack.c.b16 %v3943, %v3942
        %v3978 = vpack.c.b16 %v3945, %v3944
        %v3979 = vpack.c.b16 %v3947, %v3946
        %v4044 = vunpack.c.l.b16 %v1898
        %v4045 = vunpack.c.l.b16 %v1899
        %v4046 = vunpack.c.l.b16 %v1900
        %v4047 = vunpack.c.l.b16 %v1901
        %v4048 = vunpack.c.l.b16 %v1902
        %v4049 = vunpack.c.l.b16 %v1903
        %v4050 = vunpack.c.l.b16 %v1904
        %v4051 = vunpack.c.l.b16 %v1905
        %v4052 = vunpack.c.l.b16 %v1906
        %v4053 = vunpack.c.l.b16 %v1907
        %v4054 = vunpack.c.l.b16 %v1908
        %v4055 = vunpack.c.l.b16 %v1909
        %v4056 = vunpack.c.l.b16 %v1910
        %v4057 = vunpack.c.l.b16 %v1911
        %v4058 = vunpack.c.l.b16 %v1912
        %v4059 = vunpack.c.l.b16 %v1913
        %v4060 = vunpack.c.l.b16 %v1914
        %v4061 = vunpack.c.l.b16 %v1915
        %v4062 = vunpack.c.l.b16 %v1916
        %v4063 = vunpack.c.l.b16 %v1917
        %v4064 = vunpack.c.l.b16 %v1918
        %v4065 = vunpack.c.l.b16 %v1919
        %v4066 = vunpack.c.l.b16 %v1920
        %v4067 = vunpack.c.l.b16 %v1921
        %v4068 = vunpack.c.l.b16 %v1922
        %v4069 = vunpack.c.l.b16 %v1923
        %v4070 = vunpack.c.l.b16 %v1924
        %v4071 = vunpack.c.l.b16 %v1925
        %v4072 = vunpack.c.l.b16 %v1926
        %v4073 = vunpack.c.l.b16 %v1927
        %v4074 = vunpack.c.l.b16 %v1928
        %v4075 = vunpack.c.l.b16 %v1929
        %v4076 = vpack.c.b16 %v4044, %v4044
        %v4077 = vpack.c.b16 %v4045, %v4045
        %v4078 = vpack.c.b16 %v4046, %v4046
        %v4079 = vpack.c.b16 %v4047, %v4047
        %v4080 = vpack.c.b16 %v4048, %v4048
        %v4081 = vpack.c.b16 %v4049, %v4049
        %v4082 = vpack.c.b16 %v4050, %v4050
        %v4083 = vpack.c.b16 %v4051, %v4051
        %v4084 = vpack.c.b16 %v4052, %v4052
        %v4085 = vpack.c.b16 %v4053, %v4053
        %v4086 = vpack.c.b16 %v4054, %v4054
        %v4087 = vpack.c.b16 %v4055, %v4055
        %v4088 = vpack.c.b16 %v4056, %v4056
        %v4089 = vpack.c.b16 %v4057, %v4057
        %v4090 = vpack.c.b16 %v4058, %v4058
        %v4091 = vpack.c.b16 %v4059, %v4059
        %v4092 = vpack.c.b16 %v4060, %v4060
        %v4093 = vpack.c.b16 %v4061, %v4061
        %v4094 = vpack.c.b16 %v4062, %v4062
        %v4095 = vpack.c.b16 %v4063, %v4063
        %v4096 = vpack.c.b16 %v4064, %v4064
        %v4097 = vpack.c.b16 %v4065, %v4065
        %v4098 = vpack.c.b16 %v4066, %v4066
        %v4099 = vpack.c.b16 %v4067, %v4067
        %v4100 = vpack.c.b16 %v4068, %v4068
        %v4101 = vpack.c.b16 %v4069, %v4069
        %v4102 = vpack.c.b16 %v4070, %v4070
        %v4103 = vpack.c.b16 %v4071, %v4071
        %v4104 = vpack.c.b16 %v4072, %v4072
        %v4105 = vpack.c.b16 %v4073, %v4073
        %v4106 = vpack.c.b16 %v4074, %v4074
        %v4107 = vpack.c.b16 %v4075, %v4075
        %v4109 = vshrl.u32 %v3948, 16
        %v4111 = vshll.u32 %v3948, 16
        %v4113 = vrot.slane %v4111, 1
        %v4114 = vor.u32 %v4109, %v4113
        %v4116 = vshll.u32 %v4076, 16
        %v4118 = vrot.slane %v4116, 1
        %v4119 = vsel %vm2250, %v4114, %v4118
        %v4121 = vshrl.u32 %v3949, 16
        %v4123 = vshll.u32 %v3949, 16
        %v4125 = vrot.slane %v4123, 1
        %v4126 = vor.u32 %v4121, %v4125
        %v4128 = vshll.u32 %v4077, 16
        %v4130 = vrot.slane %v4128, 1
        %v4131 = vsel %vm2250, %v4126, %v4130
        %v4133 = vshrl.u32 %v3950, 16
        %v4135 = vshll.u32 %v3950, 16
        %v4137 = vrot.slane %v4135, 1
        %v4138 = vor.u32 %v4133, %v4137
        %v4140 = vshll.u32 %v4078, 16
        %v4142 = vrot.slane %v4140, 1
        %v4143 = vsel %vm2250, %v4138, %v4142
        %v4145 = vshrl.u32 %v3951, 16
        %v4147 = vshll.u32 %v3951, 16
        %v4149 = vrot.slane %v4147, 1
        %v4150 = vor.u32 %v4145, %v4149
        %v4152 = vshll.u32 %v4079, 16
        %v4154 = vrot.slane %v4152, 1
        %v4155 = vsel %vm2250, %v4150, %v4154
        %v4157 = vshrl.u32 %v3952, 16
        %v4159 = vshll.u32 %v3952, 16
        %v4161 = vrot.slane %v4159, 1
        %v4162 = vor.u32 %v4157, %v4161
        %v4164 = vshll.u32 %v4080, 16
        %v4166 = vrot.slane %v4164, 1
        %v4167 = vsel %vm2250, %v4162, %v4166
        %v4169 = vshrl.u32 %v3953, 16
        %v4171 = vshll.u32 %v3953, 16
        %v4173 = vrot.slane %v4171, 1
        %v4174 = vor.u32 %v4169, %v4173
        %v4176 = vshll.u32 %v4081, 16
        %v4178 = vrot.slane %v4176, 1
        %v4179 = vsel %vm2250, %v4174, %v4178
        %v4181 = vshrl.u32 %v3954, 16
        %v4183 = vshll.u32 %v3954, 16
        %v4185 = vrot.slane %v4183, 1
        %v4186 = vor.u32 %v4181, %v4185
        %v4188 = vshll.u32 %v4082, 16
        %v4190 = vrot.slane %v4188, 1
        %v4191 = vsel %vm2250, %v4186, %v4190
        %v4193 = vshrl.u32 %v3955, 16
        %v4195 = vshll.u32 %v3955, 16
        %v4197 = vrot.slane %v4195, 1
        %v4198 = vor.u32 %v4193, %v4197
        %v4200 = vshll.u32 %v4083, 16
        %v4202 = vrot.slane %v4200, 1
        %v4203 = vsel %vm2250, %v4198, %v4202
        %v4205 = vshrl.u32 %v3956, 16
        %v4207 = vshll.u32 %v3956, 16
        %v4209 = vrot.slane %v4207, 1
        %v4210 = vor.u32 %v4205, %v4209
        %v4212 = vshll.u32 %v4084, 16
        %v4214 = vrot.slane %v4212, 1
        %v4215 = vsel %vm2250, %v4210, %v4214
        %v4217 = vshrl.u32 %v3957, 16
        %v4219 = vshll.u32 %v3957, 16
        %v4221 = vrot.slane %v4219, 1
        %v4222 = vor.u32 %v4217, %v4221
        %v4224 = vshll.u32 %v4085, 16
        %v4226 = vrot.slane %v4224, 1
        %v4227 = vsel %vm2250, %v4222, %v4226
        %v4229 = vshrl.u32 %v3958, 16
        %v4231 = vshll.u32 %v3958, 16
        %v4233 = vrot.slane %v4231, 1
        %v4234 = vor.u32 %v4229, %v4233
        %v4236 = vshll.u32 %v4086, 16
        %v4238 = vrot.slane %v4236, 1
        %v4239 = vsel %vm2250, %v4234, %v4238
        %v4241 = vshrl.u32 %v3959, 16
        %v4243 = vshll.u32 %v3959, 16
        %v4245 = vrot.slane %v4243, 1
        %v4246 = vor.u32 %v4241, %v4245
        %v4248 = vshll.u32 %v4087, 16
        %v4250 = vrot.slane %v4248, 1
        %v4251 = vsel %vm2250, %v4246, %v4250
        %v4253 = vshrl.u32 %v3960, 16
        %v4255 = vshll.u32 %v3960, 16
        %v4257 = vrot.slane %v4255, 1
        %v4258 = vor.u32 %v4253, %v4257
        %v4260 = vshll.u32 %v4088, 16
        %v4262 = vrot.slane %v4260, 1
        %v4263 = vsel %vm2250, %v4258, %v4262
        %v4265 = vshrl.u32 %v3961, 16
        %v4267 = vshll.u32 %v3961, 16
        %v4269 = vrot.slane %v4267, 1
        %v4270 = vor.u32 %v4265, %v4269
        %v4272 = vshll.u32 %v4089, 16
        %v4274 = vrot.slane %v4272, 1
        %v4275 = vsel %vm2250, %v4270, %v4274
        %v4277 = vshrl.u32 %v3962, 16
        %v4279 = vshll.u32 %v3962, 16
        %v4281 = vrot.slane %v4279, 1
        %v4282 = vor.u32 %v4277, %v4281
        %v4284 = vshll.u32 %v4090, 16
        %v4286 = vrot.slane %v4284, 1
        %v4287 = vsel %vm2250, %v4282, %v4286
        %v4289 = vshrl.u32 %v3963, 16
        %v4291 = vshll.u32 %v3963, 16
        %v4293 = vrot.slane %v4291, 1
        %v4294 = vor.u32 %v4289, %v4293
        %v4296 = vshll.u32 %v4091, 16
        %v4298 = vrot.slane %v4296, 1
        %v4299 = vsel %vm2250, %v4294, %v4298
        %v4301 = vshrl.u32 %v3964, 16
        %v4303 = vshll.u32 %v3964, 16
        %v4305 = vrot.slane %v4303, 1
        %v4306 = vor.u32 %v4301, %v4305
        %v4308 = vshll.u32 %v4092, 16
        %v4310 = vrot.slane %v4308, 1
        %v4311 = vsel %vm2250, %v4306, %v4310
        %v4313 = vshrl.u32 %v3965, 16
        %v4315 = vshll.u32 %v3965, 16
        %v4317 = vrot.slane %v4315, 1
        %v4318 = vor.u32 %v4313, %v4317
        %v4320 = vshll.u32 %v4093, 16
        %v4322 = vrot.slane %v4320, 1
        %v4323 = vsel %vm2250, %v4318, %v4322
        %v4325 = vshrl.u32 %v3966, 16
        %v4327 = vshll.u32 %v3966, 16
        %v4329 = vrot.slane %v4327, 1
        %v4330 = vor.u32 %v4325, %v4329
        %v4332 = vshll.u32 %v4094, 16
        %v4334 = vrot.slane %v4332, 1
        %v4335 = vsel %vm2250, %v4330, %v4334
        %v4337 = vshrl.u32 %v3967, 16
        %v4339 = vshll.u32 %v3967, 16
        %v4341 = vrot.slane %v4339, 1
        %v4342 = vor.u32 %v4337, %v4341
        %v4344 = vshll.u32 %v4095, 16
        %v4346 = vrot.slane %v4344, 1
        %v4347 = vsel %vm2250, %v4342, %v4346
        %v4349 = vshrl.u32 %v3968, 16
        %v4351 = vshll.u32 %v3968, 16
        %v4353 = vrot.slane %v4351, 1
        %v4354 = vor.u32 %v4349, %v4353
        %v4356 = vshll.u32 %v4096, 16
        %v4358 = vrot.slane %v4356, 1
        %v4359 = vsel %vm2250, %v4354, %v4358
        %v4361 = vshrl.u32 %v3969, 16
        %v4363 = vshll.u32 %v3969, 16
        %v4365 = vrot.slane %v4363, 1
        %v4366 = vor.u32 %v4361, %v4365
        %v4368 = vshll.u32 %v4097, 16
        %v4370 = vrot.slane %v4368, 1
        %v4371 = vsel %vm2250, %v4366, %v4370
        %v4373 = vshrl.u32 %v3970, 16
        %v4375 = vshll.u32 %v3970, 16
        %v4377 = vrot.slane %v4375, 1
        %v4378 = vor.u32 %v4373, %v4377
        %v4380 = vshll.u32 %v4098, 16
        %v4382 = vrot.slane %v4380, 1
        %v4383 = vsel %vm2250, %v4378, %v4382
        %v4385 = vshrl.u32 %v3971, 16
        %v4387 = vshll.u32 %v3971, 16
        %v4389 = vrot.slane %v4387, 1
        %v4390 = vor.u32 %v4385, %v4389
        %v4392 = vshll.u32 %v4099, 16
        %v4394 = vrot.slane %v4392, 1
        %v4395 = vsel %vm2250, %v4390, %v4394
        %v4397 = vshrl.u32 %v3972, 16
        %v4399 = vshll.u32 %v3972, 16
        %v4401 = vrot.slane %v4399, 1
        %v4402 = vor.u32 %v4397, %v4401
        %v4404 = vshll.u32 %v4100, 16
        %v4406 = vrot.slane %v4404, 1
        %v4407 = vsel %vm2250, %v4402, %v4406
        %v4409 = vshrl.u32 %v3973, 16
        %v4411 = vshll.u32 %v3973, 16
        %v4413 = vrot.slane %v4411, 1
        %v4414 = vor.u32 %v4409, %v4413
        %v4416 = vshll.u32 %v4101, 16
        %v4418 = vrot.slane %v4416, 1
        %v4419 = vsel %vm2250, %v4414, %v4418
        %v4421 = vshrl.u32 %v3974, 16
        %v4423 = vshll.u32 %v3974, 16
        %v4425 = vrot.slane %v4423, 1
        %v4426 = vor.u32 %v4421, %v4425
        %v4428 = vshll.u32 %v4102, 16
        %v4430 = vrot.slane %v4428, 1
        %v4431 = vsel %vm2250, %v4426, %v4430
        %v4433 = vshrl.u32 %v3975, 16
        %v4435 = vshll.u32 %v3975, 16
        %v4437 = vrot.slane %v4435, 1
        %v4438 = vor.u32 %v4433, %v4437
        %v4440 = vshll.u32 %v4103, 16
        %v4442 = vrot.slane %v4440, 1
        %v4443 = vsel %vm2250, %v4438, %v4442
        %v4445 = vshrl.u32 %v3976, 16
        %v4447 = vshll.u32 %v3976, 16
        %v4449 = vrot.slane %v4447, 1
        %v4450 = vor.u32 %v4445, %v4449
        %v4452 = vshll.u32 %v4104, 16
        %v4454 = vrot.slane %v4452, 1
        %v4455 = vsel %vm2250, %v4450, %v4454
        %v4457 = vshrl.u32 %v3977, 16
        %v4459 = vshll.u32 %v3977, 16
        %v4461 = vrot.slane %v4459, 1
        %v4462 = vor.u32 %v4457, %v4461
        %v4464 = vshll.u32 %v4105, 16
        %v4466 = vrot.slane %v4464, 1
        %v4467 = vsel %vm2250, %v4462, %v4466
        %v4469 = vshrl.u32 %v3978, 16
        %v4471 = vshll.u32 %v3978, 16
        %v4473 = vrot.slane %v4471, 1
        %v4474 = vor.u32 %v4469, %v4473
        %v4476 = vshll.u32 %v4106, 16
        %v4478 = vrot.slane %v4476, 1
        %v4479 = vsel %vm2250, %v4474, %v4478
        %v4481 = vshrl.u32 %v3979, 16
        %v4483 = vshll.u32 %v3979, 16
        %v4485 = vrot.slane %v4483, 1
        %v4486 = vor.u32 %v4481, %v4485
        %v4488 = vshll.u32 %v4107, 16
        %v4490 = vrot.slane %v4488, 1
        %v4491 = vsel %vm2250, %v4486, %v4490
        %v4556 = vunpack.c.l.b16 %v1930
        %v4557 = vunpack.c.l.b16 %v1931
        %v4558 = vunpack.c.l.b16 %v1932
        %v4559 = vunpack.c.l.b16 %v1933
        %v4560 = vunpack.c.l.b16 %v1934
        %v4561 = vunpack.c.l.b16 %v1935
        %v4562 = vunpack.c.l.b16 %v1936
        %v4563 = vunpack.c.l.b16 %v1937
        %v4564 = vunpack.c.l.b16 %v1938
        %v4565 = vunpack.c.l.b16 %v1939
        %v4566 = vunpack.c.l.b16 %v1940
        %v4567 = vunpack.c.l.b16 %v1941
        %v4568 = vunpack.c.l.b16 %v1942
        %v4569 = vunpack.c.l.b16 %v1943
        %v4570 = vunpack.c.l.b16 %v1944
        %v4571 = vunpack.c.l.b16 %v1945
        %v4572 = vunpack.c.l.b16 %v1946
        %v4573 = vunpack.c.l.b16 %v1947
        %v4574 = vunpack.c.l.b16 %v1948
        %v4575 = vunpack.c.l.b16 %v1949
        %v4576 = vunpack.c.l.b16 %v1950
        %v4577 = vunpack.c.l.b16 %v1951
        %v4578 = vunpack.c.l.b16 %v1952
        %v4579 = vunpack.c.l.b16 %v1953
        %v4580 = vunpack.c.l.b16 %v1954
        %v4581 = vunpack.c.l.b16 %v1955
        %v4582 = vunpack.c.l.b16 %v1956
        %v4583 = vunpack.c.l.b16 %v1957
        %v4584 = vunpack.c.l.b16 %v1958
        %v4585 = vunpack.c.l.b16 %v1959
        %v4586 = vunpack.c.l.b16 %v1960
        %v4587 = vunpack.c.l.b16 %v1961
        %v4588 = vpack.c.b16 %v3885, %v4556
        %v4589 = vpack.c.b16 %v3887, %v4557
        %v4590 = vpack.c.b16 %v3889, %v4558
        %v4591 = vpack.c.b16 %v3891, %v4559
        %v4592 = vpack.c.b16 %v3893, %v4560
        %v4593 = vpack.c.b16 %v3895, %v4561
        %v4594 = vpack.c.b16 %v3897, %v4562
        %v4595 = vpack.c.b16 %v3899, %v4563
        %v4596 = vpack.c.b16 %v3901, %v4564
        %v4597 = vpack.c.b16 %v3903, %v4565
        %v4598 = vpack.c.b16 %v3905, %v4566
        %v4599 = vpack.c.b16 %v3907, %v4567
        %v4600 = vpack.c.b16 %v3909, %v4568
        %v4601 = vpack.c.b16 %v3911, %v4569
        %v4602 = vpack.c.b16 %v3913, %v4570
        %v4603 = vpack.c.b16 %v3915, %v4571
        %v4604 = vpack.c.b16 %v3917, %v4572
        %v4605 = vpack.c.b16 %v3919, %v4573
        %v4606 = vpack.c.b16 %v3921, %v4574
        %v4607 = vpack.c.b16 %v3923, %v4575
        %v4608 = vpack.c.b16 %v3925, %v4576
        %v4609 = vpack.c.b16 %v3927, %v4577
        %v4610 = vpack.c.b16 %v3929, %v4578
        %v4611 = vpack.c.b16 %v3931, %v4579
        %v4612 = vpack.c.b16 %v3933, %v4580
        %v4613 = vpack.c.b16 %v3935, %v4581
        %v4614 = vpack.c.b16 %v3937, %v4582
        %v4615 = vpack.c.b16 %v3939, %v4583
        %v4616 = vpack.c.b16 %v3941, %v4584
        %v4617 = vpack.c.b16 %v3943, %v4585
        %v4618 = vpack.c.b16 %v3945, %v4586
        %v4619 = vpack.c.b16 %v3947, %v4587
        %v4620 = vrot.slane %v4588, 1
        %v4621 = vrot.slane %v4076, 1
        %v4622 = vsel %vm2763, %v4620, %v4621
        %v4623 = vrot.slane %v4589, 1
        %v4624 = vrot.slane %v4077, 1
        %v4625 = vsel %vm2763, %v4623, %v4624
        %v4626 = vrot.slane %v4590, 1
        %v4627 = vrot.slane %v4078, 1
        %v4628 = vsel %vm2763, %v4626, %v4627
        %v4629 = vrot.slane %v4591, 1
        %v4630 = vrot.slane %v4079, 1
        %v4631 = vsel %vm2763, %v4629, %v4630
        %v4632 = vrot.slane %v4592, 1
        %v4633 = vrot.slane %v4080, 1
        %v4634 = vsel %vm2763, %v4632, %v4633
        %v4635 = vrot.slane %v4593, 1
        %v4636 = vrot.slane %v4081, 1
        %v4637 = vsel %vm2763, %v4635, %v4636
        %v4638 = vrot.slane %v4594, 1
        %v4639 = vrot.slane %v4082, 1
        %v4640 = vsel %vm2763, %v4638, %v4639
        %v4641 = vrot.slane %v4595, 1
        %v4642 = vrot.slane %v4083, 1
        %v4643 = vsel %vm2763, %v4641, %v4642
        %v4644 = vrot.slane %v4596, 1
        %v4645 = vrot.slane %v4084, 1
        %v4646 = vsel %vm2763, %v4644, %v4645
        %v4647 = vrot.slane %v4597, 1
        %v4648 = vrot.slane %v4085, 1
        %v4649 = vsel %vm2763, %v4647, %v4648
        %v4650 = vrot.slane %v4598, 1
        %v4651 = vrot.slane %v4086, 1
        %v4652 = vsel %vm2763, %v4650, %v4651
        %v4653 = vrot.slane %v4599, 1
        %v4654 = vrot.slane %v4087, 1
        %v4655 = vsel %vm2763, %v4653, %v4654
        %v4656 = vrot.slane %v4600, 1
        %v4657 = vrot.slane %v4088, 1
        %v4658 = vsel %vm2763, %v4656, %v4657
        %v4659 = vrot.slane %v4601, 1
        %v4660 = vrot.slane %v4089, 1
        %v4661 = vsel %vm2763, %v4659, %v4660
        %v4662 = vrot.slane %v4602, 1
        %v4663 = vrot.slane %v4090, 1
        %v4664 = vsel %vm2763, %v4662, %v4663
        %v4665 = vrot.slane %v4603, 1
        %v4666 = vrot.slane %v4091, 1
        %v4667 = vsel %vm2763, %v4665, %v4666
        %v4668 = vrot.slane %v4604, 1
        %v4669 = vrot.slane %v4092, 1
        %v4670 = vsel %vm2763, %v4668, %v4669
        %v4671 = vrot.slane %v4605, 1
        %v4672 = vrot.slane %v4093, 1
        %v4673 = vsel %vm2763, %v4671, %v4672
        %v4674 = vrot.slane %v4606, 1
        %v4675 = vrot.slane %v4094, 1
        %v4676 = vsel %vm2763, %v4674, %v4675
        %v4677 = vrot.slane %v4607, 1
        %v4678 = vrot.slane %v4095, 1
        %v4679 = vsel %vm2763, %v4677, %v4678
        %v4680 = vrot.slane %v4608, 1
        %v4681 = vrot.slane %v4096, 1
        %v4682 = vsel %vm2763, %v4680, %v4681
        %v4683 = vrot.slane %v4609, 1
        %v4684 = vrot.slane %v4097, 1
        %v4685 = vsel %vm2763, %v4683, %v4684
        %v4686 = vrot.slane %v4610, 1
        %v4687 = vrot.slane %v4098, 1
        %v4688 = vsel %vm2763, %v4686, %v4687
        %v4689 = vrot.slane %v4611, 1
        %v4690 = vrot.slane %v4099, 1
        %v4691 = vsel %vm2763, %v4689, %v4690
        %v4692 = vrot.slane %v4612, 1
        %v4693 = vrot.slane %v4100, 1
        %v4694 = vsel %vm2763, %v4692, %v4693
        %v4695 = vrot.slane %v4613, 1
        %v4696 = vrot.slane %v4101, 1
        %v4697 = vsel %vm2763, %v4695, %v4696
        %v4698 = vrot.slane %v4614, 1
        %v4699 = vrot.slane %v4102, 1
        %v4700 = vsel %vm2763, %v4698, %v4699
        %v4701 = vrot.slane %v4615, 1
        %v4702 = vrot.slane %v4103, 1
        %v4703 = vsel %vm2763, %v4701, %v4702
        %v4704 = vrot.slane %v4616, 1
        %v4705 = vrot.slane %v4104, 1
        %v4706 = vsel %vm2763, %v4704, %v4705
        %v4707 = vrot.slane %v4617, 1
        %v4708 = vrot.slane %v4105, 1
        %v4709 = vsel %vm2763, %v4707, %v4708
        %v4710 = vrot.slane %v4618, 1
        %v4711 = vrot.slane %v4106, 1
        %v4712 = vsel %vm2763, %v4710, %v4711
        %v4713 = vrot.slane %v4619, 1
        %v4714 = vrot.slane %v4107, 1
        %v4715 = vsel %vm2763, %v4713, %v4714
        %v4748 = vld [vmem:[#allocation7] sm:$0xf]
        %v4749 = vld [vmem:[#allocation7 + $0x4] sm:$0xf]
        %v4750 = vld [vmem:[#allocation7 + $0x8] sm:$0xf]
        %v4751 = vld [vmem:[#allocation7 + $0xc] sm:$0xf]
        %v4752 = vld [vmem:[#allocation7 + $0x10] sm:$0xf]
        %v4753 = vld [vmem:[#allocation7 + $0x14] sm:$0xf]
        %v4754 = vld [vmem:[#allocation7 + $0x18] sm:$0xf]
        %v4755 = vld [vmem:[#allocation7 + $0x1c] sm:$0xf]
        %v4756 = vld [vmem:[#allocation7 + $0x20] sm:$0xf]
        %v4757 = vld [vmem:[#allocation7 + $0x24] sm:$0xf]
        %v4758 = vld [vmem:[#allocation7 + $0x28] sm:$0xf]
        %v4759 = vld [vmem:[#allocation7 + $0x2c] sm:$0xf]
        %v4760 = vld [vmem:[#allocation7 + $0x30] sm:$0xf]
        %v4761 = vld [vmem:[#allocation7 + $0x34] sm:$0xf]
        %v4762 = vld [vmem:[#allocation7 + $0x38] sm:$0xf]
        %v4763 = vld [vmem:[#allocation7 + $0x3c] sm:$0xf]
        %v4764 = vld [vmem:[#allocation7 + $0x40] sm:$0xf]
        %v4765 = vld [vmem:[#allocation7 + $0x44] sm:$0xf]
        %v4766 = vld [vmem:[#allocation7 + $0x48] sm:$0xf]
        %v4767 = vld [vmem:[#allocation7 + $0x4c] sm:$0xf]
        %v4768 = vld [vmem:[#allocation7 + $0x50] sm:$0xf]
        %v4769 = vld [vmem:[#allocation7 + $0x54] sm:$0xf]
        %v4770 = vld [vmem:[#allocation7 + $0x58] sm:$0xf]
        %v4771 = vld [vmem:[#allocation7 + $0x5c] sm:$0xf]
        %v4772 = vld [vmem:[#allocation7 + $0x60] sm:$0xf]
        %v4773 = vld [vmem:[#allocation7 + $0x64] sm:$0xf]
        %v4774 = vld [vmem:[#allocation7 + $0x68] sm:$0xf]
        %v4775 = vld [vmem:[#allocation7 + $0x6c] sm:$0xf]
        %v4776 = vld [vmem:[#allocation7 + $0x70] sm:$0xf]
        %v4777 = vld [vmem:[#allocation7 + $0x74] sm:$0xf]
        %v4778 = vld [vmem:[#allocation7 + $0x78] sm:$0xf]
        %v4779 = vld [vmem:[#allocation7 + $0x7c] sm:$0xf]
        %v4780 = vld [vmem:[#allocation7 + $0x80] sm:$0xf]
        %v4781 = vld [vmem:[#allocation7 + $0x84] sm:$0xf]
        %v4782 = vld [vmem:[#allocation7 + $0x88] sm:$0xf]
        %v4783 = vld [vmem:[#allocation7 + $0x8c] sm:$0xf]
        %v4784 = vld [vmem:[#allocation7 + $0x90] sm:$0xf]
        %v4785 = vld [vmem:[#allocation7 + $0x94] sm:$0xf]
        %v4786 = vld [vmem:[#allocation7 + $0x98] sm:$0xf]
        %v4787 = vld [vmem:[#allocation7 + $0x9c] sm:$0xf]
        %v4788 = vld [vmem:[#allocation7 + $0xa0] sm:$0xf]
        %v4789 = vld [vmem:[#allocation7 + $0xa4] sm:$0xf]
        %v4790 = vld [vmem:[#allocation7 + $0xa8] sm:$0xf]
        %v4791 = vld [vmem:[#allocation7 + $0xac] sm:$0xf]
        %v4792 = vld [vmem:[#allocation7 + $0xb0] sm:$0xf]
        %v4793 = vld [vmem:[#allocation7 + $0xb4] sm:$0xf]
        %v4794 = vld [vmem:[#allocation7 + $0xb8] sm:$0xf]
        %v4795 = vld [vmem:[#allocation7 + $0xbc] sm:$0xf]
        %v4796 = vld [vmem:[#allocation7 + $0xc0] sm:$0xf]
        %v4797 = vld [vmem:[#allocation7 + $0xc4] sm:$0xf]
        %v4798 = vld [vmem:[#allocation7 + $0xc8] sm:$0xf]
        %v4799 = vld [vmem:[#allocation7 + $0xcc] sm:$0xf]
        %v4800 = vld [vmem:[#allocation7 + $0xd0] sm:$0xf]
        %v4801 = vld [vmem:[#allocation7 + $0xd4] sm:$0xf]
        %v4802 = vld [vmem:[#allocation7 + $0xd8] sm:$0xf]
        %v4803 = vld [vmem:[#allocation7 + $0xdc] sm:$0xf]
        %v4804 = vld [vmem:[#allocation7 + $0xe0] sm:$0xf]
        %v4805 = vld [vmem:[#allocation7 + $0xe4] sm:$0xf]
        %v4806 = vld [vmem:[#allocation7 + $0xe8] sm:$0xf]
        %v4807 = vld [vmem:[#allocation7 + $0xec] sm:$0xf]
        %v4808 = vld [vmem:[#allocation7 + $0xf0] sm:$0xf]
        %v4809 = vld [vmem:[#allocation7 + $0xf4] sm:$0xf]
        %v4810 = vld [vmem:[#allocation7 + $0xf8] sm:$0xf]
        %v4811 = vld [vmem:[#allocation7 + $0xfc] sm:$0xf]
        %v4812 = vld [vmem:[#allocation7 + $0x100] sm:$0xf]
        %v4813 = vld [vmem:[#allocation7 + $0x104] sm:$0xf]
        %v4814 = vld [vmem:[#allocation7 + $0x108] sm:$0xf]
        %v4815 = vld [vmem:[#allocation7 + $0x10c] sm:$0xf]
        %v4816 = vld [vmem:[#allocation7 + $0x110] sm:$0xf]
        %v4817 = vld [vmem:[#allocation7 + $0x114] sm:$0xf]
        %v4818 = vld [vmem:[#allocation7 + $0x118] sm:$0xf]
        %v4819 = vld [vmem:[#allocation7 + $0x11c] sm:$0xf]
        %v4820 = vld [vmem:[#allocation7 + $0x120] sm:$0xf]
        %v4821 = vld [vmem:[#allocation7 + $0x124] sm:$0xf]
        %v4822 = vld [vmem:[#allocation7 + $0x128] sm:$0xf]
        %v4823 = vld [vmem:[#allocation7 + $0x12c] sm:$0xf]
        %v4824 = vld [vmem:[#allocation7 + $0x130] sm:$0xf]
        %v4825 = vld [vmem:[#allocation7 + $0x134] sm:$0xf]
        %v4826 = vld [vmem:[#allocation7 + $0x138] sm:$0xf]
        %v4827 = vld [vmem:[#allocation7 + $0x13c] sm:$0xf]
        %v4828 = vld [vmem:[#allocation7 + $0x140] sm:$0xf]
        %v4829 = vld [vmem:[#allocation7 + $0x144] sm:$0xf]
        %v4830 = vld [vmem:[#allocation7 + $0x148] sm:$0xf]
        %v4831 = vld [vmem:[#allocation7 + $0x14c] sm:$0xf]
        %v4832 = vld [vmem:[#allocation7 + $0x150] sm:$0xf]
        %v4833 = vld [vmem:[#allocation7 + $0x154] sm:$0xf]
        %v4834 = vld [vmem:[#allocation7 + $0x158] sm:$0xf]
        %v4835 = vld [vmem:[#allocation7 + $0x15c] sm:$0xf]
        %v4836 = vld [vmem:[#allocation7 + $0x160] sm:$0xf]
        %v4837 = vld [vmem:[#allocation7 + $0x164] sm:$0xf]
        %v4838 = vld [vmem:[#allocation7 + $0x168] sm:$0xf]
        %v4839 = vld [vmem:[#allocation7 + $0x16c] sm:$0xf]
        %v4840 = vld [vmem:[#allocation7 + $0x170] sm:$0xf]
        %v4841 = vld [vmem:[#allocation7 + $0x174] sm:$0xf]
        %v4842 = vld [vmem:[#allocation7 + $0x178] sm:$0xf]
        %v4843 = vld [vmem:[#allocation7 + $0x17c] sm:$0xf]
        %v4844 = vld [vmem:[#allocation7 + $0x180] sm:$0xf]
        %v4845 = vld [vmem:[#allocation7 + $0x184] sm:$0xf]
        %v4846 = vld [vmem:[#allocation7 + $0x188] sm:$0xf]
        %v4847 = vld [vmem:[#allocation7 + $0x18c] sm:$0xf]
        %v4848 = vld [vmem:[#allocation7 + $0x190] sm:$0xf]
        %v4849 = vld [vmem:[#allocation7 + $0x194] sm:$0xf]
        %v4850 = vld [vmem:[#allocation7 + $0x198] sm:$0xf]
        %v4851 = vld [vmem:[#allocation7 + $0x19c] sm:$0xf]
        %v4852 = vld [vmem:[#allocation7 + $0x1a0] sm:$0xf]
        %v4853 = vld [vmem:[#allocation7 + $0x1a4] sm:$0xf]
        %v4854 = vld [vmem:[#allocation7 + $0x1a8] sm:$0xf]
        %v4855 = vld [vmem:[#allocation7 + $0x1ac] sm:$0xf]
        %v4856 = vld [vmem:[#allocation7 + $0x1b0] sm:$0xf]
        %v4857 = vld [vmem:[#allocation7 + $0x1b4] sm:$0xf]
        %v4858 = vld [vmem:[#allocation7 + $0x1b8] sm:$0xf]
        %v4859 = vld [vmem:[#allocation7 + $0x1bc] sm:$0xf]
        %v4860 = vld [vmem:[#allocation7 + $0x1c0] sm:$0xf]
        %v4861 = vld [vmem:[#allocation7 + $0x1c4] sm:$0xf]
        %v4862 = vld [vmem:[#allocation7 + $0x1c8] sm:$0xf]
        %v4863 = vld [vmem:[#allocation7 + $0x1cc] sm:$0xf]
        %v4864 = vld [vmem:[#allocation7 + $0x1d0] sm:$0xf]
        %v4865 = vld [vmem:[#allocation7 + $0x1d4] sm:$0xf]
        %v4866 = vld [vmem:[#allocation7 + $0x1d8] sm:$0xf]
        %v4867 = vld [vmem:[#allocation7 + $0x1dc] sm:$0xf]
        %v4868 = vld [vmem:[#allocation7 + $0x1e0] sm:$0xf]
        %v4869 = vld [vmem:[#allocation7 + $0x1e4] sm:$0xf]
        %v4870 = vld [vmem:[#allocation7 + $0x1e8] sm:$0xf]
        %v4871 = vld [vmem:[#allocation7 + $0x1ec] sm:$0xf]
        %v4872 = vld [vmem:[#allocation7 + $0x1f0] sm:$0xf]
        %v4873 = vld [vmem:[#allocation7 + $0x1f4] sm:$0xf]
        %v4874 = vld [vmem:[#allocation7 + $0x1f8] sm:$0xf]
        %v4875 = vld [vmem:[#allocation7 + $0x1fc] sm:$0xf]
        %v4876 = vld [vmem:[#allocation7 + $0x200] sm:$0xf]
        %v4877 = vld [vmem:[#allocation7 + $0x204] sm:$0xf]
        %v4878 = vld [vmem:[#allocation7 + $0x208] sm:$0xf]
        %v4879 = vld [vmem:[#allocation7 + $0x20c] sm:$0xf]
        %v4880 = vld [vmem:[#allocation7 + $0x210] sm:$0xf]
        %v4881 = vld [vmem:[#allocation7 + $0x214] sm:$0xf]
        %v4882 = vld [vmem:[#allocation7 + $0x218] sm:$0xf]
        %v4883 = vld [vmem:[#allocation7 + $0x21c] sm:$0xf]
        %v4884 = vld [vmem:[#allocation7 + $0x220] sm:$0xf]
        %v4885 = vld [vmem:[#allocation7 + $0x224] sm:$0xf]
        %v4886 = vld [vmem:[#allocation7 + $0x228] sm:$0xf]
        %v4887 = vld [vmem:[#allocation7 + $0x22c] sm:$0xf]
        %v4888 = vld [vmem:[#allocation7 + $0x230] sm:$0xf]
        %v4889 = vld [vmem:[#allocation7 + $0x234] sm:$0xf]
        %v4890 = vld [vmem:[#allocation7 + $0x238] sm:$0xf]
        %v4891 = vld [vmem:[#allocation7 + $0x23c] sm:$0xf]
        %v4892 = vld [vmem:[%s2] sm:$0x1]
        %v4894 = vlaneseq
        %v4895 = vshrl.u32 %v4894, 7
        %v4896 = vsub.s32 0, %v4895
        %v4897 = vrot.slane %v4892, %v4896
        %v5043 = vunpack.c.l.b16 %v4748
        %v5044 = vunpack.c.l.b16 %v4749
        %v5045 = vunpack.c.l.b16 %v4750
        %v5046 = vunpack.c.l.b16 %v4751
        %v5047 = vunpack.c.l.b16 %v4752
        %v5048 = vunpack.c.l.b16 %v4753
        %v5049 = vunpack.c.l.b16 %v4754
        %v5050 = vunpack.c.l.b16 %v4755
        %v5051 = vunpack.c.l.b16 %v4756
        %v5052 = vunpack.c.l.b16 %v4757
        %v5053 = vunpack.c.l.b16 %v4758
        %v5054 = vunpack.c.l.b16 %v4759
        %v5055 = vunpack.c.l.b16 %v4760
        %v5056 = vunpack.c.l.b16 %v4761
        %v5057 = vunpack.c.l.b16 %v4762
        %v5058 = vunpack.c.l.b16 %v4763
        %v5059 = vunpack.c.l.b16 %v4764
        %v5060 = vunpack.c.l.b16 %v4765
        %v5061 = vunpack.c.l.b16 %v4766
        %v5062 = vunpack.c.l.b16 %v4767
        %v5063 = vunpack.c.l.b16 %v4768
        %v5064 = vunpack.c.l.b16 %v4769
        %v5065 = vunpack.c.l.b16 %v4770
        %v5066 = vunpack.c.l.b16 %v4771
        %v5067 = vunpack.c.l.b16 %v4772
        %v5068 = vunpack.c.l.b16 %v4773
        %v5069 = vunpack.c.l.b16 %v4774
        %v5070 = vunpack.c.l.b16 %v4775
        %v5071 = vunpack.c.l.b16 %v4776
        %v5072 = vunpack.c.l.b16 %v4777
        %v5073 = vunpack.c.l.b16 %v4778
        %v5074 = vunpack.c.l.b16 %v4779
        %v5075 = vunpack.c.l.b16 %v4780
        %v5076 = vunpack.c.l.b16 %v4781
        %v5077 = vunpack.c.l.b16 %v4782
        %v5078 = vunpack.c.l.b16 %v4783
        %v5079 = vunpack.c.l.b16 %v4784
        %v5080 = vunpack.c.l.b16 %v4785
        %v5081 = vunpack.c.l.b16 %v4786
        %v5082 = vunpack.c.l.b16 %v4787
        %v5083 = vunpack.c.l.b16 %v4788
        %v5084 = vunpack.c.l.b16 %v4789
        %v5085 = vunpack.c.l.b16 %v4790
        %v5086 = vunpack.c.l.b16 %v4791
        %v5087 = vunpack.c.l.b16 %v4792
        %v5088 = vunpack.c.l.b16 %v4793
        %v5089 = vunpack.c.l.b16 %v4794
        %v5090 = vunpack.c.l.b16 %v4795
        %v5091 = vunpack.c.l.b16 %v4796
        %v5092 = vunpack.c.l.b16 %v4797
        %v5093 = vunpack.c.l.b16 %v4798
        %v5094 = vunpack.c.l.b16 %v4799
        %v5095 = vunpack.c.l.b16 %v4800
        %v5096 = vunpack.c.l.b16 %v4801
        %v5097 = vunpack.c.l.b16 %v4802
        %v5098 = vunpack.c.l.b16 %v4803
        %v5099 = vunpack.c.l.b16 %v4804
        %v5100 = vunpack.c.l.b16 %v4805
        %v5101 = vunpack.c.l.b16 %v4806
        %v5102 = vunpack.c.l.b16 %v4807
        %v5103 = vunpack.c.l.b16 %v4808
        %v5104 = vunpack.c.l.b16 %v4809
        %v5105 = vunpack.c.l.b16 %v4810
        %v5106 = vunpack.c.l.b16 %v4811
        %v5107 = vunpack.c.l.b16 %v4812
        %v5108 = vunpack.c.l.b16 %v4813
        %v5109 = vunpack.c.l.b16 %v4814
        %v5110 = vunpack.c.l.b16 %v4815
        %v5111 = vunpack.c.l.b16 %v4816
        %v5112 = vunpack.c.l.b16 %v4817
        %v5113 = vunpack.c.l.b16 %v4818
        %v5114 = vunpack.c.l.b16 %v4819
        %v5115 = vunpack.c.l.b16 %v4820
        %v5116 = vunpack.c.l.b16 %v4821
        %v5117 = vunpack.c.l.b16 %v4822
        %v5118 = vunpack.c.l.b16 %v4823
        %v5119 = vunpack.c.l.b16 %v4824
        %v5120 = vunpack.c.l.b16 %v4825
        %v5121 = vunpack.c.l.b16 %v4826
        %v5122 = vunpack.c.l.b16 %v4827
        %v5123 = vunpack.c.l.b16 %v4828
        %v5124 = vunpack.c.l.b16 %v4829
        %v5125 = vunpack.c.l.b16 %v4830
        %v5126 = vunpack.c.l.b16 %v4831
        %v5127 = vunpack.c.l.b16 %v4832
        %v5128 = vunpack.c.l.b16 %v4833
        %v5129 = vunpack.c.l.b16 %v4834
        %v5130 = vunpack.c.l.b16 %v4835
        %v5131 = vunpack.c.l.b16 %v4836
        %v5132 = vunpack.c.l.b16 %v4837
        %v5133 = vunpack.c.l.b16 %v4838
        %v5134 = vunpack.c.l.b16 %v4839
        %v5135 = vunpack.c.l.b16 %v4840
        %v5136 = vunpack.c.l.b16 %v4841
        %v5137 = vunpack.c.l.b16 %v4842
        %v5138 = vunpack.c.l.b16 %v4843
        %v5139 = vunpack.c.l.b16 %v4844
        %v5140 = vunpack.c.l.b16 %v4845
        %v5141 = vunpack.c.l.b16 %v4846
        %v5142 = vunpack.c.l.b16 %v4847
        %v5143 = vunpack.c.l.b16 %v4848
        %v5144 = vunpack.c.l.b16 %v4849
        %v5145 = vunpack.c.l.b16 %v4850
        %v5146 = vunpack.c.l.b16 %v4851
        %v5147 = vunpack.c.l.b16 %v4852
        %v5148 = vunpack.c.l.b16 %v4853
        %v5149 = vunpack.c.l.b16 %v4854
        %v5150 = vunpack.c.l.b16 %v4855
        %v5151 = vunpack.c.l.b16 %v4856
        %v5152 = vunpack.c.l.b16 %v4857
        %v5153 = vunpack.c.l.b16 %v4858
        %v5154 = vunpack.c.l.b16 %v4859
        %v5155 = vunpack.c.l.b16 %v4860
        %v5156 = vunpack.c.l.b16 %v4861
        %v5157 = vunpack.c.l.b16 %v4862
        %v5158 = vunpack.c.l.b16 %v4863
        %v5159 = vunpack.c.l.b16 %v4864
        %v5160 = vunpack.c.l.b16 %v4865
        %v5161 = vunpack.c.l.b16 %v4866
        %v5162 = vunpack.c.l.b16 %v4867
        %v5163 = vunpack.c.l.b16 %v4868
        %v5164 = vunpack.c.l.b16 %v4869
        %v5165 = vunpack.c.l.b16 %v4870
        %v5166 = vunpack.c.l.b16 %v4871
        %v5167 = vunpack.c.l.b16 %v4872
        %v5168 = vunpack.c.l.b16 %v4873
        %v5169 = vunpack.c.l.b16 %v4874
        %v5170 = vunpack.c.l.b16 %v4875
        %v5171 = vunpack.c.l.b16 %v4876
        %v5172 = vunpack.c.l.b16 %v4877
        %v5173 = vunpack.c.l.b16 %v4878
        %v5174 = vunpack.c.l.b16 %v4879
        %v5175 = vunpack.c.l.b16 %v4880
        %v5176 = vunpack.c.l.b16 %v4881
        %v5177 = vunpack.c.l.b16 %v4882
        %v5178 = vunpack.c.l.b16 %v4883
        %v5179 = vunpack.c.l.b16 %v4884
        %v5180 = vunpack.c.l.b16 %v4885
        %v5181 = vunpack.c.l.b16 %v4886
        %v5182 = vunpack.c.l.b16 %v4887
        %v5183 = vunpack.c.l.b16 %v4888
        %v5184 = vunpack.c.l.b16 %v4889
        %v5185 = vunpack.c.l.b16 %v4890
        %v5186 = vunpack.c.l.b16 %v4891
        %v5187 = vpack.c.b16 %v5044, %v5043
        %v5188 = vpack.c.b16 %v5046, %v5045
        %v5189 = vpack.c.b16 %v5048, %v5047
        %v5190 = vpack.c.b16 %v5050, %v5049
        %v5191 = vpack.c.b16 %v5052, %v5051
        %v5192 = vpack.c.b16 %v5054, %v5053
        %v5193 = vpack.c.b16 %v5056, %v5055
        %v5194 = vpack.c.b16 %v5058, %v5057
        %v5195 = vpack.c.b16 %v5060, %v5059
        %v5196 = vpack.c.b16 %v5062, %v5061
        %v5197 = vpack.c.b16 %v5064, %v5063
        %v5198 = vpack.c.b16 %v5066, %v5065
        %v5199 = vpack.c.b16 %v5068, %v5067
        %v5200 = vpack.c.b16 %v5070, %v5069
        %v5201 = vpack.c.b16 %v5072, %v5071
        %v5202 = vpack.c.b16 %v5074, %v5073
        %v5203 = vpack.c.b16 %v5076, %v5075
        %v5204 = vpack.c.b16 %v5078, %v5077
        %v5205 = vpack.c.b16 %v5080, %v5079
        %v5206 = vpack.c.b16 %v5082, %v5081
        %v5207 = vpack.c.b16 %v5084, %v5083
        %v5208 = vpack.c.b16 %v5086, %v5085
        %v5209 = vpack.c.b16 %v5088, %v5087
        %v5210 = vpack.c.b16 %v5090, %v5089
        %v5211 = vpack.c.b16 %v5092, %v5091
        %v5212 = vpack.c.b16 %v5094, %v5093
        %v5213 = vpack.c.b16 %v5096, %v5095
        %v5214 = vpack.c.b16 %v5098, %v5097
        %v5215 = vpack.c.b16 %v5100, %v5099
        %v5216 = vpack.c.b16 %v5102, %v5101
        %v5217 = vpack.c.b16 %v5104, %v5103
        %v5218 = vpack.c.b16 %v5106, %v5105
        %v5219 = vpack.c.b16 %v5108, %v5107
        %v5220 = vpack.c.b16 %v5110, %v5109
        %v5221 = vpack.c.b16 %v5112, %v5111
        %v5222 = vpack.c.b16 %v5114, %v5113
        %v5223 = vpack.c.b16 %v5116, %v5115
        %v5224 = vpack.c.b16 %v5118, %v5117
        %v5225 = vpack.c.b16 %v5120, %v5119
        %v5226 = vpack.c.b16 %v5122, %v5121
        %v5227 = vpack.c.b16 %v5124, %v5123
        %v5228 = vpack.c.b16 %v5126, %v5125
        %v5229 = vpack.c.b16 %v5128, %v5127
        %v5230 = vpack.c.b16 %v5130, %v5129
        %v5231 = vpack.c.b16 %v5132, %v5131
        %v5232 = vpack.c.b16 %v5134, %v5133
        %v5233 = vpack.c.b16 %v5136, %v5135
        %v5234 = vpack.c.b16 %v5138, %v5137
        %v5235 = vpack.c.b16 %v5140, %v5139
        %v5236 = vpack.c.b16 %v5142, %v5141
        %v5237 = vpack.c.b16 %v5144, %v5143
        %v5238 = vpack.c.b16 %v5146, %v5145
        %v5239 = vpack.c.b16 %v5148, %v5147
        %v5240 = vpack.c.b16 %v5150, %v5149
        %v5241 = vpack.c.b16 %v5152, %v5151
        %v5242 = vpack.c.b16 %v5154, %v5153
        %v5243 = vpack.c.b16 %v5156, %v5155
        %v5244 = vpack.c.b16 %v5158, %v5157
        %v5245 = vpack.c.b16 %v5160, %v5159
        %v5246 = vpack.c.b16 %v5162, %v5161
        %v5247 = vpack.c.b16 %v5164, %v5163
        %v5248 = vpack.c.b16 %v5166, %v5165
        %v5249 = vpack.c.b16 %v5168, %v5167
        %v5250 = vpack.c.b16 %v5170, %v5169
        %v5251 = vpack.c.b16 %v5172, %v5171
        %v5252 = vpack.c.b16 %v5174, %v5173
        %v5253 = vpack.c.b16 %v5176, %v5175
        %v5254 = vpack.c.b16 %v5178, %v5177
        %v5255 = vpack.c.b16 %v5180, %v5179
        %v5256 = vpack.c.b16 %v5182, %v5181
        %v5257 = vpack.c.b16 %v5184, %v5183
        %v5258 = vpack.c.b16 %v5186, %v5185
        %5331 = vmatprep.subr.bf16.mxu0 0
        %5332 = vmatpush1.bf16.msra.mxu0 %v5187
        %5333 = vmatprep.subr.bf16.mxu0 0
        %5334 = vmatpush1.bf16.msra.mxu0 %v5188
        %5335 = vmatprep.subr.bf16.mxu0 0
        %5336 = vmatpush1.bf16.msra.mxu0 %v5189
        %5337 = vmatprep.subr.bf16.mxu0 0
        %5338 = vmatpush1.bf16.msra.mxu0 %v5190
        %5339 = vmatprep.subr.bf16.mxu0 0
        %5340 = vmatpush1.bf16.msra.mxu0 %v5191
        %5341 = vmatprep.subr.bf16.mxu0 0
        %5342 = vmatpush1.bf16.msra.mxu0 %v5192
        %5343 = vmatprep.subr.bf16.mxu0 0
        %5344 = vmatpush1.bf16.msra.mxu0 %v5193
        %5345 = vmatprep.subr.bf16.mxu0 0
        %5346 = vmatpush1.bf16.msra.mxu0 %v5194
        %5347 = vmatprep.subr.bf16.mxu0 0
        %5348 = vmatpush1.bf16.msra.mxu0 %v5195
        %5349 = vmatprep.subr.bf16.mxu0 0
        %5350 = vmatpush1.bf16.msra.mxu0 %v5196
        %5351 = vmatprep.subr.bf16.mxu0 0
        %5352 = vmatpush1.bf16.msra.mxu0 %v5197
        %5353 = vmatprep.subr.bf16.mxu0 0
        %5354 = vmatpush1.bf16.msra.mxu0 %v5198
        %5355 = vmatprep.subr.bf16.mxu0 0
        %5356 = vmatpush1.bf16.msra.mxu0 %v5199
        %5357 = vmatprep.subr.bf16.mxu0 0
        %5358 = vmatpush1.bf16.msra.mxu0 %v5200
        %5359 = vmatprep.subr.bf16.mxu0 0
        %5360 = vmatpush1.bf16.msra.mxu0 %v5201
        %5361 = vmatprep.subr.bf16.mxu0 0
        %5362 = vmatpush1.bf16.msra.mxu0 %v5202
        %5363 = vmatprep.mubr.bf16.mxu0 %v2262
        %5364 = vmatmul.mubr.bf16.gmra.mrb[0].mxu0 %v2090
        %v5365 = vpop.f32.mrb[0].mxu0
        %v5366 = vadd.f32 %v4897, %v5365
        %v5367 = vpop.f32.mrb[0].mxu0
        %v5368 = vpop.f32.mrb[0].mxu0
        %v5369 = vadd.f32 %v4897, %v5368
        %v5370 = vpop.f32.mrb[0].mxu0
        %5371 = vmatprep.mubr.bf16.mxu0 %v2274
        %5372 = vmatmul.mubr.bf16.gmra.mrb[0].mxu0 %v2091
        %v5373 = vpop.f32.mrb[0].mxu0
        %v5374 = vadd.f32 %v4897, %v5373
        %v5375 = vpop.f32.mrb[0].mxu0
        %v5376 = vpop.f32.mrb[0].mxu0
        %v5377 = vadd.f32 %v4897, %v5376
        %v5378 = vpop.f32.mrb[0].mxu0
        %5379 = vmatprep.mubr.bf16.mxu0 %v2286
        %5380 = vmatmul.mubr.bf16.gmra.mrb[0].mxu0 %v2092
        %v5381 = vpop.f32.mrb[0].mxu0
        %v5382 = vadd.f32 %v4897, %v5381
        %v5383 = vpop.f32.mrb[0].mxu0
        %v5384 = vpop.f32.mrb[0].mxu0
        %v5385 = vadd.f32 %v4897, %v5384
        %v5386 = vpop.f32.mrb[0].mxu0
        %5387 = vmatprep.mubr.bf16.mxu0 %v2298
        %5388 = vmatmul.mubr.bf16.gmra.mrb[0].mxu0 %v2093
        %v5389 = vpop.f32.mrb[0].mxu0
        %v5390 = vadd.f32 %v4897, %v5389
        %v5391 = vpop.f32.mrb[0].mxu0
        %v5392 = vpop.f32.mrb[0].mxu0
        %v5393 = vadd.f32 %v4897, %v5392
        %v5394 = vpop.f32.mrb[0].mxu0
        %5395 = vmatprep.mubr.bf16.mxu0 %v2310
        %5396 = vmatmul.mubr.bf16.gmra.mrb[0].mxu0 %v2094
        %v5397 = vpop.f32.mrb[0].mxu0
        %v5398 = vadd.f32 %v4897, %v5397
        %v5399 = vpop.f32.mrb[0].mxu0
        %v5400 = vpop.f32.mrb[0].mxu0
        %v5401 = vadd.f32 %v4897, %v5400
        %v5402 = vpop.f32.mrb[0].mxu0
        %5403 = vmatprep.mubr.bf16.mxu0 %v2322
        %5404 = vmatmul.mubr.bf16.gmra.mrb[0].mxu0 %v2095
        %v5405 = vpop.f32.mrb[0].mxu0
        %v5406 = vadd.f32 %v4897, %v5405
        %v5407 = vpop.f32.mrb[0].mxu0
        %v5408 = vpop.f32.mrb[0].mxu0
        %v5409 = vadd.f32 %v4897, %v5408
        %v5410 = vpop.f32.mrb[0].mxu0
        %5411 = vmatprep.mubr.bf16.mxu0 %v2334
        %5412 = vmatmul.mubr.bf16.gmra.mrb[0].mxu0 %v2096
        %v5413 = vpop.f32.mrb[0].mxu0
        %v5414 = vadd.f32 %v4897, %v5413
        %v5415 = vpop.f32.mrb[0].mxu0
        %v5416 = vpop.f32.mrb[0].mxu0
        %v5417 = vadd.f32 %v4897, %v5416
        %v5418 = vpop.f32.mrb[0].mxu0
        %5419 = vmatprep.mubr.bf16.mxu0 %v2346
        %5420 = vmatmul.mubr.bf16.gmra.mrb[0].mxu0 %v2097
        %v5421 = vpop.f32.mrb[0].mxu0
        %v5422 = vadd.f32 %v4897, %v5421
        %v5423 = vpop.f32.mrb[0].mxu0
        %v5424 = vpop.f32.mrb[0].mxu0
        %v5425 = vadd.f32 %v4897, %v5424
        %v5426 = vpop.f32.mrb[0].mxu0
        %5427 = vmatprep.mubr.bf16.mxu0 %v2358
        %5428 = vmatmul.mubr.bf16.gmra.mrb[0].mxu0 %v2098
        %v5429 = vpop.f32.mrb[0].mxu0
        %v5430 = vadd.f32 %v4897, %v5429
        %v5431 = vpop.f32.mrb[0].mxu0
        %v5432 = vpop.f32.mrb[0].mxu0
        %v5433 = vadd.f32 %v4897, %v5432
        %v5434 = vpop.f32.mrb[0].mxu0
        %5435 = vmatprep.mubr.bf16.mxu0 %v2370
        %5436 = vmatmul.mubr.bf16.gmra.mrb[0].mxu0 %v2099
        %v5437 = vpop.f32.mrb[0].mxu0
        %v5438 = vadd.f32 %v4897, %v5437
        %v5439 = vpop.f32.mrb[0].mxu0
        %v5440 = vpop.f32.mrb[0].mxu0
        %v5441 = vadd.f32 %v4897, %v5440
        %v5442 = vpop.f32.mrb[0].mxu0
        %5443 = vmatprep.mubr.bf16.mxu0 %v2382
        %5444 = vmatmul.mubr.bf16.gmra.mrb[0].mxu0 %v2100
        %v5445 = vpop.f32.mrb[0].mxu0
        %v5446 = vadd.f32 %v4897, %v5445
        %v5447 = vpop.f32.mrb[0].mxu0
        %v5448 = vpop.f32.mrb[0].mxu0
        %v5449 = vadd.f32 %v4897, %v5448
        %v5450 = vpop.f32.mrb[0].mxu0
        %5451 = vmatprep.mubr.bf16.mxu0 %v2394
        %5452 = vmatmul.mubr.bf16.gmra.mrb[0].mxu0 %v2101
        %v5453 = vpop.f32.mrb[0].mxu0
        %v5454 = vadd.f32 %v4897, %v5453
        %v5455 = vpop.f32.mrb[0].mxu0
        %v5456 = vpop.f32.mrb[0].mxu0
        %v5457 = vadd.f32 %v4897, %v5456
        %v5458 = vpop.f32.mrb[0].mxu0
        %5459 = vmatprep.mubr.bf16.mxu0 %v2406
        %5460 = vmatmul.mubr.bf16.gmra.mrb[0].mxu0 %v2102
        %v5461 = vpop.f32.mrb[0].mxu0
        %v5462 = vadd.f32 %v4897, %v5461
        %v5463 = vpop.f32.mrb[0].mxu0
        %v5464 = vpop.f32.mrb[0].mxu0
        %v5465 = vadd.f32 %v4897, %v5464
        %v5466 = vpop.f32.mrb[0].mxu0
        %5467 = vmatprep.mubr.bf16.mxu0 %v2418
        %5468 = vmatmul.mubr.bf16.gmra.mrb[0].mxu0 %v2103
        %v5469 = vpop.f32.mrb[0].mxu0
        %v5470 = vadd.f32 %v4897, %v5469
        %v5471 = vpop.f32.mrb[0].mxu0
        %v5472 = vpop.f32.mrb[0].mxu0
        %v5473 = vadd.f32 %v4897, %v5472
        %v5474 = vpop.f32.mrb[0].mxu0
        %5475 = vmatprep.mubr.bf16.mxu0 %v2430
        %5476 = vmatmul.mubr.bf16.gmra.mrb[0].mxu0 %v2104
        %v5477 = vpop.f32.mrb[0].mxu0
        %v5478 = vadd.f32 %v4897, %v5477
        %v5479 = vpop.f32.mrb[0].mxu0
        %v5480 = vpop.f32.mrb[0].mxu0
        %v5481 = vadd.f32 %v4897, %v5480
        %v5482 = vpop.f32.mrb[0].mxu0
        %5483 = vmatprep.mubr.bf16.mxu0 %v2442
        %5484 = vmatmul.mubr.bf16.gmra.mrb[0].mxu0 %v2105
        %v5485 = vpop.f32.mrb[0].mxu0
        %v5486 = vadd.f32 %v4897, %v5485
        %v5487 = vpop.f32.mrb[0].mxu0
        %v5488 = vpop.f32.mrb[0].mxu0
        %v5489 = vadd.f32 %v4897, %v5488
        %v5490 = vpop.f32.mrb[0].mxu0
        %5491 = vmatprep.mubr.bf16.mxu0 %v2454
        %5492 = vmatmul.mubr.bf16.gmra.mrb[0].mxu0 %v2106
        %v5493 = vpop.f32.mrb[0].mxu0
        %v5494 = vadd.f32 %v4897, %v5493
        %v5495 = vpop.f32.mrb[0].mxu0
        %v5496 = vpop.f32.mrb[0].mxu0
        %v5497 = vadd.f32 %v4897, %v5496
        %v5498 = vpop.f32.mrb[0].mxu0
        %5499 = vmatprep.mubr.bf16.mxu0 %v2466
        %5500 = vmatmul.mubr.bf16.gmra.mrb[0].mxu0 %v2107
        %v5501 = vpop.f32.mrb[0].mxu0
        %v5502 = vadd.f32 %v4897, %v5501
        %v5503 = vpop.f32.mrb[0].mxu0
        %v5504 = vpop.f32.mrb[0].mxu0
        %v5505 = vadd.f32 %v4897, %v5504
        %v5506 = vpop.f32.mrb[0].mxu0
        %5507 = vmatprep.mubr.bf16.mxu0 %v2478
        %5508 = vmatmul.mubr.bf16.gmra.mrb[0].mxu0 %v2108
        %v5509 = vpop.f32.mrb[0].mxu0
        %v5510 = vadd.f32 %v4897, %v5509
        %v5511 = vpop.f32.mrb[0].mxu0
        %v5512 = vpop.f32.mrb[0].mxu0
        %v5513 = vadd.f32 %v4897, %v5512
        %v5514 = vpop.f32.mrb[0].mxu0
        %5515 = vmatprep.mubr.bf16.mxu0 %v2490
        %5516 = vmatmul.mubr.bf16.gmra.mrb[0].mxu0 %v2109
        %v5517 = vpop.f32.mrb[0].mxu0
        %v5518 = vadd.f32 %v4897, %v5517
        %v5519 = vpop.f32.mrb[0].mxu0
        %v5520 = vpop.f32.mrb[0].mxu0
        %v5521 = vadd.f32 %v4897, %v5520
        %v5522 = vpop.f32.mrb[0].mxu0
        %5523 = vmatprep.mubr.bf16.mxu0 %v2502
        %5524 = vmatmul.mubr.bf16.gmra.mrb[0].mxu0 %v2110
        %v5525 = vpop.f32.mrb[0].mxu0
        %v5526 = vadd.f32 %v4897, %v5525
        %v5527 = vpop.f32.mrb[0].mxu0
        %v5528 = vpop.f32.mrb[0].mxu0
        %v5529 = vadd.f32 %v4897, %v5528
        %v5530 = vpop.f32.mrb[0].mxu0
        %5531 = vmatprep.mubr.bf16.mxu0 %v2514
        %5532 = vmatmul.mubr.bf16.gmra.mrb[0].mxu0 %v2111
        %v5533 = vpop.f32.mrb[0].mxu0
        %v5534 = vadd.f32 %v4897, %v5533
        %v5535 = vpop.f32.mrb[0].mxu0
        %v5536 = vpop.f32.mrb[0].mxu0
        %v5537 = vadd.f32 %v4897, %v5536
        %v5538 = vpop.f32.mrb[0].mxu0
        %5539 = vmatprep.mubr.bf16.mxu0 %v2526
        %5540 = vmatmul.mubr.bf16.gmra.mrb[0].mxu0 %v2112
        %v5541 = vpop.f32.mrb[0].mxu0
        %v5542 = vadd.f32 %v4897, %v5541
        %v5543 = vpop.f32.mrb[0].mxu0
        %v5544 = vpop.f32.mrb[0].mxu0
        %v5545 = vadd.f32 %v4897, %v5544
        %v5546 = vpop.f32.mrb[0].mxu0
        %5547 = vmatprep.mubr.bf16.mxu0 %v2538
        %5548 = vmatmul.mubr.bf16.gmra.mrb[0].mxu0 %v2113
        %v5549 = vpop.f32.mrb[0].mxu0
        %v5550 = vadd.f32 %v4897, %v5549
        %v5551 = vpop.f32.mrb[0].mxu0
        %v5552 = vpop.f32.mrb[0].mxu0
        %v5553 = vadd.f32 %v4897, %v5552
        %v5554 = vpop.f32.mrb[0].mxu0
        %5555 = vmatprep.mubr.bf16.mxu0 %v2550
        %5556 = vmatmul.mubr.bf16.gmra.mrb[0].mxu0 %v2114
        %v5557 = vpop.f32.mrb[0].mxu0
        %v5558 = vadd.f32 %v4897, %v5557
        %v5559 = vpop.f32.mrb[0].mxu0
        %v5560 = vpop.f32.mrb[0].mxu0
        %v5561 = vadd.f32 %v4897, %v5560
        %v5562 = vpop.f32.mrb[0].mxu0
        %5563 = vmatprep.mubr.bf16.mxu0 %v2562
        %5564 = vmatmul.mubr.bf16.gmra.mrb[0].mxu0 %v2115
        %v5565 = vpop.f32.mrb[0].mxu0
        %v5566 = vadd.f32 %v4897, %v5565
        %v5567 = vpop.f32.mrb[0].mxu0
        %v5568 = vpop.f32.mrb[0].mxu0
        %v5569 = vadd.f32 %v4897, %v5568
        %v5570 = vpop.f32.mrb[0].mxu0
        %5571 = vmatprep.mubr.bf16.mxu0 %v2574
        %5572 = vmatmul.mubr.bf16.gmra.mrb[0].mxu0 %v2116
        %v5573 = vpop.f32.mrb[0].mxu0
        %v5574 = vadd.f32 %v4897, %v5573
        %v5575 = vpop.f32.mrb[0].mxu0
        %v5576 = vpop.f32.mrb[0].mxu0
        %v5577 = vadd.f32 %v4897, %v5576
        %v5578 = vpop.f32.mrb[0].mxu0
        %5579 = vmatprep.mubr.bf16.mxu0 %v2586
        %5580 = vmatmul.mubr.bf16.gmra.mrb[0].mxu0 %v2117
        %v5581 = vpop.f32.mrb[0].mxu0
        %v5582 = vadd.f32 %v4897, %v5581
        %v5583 = vpop.f32.mrb[0].mxu0
        %v5584 = vpop.f32.mrb[0].mxu0
        %v5585 = vadd.f32 %v4897, %v5584
        %v5586 = vpop.f32.mrb[0].mxu0
        %5587 = vmatprep.mubr.bf16.mxu0 %v2598
        %5588 = vmatmul.mubr.bf16.gmra.mrb[0].mxu0 %v2118
        %v5589 = vpop.f32.mrb[0].mxu0
        %v5590 = vadd.f32 %v4897, %v5589
        %v5591 = vpop.f32.mrb[0].mxu0
        %v5592 = vpop.f32.mrb[0].mxu0
        %v5593 = vadd.f32 %v4897, %v5592
        %v5594 = vpop.f32.mrb[0].mxu0
        %5595 = vmatprep.mubr.bf16.mxu0 %v2610
        %5596 = vmatmul.mubr.bf16.gmra.mrb[0].mxu0 %v2119
        %v5597 = vpop.f32.mrb[0].mxu0
        %v5598 = vadd.f32 %v4897, %v5597
        %v5599 = vpop.f32.mrb[0].mxu0
        %v5600 = vpop.f32.mrb[0].mxu0
        %v5601 = vadd.f32 %v4897, %v5600
        %v5602 = vpop.f32.mrb[0].mxu0
        %5603 = vmatprep.mubr.bf16.mxu0 %v2622
        %5604 = vmatmul.mubr.bf16.gmra.mrb[0].mxu0 %v2120
        %v5605 = vpop.f32.mrb[0].mxu0
        %v5606 = vadd.f32 %v4897, %v5605
        %v5607 = vpop.f32.mrb[0].mxu0
        %v5608 = vpop.f32.mrb[0].mxu0
        %v5609 = vadd.f32 %v4897, %v5608
        %v5610 = vpop.f32.mrb[0].mxu0
        %5611 = vmatprep.mubr.bf16.mxu0 %v2634
        %5612 = vmatmul.mubr.bf16.gmra.mrb[0].mxu0 %v2121
        %v5613 = vpop.f32.mrb[0].mxu0
        %v5614 = vadd.f32 %v4897, %v5613
        %v5615 = vpop.f32.mrb[0].mxu0
        %v5616 = vpop.f32.mrb[0].mxu0
        %v5617 = vadd.f32 %v4897, %v5616
        %v5618 = vpop.f32.mrb[0].mxu0
        %5619 = vdwg.mxu0
        %5620 = vmatprep.subr.bf16.mxu0 0
        %5621 = vmatpush1.bf16.msra.mxu0 %v5203
        %5622 = vmatprep.subr.bf16.mxu0 0
        %5623 = vmatpush1.bf16.msra.mxu0 %v5204
        %5624 = vmatprep.subr.bf16.mxu0 0
        %5625 = vmatpush1.bf16.msra.mxu0 %v5205
        %5626 = vmatprep.subr.bf16.mxu0 0
        %5627 = vmatpush1.bf16.msra.mxu0 %v5206
        %5628 = vmatprep.subr.bf16.mxu0 0
        %5629 = vmatpush1.bf16.msra.mxu0 %v5207
        %5630 = vmatprep.subr.bf16.mxu0 0
        %5631 = vmatpush1.bf16.msra.mxu0 %v5208
        %5632 = vmatprep.subr.bf16.mxu0 0
        %5633 = vmatpush1.bf16.msra.mxu0 %v5209
        %5634 = vmatprep.subr.bf16.mxu0 0
        %5635 = vmatpush1.bf16.msra.mxu0 %v5210
        %5636 = vmatprep.subr.bf16.mxu0 0
        %5637 = vmatpush1.bf16.msra.mxu0 %v5211
        %5638 = vmatprep.subr.bf16.mxu0 0
        %5639 = vmatpush1.bf16.msra.mxu0 %v5212
        %5640 = vmatprep.subr.bf16.mxu0 0
        %5641 = vmatpush1.bf16.msra.mxu0 %v5213
        %5642 = vmatprep.subr.bf16.mxu0 0
        %5643 = vmatpush1.bf16.msra.mxu0 %v5214
        %5644 = vmatprep.subr.bf16.mxu0 0
        %5645 = vmatpush1.bf16.msra.mxu0 %v5215
        %5646 = vmatprep.subr.bf16.mxu0 0
        %5647 = vmatpush1.bf16.msra.mxu0 %v5216
        %5648 = vmatprep.subr.bf16.mxu0 0
        %5649 = vmatpush1.bf16.msra.mxu0 %v5217
        %5650 = vmatprep.subr.bf16.mxu0 0
        %5651 = vmatpush1.bf16.msra.mxu0 %v5218
        %5652 = vmatprep.mubr.bf16.mxu0 %v3020
        %5653 = vmatmul.mubr.bf16.gmra.mrb[0].mxu0 %v2766
        %v5654 = vpop.f32.mrb[0].mxu0
        %v5655 = vadd.f32 %v5366, %v5654
        %v5656 = vpop.f32.mrb[0].mxu0
        %v5657 = vpop.f32.mrb[0].mxu0
        %v5658 = vadd.f32 %v5369, %v5657
        %v5659 = vpop.f32.mrb[0].mxu0
        %5660 = vmatprep.mubr.bf16.mxu0 %v3021
        %5661 = vmatmul.mubr.bf16.gmra.mrb[0].mxu0 %v2769
        %v5662 = vpop.f32.mrb[0].mxu0
        %v5663 = vadd.f32 %v5374, %v5662
        %v5664 = vpop.f32.mrb[0].mxu0
        %v5665 = vpop.f32.mrb[0].mxu0
        %v5666 = vadd.f32 %v5377, %v5665
        %v5667 = vpop.f32.mrb[0].mxu0
        %5668 = vmatprep.mubr.bf16.mxu0 %v3022
        %5669 = vmatmul.mubr.bf16.gmra.mrb[0].mxu0 %v2772
        %v5670 = vpop.f32.mrb[0].mxu0
        %v5671 = vadd.f32 %v5382, %v5670
        %v5672 = vpop.f32.mrb[0].mxu0
        %v5673 = vpop.f32.mrb[0].mxu0
        %v5674 = vadd.f32 %v5385, %v5673
        %v5675 = vpop.f32.mrb[0].mxu0
        %5676 = vmatprep.mubr.bf16.mxu0 %v3023
        %5677 = vmatmul.mubr.bf16.gmra.mrb[0].mxu0 %v2775
        %v5678 = vpop.f32.mrb[0].mxu0
        %v5679 = vadd.f32 %v5390, %v5678
        %v5680 = vpop.f32.mrb[0].mxu0
        %v5681 = vpop.f32.mrb[0].mxu0
        %v5682 = vadd.f32 %v5393, %v5681
        %v5683 = vpop.f32.mrb[0].mxu0
        %5684 = vmatprep.mubr.bf16.mxu0 %v3024
        %5685 = vmatmul.mubr.bf16.gmra.mrb[0].mxu0 %v2778
        %v5686 = vpop.f32.mrb[0].mxu0
        %v5687 = vadd.f32 %v5398, %v5686
        %v5688 = vpop.f32.mrb[0].mxu0
        %v5689 = vpop.f32.mrb[0].mxu0
        %v5690 = vadd.f32 %v5401, %v5689
        %v5691 = vpop.f32.mrb[0].mxu0
        %5692 = vmatprep.mubr.bf16.mxu0 %v3025
        %5693 = vmatmul.mubr.bf16.gmra.mrb[0].mxu0 %v2781
        %v5694 = vpop.f32.mrb[0].mxu0
        %v5695 = vadd.f32 %v5406, %v5694
        %v5696 = vpop.f32.mrb[0].mxu0
        %v5697 = vpop.f32.mrb[0].mxu0
        %v5698 = vadd.f32 %v5409, %v5697
        %v5699 = vpop.f32.mrb[0].mxu0
        %5700 = vmatprep.mubr.bf16.mxu0 %v3026
        %5701 = vmatmul.mubr.bf16.gmra.mrb[0].mxu0 %v2784
        %v5702 = vpop.f32.mrb[0].mxu0
        %v5703 = vadd.f32 %v5414, %v5702
        %v5704 = vpop.f32.mrb[0].mxu0
        %v5705 = vpop.f32.mrb[0].mxu0
        %v5706 = vadd.f32 %v5417, %v5705
        %v5707 = vpop.f32.mrb[0].mxu0
        %5708 = vmatprep.mubr.bf16.mxu0 %v3027
        %5709 = vmatmul.mubr.bf16.gmra.mrb[0].mxu0 %v2787
        %v5710 = vpop.f32.mrb[0].mxu0
        %v5711 = vadd.f32 %v5422, %v5710
        %v5712 = vpop.f32.mrb[0].mxu0
        %v5713 = vpop.f32.mrb[0].mxu0
        %v5714 = vadd.f32 %v5425, %v5713
        %v5715 = vpop.f32.mrb[0].mxu0
        %5716 = vmatprep.mubr.bf16.mxu0 %v3028
        %5717 = vmatmul.mubr.bf16.gmra.mrb[0].mxu0 %v2790
        %v5718 = vpop.f32.mrb[0].mxu0
        %v5719 = vadd.f32 %v5430, %v5718
        %v5720 = vpop.f32.mrb[0].mxu0
        %v5721 = vpop.f32.mrb[0].mxu0
        %v5722 = vadd.f32 %v5433, %v5721
        %v5723 = vpop.f32.mrb[0].mxu0
        %5724 = vmatprep.mubr.bf16.mxu0 %v3029
        %5725 = vmatmul.mubr.bf16.gmra.mrb[0].mxu0 %v2793
        %v5726 = vpop.f32.mrb[0].mxu0
        %v5727 = vadd.f32 %v5438, %v5726
        %v5728 = vpop.f32.mrb[0].mxu0
        %v5729 = vpop.f32.mrb[0].mxu0
        %v5730 = vadd.f32 %v5441, %v5729
        %v5731 = vpop.f32.mrb[0].mxu0
        %5732 = vmatprep.mubr.bf16.mxu0 %v3030
        %5733 = vmatmul.mubr.bf16.gmra.mrb[0].mxu0 %v2796
        %v5734 = vpop.f32.mrb[0].mxu0
        %v5735 = vadd.f32 %v5446, %v5734
        %v5736 = vpop.f32.mrb[0].mxu0
        %v5737 = vpop.f32.mrb[0].mxu0
        %v5738 = vadd.f32 %v5449, %v5737
        %v5739 = vpop.f32.mrb[0].mxu0
        %5740 = vmatprep.mubr.bf16.mxu0 %v3031
        %5741 = vmatmul.mubr.bf16.gmra.mrb[0].mxu0 %v2799
        %v5742 = vpop.f32.mrb[0].mxu0
        %v5743 = vadd.f32 %v5454, %v5742
        %v5744 = vpop.f32.mrb[0].mxu0
        %v5745 = vpop.f32.mrb[0].mxu0
        %v5746 = vadd.f32 %v5457, %v5745
        %v5747 = vpop.f32.mrb[0].mxu0
        %5748 = vmatprep.mubr.bf16.mxu0 %v3032
        %5749 = vmatmul.mubr.bf16.gmra.mrb[0].mxu0 %v2802
        %v5750 = vpop.f32.mrb[0].mxu0
        %v5751 = vadd.f32 %v5462, %v5750
        %v5752 = vpop.f32.mrb[0].mxu0
        %v5753 = vpop.f32.mrb[0].mxu0
        %v5754 = vadd.f32 %v5465, %v5753
        %v5755 = vpop.f32.mrb[0].mxu0
        %5756 = vmatprep.mubr.bf16.mxu0 %v3033
        %5757 = vmatmul.mubr.bf16.gmra.mrb[0].mxu0 %v2805
        %v5758 = vpop.f32.mrb[0].mxu0
        %v5759 = vadd.f32 %v5470, %v5758
        %v5760 = vpop.f32.mrb[0].mxu0
        %v5761 = vpop.f32.mrb[0].mxu0
        %v5762 = vadd.f32 %v5473, %v5761
        %v5763 = vpop.f32.mrb[0].mxu0
        %5764 = vmatprep.mubr.bf16.mxu0 %v3034
        %5765 = vmatmul.mubr.bf16.gmra.mrb[0].mxu0 %v2808
        %v5766 = vpop.f32.mrb[0].mxu0
        %v5767 = vadd.f32 %v5478, %v5766
        %v5768 = vpop.f32.mrb[0].mxu0
        %v5769 = vpop.f32.mrb[0].mxu0
        %v5770 = vadd.f32 %v5481, %v5769
        %v5771 = vpop.f32.mrb[0].mxu0
        %5772 = vmatprep.mubr.bf16.mxu0 %v3035
        %5773 = vmatmul.mubr.bf16.gmra.mrb[0].mxu0 %v2811
        %v5774 = vpop.f32.mrb[0].mxu0
        %v5775 = vadd.f32 %v5486, %v5774
        %v5776 = vpop.f32.mrb[0].mxu0
        %v5777 = vpop.f32.mrb[0].mxu0
        %v5778 = vadd.f32 %v5489, %v5777
        %v5779 = vpop.f32.mrb[0].mxu0
        %5780 = vmatprep.mubr.bf16.mxu0 %v3036
        %5781 = vmatmul.mubr.bf16.gmra.mrb[0].mxu0 %v2814
        %v5782 = vpop.f32.mrb[0].mxu0
        %v5783 = vadd.f32 %v5494, %v5782
        %v5784 = vpop.f32.mrb[0].mxu0
        %v5785 = vpop.f32.mrb[0].mxu0
        %v5786 = vadd.f32 %v5497, %v5785
        %v5787 = vpop.f32.mrb[0].mxu0
        %5788 = vmatprep.mubr.bf16.mxu0 %v3037
        %5789 = vmatmul.mubr.bf16.gmra.mrb[0].mxu0 %v2817
        %v5790 = vpop.f32.mrb[0].mxu0
        %v5791 = vadd.f32 %v5502, %v5790
        %v5792 = vpop.f32.mrb[0].mxu0
        %v5793 = vpop.f32.mrb[0].mxu0
        %v5794 = vadd.f32 %v5505, %v5793
        %v5795 = vpop.f32.mrb[0].mxu0
        %5796 = vmatprep.mubr.bf16.mxu0 %v3038
        %5797 = vmatmul.mubr.bf16.gmra.mrb[0].mxu0 %v2820
        %v5798 = vpop.f32.mrb[0].mxu0
        %v5799 = vadd.f32 %v5510, %v5798
        %v5800 = vpop.f32.mrb[0].mxu0
        %v5801 = vpop.f32.mrb[0].mxu0
        %v5802 = vadd.f32 %v5513, %v5801
        %v5803 = vpop.f32.mrb[0].mxu0
        %5804 = vmatprep.mubr.bf16.mxu0 %v3039
        %5805 = vmatmul.mubr.bf16.gmra.mrb[0].mxu0 %v2823
        %v5806 = vpop.f32.mrb[0].mxu0
        %v5807 = vadd.f32 %v5518, %v5806
        %v5808 = vpop.f32.mrb[0].mxu0
        %v5809 = vpop.f32.mrb[0].mxu0
        %v5810 = vadd.f32 %v5521, %v5809
        %v5811 = vpop.f32.mrb[0].mxu0
        %5812 = vmatprep.mubr.bf16.mxu0 %v3040
        %5813 = vmatmul.mubr.bf16.gmra.mrb[0].mxu0 %v2826
        %v5814 = vpop.f32.mrb[0].mxu0
        %v5815 = vadd.f32 %v5526, %v5814
        %v5816 = vpop.f32.mrb[0].mxu0
        %v5817 = vpop.f32.mrb[0].mxu0
        %v5818 = vadd.f32 %v5529, %v5817
        %v5819 = vpop.f32.mrb[0].mxu0
        %5820 = vmatprep.mubr.bf16.mxu0 %v3041
        %5821 = vmatmul.mubr.bf16.gmra.mrb[0].mxu0 %v2829
        %v5822 = vpop.f32.mrb[0].mxu0
        %v5823 = vadd.f32 %v5534, %v5822
        %v5824 = vpop.f32.mrb[0].mxu0
        %v5825 = vpop.f32.mrb[0].mxu0
        %v5826 = vadd.f32 %v5537, %v5825
        %v5827 = vpop.f32.mrb[0].mxu0
        %5828 = vmatprep.mubr.bf16.mxu0 %v3042
        %5829 = vmatmul.mubr.bf16.gmra.mrb[0].mxu0 %v2832
        %v5830 = vpop.f32.mrb[0].mxu0
        %v5831 = vadd.f32 %v5542, %v5830
        %v5832 = vpop.f32.mrb[0].mxu0
        %v5833 = vpop.f32.mrb[0].mxu0
        %v5834 = vadd.f32 %v5545, %v5833
        %v5835 = vpop.f32.mrb[0].mxu0
        %5836 = vmatprep.mubr.bf16.mxu0 %v3043
        %5837 = vmatmul.mubr.bf16.gmra.mrb[0].mxu0 %v2835
        %v5838 = vpop.f32.mrb[0].mxu0
        %v5839 = vadd.f32 %v5550, %v5838
        %v5840 = vpop.f32.mrb[0].mxu0
        %v5841 = vpop.f32.mrb[0].mxu0
        %v5842 = vadd.f32 %v5553, %v5841
        %v5843 = vpop.f32.mrb[0].mxu0
        %5844 = vmatprep.mubr.bf16.mxu0 %v3044
        %5845 = vmatmul.mubr.bf16.gmra.mrb[0].mxu0 %v2838
        %v5846 = vpop.f32.mrb[0].mxu0
        %v5847 = vadd.f32 %v5558, %v5846
        %v5848 = vpop.f32.mrb[0].mxu0
        %v5849 = vpop.f32.mrb[0].mxu0
        %v5850 = vadd.f32 %v5561, %v5849
        %v5851 = vpop.f32.mrb[0].mxu0
        %5852 = vmatprep.mubr.bf16.mxu0 %v3045
        %5853 = vmatmul.mubr.bf16.gmra.mrb[0].mxu0 %v2841
        %v5854 = vpop.f32.mrb[0].mxu0
        %v5855 = vadd.f32 %v5566, %v5854
        %v5856 = vpop.f32.mrb[0].mxu0
        %v5857 = vpop.f32.mrb[0].mxu0
        %v5858 = vadd.f32 %v5569, %v5857
        %v5859 = vpop.f32.mrb[0].mxu0
        %5860 = vmatprep.mubr.bf16.mxu0 %v3046
        %5861 = vmatmul.mubr.bf16.gmra.mrb[0].mxu0 %v2844
        %v5862 = vpop.f32.mrb[0].mxu0
        %v5863 = vadd.f32 %v5574, %v5862
        %v5864 = vpop.f32.mrb[0].mxu0
        %v5865 = vpop.f32.mrb[0].mxu0
        %v5866 = vadd.f32 %v5577, %v5865
        %v5867 = vpop.f32.mrb[0].mxu0
        %5868 = vmatprep.mubr.bf16.mxu0 %v3047
        %5869 = vmatmul.mubr.bf16.gmra.mrb[0].mxu0 %v2847
        %v5870 = vpop.f32.mrb[0].mxu0
        %v5871 = vadd.f32 %v5582, %v5870
        %v5872 = vpop.f32.mrb[0].mxu0
        %v5873 = vpop.f32.mrb[0].mxu0
        %v5874 = vadd.f32 %v5585, %v5873
        %v5875 = vpop.f32.mrb[0].mxu0
        %5876 = vmatprep.mubr.bf16.mxu0 %v3048
        %5877 = vmatmul.mubr.bf16.gmra.mrb[0].mxu0 %v2850
        %v5878 = vpop.f32.mrb[0].mxu0
        %v5879 = vadd.f32 %v5590, %v5878
        %v5880 = vpop.f32.mrb[0].mxu0
        %v5881 = vpop.f32.mrb[0].mxu0
        %v5882 = vadd.f32 %v5593, %v5881
        %v5883 = vpop.f32.mrb[0].mxu0
        %5884 = vmatprep.mubr.bf16.mxu0 %v3049
        %5885 = vmatmul.mubr.bf16.gmra.mrb[0].mxu0 %v2853
        %v5886 = vpop.f32.mrb[0].mxu0
        %v5887 = vadd.f32 %v5598, %v5886
        %v5888 = vpop.f32.mrb[0].mxu0
        %v5889 = vpop.f32.mrb[0].mxu0
        %v5890 = vadd.f32 %v5601, %v5889
        %v5891 = vpop.f32.mrb[0].mxu0
        %5892 = vmatprep.mubr.bf16.mxu0 %v3050
        %5893 = vmatmul.mubr.bf16.gmra.mrb[0].mxu0 %v2856
        %v5894 = vpop.f32.mrb[0].mxu0
        %v5895 = vadd.f32 %v5606, %v5894
        %v5896 = vpop.f32.mrb[0].mxu0
        %v5897 = vpop.f32.mrb[0].mxu0
        %v5898 = vadd.f32 %v5609, %v5897
        %v5899 = vpop.f32.mrb[0].mxu0
        %5900 = vmatprep.mubr.bf16.mxu0 %v3051
        %5901 = vmatmul.mubr.bf16.gmra.mrb[0].mxu0 %v2859
        %v5902 = vpop.f32.mrb[0].mxu0
        %v5903 = vadd.f32 %v5614, %v5902
        %v5904 = vpop.f32.mrb[0].mxu0
        %v5905 = vpop.f32.mrb[0].mxu0
        %v5906 = vadd.f32 %v5617, %v5905
        %v5907 = vpop.f32.mrb[0].mxu0
        %5908 = vdwg.mxu0
        %5909 = vmatprep.subr.bf16.mxu0 0
        %5910 = vmatpush1.bf16.msra.mxu0 %v5219
        %5911 = vmatprep.subr.bf16.mxu0 0
        %5912 = vmatpush1.bf16.msra.mxu0 %v5220
        %5913 = vmatprep.subr.bf16.mxu0 0
        %5914 = vmatpush1.bf16.msra.mxu0 %v5221
        %5915 = vmatprep.subr.bf16.mxu0 0
        %5916 = vmatpush1.bf16.msra.mxu0 %v5222
        %5917 = vmatprep.subr.bf16.mxu0 0
        %5918 = vmatpush1.bf16.msra.mxu0 %v5223
        %5919 = vmatprep.subr.bf16.mxu0 0
        %5920 = vmatpush1.bf16.msra.mxu0 %v5224
        %5921 = vmatprep.subr.bf16.mxu0 0
        %5922 = vmatpush1.bf16.msra.mxu0 %v5225
        %5923 = vmatprep.subr.bf16.mxu0 0
        %5924 = vmatpush1.bf16.msra.mxu0 %v5226
        %5925 = vmatprep.subr.bf16.mxu0 0
        %5926 = vmatpush1.bf16.msra.mxu0 %v5227
        %5927 = vmatprep.subr.bf16.mxu0 0
        %5928 = vmatpush1.bf16.msra.mxu0 %v5228
        %5929 = vmatprep.subr.bf16.mxu0 0
        %5930 = vmatpush1.bf16.msra.mxu0 %v5229
        %5931 = vmatprep.subr.bf16.mxu0 0
        %5932 = vmatpush1.bf16.msra.mxu0 %v5230
        %5933 = vmatprep.subr.bf16.mxu0 0
        %5934 = vmatpush1.bf16.msra.mxu0 %v5231
        %5935 = vmatprep.subr.bf16.mxu0 0
        %5936 = vmatpush1.bf16.msra.mxu0 %v5232
        %5937 = vmatprep.subr.bf16.mxu0 0
        %5938 = vmatpush1.bf16.msra.mxu0 %v5233
        %5939 = vmatprep.subr.bf16.mxu0 0
        %5940 = vmatpush1.bf16.msra.mxu0 %v5234
        %5941 = vmatprep.mubr.bf16.mxu0 %v3694
        %5942 = vmatmul.mubr.bf16.gmra.mrb[0].mxu0 %v3191
        %v5943 = vpop.f32.mrb[0].mxu0
        %v5944 = vadd.f32 %v5655, %v5943
        %v5945 = vpop.f32.mrb[0].mxu0
        %v5946 = vpop.f32.mrb[0].mxu0
        %v5947 = vadd.f32 %v5658, %v5946
        %v5948 = vpop.f32.mrb[0].mxu0
        %5949 = vmatprep.mubr.bf16.mxu0 %v3697
        %5950 = vmatmul.mubr.bf16.gmra.mrb[0].mxu0 %v3203
        %v5951 = vpop.f32.mrb[0].mxu0
        %v5952 = vadd.f32 %v5663, %v5951
        %v5953 = vpop.f32.mrb[0].mxu0
        %v5954 = vpop.f32.mrb[0].mxu0
        %v5955 = vadd.f32 %v5666, %v5954
        %v5956 = vpop.f32.mrb[0].mxu0
        %5957 = vmatprep.mubr.bf16.mxu0 %v3700
        %5958 = vmatmul.mubr.bf16.gmra.mrb[0].mxu0 %v3215
        %v5959 = vpop.f32.mrb[0].mxu0
        %v5960 = vadd.f32 %v5671, %v5959
        %v5961 = vpop.f32.mrb[0].mxu0
        %v5962 = vpop.f32.mrb[0].mxu0
        %v5963 = vadd.f32 %v5674, %v5962
        %v5964 = vpop.f32.mrb[0].mxu0
        %5965 = vmatprep.mubr.bf16.mxu0 %v3703
        %5966 = vmatmul.mubr.bf16.gmra.mrb[0].mxu0 %v3227
        %v5967 = vpop.f32.mrb[0].mxu0
        %v5968 = vadd.f32 %v5679, %v5967
        %v5969 = vpop.f32.mrb[0].mxu0
        %v5970 = vpop.f32.mrb[0].mxu0
        %v5971 = vadd.f32 %v5682, %v5970
        %v5972 = vpop.f32.mrb[0].mxu0
        %5973 = vmatprep.mubr.bf16.mxu0 %v3706
        %5974 = vmatmul.mubr.bf16.gmra.mrb[0].mxu0 %v3239
        %v5975 = vpop.f32.mrb[0].mxu0
        %v5976 = vadd.f32 %v5687, %v5975
        %v5977 = vpop.f32.mrb[0].mxu0
        %v5978 = vpop.f32.mrb[0].mxu0
        %v5979 = vadd.f32 %v5690, %v5978
        %v5980 = vpop.f32.mrb[0].mxu0
        %5981 = vmatprep.mubr.bf16.mxu0 %v3709
        %5982 = vmatmul.mubr.bf16.gmra.mrb[0].mxu0 %v3251
        %v5983 = vpop.f32.mrb[0].mxu0
        %v5984 = vadd.f32 %v5695, %v5983
        %v5985 = vpop.f32.mrb[0].mxu0
        %v5986 = vpop.f32.mrb[0].mxu0
        %v5987 = vadd.f32 %v5698, %v5986
        %v5988 = vpop.f32.mrb[0].mxu0
        %5989 = vmatprep.mubr.bf16.mxu0 %v3712
        %5990 = vmatmul.mubr.bf16.gmra.mrb[0].mxu0 %v3263
        %v5991 = vpop.f32.mrb[0].mxu0
        %v5992 = vadd.f32 %v5703, %v5991
        %v5993 = vpop.f32.mrb[0].mxu0
        %v5994 = vpop.f32.mrb[0].mxu0
        %v5995 = vadd.f32 %v5706, %v5994
        %v5996 = vpop.f32.mrb[0].mxu0
        %5997 = vmatprep.mubr.bf16.mxu0 %v3715
        %5998 = vmatmul.mubr.bf16.gmra.mrb[0].mxu0 %v3275
        %v5999 = vpop.f32.mrb[0].mxu0
        %v6000 = vadd.f32 %v5711, %v5999
        %v6001 = vpop.f32.mrb[0].mxu0
        %v6002 = vpop.f32.mrb[0].mxu0
        %v6003 = vadd.f32 %v5714, %v6002
        %v6004 = vpop.f32.mrb[0].mxu0
        %6005 = vmatprep.mubr.bf16.mxu0 %v3718
        %6006 = vmatmul.mubr.bf16.gmra.mrb[0].mxu0 %v3287
        %v6007 = vpop.f32.mrb[0].mxu0
        %v6008 = vadd.f32 %v5719, %v6007
        %v6009 = vpop.f32.mrb[0].mxu0
        %v6010 = vpop.f32.mrb[0].mxu0
        %v6011 = vadd.f32 %v5722, %v6010
        %v6012 = vpop.f32.mrb[0].mxu0
        %6013 = vmatprep.mubr.bf16.mxu0 %v3721
        %6014 = vmatmul.mubr.bf16.gmra.mrb[0].mxu0 %v3299
        %v6015 = vpop.f32.mrb[0].mxu0
        %v6016 = vadd.f32 %v5727, %v6015
        %v6017 = vpop.f32.mrb[0].mxu0
        %v6018 = vpop.f32.mrb[0].mxu0
        %v6019 = vadd.f32 %v5730, %v6018
        %v6020 = vpop.f32.mrb[0].mxu0
        %6021 = vmatprep.mubr.bf16.mxu0 %v3724
        %6022 = vmatmul.mubr.bf16.gmra.mrb[0].mxu0 %v3311
        %v6023 = vpop.f32.mrb[0].mxu0
        %v6024 = vadd.f32 %v5735, %v6023
        %v6025 = vpop.f32.mrb[0].mxu0
        %v6026 = vpop.f32.mrb[0].mxu0
        %v6027 = vadd.f32 %v5738, %v6026
        %v6028 = vpop.f32.mrb[0].mxu0
        %6029 = vmatprep.mubr.bf16.mxu0 %v3727
        %6030 = vmatmul.mubr.bf16.gmra.mrb[0].mxu0 %v3323
        %v6031 = vpop.f32.mrb[0].mxu0
        %v6032 = vadd.f32 %v5743, %v6031
        %v6033 = vpop.f32.mrb[0].mxu0
        %v6034 = vpop.f32.mrb[0].mxu0
        %v6035 = vadd.f32 %v5746, %v6034
        %v6036 = vpop.f32.mrb[0].mxu0
        %6037 = vmatprep.mubr.bf16.mxu0 %v3730
        %6038 = vmatmul.mubr.bf16.gmra.mrb[0].mxu0 %v3335
        %v6039 = vpop.f32.mrb[0].mxu0
        %v6040 = vadd.f32 %v5751, %v6039
        %v6041 = vpop.f32.mrb[0].mxu0
        %v6042 = vpop.f32.mrb[0].mxu0
        %v6043 = vadd.f32 %v5754, %v6042
        %v6044 = vpop.f32.mrb[0].mxu0
        %6045 = vmatprep.mubr.bf16.mxu0 %v3733
        %6046 = vmatmul.mubr.bf16.gmra.mrb[0].mxu0 %v3347
        %v6047 = vpop.f32.mrb[0].mxu0
        %v6048 = vadd.f32 %v5759, %v6047
        %v6049 = vpop.f32.mrb[0].mxu0
        %v6050 = vpop.f32.mrb[0].mxu0
        %v6051 = vadd.f32 %v5762, %v6050
        %v6052 = vpop.f32.mrb[0].mxu0
        %6053 = vmatprep.mubr.bf16.mxu0 %v3736
        %6054 = vmatmul.mubr.bf16.gmra.mrb[0].mxu0 %v3359
        %v6055 = vpop.f32.mrb[0].mxu0
        %v6056 = vadd.f32 %v5767, %v6055
        %v6057 = vpop.f32.mrb[0].mxu0
        %v6058 = vpop.f32.mrb[0].mxu0
        %v6059 = vadd.f32 %v5770, %v6058
        %v6060 = vpop.f32.mrb[0].mxu0
        %6061 = vmatprep.mubr.bf16.mxu0 %v3739
        %6062 = vmatmul.mubr.bf16.gmra.mrb[0].mxu0 %v3371
        %v6063 = vpop.f32.mrb[0].mxu0
        %v6064 = vadd.f32 %v5775, %v6063
        %v6065 = vpop.f32.mrb[0].mxu0
        %v6066 = vpop.f32.mrb[0].mxu0
        %v6067 = vadd.f32 %v5778, %v6066
        %v6068 = vpop.f32.mrb[0].mxu0
        %6069 = vmatprep.mubr.bf16.mxu0 %v3742
        %6070 = vmatmul.mubr.bf16.gmra.mrb[0].mxu0 %v3383
        %v6071 = vpop.f32.mrb[0].mxu0
        %v6072 = vadd.f32 %v5783, %v6071
        %v6073 = vpop.f32.mrb[0].mxu0
        %v6074 = vpop.f32.mrb[0].mxu0
        %v6075 = vadd.f32 %v5786, %v6074
        %v6076 = vpop.f32.mrb[0].mxu0
        %6077 = vmatprep.mubr.bf16.mxu0 %v3745
        %6078 = vmatmul.mubr.bf16.gmra.mrb[0].mxu0 %v3395
        %v6079 = vpop.f32.mrb[0].mxu0
        %v6080 = vadd.f32 %v5791, %v6079
        %v6081 = vpop.f32.mrb[0].mxu0
        %v6082 = vpop.f32.mrb[0].mxu0
        %v6083 = vadd.f32 %v5794, %v6082
        %v6084 = vpop.f32.mrb[0].mxu0
        %6085 = vmatprep.mubr.bf16.mxu0 %v3748
        %6086 = vmatmul.mubr.bf16.gmra.mrb[0].mxu0 %v3407
        %v6087 = vpop.f32.mrb[0].mxu0
        %v6088 = vadd.f32 %v5799, %v6087
        %v6089 = vpop.f32.mrb[0].mxu0
        %v6090 = vpop.f32.mrb[0].mxu0
        %v6091 = vadd.f32 %v5802, %v6090
        %v6092 = vpop.f32.mrb[0].mxu0
        %6093 = vmatprep.mubr.bf16.mxu0 %v3751
        %6094 = vmatmul.mubr.bf16.gmra.mrb[0].mxu0 %v3419
        %v6095 = vpop.f32.mrb[0].mxu0
        %v6096 = vadd.f32 %v5807, %v6095
        %v6097 = vpop.f32.mrb[0].mxu0
        %v6098 = vpop.f32.mrb[0].mxu0
        %v6099 = vadd.f32 %v5810, %v6098
        %v6100 = vpop.f32.mrb[0].mxu0
        %6101 = vmatprep.mubr.bf16.mxu0 %v3754
        %6102 = vmatmul.mubr.bf16.gmra.mrb[0].mxu0 %v3431
        %v6103 = vpop.f32.mrb[0].mxu0
        %v6104 = vadd.f32 %v5815, %v6103
        %v6105 = vpop.f32.mrb[0].mxu0
        %v6106 = vpop.f32.mrb[0].mxu0
        %v6107 = vadd.f32 %v5818, %v6106
        %v6108 = vpop.f32.mrb[0].mxu0
        %6109 = vmatprep.mubr.bf16.mxu0 %v3757
        %6110 = vmatmul.mubr.bf16.gmra.mrb[0].mxu0 %v3443
        %v6111 = vpop.f32.mrb[0].mxu0
        %v6112 = vadd.f32 %v5823, %v6111
        %v6113 = vpop.f32.mrb[0].mxu0
        %v6114 = vpop.f32.mrb[0].mxu0
        %v6115 = vadd.f32 %v5826, %v6114
        %v6116 = vpop.f32.mrb[0].mxu0
        %6117 = vmatprep.mubr.bf16.mxu0 %v3760
        %6118 = vmatmul.mubr.bf16.gmra.mrb[0].mxu0 %v3455
        %v6119 = vpop.f32.mrb[0].mxu0
        %v6120 = vadd.f32 %v5831, %v6119
        %v6121 = vpop.f32.mrb[0].mxu0
        %v6122 = vpop.f32.mrb[0].mxu0
        %v6123 = vadd.f32 %v5834, %v6122
        %v6124 = vpop.f32.mrb[0].mxu0
        %6125 = vmatprep.mubr.bf16.mxu0 %v3763
        %6126 = vmatmul.mubr.bf16.gmra.mrb[0].mxu0 %v3467
        %v6127 = vpop.f32.mrb[0].mxu0
        %v6128 = vadd.f32 %v5839, %v6127
        %v6129 = vpop.f32.mrb[0].mxu0
        %v6130 = vpop.f32.mrb[0].mxu0
        %v6131 = vadd.f32 %v5842, %v6130
        %v6132 = vpop.f32.mrb[0].mxu0
        %6133 = vmatprep.mubr.bf16.mxu0 %v3766
        %6134 = vmatmul.mubr.bf16.gmra.mrb[0].mxu0 %v3479
        %v6135 = vpop.f32.mrb[0].mxu0
        %v6136 = vadd.f32 %v5847, %v6135
        %v6137 = vpop.f32.mrb[0].mxu0
        %v6138 = vpop.f32.mrb[0].mxu0
        %v6139 = vadd.f32 %v5850, %v6138
        %v6140 = vpop.f32.mrb[0].mxu0
        %6141 = vmatprep.mubr.bf16.mxu0 %v3769
        %6142 = vmatmul.mubr.bf16.gmra.mrb[0].mxu0 %v3491
        %v6143 = vpop.f32.mrb[0].mxu0
        %v6144 = vadd.f32 %v5855, %v6143
        %v6145 = vpop.f32.mrb[0].mxu0
        %v6146 = vpop.f32.mrb[0].mxu0
        %v6147 = vadd.f32 %v5858, %v6146
        %v6148 = vpop.f32.mrb[0].mxu0
        %6149 = vmatprep.mubr.bf16.mxu0 %v3772
        %6150 = vmatmul.mubr.bf16.gmra.mrb[0].mxu0 %v3503
        %v6151 = vpop.f32.mrb[0].mxu0
        %v6152 = vadd.f32 %v5863, %v6151
        %v6153 = vpop.f32.mrb[0].mxu0
        %v6154 = vpop.f32.mrb[0].mxu0
        %v6155 = vadd.f32 %v5866, %v6154
        %v6156 = vpop.f32.mrb[0].mxu0
        %6157 = vmatprep.mubr.bf16.mxu0 %v3775
        %6158 = vmatmul.mubr.bf16.gmra.mrb[0].mxu0 %v3515
        %v6159 = vpop.f32.mrb[0].mxu0
        %v6160 = vadd.f32 %v5871, %v6159
        %v6161 = vpop.f32.mrb[0].mxu0
        %v6162 = vpop.f32.mrb[0].mxu0
        %v6163 = vadd.f32 %v5874, %v6162
        %v6164 = vpop.f32.mrb[0].mxu0
        %6165 = vmatprep.mubr.bf16.mxu0 %v3778
        %6166 = vmatmul.mubr.bf16.gmra.mrb[0].mxu0 %v3527
        %v6167 = vpop.f32.mrb[0].mxu0
        %v6168 = vadd.f32 %v5879, %v6167
        %v6169 = vpop.f32.mrb[0].mxu0
        %v6170 = vpop.f32.mrb[0].mxu0
        %v6171 = vadd.f32 %v5882, %v6170
        %v6172 = vpop.f32.mrb[0].mxu0
        %6173 = vmatprep.mubr.bf16.mxu0 %v3781
        %6174 = vmatmul.mubr.bf16.gmra.mrb[0].mxu0 %v3539
        %v6175 = vpop.f32.mrb[0].mxu0
        %v6176 = vadd.f32 %v5887, %v6175
        %v6177 = vpop.f32.mrb[0].mxu0
        %v6178 = vpop.f32.mrb[0].mxu0
        %v6179 = vadd.f32 %v5890, %v6178
        %v6180 = vpop.f32.mrb[0].mxu0
        %6181 = vmatprep.mubr.bf16.mxu0 %v3784
        %6182 = vmatmul.mubr.bf16.gmra.mrb[0].mxu0 %v3551
        %v6183 = vpop.f32.mrb[0].mxu0
        %v6184 = vadd.f32 %v5895, %v6183
        %v6185 = vpop.f32.mrb[0].mxu0
        %v6186 = vpop.f32.mrb[0].mxu0
        %v6187 = vadd.f32 %v5898, %v6186
        %v6188 = vpop.f32.mrb[0].mxu0
        %6189 = vmatprep.mubr.bf16.mxu0 %v3787
        %6190 = vmatmul.mubr.bf16.gmra.mrb[0].mxu0 %v3563
        %v6191 = vpop.f32.mrb[0].mxu0
        %v6192 = vadd.f32 %v5903, %v6191
        %v6193 = vpop.f32.mrb[0].mxu0
        %v6194 = vpop.f32.mrb[0].mxu0
        %v6195 = vadd.f32 %v5906, %v6194
        %v6196 = vpop.f32.mrb[0].mxu0
        %6197 = vdwg.mxu0
        %6198 = vmatprep.subr.bf16.mxu0 0
        %6199 = vmatpush1.bf16.msra.mxu0 %v5235
        %6200 = vmatprep.subr.bf16.mxu0 0
        %6201 = vmatpush1.bf16.msra.mxu0 %v5236
        %6202 = vmatprep.subr.bf16.mxu0 0
        %6203 = vmatpush1.bf16.msra.mxu0 %v5237
        %6204 = vmatprep.subr.bf16.mxu0 0
        %6205 = vmatpush1.bf16.msra.mxu0 %v5238
        %6206 = vmatprep.subr.bf16.mxu0 0
        %6207 = vmatpush1.bf16.msra.mxu0 %v5239
        %6208 = vmatprep.subr.bf16.mxu0 0
        %6209 = vmatpush1.bf16.msra.mxu0 %v5240
        %6210 = vmatprep.subr.bf16.mxu0 0
        %6211 = vmatpush1.bf16.msra.mxu0 %v5241
        %6212 = vmatprep.subr.bf16.mxu0 0
        %6213 = vmatpush1.bf16.msra.mxu0 %v5242
        %6214 = vmatprep.subr.bf16.mxu0 0
        %6215 = vmatpush1.bf16.msra.mxu0 %v5243
        %6216 = vmatprep.subr.bf16.mxu0 0
        %6217 = vmatpush1.bf16.msra.mxu0 %v5244
        %6218 = vmatprep.subr.bf16.mxu0 0
        %6219 = vmatpush1.bf16.msra.mxu0 %v5245
        %6220 = vmatprep.subr.bf16.mxu0 0
        %6221 = vmatpush1.bf16.msra.mxu0 %v5246
        %6222 = vmatprep.subr.bf16.mxu0 0
        %6223 = vmatpush1.bf16.msra.mxu0 %v5247
        %6224 = vmatprep.subr.bf16.mxu0 0
        %6225 = vmatpush1.bf16.msra.mxu0 %v5248
        %6226 = vmatprep.subr.bf16.mxu0 0
        %6227 = vmatpush1.bf16.msra.mxu0 %v5249
        %6228 = vmatprep.subr.bf16.mxu0 0
        %6229 = vmatpush1.bf16.msra.mxu0 %v5250
        %6230 = vmatprep.mubr.bf16.mxu0 %v4119
        %6231 = vmatmul.mubr.bf16.gmra.mrb[0].mxu0 %v3948
        %v6232 = vpop.f32.mrb[0].mxu0
        %v6233 = vadd.f32 %v5944, %v6232
        %v6234 = vpop.f32.mrb[0].mxu0
        %v6235 = vpop.f32.mrb[0].mxu0
        %v6236 = vadd.f32 %v5947, %v6235
        %v6237 = vpop.f32.mrb[0].mxu0
        %6238 = vmatprep.mubr.bf16.mxu0 %v4131
        %6239 = vmatmul.mubr.bf16.gmra.mrb[0].mxu0 %v3949
        %v6240 = vpop.f32.mrb[0].mxu0
        %v6241 = vadd.f32 %v5952, %v6240
        %v6242 = vpop.f32.mrb[0].mxu0
        %v6243 = vpop.f32.mrb[0].mxu0
        %v6244 = vadd.f32 %v5955, %v6243
        %v6245 = vpop.f32.mrb[0].mxu0
        %6246 = vmatprep.mubr.bf16.mxu0 %v4143
        %6247 = vmatmul.mubr.bf16.gmra.mrb[0].mxu0 %v3950
        %v6248 = vpop.f32.mrb[0].mxu0
        %v6249 = vadd.f32 %v5960, %v6248
        %v6250 = vpop.f32.mrb[0].mxu0
        %v6251 = vpop.f32.mrb[0].mxu0
        %v6252 = vadd.f32 %v5963, %v6251
        %v6253 = vpop.f32.mrb[0].mxu0
        %6254 = vmatprep.mubr.bf16.mxu0 %v4155
        %6255 = vmatmul.mubr.bf16.gmra.mrb[0].mxu0 %v3951
        %v6256 = vpop.f32.mrb[0].mxu0
        %v6257 = vadd.f32 %v5968, %v6256
        %v6258 = vpop.f32.mrb[0].mxu0
        %v6259 = vpop.f32.mrb[0].mxu0
        %v6260 = vadd.f32 %v5971, %v6259
        %v6261 = vpop.f32.mrb[0].mxu0
        %6262 = vmatprep.mubr.bf16.mxu0 %v4167
        %6263 = vmatmul.mubr.bf16.gmra.mrb[0].mxu0 %v3952
        %v6264 = vpop.f32.mrb[0].mxu0
        %v6265 = vadd.f32 %v5976, %v6264
        %v6266 = vpop.f32.mrb[0].mxu0
        %v6267 = vpop.f32.mrb[0].mxu0
        %v6268 = vadd.f32 %v5979, %v6267
        %v6269 = vpop.f32.mrb[0].mxu0
        %6270 = vmatprep.mubr.bf16.mxu0 %v4179
        %6271 = vmatmul.mubr.bf16.gmra.mrb[0].mxu0 %v3953
        %v6272 = vpop.f32.mrb[0].mxu0
        %v6273 = vadd.f32 %v5984, %v6272
        %v6274 = vpop.f32.mrb[0].mxu0
        %v6275 = vpop.f32.mrb[0].mxu0
        %v6276 = vadd.f32 %v5987, %v6275
        %v6277 = vpop.f32.mrb[0].mxu0
        %6278 = vmatprep.mubr.bf16.mxu0 %v4191
        %6279 = vmatmul.mubr.bf16.gmra.mrb[0].mxu0 %v3954
        %v6280 = vpop.f32.mrb[0].mxu0
        %v6281 = vadd.f32 %v5992, %v6280
        %v6282 = vpop.f32.mrb[0].mxu0
        %v6283 = vpop.f32.mrb[0].mxu0
        %v6284 = vadd.f32 %v5995, %v6283
        %v6285 = vpop.f32.mrb[0].mxu0
        %6286 = vmatprep.mubr.bf16.mxu0 %v4203
        %6287 = vmatmul.mubr.bf16.gmra.mrb[0].mxu0 %v3955
        %v6288 = vpop.f32.mrb[0].mxu0
        %v6289 = vadd.f32 %v6000, %v6288
        %v6290 = vpop.f32.mrb[0].mxu0
        %v6291 = vpop.f32.mrb[0].mxu0
        %v6292 = vadd.f32 %v6003, %v6291
        %v6293 = vpop.f32.mrb[0].mxu0
        %6294 = vmatprep.mubr.bf16.mxu0 %v4215
        %6295 = vmatmul.mubr.bf16.gmra.mrb[0].mxu0 %v3956
        %v6296 = vpop.f32.mrb[0].mxu0
        %v6297 = vadd.f32 %v6008, %v6296
        %v6298 = vpop.f32.mrb[0].mxu0
        %v6299 = vpop.f32.mrb[0].mxu0
        %v6300 = vadd.f32 %v6011, %v6299
        %v6301 = vpop.f32.mrb[0].mxu0
        %6302 = vmatprep.mubr.bf16.mxu0 %v4227
        %6303 = vmatmul.mubr.bf16.gmra.mrb[0].mxu0 %v3957
        %v6304 = vpop.f32.mrb[0].mxu0
        %v6305 = vadd.f32 %v6016, %v6304
        %v6306 = vpop.f32.mrb[0].mxu0
        %v6307 = vpop.f32.mrb[0].mxu0
        %v6308 = vadd.f32 %v6019, %v6307
        %v6309 = vpop.f32.mrb[0].mxu0
        %6310 = vmatprep.mubr.bf16.mxu0 %v4239
        %6311 = vmatmul.mubr.bf16.gmra.mrb[0].mxu0 %v3958
        %v6312 = vpop.f32.mrb[0].mxu0
        %v6313 = vadd.f32 %v6024, %v6312
        %v6314 = vpop.f32.mrb[0].mxu0
        %v6315 = vpop.f32.mrb[0].mxu0
        %v6316 = vadd.f32 %v6027, %v6315
        %v6317 = vpop.f32.mrb[0].mxu0
        %6318 = vmatprep.mubr.bf16.mxu0 %v4251
        %6319 = vmatmul.mubr.bf16.gmra.mrb[0].mxu0 %v3959
        %v6320 = vpop.f32.mrb[0].mxu0
        %v6321 = vadd.f32 %v6032, %v6320
        %v6322 = vpop.f32.mrb[0].mxu0
        %v6323 = vpop.f32.mrb[0].mxu0
        %v6324 = vadd.f32 %v6035, %v6323
        %v6325 = vpop.f32.mrb[0].mxu0
        %6326 = vmatprep.mubr.bf16.mxu0 %v4263
        %6327 = vmatmul.mubr.bf16.gmra.mrb[0].mxu0 %v3960
        %v6328 = vpop.f32.mrb[0].mxu0
        %v6329 = vadd.f32 %v6040, %v6328
        %v6330 = vpop.f32.mrb[0].mxu0
        %v6331 = vpop.f32.mrb[0].mxu0
        %v6332 = vadd.f32 %v6043, %v6331
        %v6333 = vpop.f32.mrb[0].mxu0
        %6334 = vmatprep.mubr.bf16.mxu0 %v4275
        %6335 = vmatmul.mubr.bf16.gmra.mrb[0].mxu0 %v3961
        %v6336 = vpop.f32.mrb[0].mxu0
        %v6337 = vadd.f32 %v6048, %v6336
        %v6338 = vpop.f32.mrb[0].mxu0
        %v6339 = vpop.f32.mrb[0].mxu0
        %v6340 = vadd.f32 %v6051, %v6339
        %v6341 = vpop.f32.mrb[0].mxu0
        %6342 = vmatprep.mubr.bf16.mxu0 %v4287
        %6343 = vmatmul.mubr.bf16.gmra.mrb[0].mxu0 %v3962
        %v6344 = vpop.f32.mrb[0].mxu0
        %v6345 = vadd.f32 %v6056, %v6344
        %v6346 = vpop.f32.mrb[0].mxu0
        %v6347 = vpop.f32.mrb[0].mxu0
        %v6348 = vadd.f32 %v6059, %v6347
        %v6349 = vpop.f32.mrb[0].mxu0
        %6350 = vmatprep.mubr.bf16.mxu0 %v4299
        %6351 = vmatmul.mubr.bf16.gmra.mrb[0].mxu0 %v3963
        %v6352 = vpop.f32.mrb[0].mxu0
        %v6353 = vadd.f32 %v6064, %v6352
        %v6354 = vpop.f32.mrb[0].mxu0
        %v6355 = vpop.f32.mrb[0].mxu0
        %v6356 = vadd.f32 %v6067, %v6355
        %v6357 = vpop.f32.mrb[0].mxu0
        %6358 = vmatprep.mubr.bf16.mxu0 %v4311
        %6359 = vmatmul.mubr.bf16.gmra.mrb[0].mxu0 %v3964
        %v6360 = vpop.f32.mrb[0].mxu0
        %v6361 = vadd.f32 %v6072, %v6360
        %v6362 = vpop.f32.mrb[0].mxu0
        %v6363 = vpop.f32.mrb[0].mxu0
        %v6364 = vadd.f32 %v6075, %v6363
        %v6365 = vpop.f32.mrb[0].mxu0
        %6366 = vmatprep.mubr.bf16.mxu0 %v4323
        %6367 = vmatmul.mubr.bf16.gmra.mrb[0].mxu0 %v3965
        %v6368 = vpop.f32.mrb[0].mxu0
        %v6369 = vadd.f32 %v6080, %v6368
        %v6370 = vpop.f32.mrb[0].mxu0
        %v6371 = vpop.f32.mrb[0].mxu0
        %v6372 = vadd.f32 %v6083, %v6371
        %v6373 = vpop.f32.mrb[0].mxu0
        %6374 = vmatprep.mubr.bf16.mxu0 %v4335
        %6375 = vmatmul.mubr.bf16.gmra.mrb[0].mxu0 %v3966
        %v6376 = vpop.f32.mrb[0].mxu0
        %v6377 = vadd.f32 %v6088, %v6376
        %v6378 = vpop.f32.mrb[0].mxu0
        %v6379 = vpop.f32.mrb[0].mxu0
        %v6380 = vadd.f32 %v6091, %v6379
        %v6381 = vpop.f32.mrb[0].mxu0
        %6382 = vmatprep.mubr.bf16.mxu0 %v4347
        %6383 = vmatmul.mubr.bf16.gmra.mrb[0].mxu0 %v3967
        %v6384 = vpop.f32.mrb[0].mxu0
        %v6385 = vadd.f32 %v6096, %v6384
        %v6386 = vpop.f32.mrb[0].mxu0
        %v6387 = vpop.f32.mrb[0].mxu0
        %v6388 = vadd.f32 %v6099, %v6387
        %v6389 = vpop.f32.mrb[0].mxu0
        %6390 = vmatprep.mubr.bf16.mxu0 %v4359
        %6391 = vmatmul.mubr.bf16.gmra.mrb[0].mxu0 %v3968
        %v6392 = vpop.f32.mrb[0].mxu0
        %v6393 = vadd.f32 %v6104, %v6392
        %v6394 = vpop.f32.mrb[0].mxu0
        %v6395 = vpop.f32.mrb[0].mxu0
        %v6396 = vadd.f32 %v6107, %v6395
        %v6397 = vpop.f32.mrb[0].mxu0
        %6398 = vmatprep.mubr.bf16.mxu0 %v4371
        %6399 = vmatmul.mubr.bf16.gmra.mrb[0].mxu0 %v3969
        %v6400 = vpop.f32.mrb[0].mxu0
        %v6401 = vadd.f32 %v6112, %v6400
        %v6402 = vpop.f32.mrb[0].mxu0
        %v6403 = vpop.f32.mrb[0].mxu0
        %v6404 = vadd.f32 %v6115, %v6403
        %v6405 = vpop.f32.mrb[0].mxu0
        %6406 = vmatprep.mubr.bf16.mxu0 %v4383
        %6407 = vmatmul.mubr.bf16.gmra.mrb[0].mxu0 %v3970
        %v6408 = vpop.f32.mrb[0].mxu0
        %v6409 = vadd.f32 %v6120, %v6408
        %v6410 = vpop.f32.mrb[0].mxu0
        %v6411 = vpop.f32.mrb[0].mxu0
        %v6412 = vadd.f32 %v6123, %v6411
        %v6413 = vpop.f32.mrb[0].mxu0
        %6414 = vmatprep.mubr.bf16.mxu0 %v4395
        %6415 = vmatmul.mubr.bf16.gmra.mrb[0].mxu0 %v3971
        %v6416 = vpop.f32.mrb[0].mxu0
        %v6417 = vadd.f32 %v6128, %v6416
        %v6418 = vpop.f32.mrb[0].mxu0
        %v6419 = vpop.f32.mrb[0].mxu0
        %v6420 = vadd.f32 %v6131, %v6419
        %v6421 = vpop.f32.mrb[0].mxu0
        %6422 = vmatprep.mubr.bf16.mxu0 %v4407
        %6423 = vmatmul.mubr.bf16.gmra.mrb[0].mxu0 %v3972
        %v6424 = vpop.f32.mrb[0].mxu0
        %v6425 = vadd.f32 %v6136, %v6424
        %v6426 = vpop.f32.mrb[0].mxu0
        %v6427 = vpop.f32.mrb[0].mxu0
        %v6428 = vadd.f32 %v6139, %v6427
        %v6429 = vpop.f32.mrb[0].mxu0
        %6430 = vmatprep.mubr.bf16.mxu0 %v4419
        %6431 = vmatmul.mubr.bf16.gmra.mrb[0].mxu0 %v3973
        %v6432 = vpop.f32.mrb[0].mxu0
        %v6433 = vadd.f32 %v6144, %v6432
        %v6434 = vpop.f32.mrb[0].mxu0
        %v6435 = vpop.f32.mrb[0].mxu0
        %v6436 = vadd.f32 %v6147, %v6435
        %v6437 = vpop.f32.mrb[0].mxu0
        %6438 = vmatprep.mubr.bf16.mxu0 %v4431
        %6439 = vmatmul.mubr.bf16.gmra.mrb[0].mxu0 %v3974
        %v6440 = vpop.f32.mrb[0].mxu0
        %v6441 = vadd.f32 %v6152, %v6440
        %v6442 = vpop.f32.mrb[0].mxu0
        %v6443 = vpop.f32.mrb[0].mxu0
        %v6444 = vadd.f32 %v6155, %v6443
        %v6445 = vpop.f32.mrb[0].mxu0
        %6446 = vmatprep.mubr.bf16.mxu0 %v4443
        %6447 = vmatmul.mubr.bf16.gmra.mrb[0].mxu0 %v3975
        %v6448 = vpop.f32.mrb[0].mxu0
        %v6449 = vadd.f32 %v6160, %v6448
        %v6450 = vpop.f32.mrb[0].mxu0
        %v6451 = vpop.f32.mrb[0].mxu0
        %v6452 = vadd.f32 %v6163, %v6451
        %v6453 = vpop.f32.mrb[0].mxu0
        %6454 = vmatprep.mubr.bf16.mxu0 %v4455
        %6455 = vmatmul.mubr.bf16.gmra.mrb[0].mxu0 %v3976
        %v6456 = vpop.f32.mrb[0].mxu0
        %v6457 = vadd.f32 %v6168, %v6456
        %v6458 = vpop.f32.mrb[0].mxu0
        %v6459 = vpop.f32.mrb[0].mxu0
        %v6460 = vadd.f32 %v6171, %v6459
        %v6461 = vpop.f32.mrb[0].mxu0
        %6462 = vmatprep.mubr.bf16.mxu0 %v4467
        %6463 = vmatmul.mubr.bf16.gmra.mrb[0].mxu0 %v3977
        %v6464 = vpop.f32.mrb[0].mxu0
        %v6465 = vadd.f32 %v6176, %v6464
        %v6466 = vpop.f32.mrb[0].mxu0
        %v6467 = vpop.f32.mrb[0].mxu0
        %v6468 = vadd.f32 %v6179, %v6467
        %v6469 = vpop.f32.mrb[0].mxu0
        %6470 = vmatprep.mubr.bf16.mxu0 %v4479
        %6471 = vmatmul.mubr.bf16.gmra.mrb[0].mxu0 %v3978
        %v6472 = vpop.f32.mrb[0].mxu0
        %v6473 = vadd.f32 %v6184, %v6472
        %v6474 = vpop.f32.mrb[0].mxu0
        %v6475 = vpop.f32.mrb[0].mxu0
        %v6476 = vadd.f32 %v6187, %v6475
        %v6477 = vpop.f32.mrb[0].mxu0
        %6478 = vmatprep.mubr.bf16.mxu0 %v4491
        %6479 = vmatmul.mubr.bf16.gmra.mrb[0].mxu0 %v3979
        %v6480 = vpop.f32.mrb[0].mxu0
        %v6481 = vadd.f32 %v6192, %v6480
        %v6482 = vpop.f32.mrb[0].mxu0
        %v6483 = vpop.f32.mrb[0].mxu0
        %v6484 = vadd.f32 %v6195, %v6483
        %v6485 = vpop.f32.mrb[0].mxu0
        %6486 = vdwg.mxu0
        %6487 = vmatprep.subr.bf16.mxu0 0
        %6488 = vmatpush1.bf16.msra.mxu0 %v5251
        %6489 = vmatprep.subr.bf16.mxu0 0
        %6490 = vmatpush1.bf16.msra.mxu0 %v5252
        %6491 = vmatprep.subr.bf16.mxu0 0
        %6492 = vmatpush1.bf16.msra.mxu0 %v5253
        %6493 = vmatprep.subr.bf16.mxu0 0
        %6494 = vmatpush1.bf16.msra.mxu0 %v5254
        %6495 = vmatprep.subr.bf16.mxu0 0
        %6496 = vmatpush1.bf16.msra.mxu0 %v5255
        %6497 = vmatprep.subr.bf16.mxu0 0
        %6498 = vmatpush1.bf16.msra.mxu0 %v5256
        %6499 = vmatprep.subr.bf16.mxu0 0
        %6500 = vmatpush1.bf16.msra.mxu0 %v5257
        %6501 = vmatprep.subr.bf16.mxu0 0
        %6502 = vmatpush1.bf16.msra.mxu0 %v5258
        %6503 = vmatprep.subr.bf16.mxu0 0
        %6504 = vmatpush1.bf16.msra.mxu0 0
        %6505 = vmatprep.subr.bf16.mxu0 0
        %6506 = vmatpush1.bf16.msra.mxu0 0
        %6507 = vmatprep.subr.bf16.mxu0 0
        %6508 = vmatpush1.bf16.msra.mxu0 0
        %6509 = vmatprep.subr.bf16.mxu0 0
        %6510 = vmatpush1.bf16.msra.mxu0 0
        %6511 = vmatprep.subr.bf16.mxu0 0
        %6512 = vmatpush1.bf16.msra.mxu0 0
        %6513 = vmatprep.subr.bf16.mxu0 0
        %6514 = vmatpush1.bf16.msra.mxu0 0
        %6515 = vmatprep.subr.bf16.mxu0 0
        %6516 = vmatpush1.bf16.msra.mxu0 0
        %6517 = vmatprep.subr.bf16.mxu0 0
        %6518 = vmatpush1.bf16.msra.mxu0 0
        %6519 = vmatprep.mubr.bf16.mxu0 0
        %6520 = vmatmul.mubr.bf16.gmra.mrb[0].mxu0 %v4622
        %v6521 = vpop.f32.mrb[0].mxu0
        %v6522 = vadd.f32 %v6233, %v6521
        %v6523 = vpop.f32.mrb[0].mxu0
        %v6524 = vpop.f32.mrb[0].mxu0
        %v6525 = vadd.f32 %v6236, %v6524
        %v6526 = vpop.f32.mrb[0].mxu0
        %6527 = vmatprep.mubr.bf16.mxu0 0
        %6528 = vmatmul.mubr.bf16.gmra.mrb[0].mxu0 %v4625
        %v6529 = vpop.f32.mrb[0].mxu0
        %v6530 = vadd.f32 %v6241, %v6529
        %v6531 = vpop.f32.mrb[0].mxu0
        %v6532 = vpop.f32.mrb[0].mxu0
        %v6533 = vadd.f32 %v6244, %v6532
        %v6534 = vpop.f32.mrb[0].mxu0
        %6535 = vmatprep.mubr.bf16.mxu0 0
        %6536 = vmatmul.mubr.bf16.gmra.mrb[0].mxu0 %v4628
        %v6537 = vpop.f32.mrb[0].mxu0
        %v6538 = vadd.f32 %v6249, %v6537
        %v6539 = vpop.f32.mrb[0].mxu0
        %v6540 = vpop.f32.mrb[0].mxu0
        %v6541 = vadd.f32 %v6252, %v6540
        %v6542 = vpop.f32.mrb[0].mxu0
        %6543 = vmatprep.mubr.bf16.mxu0 0
        %6544 = vmatmul.mubr.bf16.gmra.mrb[0].mxu0 %v4631
        %v6545 = vpop.f32.mrb[0].mxu0
        %v6546 = vadd.f32 %v6257, %v6545
        %v6547 = vpop.f32.mrb[0].mxu0
        %v6548 = vpop.f32.mrb[0].mxu0
        %v6549 = vadd.f32 %v6260, %v6548
        %v6550 = vpop.f32.mrb[0].mxu0
        %6551 = vmatprep.mubr.bf16.mxu0 0
        %6552 = vmatmul.mubr.bf16.gmra.mrb[0].mxu0 %v4634
        %v6553 = vpop.f32.mrb[0].mxu0
        %v6554 = vadd.f32 %v6265, %v6553
        %v6555 = vpop.f32.mrb[0].mxu0
        %v6556 = vpop.f32.mrb[0].mxu0
        %v6557 = vadd.f32 %v6268, %v6556
        %v6558 = vpop.f32.mrb[0].mxu0
        %6559 = vmatprep.mubr.bf16.mxu0 0
        %6560 = vmatmul.mubr.bf16.gmra.mrb[0].mxu0 %v4637
        %v6561 = vpop.f32.mrb[0].mxu0
        %v6562 = vadd.f32 %v6273, %v6561
        %v6563 = vpop.f32.mrb[0].mxu0
        %v6564 = vpop.f32.mrb[0].mxu0
        %v6565 = vadd.f32 %v6276, %v6564
        %v6566 = vpop.f32.mrb[0].mxu0
        %6567 = vmatprep.mubr.bf16.mxu0 0
        %6568 = vmatmul.mubr.bf16.gmra.mrb[0].mxu0 %v4640
        %v6569 = vpop.f32.mrb[0].mxu0
        %v6570 = vadd.f32 %v6281, %v6569
        %v6571 = vpop.f32.mrb[0].mxu0
        %v6572 = vpop.f32.mrb[0].mxu0
        %v6573 = vadd.f32 %v6284, %v6572
        %v6574 = vpop.f32.mrb[0].mxu0
        %6575 = vmatprep.mubr.bf16.mxu0 0
        %6576 = vmatmul.mubr.bf16.gmra.mrb[0].mxu0 %v4643
        %v6577 = vpop.f32.mrb[0].mxu0
        %v6578 = vadd.f32 %v6289, %v6577
        %v6579 = vpop.f32.mrb[0].mxu0
        %v6580 = vpop.f32.mrb[0].mxu0
        %v6581 = vadd.f32 %v6292, %v6580
        %v6582 = vpop.f32.mrb[0].mxu0
        %6583 = vmatprep.mubr.bf16.mxu0 0
        %6584 = vmatmul.mubr.bf16.gmra.mrb[0].mxu0 %v4646
        %v6585 = vpop.f32.mrb[0].mxu0
        %v6586 = vadd.f32 %v6297, %v6585
        %v6587 = vpop.f32.mrb[0].mxu0
        %v6588 = vpop.f32.mrb[0].mxu0
        %v6589 = vadd.f32 %v6300, %v6588
        %v6590 = vpop.f32.mrb[0].mxu0
        %6591 = vmatprep.mubr.bf16.mxu0 0
        %6592 = vmatmul.mubr.bf16.gmra.mrb[0].mxu0 %v4649
        %v6593 = vpop.f32.mrb[0].mxu0
        %v6594 = vadd.f32 %v6305, %v6593
        %v6595 = vpop.f32.mrb[0].mxu0
        %v6596 = vpop.f32.mrb[0].mxu0
        %v6597 = vadd.f32 %v6308, %v6596
        %v6598 = vpop.f32.mrb[0].mxu0
        %6599 = vmatprep.mubr.bf16.mxu0 0
        %6600 = vmatmul.mubr.bf16.gmra.mrb[0].mxu0 %v4652
        %v6601 = vpop.f32.mrb[0].mxu0
        %v6602 = vadd.f32 %v6313, %v6601
        %v6603 = vpop.f32.mrb[0].mxu0
        %v6604 = vpop.f32.mrb[0].mxu0
        %v6605 = vadd.f32 %v6316, %v6604
        %v6606 = vpop.f32.mrb[0].mxu0
        %6607 = vmatprep.mubr.bf16.mxu0 0
        %6608 = vmatmul.mubr.bf16.gmra.mrb[0].mxu0 %v4655
        %v6609 = vpop.f32.mrb[0].mxu0
        %v6610 = vadd.f32 %v6321, %v6609
        %v6611 = vpop.f32.mrb[0].mxu0
        %v6612 = vpop.f32.mrb[0].mxu0
        %v6613 = vadd.f32 %v6324, %v6612
        %v6614 = vpop.f32.mrb[0].mxu0
        %6615 = vmatprep.mubr.bf16.mxu0 0
        %6616 = vmatmul.mubr.bf16.gmra.mrb[0].mxu0 %v4658
        %v6617 = vpop.f32.mrb[0].mxu0
        %v6618 = vadd.f32 %v6329, %v6617
        %v6619 = vpop.f32.mrb[0].mxu0
        %v6620 = vpop.f32.mrb[0].mxu0
        %v6621 = vadd.f32 %v6332, %v6620
        %v6622 = vpop.f32.mrb[0].mxu0
        %6623 = vmatprep.mubr.bf16.mxu0 0
        %6624 = vmatmul.mubr.bf16.gmra.mrb[0].mxu0 %v4661
        %v6625 = vpop.f32.mrb[0].mxu0
        %v6626 = vadd.f32 %v6337, %v6625
        %v6627 = vpop.f32.mrb[0].mxu0
        %v6628 = vpop.f32.mrb[0].mxu0
        %v6629 = vadd.f32 %v6340, %v6628
        %v6630 = vpop.f32.mrb[0].mxu0
        %6631 = vmatprep.mubr.bf16.mxu0 0
        %6632 = vmatmul.mubr.bf16.gmra.mrb[0].mxu0 %v4664
        %v6633 = vpop.f32.mrb[0].mxu0
        %v6634 = vadd.f32 %v6345, %v6633
        %v6635 = vpop.f32.mrb[0].mxu0
        %v6636 = vpop.f32.mrb[0].mxu0
        %v6637 = vadd.f32 %v6348, %v6636
        %v6638 = vpop.f32.mrb[0].mxu0
        %6639 = vmatprep.mubr.bf16.mxu0 0
        %6640 = vmatmul.mubr.bf16.gmra.mrb[0].mxu0 %v4667
        %v6641 = vpop.f32.mrb[0].mxu0
        %v6642 = vadd.f32 %v6353, %v6641
        %v6643 = vpop.f32.mrb[0].mxu0
        %v6644 = vpop.f32.mrb[0].mxu0
        %v6645 = vadd.f32 %v6356, %v6644
        %v6646 = vpop.f32.mrb[0].mxu0
        %6647 = vmatprep.mubr.bf16.mxu0 0
        %6648 = vmatmul.mubr.bf16.gmra.mrb[0].mxu0 %v4670
        %v6649 = vpop.f32.mrb[0].mxu0
        %v6650 = vadd.f32 %v6361, %v6649
        %v6651 = vpop.f32.mrb[0].mxu0
        %v6652 = vpop.f32.mrb[0].mxu0
        %v6653 = vadd.f32 %v6364, %v6652
        %v6654 = vpop.f32.mrb[0].mxu0
        %6655 = vmatprep.mubr.bf16.mxu0 0
        %6656 = vmatmul.mubr.bf16.gmra.mrb[0].mxu0 %v4673
        %v6657 = vpop.f32.mrb[0].mxu0
        %v6658 = vadd.f32 %v6369, %v6657
        %v6659 = vpop.f32.mrb[0].mxu0
        %v6660 = vpop.f32.mrb[0].mxu0
        %v6661 = vadd.f32 %v6372, %v6660
        %v6662 = vpop.f32.mrb[0].mxu0
        %6663 = vmatprep.mubr.bf16.mxu0 0
        %6664 = vmatmul.mubr.bf16.gmra.mrb[0].mxu0 %v4676
        %v6665 = vpop.f32.mrb[0].mxu0
        %v6666 = vadd.f32 %v6377, %v6665
        %v6667 = vpop.f32.mrb[0].mxu0
        %v6668 = vpop.f32.mrb[0].mxu0
        %v6669 = vadd.f32 %v6380, %v6668
        %v6670 = vpop.f32.mrb[0].mxu0
        %6671 = vmatprep.mubr.bf16.mxu0 0
        %6672 = vmatmul.mubr.bf16.gmra.mrb[0].mxu0 %v4679
        %v6673 = vpop.f32.mrb[0].mxu0
        %v6674 = vadd.f32 %v6385, %v6673
        %v6675 = vpop.f32.mrb[0].mxu0
        %v6676 = vpop.f32.mrb[0].mxu0
        %v6677 = vadd.f32 %v6388, %v6676
        %v6678 = vpop.f32.mrb[0].mxu0
        %6679 = vmatprep.mubr.bf16.mxu0 0
        %6680 = vmatmul.mubr.bf16.gmra.mrb[0].mxu0 %v4682
        %v6681 = vpop.f32.mrb[0].mxu0
        %v6682 = vadd.f32 %v6393, %v6681
        %v6683 = vpop.f32.mrb[0].mxu0
        %v6684 = vpop.f32.mrb[0].mxu0
        %v6685 = vadd.f32 %v6396, %v6684
        %v6686 = vpop.f32.mrb[0].mxu0
        %6687 = vmatprep.mubr.bf16.mxu0 0
        %6688 = vmatmul.mubr.bf16.gmra.mrb[0].mxu0 %v4685
        %v6689 = vpop.f32.mrb[0].mxu0
        %v6690 = vadd.f32 %v6401, %v6689
        %v6691 = vpop.f32.mrb[0].mxu0
        %v6692 = vpop.f32.mrb[0].mxu0
        %v6693 = vadd.f32 %v6404, %v6692
        %v6694 = vpop.f32.mrb[0].mxu0
        %6695 = vmatprep.mubr.bf16.mxu0 0
        %6696 = vmatmul.mubr.bf16.gmra.mrb[0].mxu0 %v4688
        %v6697 = vpop.f32.mrb[0].mxu0
        %v6698 = vadd.f32 %v6409, %v6697
        %v6699 = vpop.f32.mrb[0].mxu0
        %v6700 = vpop.f32.mrb[0].mxu0
        %v6701 = vadd.f32 %v6412, %v6700
        %v6702 = vpop.f32.mrb[0].mxu0
        %6703 = vmatprep.mubr.bf16.mxu0 0
        %6704 = vmatmul.mubr.bf16.gmra.mrb[0].mxu0 %v4691
        %v6705 = vpop.f32.mrb[0].mxu0
        %v6706 = vadd.f32 %v6417, %v6705
        %v6707 = vpop.f32.mrb[0].mxu0
        %v6708 = vpop.f32.mrb[0].mxu0
        %v6709 = vadd.f32 %v6420, %v6708
        %v6710 = vpop.f32.mrb[0].mxu0
        %6711 = vmatprep.mubr.bf16.mxu0 0
        %6712 = vmatmul.mubr.bf16.gmra.mrb[0].mxu0 %v4694
        %v6713 = vpop.f32.mrb[0].mxu0
        %v6714 = vadd.f32 %v6425, %v6713
        %v6715 = vpop.f32.mrb[0].mxu0
        %v6716 = vpop.f32.mrb[0].mxu0
        %v6717 = vadd.f32 %v6428, %v6716
        %v6718 = vpop.f32.mrb[0].mxu0
        %6719 = vmatprep.mubr.bf16.mxu0 0
        %6720 = vmatmul.mubr.bf16.gmra.mrb[0].mxu0 %v4697
        %v6721 = vpop.f32.mrb[0].mxu0
        %v6722 = vadd.f32 %v6433, %v6721
        %v6723 = vpop.f32.mrb[0].mxu0
        %v6724 = vpop.f32.mrb[0].mxu0
        %v6725 = vadd.f32 %v6436, %v6724
        %v6726 = vpop.f32.mrb[0].mxu0
        %6727 = vmatprep.mubr.bf16.mxu0 0
        %6728 = vmatmul.mubr.bf16.gmra.mrb[0].mxu0 %v4700
        %v6729 = vpop.f32.mrb[0].mxu0
        %v6730 = vadd.f32 %v6441, %v6729
        %v6731 = vpop.f32.mrb[0].mxu0
        %v6732 = vpop.f32.mrb[0].mxu0
        %v6733 = vadd.f32 %v6444, %v6732
        %v6734 = vpop.f32.mrb[0].mxu0
        %6735 = vmatprep.mubr.bf16.mxu0 0
        %6736 = vmatmul.mubr.bf16.gmra.mrb[0].mxu0 %v4703
        %v6737 = vpop.f32.mrb[0].mxu0
        %v6738 = vadd.f32 %v6449, %v6737
        %v6739 = vpop.f32.mrb[0].mxu0
        %v6740 = vpop.f32.mrb[0].mxu0
        %v6741 = vadd.f32 %v6452, %v6740
        %v6742 = vpop.f32.mrb[0].mxu0
        %6743 = vmatprep.mubr.bf16.mxu0 0
        %6744 = vmatmul.mubr.bf16.gmra.mrb[0].mxu0 %v4706
        %v6745 = vpop.f32.mrb[0].mxu0
        %v6746 = vadd.f32 %v6457, %v6745
        %v6747 = vpop.f32.mrb[0].mxu0
        %v6748 = vpop.f32.mrb[0].mxu0
        %v6749 = vadd.f32 %v6460, %v6748
        %v6750 = vpop.f32.mrb[0].mxu0
        %6751 = vmatprep.mubr.bf16.mxu0 0
        %6752 = vmatmul.mubr.bf16.gmra.mrb[0].mxu0 %v4709
        %v6753 = vpop.f32.mrb[0].mxu0
        %v6754 = vadd.f32 %v6465, %v6753
        %v6755 = vpop.f32.mrb[0].mxu0
        %v6756 = vpop.f32.mrb[0].mxu0
        %v6757 = vadd.f32 %v6468, %v6756
        %v6758 = vpop.f32.mrb[0].mxu0
        %6759 = vmatprep.mubr.bf16.mxu0 0
        %6760 = vmatmul.mubr.bf16.gmra.mrb[0].mxu0 %v4712
        %v6761 = vpop.f32.mrb[0].mxu0
        %v6762 = vadd.f32 %v6473, %v6761
        %v6763 = vpop.f32.mrb[0].mxu0
        %v6764 = vpop.f32.mrb[0].mxu0
        %v6765 = vadd.f32 %v6476, %v6764
        %v6766 = vpop.f32.mrb[0].mxu0
        %6767 = vmatprep.mubr.bf16.mxu0 0
        %6768 = vmatmul.mubr.bf16.gmra.mrb[0].mxu0 %v4715
        %v6769 = vpop.f32.mrb[0].mxu0
        %v6770 = vadd.f32 %v6481, %v6769
        %v6771 = vpop.f32.mrb[0].mxu0
        %v6772 = vpop.f32.mrb[0].mxu0
        %v6773 = vadd.f32 %v6484, %v6772
        %v6774 = vpop.f32.mrb[0].mxu0
        %6775 = vdwg.mxu0
        %6776 = vst [vmem:[#allocation3] sm:$0xf] 0
        %6777 = vst [vmem:[#allocation3 + $0x4] sm:$0xf] 0
        %6778 = vst [vmem:[#allocation3 + $0x8] sm:$0x1] 0
        %6779 = vst [vmem:[#allocation3 + $0xc] sm:$0xf] 0
        %6780 = vst [vmem:[#allocation3 + $0x10] sm:$0xf] 0
        %6781 = vst [vmem:[#allocation3 + $0x14] sm:$0x1] 0
        %6782 = vst [vmem:[#allocation3 + $0x18] sm:$0xf] 0
        %6783 = vst [vmem:[#allocation3 + $0x1c] sm:$0xf] 0
        %6784 = vst [vmem:[#allocation3 + $0x20] sm:$0x1] 0
        %6785 = vst [vmem:[#allocation3 + $0x24] sm:$0xf] 0
        %6786 = vst [vmem:[#allocation3 + $0x28] sm:$0xf] 0
        %6787 = vst [vmem:[#allocation3 + $0x2c] sm:$0x1] 0
        %6788 = vst [vmem:[#allocation3 + $0x30] sm:$0xf] 0
        %6789 = vst [vmem:[#allocation3 + $0x34] sm:$0xf] 0
        %6790 = vst [vmem:[#allocation3 + $0x38] sm:$0x1] 0
        %6791 = vst [vmem:[#allocation3 + $0x3c] sm:$0xf] 0
        %6792 = vst [vmem:[#allocation3 + $0x40] sm:$0xf] 0
        %6793 = vst [vmem:[#allocation3 + $0x44] sm:$0x1] 0
        %6794 = vst [vmem:[#allocation3 + $0x48] sm:$0xf] 0
        %6795 = vst [vmem:[#allocation3 + $0x4c] sm:$0xf] 0
        %6796 = vst [vmem:[#allocation3 + $0x50] sm:$0x1] 0
        %6797 = vst [vmem:[#allocation3 + $0x54] sm:$0xf] 0
        %6798 = vst [vmem:[#allocation3 + $0x58] sm:$0xf] 0
        %6799 = vst [vmem:[#allocation3 + $0x5c] sm:$0x1] 0
        %6800 = vst [vmem:[#allocation3 + $0x60] sm:$0xf] 0
        %6801 = vst [vmem:[#allocation3 + $0x64] sm:$0xf] 0
        %6802 = vst [vmem:[#allocation3 + $0x68] sm:$0x1] 0
        %6803 = vst [vmem:[#allocation3 + $0x6c] sm:$0xf] 0
        %6804 = vst [vmem:[#allocation3 + $0x70] sm:$0xf] 0
        %6805 = vst [vmem:[#allocation3 + $0x74] sm:$0x1] 0
        %6806 = vst [vmem:[#allocation3 + $0x78] sm:$0xf] 0
        %6807 = vst [vmem:[#allocation3 + $0x7c] sm:$0xf] 0
        %6808 = vst [vmem:[#allocation3 + $0x80] sm:$0x1] 0
        %6809 = vst [vmem:[#allocation3 + $0x84] sm:$0xf] 0
        %6810 = vst [vmem:[#allocation3 + $0x88] sm:$0xf] 0
        %6811 = vst [vmem:[#allocation3 + $0x8c] sm:$0x1] 0
        %6812 = vst [vmem:[#allocation3 + $0x90] sm:$0xf] 0
        %6813 = vst [vmem:[#allocation3 + $0x94] sm:$0xf] 0
        %6814 = vst [vmem:[#allocation3 + $0x98] sm:$0x1] 0
        %6815 = vst [vmem:[#allocation3 + $0x9c] sm:$0xf] 0
        %6816 = vst [vmem:[#allocation3 + $0xa0] sm:$0xf] 0
        %6817 = vst [vmem:[#allocation3 + $0xa4] sm:$0x1] 0
        %6818 = vst [vmem:[#allocation3 + $0xa8] sm:$0xf] 0
        %6819 = vst [vmem:[#allocation3 + $0xac] sm:$0xf] 0
        %6820 = vst [vmem:[#allocation3 + $0xb0] sm:$0x1] 0
        %6821 = vst [vmem:[#allocation3 + $0xb4] sm:$0xf] 0
        %6822 = vst [vmem:[#allocation3 + $0xb8] sm:$0xf] 0
        %6823 = vst [vmem:[#allocation3 + $0xbc] sm:$0x1] 0
        %6824 = vst [vmem:[#allocation3 + $0xc0] sm:$0xf] 0
        %6825 = vst [vmem:[#allocation3 + $0xc4] sm:$0xf] 0
        %6826 = vst [vmem:[#allocation3 + $0xc8] sm:$0x1] 0
        %6827 = vst [vmem:[#allocation3 + $0xcc] sm:$0xf] 0
        %6828 = vst [vmem:[#allocation3 + $0xd0] sm:$0xf] 0
        %6829 = vst [vmem:[#allocation3 + $0xd4] sm:$0x1] 0
        %6830 = vst [vmem:[#allocation3 + $0xd8] sm:$0xf] 0
        %6831 = vst [vmem:[#allocation3 + $0xdc] sm:$0xf] 0
        %6832 = vst [vmem:[#allocation3 + $0xe0] sm:$0x1] 0
        %6833 = vst [vmem:[#allocation3 + $0xe4] sm:$0xf] 0
        %6834 = vst [vmem:[#allocation3 + $0xe8] sm:$0xf] 0
        %6835 = vst [vmem:[#allocation3 + $0xec] sm:$0x1] 0
        %6836 = vst [vmem:[#allocation3 + $0xf0] sm:$0xf] 0
        %6837 = vst [vmem:[#allocation3 + $0xf4] sm:$0xf] 0
        %6838 = vst [vmem:[#allocation3 + $0xf8] sm:$0x1] 0
        %6839 = vst [vmem:[#allocation3 + $0xfc] sm:$0xf] 0
        %6840 = vst [vmem:[#allocation3 + $0x100] sm:$0xf] 0
        %6841 = vst [vmem:[#allocation3 + $0x104] sm:$0x1] 0
        %6842 = vst [vmem:[#allocation3 + $0x108] sm:$0xf] 0
        %6843 = vst [vmem:[#allocation3 + $0x10c] sm:$0xf] 0
        %6844 = vst [vmem:[#allocation3 + $0x110] sm:$0x1] 0
        %6845 = vst [vmem:[#allocation3 + $0x114] sm:$0xf] 0
        %6846 = vst [vmem:[#allocation3 + $0x118] sm:$0xf] 0
        %6847 = vst [vmem:[#allocation3 + $0x11c] sm:$0x1] 0
        %6848 = vst [vmem:[#allocation3 + $0x120] sm:$0xf] 0
        %6849 = vst [vmem:[#allocation3 + $0x124] sm:$0xf] 0
        %6850 = vst [vmem:[#allocation3 + $0x128] sm:$0x1] 0
        %6851 = vst [vmem:[#allocation3 + $0x12c] sm:$0xf] 0
        %6852 = vst [vmem:[#allocation3 + $0x130] sm:$0xf] 0
        %6853 = vst [vmem:[#allocation3 + $0x134] sm:$0x1] 0
        %6854 = vst [vmem:[#allocation3 + $0x138] sm:$0xf] 0
        %6855 = vst [vmem:[#allocation3 + $0x13c] sm:$0xf] 0
        %6856 = vst [vmem:[#allocation3 + $0x140] sm:$0x1] 0
        %6857 = vst [vmem:[#allocation3 + $0x144] sm:$0xf] 0
        %6858 = vst [vmem:[#allocation3 + $0x148] sm:$0xf] 0
        %6859 = vst [vmem:[#allocation3 + $0x14c] sm:$0x1] 0
        %6860 = vst [vmem:[#allocation3 + $0x150] sm:$0xf] 0
        %6861 = vst [vmem:[#allocation3 + $0x154] sm:$0xf] 0
        %6862 = vst [vmem:[#allocation3 + $0x158] sm:$0x1] 0
        %6863 = vst [vmem:[#allocation3 + $0x15c] sm:$0xf] 0
        %6864 = vst [vmem:[#allocation3 + $0x160] sm:$0xf] 0
        %6865 = vst [vmem:[#allocation3 + $0x164] sm:$0x1] 0
        %6866 = vst [vmem:[#allocation3 + $0x168] sm:$0xf] 0
        %6867 = vst [vmem:[#allocation3 + $0x16c] sm:$0xf] 0
        %6868 = vst [vmem:[#allocation3 + $0x170] sm:$0x1] 0
        %6869 = vst [vmem:[#allocation3 + $0x174] sm:$0xf] 0
        %6870 = vst [vmem:[#allocation3 + $0x178] sm:$0xf] 0
        %6871 = vst [vmem:[#allocation3 + $0x17c] sm:$0x1] 0
        %6872 = vst [vmem:[#allocation3 + $0x180] sm:$0xf] 0
        %6873 = vst [vmem:[#allocation3 + $0x184] sm:$0xf] 0
        %6874 = vst [vmem:[#allocation3 + $0x188] sm:$0x1] 0
        %6875 = vst [vmem:[#allocation3 + $0x18c] sm:$0xf] 0
        %6876 = vst [vmem:[#allocation3 + $0x190] sm:$0xf] 0
        %6877 = vst [vmem:[#allocation3 + $0x194] sm:$0x1] 0
        %6878 = vst [vmem:[#allocation3 + $0x198] sm:$0xf] 0
        %6879 = vst [vmem:[#allocation3 + $0x19c] sm:$0xf] 0
        %6880 = vst [vmem:[#allocation3 + $0x1a0] sm:$0x1] 0
        %6881 = vst [vmem:[#allocation3 + $0x1a4] sm:$0xf] 0
        %6882 = vst [vmem:[#allocation3 + $0x1a8] sm:$0xf] 0
        %6883 = vst [vmem:[#allocation3 + $0x1ac] sm:$0x1] 0
        %v6884 = vmax.f32 %v6522, 0.0
        %v6885 = vmax.f32 %v6525, 0.0
        %v6886 = vmax.f32 %v6530, 0.0
        %v6887 = vmax.f32 %v6533, 0.0
        %v6888 = vmax.f32 %v6538, 0.0
        %v6889 = vmax.f32 %v6541, 0.0
        %v6890 = vmax.f32 %v6546, 0.0
        %v6891 = vmax.f32 %v6549, 0.0
        %v6892 = vmax.f32 %v6554, 0.0
        %v6893 = vmax.f32 %v6557, 0.0
        %v6894 = vmax.f32 %v6562, 0.0
        %v6895 = vmax.f32 %v6565, 0.0
        %v6896 = vmax.f32 %v6570, 0.0
        %v6897 = vmax.f32 %v6573, 0.0
        %v6898 = vmax.f32 %v6578, 0.0
        %v6899 = vmax.f32 %v6581, 0.0
        %v6900 = vmax.f32 %v6586, 0.0
        %v6901 = vmax.f32 %v6589, 0.0
        %v6902 = vmax.f32 %v6594, 0.0
        %v6903 = vmax.f32 %v6597, 0.0
        %v6904 = vmax.f32 %v6602, 0.0
        %v6905 = vmax.f32 %v6605, 0.0
        %v6906 = vmax.f32 %v6610, 0.0
        %v6907 = vmax.f32 %v6613, 0.0
        %v6908 = vmax.f32 %v6618, 0.0
        %v6909 = vmax.f32 %v6621, 0.0
        %v6910 = vmax.f32 %v6626, 0.0
        %v6911 = vmax.f32 %v6629, 0.0
        %v6912 = vmax.f32 %v6634, 0.0
        %v6913 = vmax.f32 %v6637, 0.0
        %v6914 = vmax.f32 %v6642, 0.0
        %v6915 = vmax.f32 %v6645, 0.0
        %v6916 = vmax.f32 %v6650, 0.0
        %v6917 = vmax.f32 %v6653, 0.0
        %v6918 = vmax.f32 %v6658, 0.0
        %v6919 = vmax.f32 %v6661, 0.0
        %v6920 = vmax.f32 %v6666, 0.0
        %v6921 = vmax.f32 %v6669, 0.0
        %v6922 = vmax.f32 %v6674, 0.0
        %v6923 = vmax.f32 %v6677, 0.0
        %v6924 = vmax.f32 %v6682, 0.0
        %v6925 = vmax.f32 %v6685, 0.0
        %v6926 = vmax.f32 %v6690, 0.0
        %v6927 = vmax.f32 %v6693, 0.0
        %v6928 = vmax.f32 %v6698, 0.0
        %v6929 = vmax.f32 %v6701, 0.0
        %v6930 = vmax.f32 %v6706, 0.0
        %v6931 = vmax.f32 %v6709, 0.0
        %v6932 = vmax.f32 %v6714, 0.0
        %v6933 = vmax.f32 %v6717, 0.0
        %v6934 = vmax.f32 %v6722, 0.0
        %v6935 = vmax.f32 %v6725, 0.0
        %v6936 = vmax.f32 %v6730, 0.0
        %v6937 = vmax.f32 %v6733, 0.0
        %v6938 = vmax.f32 %v6738, 0.0
        %v6939 = vmax.f32 %v6741, 0.0
        %v6940 = vmax.f32 %v6746, 0.0
        %v6941 = vmax.f32 %v6749, 0.0
        %v6942 = vmax.f32 %v6754, 0.0
        %v6943 = vmax.f32 %v6757, 0.0
        %v6944 = vmax.f32 %v6762, 0.0
        %v6945 = vmax.f32 %v6765, 0.0
        %v6946 = vmax.f32 %v6770, 0.0
        %v6947 = vmax.f32 %v6773, 0.0
        %v6948 = vpack.c.bf16 %v6885, %v6884
        %v6949 = vpack.c.bf16 %v6887, %v6886
        %v6950 = vpack.c.bf16 %v6889, %v6888
        %v6951 = vpack.c.bf16 %v6891, %v6890
        %v6952 = vpack.c.bf16 %v6893, %v6892
        %v6953 = vpack.c.bf16 %v6895, %v6894
        %v6954 = vpack.c.bf16 %v6897, %v6896
        %v6955 = vpack.c.bf16 %v6899, %v6898
        %v6956 = vpack.c.bf16 %v6901, %v6900
        %v6957 = vpack.c.bf16 %v6903, %v6902
        %v6958 = vpack.c.bf16 %v6905, %v6904
        %v6959 = vpack.c.bf16 %v6907, %v6906
        %v6960 = vpack.c.bf16 %v6909, %v6908
        %v6961 = vpack.c.bf16 %v6911, %v6910
        %v6962 = vpack.c.bf16 %v6913, %v6912
        %v6963 = vpack.c.bf16 %v6915, %v6914
        %v6964 = vpack.c.bf16 %v6917, %v6916
        %v6965 = vpack.c.bf16 %v6919, %v6918
        %v6966 = vpack.c.bf16 %v6921, %v6920
        %v6967 = vpack.c.bf16 %v6923, %v6922
        %v6968 = vpack.c.bf16 %v6925, %v6924
        %v6969 = vpack.c.bf16 %v6927, %v6926
        %v6970 = vpack.c.bf16 %v6929, %v6928
        %v6971 = vpack.c.bf16 %v6931, %v6930
        %v6972 = vpack.c.bf16 %v6933, %v6932
        %v6973 = vpack.c.bf16 %v6935, %v6934
        %v6974 = vpack.c.bf16 %v6937, %v6936
        %v6975 = vpack.c.bf16 %v6939, %v6938
        %v6976 = vpack.c.bf16 %v6941, %v6940
        %v6977 = vpack.c.bf16 %v6943, %v6942
        %v6978 = vpack.c.bf16 %v6945, %v6944
        %v6979 = vpack.c.bf16 %v6947, %v6946
        %v7012 = vunpack.c.l.b16 %v6948
        %v7013 = vunpack.c.h.b16 %v6948
        %v7014 = vunpack.c.l.b16 %v6949
        %v7015 = vunpack.c.h.b16 %v6949
        %v7016 = vunpack.c.l.b16 %v6950
        %v7017 = vunpack.c.h.b16 %v6950
        %v7018 = vunpack.c.l.b16 %v6951
        %v7019 = vunpack.c.h.b16 %v6951
        %v7020 = vunpack.c.l.b16 %v6952
        %v7021 = vunpack.c.h.b16 %v6952
        %v7022 = vunpack.c.l.b16 %v6953
        %v7023 = vunpack.c.h.b16 %v6953
        %v7024 = vunpack.c.l.b16 %v6954
        %v7025 = vunpack.c.h.b16 %v6954
        %v7026 = vunpack.c.l.b16 %v6955
        %v7027 = vunpack.c.h.b16 %v6955
        %v7028 = vunpack.c.l.b16 %v6956
        %v7029 = vunpack.c.h.b16 %v6956
        %v7030 = vunpack.c.l.b16 %v6957
        %v7031 = vunpack.c.h.b16 %v6957
        %v7032 = vunpack.c.l.b16 %v6958
        %v7033 = vunpack.c.h.b16 %v6958
        %v7034 = vunpack.c.l.b16 %v6959
        %v7035 = vunpack.c.h.b16 %v6959
        %v7036 = vunpack.c.l.b16 %v6960
        %v7037 = vunpack.c.h.b16 %v6960
        %v7038 = vunpack.c.l.b16 %v6961
        %v7039 = vunpack.c.h.b16 %v6961
        %v7040 = vunpack.c.l.b16 %v6962
        %v7041 = vunpack.c.h.b16 %v6962
        %v7042 = vunpack.c.l.b16 %v6963
        %v7043 = vunpack.c.h.b16 %v6963
        %v7044 = vunpack.c.l.b16 %v6964
        %v7045 = vunpack.c.h.b16 %v6964
        %v7046 = vunpack.c.l.b16 %v6965
        %v7047 = vunpack.c.h.b16 %v6965
        %v7048 = vunpack.c.l.b16 %v6966
        %v7049 = vunpack.c.h.b16 %v6966
        %v7050 = vunpack.c.l.b16 %v6967
        %v7051 = vunpack.c.h.b16 %v6967
        %v7052 = vunpack.c.l.b16 %v6968
        %v7053 = vunpack.c.h.b16 %v6968
        %v7054 = vunpack.c.l.b16 %v6969
        %v7055 = vunpack.c.h.b16 %v6969
        %v7056 = vunpack.c.l.b16 %v6970
        %v7057 = vunpack.c.h.b16 %v6970
        %v7058 = vunpack.c.l.b16 %v6971
        %v7059 = vunpack.c.h.b16 %v6971
        %v7060 = vunpack.c.l.b16 %v6972
        %v7061 = vunpack.c.h.b16 %v6972
        %v7062 = vunpack.c.l.b16 %v6973
        %v7063 = vunpack.c.h.b16 %v6973
        %v7064 = vunpack.c.l.b16 %v6974
        %v7065 = vunpack.c.h.b16 %v6974
        %v7066 = vunpack.c.l.b16 %v6975
        %v7067 = vunpack.c.h.b16 %v6975
        %v7068 = vunpack.c.l.b16 %v6976
        %v7069 = vunpack.c.h.b16 %v6976
        %v7070 = vunpack.c.l.b16 %v6977
        %v7071 = vunpack.c.h.b16 %v6977
        %v7072 = vunpack.c.l.b16 %v6978
        %v7073 = vunpack.c.h.b16 %v6978
        %v7074 = vunpack.c.l.b16 %v6979
        %v7075 = vunpack.c.h.b16 %v6979
        %v7076 = vpack.c.b16 %v7012, %v7012
        %v7077 = vpack.c.b16 %v7013, %v7013
        %v7078 = vpack.c.b16 %v7014, %v7014
        %v7079 = vpack.c.b16 %v7015, %v7015
        %v7080 = vpack.c.b16 %v7016, %v7016
        %v7081 = vpack.c.b16 %v7017, %v7017
        %v7082 = vpack.c.b16 %v7018, %v7018
        %v7083 = vpack.c.b16 %v7019, %v7019
        %v7084 = vpack.c.b16 %v7020, %v7020
        %v7085 = vpack.c.b16 %v7021, %v7021
        %v7086 = vpack.c.b16 %v7022, %v7022
        %v7087 = vpack.c.b16 %v7023, %v7023
        %v7088 = vpack.c.b16 %v7024, %v7024
        %v7089 = vpack.c.b16 %v7025, %v7025
        %v7090 = vpack.c.b16 %v7026, %v7026
        %v7091 = vpack.c.b16 %v7027, %v7027
        %v7092 = vpack.c.b16 %v7028, %v7028
        %v7093 = vpack.c.b16 %v7029, %v7029
        %v7094 = vpack.c.b16 %v7030, %v7030
        %v7095 = vpack.c.b16 %v7031, %v7031
        %v7096 = vpack.c.b16 %v7032, %v7032
        %v7097 = vpack.c.b16 %v7033, %v7033
        %v7098 = vpack.c.b16 %v7034, %v7034
        %v7099 = vpack.c.b16 %v7035, %v7035
        %v7100 = vpack.c.b16 %v7036, %v7036
        %v7101 = vpack.c.b16 %v7037, %v7037
        %v7102 = vpack.c.b16 %v7038, %v7038
        %v7103 = vpack.c.b16 %v7039, %v7039
        %v7104 = vpack.c.b16 %v7040, %v7040
        %v7105 = vpack.c.b16 %v7041, %v7041
        %v7106 = vpack.c.b16 %v7042, %v7042
        %v7107 = vpack.c.b16 %v7043, %v7043
        %v7108 = vpack.c.b16 %v7044, %v7044
        %v7109 = vpack.c.b16 %v7045, %v7045
        %v7110 = vpack.c.b16 %v7046, %v7046
        %v7111 = vpack.c.b16 %v7047, %v7047
        %v7112 = vpack.c.b16 %v7048, %v7048
        %v7113 = vpack.c.b16 %v7049, %v7049
        %v7114 = vpack.c.b16 %v7050, %v7050
        %v7115 = vpack.c.b16 %v7051, %v7051
        %v7116 = vpack.c.b16 %v7052, %v7052
        %v7117 = vpack.c.b16 %v7053, %v7053
        %v7118 = vpack.c.b16 %v7054, %v7054
        %v7119 = vpack.c.b16 %v7055, %v7055
        %v7120 = vpack.c.b16 %v7056, %v7056
        %v7121 = vpack.c.b16 %v7057, %v7057
        %v7122 = vpack.c.b16 %v7058, %v7058
        %v7123 = vpack.c.b16 %v7059, %v7059
        %v7124 = vpack.c.b16 %v7060, %v7060
        %v7125 = vpack.c.b16 %v7061, %v7061
        %v7126 = vpack.c.b16 %v7062, %v7062
        %v7127 = vpack.c.b16 %v7063, %v7063
        %v7128 = vpack.c.b16 %v7064, %v7064
        %v7129 = vpack.c.b16 %v7065, %v7065
        %v7130 = vpack.c.b16 %v7066, %v7066
        %v7131 = vpack.c.b16 %v7067, %v7067
        %v7132 = vpack.c.b16 %v7068, %v7068
        %v7133 = vpack.c.b16 %v7069, %v7069
        %v7134 = vpack.c.b16 %v7070, %v7070
        %v7135 = vpack.c.b16 %v7071, %v7071
        %v7136 = vpack.c.b16 %v7072, %v7072
        %v7137 = vpack.c.b16 %v7073, %v7073
        %v7138 = vpack.c.b16 %v7074, %v7074
        %v7139 = vpack.c.b16 %v7075, %v7075
        %v7141 = vshrl.u32 %v7076, 16
        %v7143 = vrot.slane %v7141, 7
        %v7144 = vshll.u32 %v7076, 16
        %v7146 = vor.u32 %v7143, %v7144
        %v7147 = vrot.slane %v7143, 4
        %v7149 = vshrl.u32 %v7077, 16
        %v7151 = vrot.slane %v7149, 7
        %v7152 = vshll.u32 %v7077, 16
        %v7154 = vor.u32 %v7151, %v7152
        %v7155 = vsel %vm706, %v7147, %v7154
        %v7156 = vrot.slane %v7151, 4
        %v7158 = vshrl.u32 %v7078, 16
        %v7160 = vrot.slane %v7158, 7
        %v7161 = vshll.u32 %v7078, 16
        %v7163 = vor.u32 %v7160, %v7161
        %v7164 = vrot.slane %v7160, 4
        %v7166 = vshrl.u32 %v7079, 16
        %v7168 = vrot.slane %v7166, 7
        %v7169 = vshll.u32 %v7079, 16
        %v7171 = vor.u32 %v7168, %v7169
        %v7172 = vsel %vm706, %v7164, %v7171
        %v7173 = vrot.slane %v7168, 4
        %v7175 = vshrl.u32 %v7080, 16
        %v7177 = vrot.slane %v7175, 7
        %v7178 = vshll.u32 %v7080, 16
        %v7180 = vor.u32 %v7177, %v7178
        %v7181 = vrot.slane %v7177, 4
        %v7183 = vshrl.u32 %v7081, 16
        %v7185 = vrot.slane %v7183, 7
        %v7186 = vshll.u32 %v7081, 16
        %v7188 = vor.u32 %v7185, %v7186
        %v7189 = vsel %vm706, %v7181, %v7188
        %v7190 = vrot.slane %v7185, 4
        %v7192 = vshrl.u32 %v7082, 16
        %v7194 = vrot.slane %v7192, 7
        %v7195 = vshll.u32 %v7082, 16
        %v7197 = vor.u32 %v7194, %v7195
        %v7198 = vrot.slane %v7194, 4
        %v7200 = vshrl.u32 %v7083, 16
        %v7202 = vrot.slane %v7200, 7
        %v7203 = vshll.u32 %v7083, 16
        %v7205 = vor.u32 %v7202, %v7203
        %v7206 = vsel %vm706, %v7198, %v7205
        %v7207 = vrot.slane %v7202, 4
        %v7209 = vshrl.u32 %v7084, 16
        %v7211 = vrot.slane %v7209, 7
        %v7212 = vshll.u32 %v7084, 16
        %v7214 = vor.u32 %v7211, %v7212
        %v7215 = vrot.slane %v7211, 4
        %v7217 = vshrl.u32 %v7085, 16
        %v7219 = vrot.slane %v7217, 7
        %v7220 = vshll.u32 %v7085, 16
        %v7222 = vor.u32 %v7219, %v7220
        %v7223 = vsel %vm706, %v7215, %v7222
        %v7224 = vrot.slane %v7219, 4
        %v7226 = vshrl.u32 %v7086, 16
        %v7228 = vrot.slane %v7226, 7
        %v7229 = vshll.u32 %v7086, 16
        %v7231 = vor.u32 %v7228, %v7229
        %v7232 = vrot.slane %v7228, 4
        %v7234 = vshrl.u32 %v7087, 16
        %v7236 = vrot.slane %v7234, 7
        %v7237 = vshll.u32 %v7087, 16
        %v7239 = vor.u32 %v7236, %v7237
        %v7240 = vsel %vm706, %v7232, %v7239
        %v7241 = vrot.slane %v7236, 4
        %v7243 = vshrl.u32 %v7088, 16
        %v7245 = vrot.slane %v7243, 7
        %v7246 = vshll.u32 %v7088, 16
        %v7248 = vor.u32 %v7245, %v7246
        %v7249 = vrot.slane %v7245, 4
        %v7251 = vshrl.u32 %v7089, 16
        %v7253 = vrot.slane %v7251, 7
        %v7254 = vshll.u32 %v7089, 16
        %v7256 = vor.u32 %v7253, %v7254
        %v7257 = vsel %vm706, %v7249, %v7256
        %v7258 = vrot.slane %v7253, 4
        %v7260 = vshrl.u32 %v7090, 16
        %v7262 = vrot.slane %v7260, 7
        %v7263 = vshll.u32 %v7090, 16
        %v7265 = vor.u32 %v7262, %v7263
        %v7266 = vrot.slane %v7262, 4
        %v7268 = vshrl.u32 %v7091, 16
        %v7270 = vrot.slane %v7268, 7
        %v7271 = vshll.u32 %v7091, 16
        %v7273 = vor.u32 %v7270, %v7271
        %v7274 = vsel %vm706, %v7266, %v7273
        %v7275 = vrot.slane %v7270, 4
        %v7277 = vshrl.u32 %v7092, 16
        %v7279 = vrot.slane %v7277, 7
        %v7280 = vshll.u32 %v7092, 16
        %v7282 = vor.u32 %v7279, %v7280
        %v7283 = vrot.slane %v7279, 4
        %v7285 = vshrl.u32 %v7093, 16
        %v7287 = vrot.slane %v7285, 7
        %v7288 = vshll.u32 %v7093, 16
        %v7290 = vor.u32 %v7287, %v7288
        %v7291 = vsel %vm706, %v7283, %v7290
        %v7292 = vrot.slane %v7287, 4
        %v7294 = vshrl.u32 %v7094, 16
        %v7296 = vrot.slane %v7294, 7
        %v7297 = vshll.u32 %v7094, 16
        %v7299 = vor.u32 %v7296, %v7297
        %v7300 = vrot.slane %v7296, 4
        %v7302 = vshrl.u32 %v7095, 16
        %v7304 = vrot.slane %v7302, 7
        %v7305 = vshll.u32 %v7095, 16
        %v7307 = vor.u32 %v7304, %v7305
        %v7308 = vsel %vm706, %v7300, %v7307
        %v7309 = vrot.slane %v7304, 4
        %v7311 = vshrl.u32 %v7096, 16
        %v7313 = vrot.slane %v7311, 7
        %v7314 = vshll.u32 %v7096, 16
        %v7316 = vor.u32 %v7313, %v7314
        %v7317 = vrot.slane %v7313, 4
        %v7319 = vshrl.u32 %v7097, 16
        %v7321 = vrot.slane %v7319, 7
        %v7322 = vshll.u32 %v7097, 16
        %v7324 = vor.u32 %v7321, %v7322
        %v7325 = vsel %vm706, %v7317, %v7324
        %v7326 = vrot.slane %v7321, 4
        %v7328 = vshrl.u32 %v7098, 16
        %v7330 = vrot.slane %v7328, 7
        %v7331 = vshll.u32 %v7098, 16
        %v7333 = vor.u32 %v7330, %v7331
        %v7334 = vrot.slane %v7330, 4
        %v7336 = vshrl.u32 %v7099, 16
        %v7338 = vrot.slane %v7336, 7
        %v7339 = vshll.u32 %v7099, 16
        %v7341 = vor.u32 %v7338, %v7339
        %v7342 = vsel %vm706, %v7334, %v7341
        %v7343 = vrot.slane %v7338, 4
        %v7345 = vshrl.u32 %v7100, 16
        %v7347 = vrot.slane %v7345, 7
        %v7348 = vshll.u32 %v7100, 16
        %v7350 = vor.u32 %v7347, %v7348
        %v7351 = vrot.slane %v7347, 4
        %v7353 = vshrl.u32 %v7101, 16
        %v7355 = vrot.slane %v7353, 7
        %v7356 = vshll.u32 %v7101, 16
        %v7358 = vor.u32 %v7355, %v7356
        %v7359 = vsel %vm706, %v7351, %v7358
        %v7360 = vrot.slane %v7355, 4
        %v7362 = vshrl.u32 %v7102, 16
        %v7364 = vrot.slane %v7362, 7
        %v7365 = vshll.u32 %v7102, 16
        %v7367 = vor.u32 %v7364, %v7365
        %v7368 = vrot.slane %v7364, 4
        %v7370 = vshrl.u32 %v7103, 16
        %v7372 = vrot.slane %v7370, 7
        %v7373 = vshll.u32 %v7103, 16
        %v7375 = vor.u32 %v7372, %v7373
        %v7376 = vsel %vm706, %v7368, %v7375
        %v7377 = vrot.slane %v7372, 4
        %v7379 = vshrl.u32 %v7104, 16
        %v7381 = vrot.slane %v7379, 7
        %v7382 = vshll.u32 %v7104, 16
        %v7384 = vor.u32 %v7381, %v7382
        %v7385 = vrot.slane %v7381, 4
        %v7387 = vshrl.u32 %v7105, 16
        %v7389 = vrot.slane %v7387, 7
        %v7390 = vshll.u32 %v7105, 16
        %v7392 = vor.u32 %v7389, %v7390
        %v7393 = vsel %vm706, %v7385, %v7392
        %v7394 = vrot.slane %v7389, 4
        %v7396 = vshrl.u32 %v7106, 16
        %v7398 = vrot.slane %v7396, 7
        %v7399 = vshll.u32 %v7106, 16
        %v7401 = vor.u32 %v7398, %v7399
        %v7402 = vrot.slane %v7398, 4
        %v7404 = vshrl.u32 %v7107, 16
        %v7406 = vrot.slane %v7404, 7
        %v7407 = vshll.u32 %v7107, 16
        %v7409 = vor.u32 %v7406, %v7407
        %v7410 = vsel %vm706, %v7402, %v7409
        %v7411 = vrot.slane %v7406, 4
        %v7413 = vshrl.u32 %v7108, 16
        %v7415 = vrot.slane %v7413, 7
        %v7416 = vshll.u32 %v7108, 16
        %v7418 = vor.u32 %v7415, %v7416
        %v7419 = vrot.slane %v7415, 4
        %v7421 = vshrl.u32 %v7109, 16
        %v7423 = vrot.slane %v7421, 7
        %v7424 = vshll.u32 %v7109, 16
        %v7426 = vor.u32 %v7423, %v7424
        %v7427 = vsel %vm706, %v7419, %v7426
        %v7428 = vrot.slane %v7423, 4
        %v7430 = vshrl.u32 %v7110, 16
        %v7432 = vrot.slane %v7430, 7
        %v7433 = vshll.u32 %v7110, 16
        %v7435 = vor.u32 %v7432, %v7433
        %v7436 = vrot.slane %v7432, 4
        %v7438 = vshrl.u32 %v7111, 16
        %v7440 = vrot.slane %v7438, 7
        %v7441 = vshll.u32 %v7111, 16
        %v7443 = vor.u32 %v7440, %v7441
        %v7444 = vsel %vm706, %v7436, %v7443
        %v7445 = vrot.slane %v7440, 4
        %v7447 = vshrl.u32 %v7112, 16
        %v7449 = vrot.slane %v7447, 7
        %v7450 = vshll.u32 %v7112, 16
        %v7452 = vor.u32 %v7449, %v7450
        %v7453 = vrot.slane %v7449, 4
        %v7455 = vshrl.u32 %v7113, 16
        %v7457 = vrot.slane %v7455, 7
        %v7458 = vshll.u32 %v7113, 16
        %v7460 = vor.u32 %v7457, %v7458
        %v7461 = vsel %vm706, %v7453, %v7460
        %v7462 = vrot.slane %v7457, 4
        %v7464 = vshrl.u32 %v7114, 16
        %v7466 = vrot.slane %v7464, 7
        %v7467 = vshll.u32 %v7114, 16
        %v7469 = vor.u32 %v7466, %v7467
        %v7470 = vrot.slane %v7466, 4
        %v7472 = vshrl.u32 %v7115, 16
        %v7474 = vrot.slane %v7472, 7
        %v7475 = vshll.u32 %v7115, 16
        %v7477 = vor.u32 %v7474, %v7475
        %v7478 = vsel %vm706, %v7470, %v7477
        %v7479 = vrot.slane %v7474, 4
        %v7481 = vshrl.u32 %v7116, 16
        %v7483 = vrot.slane %v7481, 7
        %v7484 = vshll.u32 %v7116, 16
        %v7486 = vor.u32 %v7483, %v7484
        %v7487 = vrot.slane %v7483, 4
        %v7489 = vshrl.u32 %v7117, 16
        %v7491 = vrot.slane %v7489, 7
        %v7492 = vshll.u32 %v7117, 16
        %v7494 = vor.u32 %v7491, %v7492
        %v7495 = vsel %vm706, %v7487, %v7494
        %v7496 = vrot.slane %v7491, 4
        %v7498 = vshrl.u32 %v7118, 16
        %v7500 = vrot.slane %v7498, 7
        %v7501 = vshll.u32 %v7118, 16
        %v7503 = vor.u32 %v7500, %v7501
        %v7504 = vrot.slane %v7500, 4
        %v7506 = vshrl.u32 %v7119, 16
        %v7508 = vrot.slane %v7506, 7
        %v7509 = vshll.u32 %v7119, 16
        %v7511 = vor.u32 %v7508, %v7509
        %v7512 = vsel %vm706, %v7504, %v7511
        %v7513 = vrot.slane %v7508, 4
        %v7515 = vshrl.u32 %v7120, 16
        %v7517 = vrot.slane %v7515, 7
        %v7518 = vshll.u32 %v7120, 16
        %v7520 = vor.u32 %v7517, %v7518
        %v7521 = vrot.slane %v7517, 4
        %v7523 = vshrl.u32 %v7121, 16
        %v7525 = vrot.slane %v7523, 7
        %v7526 = vshll.u32 %v7121, 16
        %v7528 = vor.u32 %v7525, %v7526
        %v7529 = vsel %vm706, %v7521, %v7528
        %v7530 = vrot.slane %v7525, 4
        %v7532 = vshrl.u32 %v7122, 16
        %v7534 = vrot.slane %v7532, 7
        %v7535 = vshll.u32 %v7122, 16
        %v7537 = vor.u32 %v7534, %v7535
        %v7538 = vrot.slane %v7534, 4
        %v7540 = vshrl.u32 %v7123, 16
        %v7542 = vrot.slane %v7540, 7
        %v7543 = vshll.u32 %v7123, 16
        %v7545 = vor.u32 %v7542, %v7543
        %v7546 = vsel %vm706, %v7538, %v7545
        %v7547 = vrot.slane %v7542, 4
        %v7549 = vshrl.u32 %v7124, 16
        %v7551 = vrot.slane %v7549, 7
        %v7552 = vshll.u32 %v7124, 16
        %v7554 = vor.u32 %v7551, %v7552
        %v7555 = vrot.slane %v7551, 4
        %v7557 = vshrl.u32 %v7125, 16
        %v7559 = vrot.slane %v7557, 7
        %v7560 = vshll.u32 %v7125, 16
        %v7562 = vor.u32 %v7559, %v7560
        %v7563 = vsel %vm706, %v7555, %v7562
        %v7564 = vrot.slane %v7559, 4
        %v7566 = vshrl.u32 %v7126, 16
        %v7568 = vrot.slane %v7566, 7
        %v7569 = vshll.u32 %v7126, 16
        %v7571 = vor.u32 %v7568, %v7569
        %v7572 = vrot.slane %v7568, 4
        %v7574 = vshrl.u32 %v7127, 16
        %v7576 = vrot.slane %v7574, 7
        %v7577 = vshll.u32 %v7127, 16
        %v7579 = vor.u32 %v7576, %v7577
        %v7580 = vsel %vm706, %v7572, %v7579
        %v7581 = vrot.slane %v7576, 4
        %v7583 = vshrl.u32 %v7128, 16
        %v7585 = vrot.slane %v7583, 7
        %v7586 = vshll.u32 %v7128, 16
        %v7588 = vor.u32 %v7585, %v7586
        %v7589 = vrot.slane %v7585, 4
        %v7591 = vshrl.u32 %v7129, 16
        %v7593 = vrot.slane %v7591, 7
        %v7594 = vshll.u32 %v7129, 16
        %v7596 = vor.u32 %v7593, %v7594
        %v7597 = vsel %vm706, %v7589, %v7596
        %v7598 = vrot.slane %v7593, 4
        %v7600 = vshrl.u32 %v7130, 16
        %v7602 = vrot.slane %v7600, 7
        %v7603 = vshll.u32 %v7130, 16
        %v7605 = vor.u32 %v7602, %v7603
        %v7606 = vrot.slane %v7602, 4
        %v7608 = vshrl.u32 %v7131, 16
        %v7610 = vrot.slane %v7608, 7
        %v7611 = vshll.u32 %v7131, 16
        %v7613 = vor.u32 %v7610, %v7611
        %v7614 = vsel %vm706, %v7606, %v7613
        %v7615 = vrot.slane %v7610, 4
        %v7617 = vshrl.u32 %v7132, 16
        %v7619 = vrot.slane %v7617, 7
        %v7620 = vshll.u32 %v7132, 16
        %v7622 = vor.u32 %v7619, %v7620
        %v7623 = vrot.slane %v7619, 4
        %v7625 = vshrl.u32 %v7133, 16
        %v7627 = vrot.slane %v7625, 7
        %v7628 = vshll.u32 %v7133, 16
        %v7630 = vor.u32 %v7627, %v7628
        %v7631 = vsel %vm706, %v7623, %v7630
        %v7632 = vrot.slane %v7627, 4
        %v7634 = vshrl.u32 %v7134, 16
        %v7636 = vrot.slane %v7634, 7
        %v7637 = vshll.u32 %v7134, 16
        %v7639 = vor.u32 %v7636, %v7637
        %v7640 = vrot.slane %v7636, 4
        %v7642 = vshrl.u32 %v7135, 16
        %v7644 = vrot.slane %v7642, 7
        %v7645 = vshll.u32 %v7135, 16
        %v7647 = vor.u32 %v7644, %v7645
        %v7648 = vsel %vm706, %v7640, %v7647
        %v7649 = vrot.slane %v7644, 4
        %v7651 = vshrl.u32 %v7136, 16
        %v7653 = vrot.slane %v7651, 7
        %v7654 = vshll.u32 %v7136, 16
        %v7656 = vor.u32 %v7653, %v7654
        %v7657 = vrot.slane %v7653, 4
        %v7659 = vshrl.u32 %v7137, 16
        %v7661 = vrot.slane %v7659, 7
        %v7662 = vshll.u32 %v7137, 16
        %v7664 = vor.u32 %v7661, %v7662
        %v7665 = vsel %vm706, %v7657, %v7664
        %v7666 = vrot.slane %v7661, 4
        %v7668 = vshrl.u32 %v7138, 16
        %v7670 = vrot.slane %v7668, 7
        %v7671 = vshll.u32 %v7138, 16
        %v7673 = vor.u32 %v7670, %v7671
        %v7674 = vrot.slane %v7670, 4
        %v7676 = vshrl.u32 %v7139, 16
        %v7678 = vrot.slane %v7676, 7
        %v7679 = vshll.u32 %v7139, 16
        %v7681 = vor.u32 %v7678, %v7679
        %v7682 = vsel %vm706, %v7674, %v7681
        %v7683 = vrot.slane %v7678, 4
        %s7780 = scalar_lea.vmem [#allocation3], 12
        %v7781 = vld [vmem:[%s7780] sm:$0xf]
        %v7782 = vsel %vm1350, %v7146, %v7781
        %7783 = vst [vmem:[%s7780] sm:$0xf] %v7782
        %7784 = vst [vmem:[%s7780 + $0x4] sm:$0xf] %v7155
        %v7785 = vld [vmem:[%s7780 + $0x8] sm:$0x1]
        %v7786 = vsel %vm1356, %v7156, %v7785
        %7787 = vst [vmem:[%s7780 + $0x8] sm:$0x1] %v7786
        %v7788 = vld [vmem:[%s7780 + $0xc] sm:$0xf]
        %v7789 = vsel %vm1350, %v7163, %v7788
        %7790 = vst [vmem:[%s7780 + $0xc] sm:$0xf] %v7789
        %7791 = vst [vmem:[%s7780 + $0x10] sm:$0xf] %v7172
        %v7792 = vld [vmem:[%s7780 + $0x14] sm:$0x1]
        %v7793 = vsel %vm1356, %v7173, %v7792
        %7794 = vst [vmem:[%s7780 + $0x14] sm:$0x1] %v7793
        %v7795 = vld [vmem:[%s7780 + $0x18] sm:$0xf]
        %v7796 = vsel %vm1350, %v7180, %v7795
        %7797 = vst [vmem:[%s7780 + $0x18] sm:$0xf] %v7796
        %7798 = vst [vmem:[%s7780 + $0x1c] sm:$0xf] %v7189
        %v7799 = vld [vmem:[%s7780 + $0x20] sm:$0x1]
        %v7800 = vsel %vm1356, %v7190, %v7799
        %7801 = vst [vmem:[%s7780 + $0x20] sm:$0x1] %v7800
        %v7802 = vld [vmem:[%s7780 + $0x24] sm:$0xf]
        %v7803 = vsel %vm1350, %v7197, %v7802
        %7804 = vst [vmem:[%s7780 + $0x24] sm:$0xf] %v7803
        %7805 = vst [vmem:[%s7780 + $0x28] sm:$0xf] %v7206
        %v7806 = vld [vmem:[%s7780 + $0x2c] sm:$0x1]
        %v7807 = vsel %vm1356, %v7207, %v7806
        %7808 = vst [vmem:[%s7780 + $0x2c] sm:$0x1] %v7807
        %v7809 = vld [vmem:[%s7780 + $0x30] sm:$0xf]
        %v7810 = vsel %vm1350, %v7214, %v7809
        %7811 = vst [vmem:[%s7780 + $0x30] sm:$0xf] %v7810
        %7812 = vst [vmem:[%s7780 + $0x34] sm:$0xf] %v7223
        %v7813 = vld [vmem:[%s7780 + $0x38] sm:$0x1]
        %v7814 = vsel %vm1356, %v7224, %v7813
        %7815 = vst [vmem:[%s7780 + $0x38] sm:$0x1] %v7814
        %v7816 = vld [vmem:[%s7780 + $0x3c] sm:$0xf]
        %v7817 = vsel %vm1350, %v7231, %v7816
        %7818 = vst [vmem:[%s7780 + $0x3c] sm:$0xf] %v7817
        %7819 = vst [vmem:[%s7780 + $0x40] sm:$0xf] %v7240
        %v7820 = vld [vmem:[%s7780 + $0x44] sm:$0x1]
        %v7821 = vsel %vm1356, %v7241, %v7820
        %7822 = vst [vmem:[%s7780 + $0x44] sm:$0x1] %v7821
        %v7823 = vld [vmem:[%s7780 + $0x48] sm:$0xf]
        %v7824 = vsel %vm1350, %v7248, %v7823
        %7825 = vst [vmem:[%s7780 + $0x48] sm:$0xf] %v7824
        %7826 = vst [vmem:[%s7780 + $0x4c] sm:$0xf] %v7257
        %v7827 = vld [vmem:[%s7780 + $0x50] sm:$0x1]
        %v7828 = vsel %vm1356, %v7258, %v7827
        %7829 = vst [vmem:[%s7780 + $0x50] sm:$0x1] %v7828
        %v7830 = vld [vmem:[%s7780 + $0x54] sm:$0xf]
        %v7831 = vsel %vm1350, %v7265, %v7830
        %7832 = vst [vmem:[%s7780 + $0x54] sm:$0xf] %v7831
        %7833 = vst [vmem:[%s7780 + $0x58] sm:$0xf] %v7274
        %v7834 = vld [vmem:[%s7780 + $0x5c] sm:$0x1]
        %v7835 = vsel %vm1356, %v7275, %v7834
        %7836 = vst [vmem:[%s7780 + $0x5c] sm:$0x1] %v7835
        %v7837 = vld [vmem:[%s7780 + $0x60] sm:$0xf]
        %v7838 = vsel %vm1350, %v7282, %v7837
        %7839 = vst [vmem:[%s7780 + $0x60] sm:$0xf] %v7838
        %7840 = vst [vmem:[%s7780 + $0x64] sm:$0xf] %v7291
        %v7841 = vld [vmem:[%s7780 + $0x68] sm:$0x1]
        %v7842 = vsel %vm1356, %v7292, %v7841
        %7843 = vst [vmem:[%s7780 + $0x68] sm:$0x1] %v7842
        %v7844 = vld [vmem:[%s7780 + $0x6c] sm:$0xf]
        %v7845 = vsel %vm1350, %v7299, %v7844
        %7846 = vst [vmem:[%s7780 + $0x6c] sm:$0xf] %v7845
        %7847 = vst [vmem:[%s7780 + $0x70] sm:$0xf] %v7308
        %v7848 = vld [vmem:[%s7780 + $0x74] sm:$0x1]
        %v7849 = vsel %vm1356, %v7309, %v7848
        %7850 = vst [vmem:[%s7780 + $0x74] sm:$0x1] %v7849
        %v7851 = vld [vmem:[%s7780 + $0x78] sm:$0xf]
        %v7852 = vsel %vm1350, %v7316, %v7851
        %7853 = vst [vmem:[%s7780 + $0x78] sm:$0xf] %v7852
        %7854 = vst [vmem:[%s7780 + $0x7c] sm:$0xf] %v7325
        %v7855 = vld [vmem:[%s7780 + $0x80] sm:$0x1]
        %v7856 = vsel %vm1356, %v7326, %v7855
        %7857 = vst [vmem:[%s7780 + $0x80] sm:$0x1] %v7856
        %v7858 = vld [vmem:[%s7780 + $0x84] sm:$0xf]
        %v7859 = vsel %vm1350, %v7333, %v7858
        %7860 = vst [vmem:[%s7780 + $0x84] sm:$0xf] %v7859
        %7861 = vst [vmem:[%s7780 + $0x88] sm:$0xf] %v7342
        %v7862 = vld [vmem:[%s7780 + $0x8c] sm:$0x1]
        %v7863 = vsel %vm1356, %v7343, %v7862
        %7864 = vst [vmem:[%s7780 + $0x8c] sm:$0x1] %v7863
        %v7865 = vld [vmem:[%s7780 + $0x90] sm:$0xf]
        %v7866 = vsel %vm1350, %v7350, %v7865
        %7867 = vst [vmem:[%s7780 + $0x90] sm:$0xf] %v7866
        %7868 = vst [vmem:[%s7780 + $0x94] sm:$0xf] %v7359
        %v7869 = vld [vmem:[%s7780 + $0x98] sm:$0x1]
        %v7870 = vsel %vm1356, %v7360, %v7869
        %7871 = vst [vmem:[%s7780 + $0x98] sm:$0x1] %v7870
        %v7872 = vld [vmem:[%s7780 + $0x9c] sm:$0xf]
        %v7873 = vsel %vm1350, %v7367, %v7872
        %7874 = vst [vmem:[%s7780 + $0x9c] sm:$0xf] %v7873
        %7875 = vst [vmem:[%s7780 + $0xa0] sm:$0xf] %v7376
        %v7876 = vld [vmem:[%s7780 + $0xa4] sm:$0x1]
        %v7877 = vsel %vm1356, %v7377, %v7876
        %7878 = vst [vmem:[%s7780 + $0xa4] sm:$0x1] %v7877
        %v7879 = vld [vmem:[%s7780 + $0xa8] sm:$0xf]
        %v7880 = vsel %vm1350, %v7384, %v7879
        %7881 = vst [vmem:[%s7780 + $0xa8] sm:$0xf] %v7880
        %7882 = vst [vmem:[%s7780 + $0xac] sm:$0xf] %v7393
        %v7883 = vld [vmem:[%s7780 + $0xb0] sm:$0x1]
        %v7884 = vsel %vm1356, %v7394, %v7883
        %7885 = vst [vmem:[%s7780 + $0xb0] sm:$0x1] %v7884
        %v7886 = vld [vmem:[%s7780 + $0xb4] sm:$0xf]
        %v7887 = vsel %vm1350, %v7401, %v7886
        %7888 = vst [vmem:[%s7780 + $0xb4] sm:$0xf] %v7887
        %7889 = vst [vmem:[%s7780 + $0xb8] sm:$0xf] %v7410
        %v7890 = vld [vmem:[%s7780 + $0xbc] sm:$0x1]
        %v7891 = vsel %vm1356, %v7411, %v7890
        %7892 = vst [vmem:[%s7780 + $0xbc] sm:$0x1] %v7891
        %v7893 = vld [vmem:[%s7780 + $0xd8] sm:$0xf]
        %v7894 = vsel %vm1350, %v7418, %v7893
        %7895 = vst [vmem:[%s7780 + $0xd8] sm:$0xf] %v7894
        %7896 = vst [vmem:[%s7780 + $0xdc] sm:$0xf] %v7427
        %v7897 = vld [vmem:[%s7780 + $0xe0] sm:$0x1]
        %v7898 = vsel %vm1356, %v7428, %v7897
        %7899 = vst [vmem:[%s7780 + $0xe0] sm:$0x1] %v7898
        %v7900 = vld [vmem:[%s7780 + $0xe4] sm:$0xf]
        %v7901 = vsel %vm1350, %v7435, %v7900
        %7902 = vst [vmem:[%s7780 + $0xe4] sm:$0xf] %v7901
        %7903 = vst [vmem:[%s7780 + $0xe8] sm:$0xf] %v7444
        %v7904 = vld [vmem:[%s7780 + $0xec] sm:$0x1]
        %v7905 = vsel %vm1356, %v7445, %v7904
        %7906 = vst [vmem:[%s7780 + $0xec] sm:$0x1] %v7905
        %v7907 = vld [vmem:[%s7780 + $0xf0] sm:$0xf]
        %v7908 = vsel %vm1350, %v7452, %v7907
        %7909 = vst [vmem:[%s7780 + $0xf0] sm:$0xf] %v7908
        %7910 = vst [vmem:[%s7780 + $0xf4] sm:$0xf] %v7461
        %v7911 = vld [vmem:[%s7780 + $0xf8] sm:$0x1]
        %v7912 = vsel %vm1356, %v7462, %v7911
        %7913 = vst [vmem:[%s7780 + $0xf8] sm:$0x1] %v7912
        %v7914 = vld [vmem:[%s7780 + $0xfc] sm:$0xf]
        %v7915 = vsel %vm1350, %v7469, %v7914
        %7916 = vst [vmem:[%s7780 + $0xfc] sm:$0xf] %v7915
        %7917 = vst [vmem:[%s7780 + $0x100] sm:$0xf] %v7478
        %v7918 = vld [vmem:[%s7780 + $0x104] sm:$0x1]
        %v7919 = vsel %vm1356, %v7479, %v7918
        %7920 = vst [vmem:[%s7780 + $0x104] sm:$0x1] %v7919
        %v7921 = vld [vmem:[%s7780 + $0x108] sm:$0xf]
        %v7922 = vsel %vm1350, %v7486, %v7921
        %7923 = vst [vmem:[%s7780 + $0x108] sm:$0xf] %v7922
        %7924 = vst [vmem:[%s7780 + $0x10c] sm:$0xf] %v7495
        %v7925 = vld [vmem:[%s7780 + $0x110] sm:$0x1]
        %v7926 = vsel %vm1356, %v7496, %v7925
        %7927 = vst [vmem:[%s7780 + $0x110] sm:$0x1] %v7926
        %v7928 = vld [vmem:[%s7780 + $0x114] sm:$0xf]
        %v7929 = vsel %vm1350, %v7503, %v7928
        %7930 = vst [vmem:[%s7780 + $0x114] sm:$0xf] %v7929
        %7931 = vst [vmem:[%s7780 + $0x118] sm:$0xf] %v7512
        %v7932 = vld [vmem:[%s7780 + $0x11c] sm:$0x1]
        %v7933 = vsel %vm1356, %v7513, %v7932
        %7934 = vst [vmem:[%s7780 + $0x11c] sm:$0x1] %v7933
        %v7935 = vld [vmem:[%s7780 + $0x120] sm:$0xf]
        %v7936 = vsel %vm1350, %v7520, %v7935
        %7937 = vst [vmem:[%s7780 + $0x120] sm:$0xf] %v7936
        %7938 = vst [vmem:[%s7780 + $0x124] sm:$0xf] %v7529
        %v7939 = vld [vmem:[%s7780 + $0x128] sm:$0x1]
        %v7940 = vsel %vm1356, %v7530, %v7939
        %7941 = vst [vmem:[%s7780 + $0x128] sm:$0x1] %v7940
        %v7942 = vld [vmem:[%s7780 + $0x12c] sm:$0xf]
        %v7943 = vsel %vm1350, %v7537, %v7942
        %7944 = vst [vmem:[%s7780 + $0x12c] sm:$0xf] %v7943
        %7945 = vst [vmem:[%s7780 + $0x130] sm:$0xf] %v7546
        %v7946 = vld [vmem:[%s7780 + $0x134] sm:$0x1]
        %v7947 = vsel %vm1356, %v7547, %v7946
        %7948 = vst [vmem:[%s7780 + $0x134] sm:$0x1] %v7947
        %v7949 = vld [vmem:[%s7780 + $0x138] sm:$0xf]
        %v7950 = vsel %vm1350, %v7554, %v7949
        %7951 = vst [vmem:[%s7780 + $0x138] sm:$0xf] %v7950
        %7952 = vst [vmem:[%s7780 + $0x13c] sm:$0xf] %v7563
        %v7953 = vld [vmem:[%s7780 + $0x140] sm:$0x1]
        %v7954 = vsel %vm1356, %v7564, %v7953
        %7955 = vst [vmem:[%s7780 + $0x140] sm:$0x1] %v7954
        %v7956 = vld [vmem:[%s7780 + $0x144] sm:$0xf]
        %v7957 = vsel %vm1350, %v7571, %v7956
        %7958 = vst [vmem:[%s7780 + $0x144] sm:$0xf] %v7957
        %7959 = vst [vmem:[%s7780 + $0x148] sm:$0xf] %v7580
        %v7960 = vld [vmem:[%s7780 + $0x14c] sm:$0x1]
        %v7961 = vsel %vm1356, %v7581, %v7960
        %7962 = vst [vmem:[%s7780 + $0x14c] sm:$0x1] %v7961
        %v7963 = vld [vmem:[%s7780 + $0x150] sm:$0xf]
        %v7964 = vsel %vm1350, %v7588, %v7963
        %7965 = vst [vmem:[%s7780 + $0x150] sm:$0xf] %v7964
        %7966 = vst [vmem:[%s7780 + $0x154] sm:$0xf] %v7597
        %v7967 = vld [vmem:[%s7780 + $0x158] sm:$0x1]
        %v7968 = vsel %vm1356, %v7598, %v7967
        %7969 = vst [vmem:[%s7780 + $0x158] sm:$0x1] %v7968
        %v7970 = vld [vmem:[%s7780 + $0x15c] sm:$0xf]
        %v7971 = vsel %vm1350, %v7605, %v7970
        %7972 = vst [vmem:[%s7780 + $0x15c] sm:$0xf] %v7971
        %7973 = vst [vmem:[%s7780 + $0x160] sm:$0xf] %v7614
        %v7974 = vld [vmem:[%s7780 + $0x164] sm:$0x1]
        %v7975 = vsel %vm1356, %v7615, %v7974
        %7976 = vst [vmem:[%s7780 + $0x164] sm:$0x1] %v7975
        %v7977 = vld [vmem:[%s7780 + $0x168] sm:$0xf]
        %v7978 = vsel %vm1350, %v7622, %v7977
        %7979 = vst [vmem:[%s7780 + $0x168] sm:$0xf] %v7978
        %7980 = vst [vmem:[%s7780 + $0x16c] sm:$0xf] %v7631
        %v7981 = vld [vmem:[%s7780 + $0x170] sm:$0x1]
        %v7982 = vsel %vm1356, %v7632, %v7981
        %7983 = vst [vmem:[%s7780 + $0x170] sm:$0x1] %v7982
        %v7984 = vld [vmem:[%s7780 + $0x174] sm:$0xf]
        %v7985 = vsel %vm1350, %v7639, %v7984
        %7986 = vst [vmem:[%s7780 + $0x174] sm:$0xf] %v7985
        %7987 = vst [vmem:[%s7780 + $0x178] sm:$0xf] %v7648
        %v7988 = vld [vmem:[%s7780 + $0x17c] sm:$0x1]
        %v7989 = vsel %vm1356, %v7649, %v7988
        %7990 = vst [vmem:[%s7780 + $0x17c] sm:$0x1] %v7989
        %v7991 = vld [vmem:[%s7780 + $0x180] sm:$0xf]
        %v7992 = vsel %vm1350, %v7656, %v7991
        %7993 = vst [vmem:[%s7780 + $0x180] sm:$0xf] %v7992
        %7994 = vst [vmem:[%s7780 + $0x184] sm:$0xf] %v7665
        %v7995 = vld [vmem:[%s7780 + $0x188] sm:$0x1]
        %v7996 = vsel %vm1356, %v7666, %v7995
        %7997 = vst [vmem:[%s7780 + $0x188] sm:$0x1] %v7996
        %v7998 = vld [vmem:[%s7780 + $0x18c] sm:$0xf]
        %v7999 = vsel %vm1350, %v7673, %v7998
        %8000 = vst [vmem:[%s7780 + $0x18c] sm:$0xf] %v7999
        %8001 = vst [vmem:[%s7780 + $0x190] sm:$0xf] %v7682
        %v8002 = vld [vmem:[%s7780 + $0x194] sm:$0x1]
        %v8003 = vsel %vm1356, %v7683, %v8002
        %8004 = vst [vmem:[%s7780 + $0x194] sm:$0x1] %v8003
        %v8005 = vld [vmem:[#allocation3] sm:$0xf]
        %v8006 = vld [vmem:[#allocation3 + $0x4] sm:$0xf]
        %v8007 = vld [vmem:[#allocation3 + $0xc] sm:$0xf]
        %v8008 = vld [vmem:[#allocation3 + $0x10] sm:$0xf]
        %v8009 = vld [vmem:[#allocation3 + $0x18] sm:$0xf]
        %v8010 = vld [vmem:[#allocation3 + $0x1c] sm:$0xf]
        %v8011 = vld [vmem:[#allocation3 + $0x24] sm:$0xf]
        %v8012 = vld [vmem:[#allocation3 + $0x28] sm:$0xf]
        %v8013 = vld [vmem:[#allocation3 + $0x30] sm:$0xf]
        %v8014 = vld [vmem:[#allocation3 + $0x34] sm:$0xf]
        %v8015 = vld [vmem:[#allocation3 + $0x3c] sm:$0xf]
        %v8016 = vld [vmem:[#allocation3 + $0x40] sm:$0xf]
        %v8017 = vld [vmem:[#allocation3 + $0x48] sm:$0xf]
        %v8018 = vld [vmem:[#allocation3 + $0x4c] sm:$0xf]
        %v8019 = vld [vmem:[#allocation3 + $0x54] sm:$0xf]
        %v8020 = vld [vmem:[#allocation3 + $0x58] sm:$0xf]
        %v8021 = vld [vmem:[#allocation3 + $0x60] sm:$0xf]
        %v8022 = vld [vmem:[#allocation3 + $0x64] sm:$0xf]
        %v8023 = vld [vmem:[#allocation3 + $0x6c] sm:$0xf]
        %v8024 = vld [vmem:[#allocation3 + $0x70] sm:$0xf]
        %v8025 = vld [vmem:[#allocation3 + $0x78] sm:$0xf]
        %v8026 = vld [vmem:[#allocation3 + $0x7c] sm:$0xf]
        %v8027 = vld [vmem:[#allocation3 + $0x84] sm:$0xf]
        %v8028 = vld [vmem:[#allocation3 + $0x88] sm:$0xf]
        %v8029 = vld [vmem:[#allocation3 + $0x90] sm:$0xf]
        %v8030 = vld [vmem:[#allocation3 + $0x94] sm:$0xf]
        %v8031 = vld [vmem:[#allocation3 + $0x9c] sm:$0xf]
        %v8032 = vld [vmem:[#allocation3 + $0xa0] sm:$0xf]
        %v8033 = vld [vmem:[#allocation3 + $0xa8] sm:$0xf]
        %v8034 = vld [vmem:[#allocation3 + $0xac] sm:$0xf]
        %v8035 = vld [vmem:[#allocation3 + $0xb4] sm:$0xf]
        %v8036 = vld [vmem:[#allocation3 + $0xb8] sm:$0xf]
        %v8037 = vld [vmem:[#allocation3 + $0xd8] sm:$0xf]
        %v8038 = vld [vmem:[#allocation3 + $0xdc] sm:$0xf]
        %v8039 = vld [vmem:[#allocation3 + $0xe4] sm:$0xf]
        %v8040 = vld [vmem:[#allocation3 + $0xe8] sm:$0xf]
        %v8041 = vld [vmem:[#allocation3 + $0xf0] sm:$0xf]
        %v8042 = vld [vmem:[#allocation3 + $0xf4] sm:$0xf]
        %v8043 = vld [vmem:[#allocation3 + $0xfc] sm:$0xf]
        %v8044 = vld [vmem:[#allocation3 + $0x100] sm:$0xf]
        %v8045 = vld [vmem:[#allocation3 + $0x108] sm:$0xf]
        %v8046 = vld [vmem:[#allocation3 + $0x10c] sm:$0xf]
        %v8047 = vld [vmem:[#allocation3 + $0x114] sm:$0xf]
        %v8048 = vld [vmem:[#allocation3 + $0x118] sm:$0xf]
        %v8049 = vld [vmem:[#allocation3 + $0x120] sm:$0xf]
        %v8050 = vld [vmem:[#allocation3 + $0x124] sm:$0xf]
        %v8051 = vld [vmem:[#allocation3 + $0x12c] sm:$0xf]
        %v8052 = vld [vmem:[#allocation3 + $0x130] sm:$0xf]
        %v8053 = vld [vmem:[#allocation3 + $0x138] sm:$0xf]
        %v8054 = vld [vmem:[#allocation3 + $0x13c] sm:$0xf]
        %v8055 = vld [vmem:[#allocation3 + $0x144] sm:$0xf]
        %v8056 = vld [vmem:[#allocation3 + $0x148] sm:$0xf]
        %v8057 = vld [vmem:[#allocation3 + $0x150] sm:$0xf]
        %v8058 = vld [vmem:[#allocation3 + $0x154] sm:$0xf]
        %v8059 = vld [vmem:[#allocation3 + $0x15c] sm:$0xf]
        %v8060 = vld [vmem:[#allocation3 + $0x160] sm:$0xf]
        %v8061 = vld [vmem:[#allocation3 + $0x168] sm:$0xf]
        %v8062 = vld [vmem:[#allocation3 + $0x16c] sm:$0xf]
        %v8063 = vld [vmem:[#allocation3 + $0x174] sm:$0xf]
        %v8064 = vld [vmem:[#allocation3 + $0x178] sm:$0xf]
        %v8065 = vld [vmem:[#allocation3 + $0x180] sm:$0xf]
        %v8066 = vld [vmem:[#allocation3 + $0x184] sm:$0xf]
        %v8067 = vld [vmem:[#allocation3 + $0x18c] sm:$0xf]
        %v8068 = vld [vmem:[#allocation3 + $0x190] sm:$0xf]
        %v8069 = vld [vmem:[#allocation3 + $0x8] sm:$0x1]
        %v8070 = vld [vmem:[#allocation3 + $0x14] sm:$0x1]
        %v8071 = vld [vmem:[#allocation3 + $0x20] sm:$0x1]
        %v8072 = vld [vmem:[#allocation3 + $0x2c] sm:$0x1]
        %v8073 = vld [vmem:[#allocation3 + $0x38] sm:$0x1]
        %v8074 = vld [vmem:[#allocation3 + $0x44] sm:$0x1]
        %v8075 = vld [vmem:[#allocation3 + $0x50] sm:$0x1]
        %v8076 = vld [vmem:[#allocation3 + $0x5c] sm:$0x1]
        %v8077 = vld [vmem:[#allocation3 + $0x68] sm:$0x1]
        %v8078 = vld [vmem:[#allocation3 + $0x74] sm:$0x1]
        %v8079 = vld [vmem:[#allocation3 + $0x80] sm:$0x1]
        %v8080 = vld [vmem:[#allocation3 + $0x8c] sm:$0x1]
        %v8081 = vld [vmem:[#allocation3 + $0x98] sm:$0x1]
        %v8082 = vld [vmem:[#allocation3 + $0xa4] sm:$0x1]
        %v8083 = vld [vmem:[#allocation3 + $0xb0] sm:$0x1]
        %v8084 = vld [vmem:[#allocation3 + $0xbc] sm:$0x1]
        %v8085 = vld [vmem:[#allocation3 + $0xe0] sm:$0x1]
        %v8086 = vld [vmem:[#allocation3 + $0xec] sm:$0x1]
        %v8087 = vld [vmem:[#allocation3 + $0xf8] sm:$0x1]
        %v8088 = vld [vmem:[#allocation3 + $0x104] sm:$0x1]
        %v8089 = vld [vmem:[#allocation3 + $0x110] sm:$0x1]
        %v8090 = vld [vmem:[#allocation3 + $0x11c] sm:$0x1]
        %v8091 = vld [vmem:[#allocation3 + $0x128] sm:$0x1]
        %v8092 = vld [vmem:[#allocation3 + $0x134] sm:$0x1]
        %v8093 = vld [vmem:[#allocation3 + $0x140] sm:$0x1]
        %v8094 = vld [vmem:[#allocation3 + $0x14c] sm:$0x1]
        %v8095 = vld [vmem:[#allocation3 + $0x158] sm:$0x1]
        %v8096 = vld [vmem:[#allocation3 + $0x164] sm:$0x1]
        %v8097 = vld [vmem:[#allocation3 + $0x170] sm:$0x1]
        %v8098 = vld [vmem:[#allocation3 + $0x17c] sm:$0x1]
        %v8099 = vld [vmem:[#allocation3 + $0x188] sm:$0x1]
        %v8100 = vld [vmem:[#allocation3 + $0x194] sm:$0x1]
        %v8101 = vld [vmem:[#allocation3] sm:$0xe]
        %v8102 = vld [vmem:[#allocation3 + $0xc] sm:$0xe]
        %v8103 = vld [vmem:[#allocation3 + $0x18] sm:$0xe]
        %v8104 = vld [vmem:[#allocation3 + $0x24] sm:$0xe]
        %v8105 = vld [vmem:[#allocation3 + $0x30] sm:$0xe]
        %v8106 = vld [vmem:[#allocation3 + $0x3c] sm:$0xe]
        %v8107 = vld [vmem:[#allocation3 + $0x48] sm:$0xe]
        %v8108 = vld [vmem:[#allocation3 + $0x54] sm:$0xe]
        %v8109 = vld [vmem:[#allocation3 + $0x60] sm:$0xe]
        %v8110 = vld [vmem:[#allocation3 + $0x6c] sm:$0xe]
        %v8111 = vld [vmem:[#allocation3 + $0x78] sm:$0xe]
        %v8112 = vld [vmem:[#allocation3 + $0x84] sm:$0xe]
        %v8113 = vld [vmem:[#allocation3 + $0x90] sm:$0xe]
        %v8114 = vld [vmem:[#allocation3 + $0x9c] sm:$0xe]
        %v8115 = vld [vmem:[#allocation3 + $0xa8] sm:$0xe]
        %v8116 = vld [vmem:[#allocation3 + $0xb4] sm:$0xe]
        %v8117 = vld [vmem:[#allocation3 + $0xd8] sm:$0xe]
        %v8118 = vld [vmem:[#allocation3 + $0xe4] sm:$0xe]
        %v8119 = vld [vmem:[#allocation3 + $0xf0] sm:$0xe]
        %v8120 = vld [vmem:[#allocation3 + $0xfc] sm:$0xe]
        %v8121 = vld [vmem:[#allocation3 + $0x108] sm:$0xe]
        %v8122 = vld [vmem:[#allocation3 + $0x114] sm:$0xe]
        %v8123 = vld [vmem:[#allocation3 + $0x120] sm:$0xe]
        %v8124 = vld [vmem:[#allocation3 + $0x12c] sm:$0xe]
        %v8125 = vld [vmem:[#allocation3 + $0x138] sm:$0xe]
        %v8126 = vld [vmem:[#allocation3 + $0x144] sm:$0xe]
        %v8127 = vld [vmem:[#allocation3 + $0x150] sm:$0xe]
        %v8128 = vld [vmem:[#allocation3 + $0x15c] sm:$0xe]
        %v8129 = vld [vmem:[#allocation3 + $0x168] sm:$0xe]
        %v8130 = vld [vmem:[#allocation3 + $0x174] sm:$0xe]
        %v8131 = vld [vmem:[#allocation3 + $0x180] sm:$0xe]
        %v8132 = vld [vmem:[#allocation3 + $0x18c] sm:$0xe]
        %v8133 = vld [vmem:[%s7780] sm:$0xf]
        %v8134 = vld [vmem:[%s7780 + $0x4] sm:$0xf]
        %v8135 = vld [vmem:[%s7780 + $0xc] sm:$0xf]
        %v8136 = vld [vmem:[%s7780 + $0x10] sm:$0xf]
        %v8137 = vld [vmem:[%s7780 + $0x18] sm:$0xf]
        %v8138 = vld [vmem:[%s7780 + $0x1c] sm:$0xf]
        %v8139 = vld [vmem:[%s7780 + $0x24] sm:$0xf]
        %v8140 = vld [vmem:[%s7780 + $0x28] sm:$0xf]
        %v8141 = vld [vmem:[%s7780 + $0x30] sm:$0xf]
        %v8142 = vld [vmem:[%s7780 + $0x34] sm:$0xf]
        %v8143 = vld [vmem:[%s7780 + $0x3c] sm:$0xf]
        %v8144 = vld [vmem:[%s7780 + $0x40] sm:$0xf]
        %v8145 = vld [vmem:[%s7780 + $0x48] sm:$0xf]
        %v8146 = vld [vmem:[%s7780 + $0x4c] sm:$0xf]
        %v8147 = vld [vmem:[%s7780 + $0x54] sm:$0xf]
        %v8148 = vld [vmem:[%s7780 + $0x58] sm:$0xf]
        %v8149 = vld [vmem:[%s7780 + $0x60] sm:$0xf]
        %v8150 = vld [vmem:[%s7780 + $0x64] sm:$0xf]
        %v8151 = vld [vmem:[%s7780 + $0x6c] sm:$0xf]
        %v8152 = vld [vmem:[%s7780 + $0x70] sm:$0xf]
        %v8153 = vld [vmem:[%s7780 + $0x78] sm:$0xf]
        %v8154 = vld [vmem:[%s7780 + $0x7c] sm:$0xf]
        %v8155 = vld [vmem:[%s7780 + $0x84] sm:$0xf]
        %v8156 = vld [vmem:[%s7780 + $0x88] sm:$0xf]
        %v8157 = vld [vmem:[%s7780 + $0x90] sm:$0xf]
        %v8158 = vld [vmem:[%s7780 + $0x94] sm:$0xf]
        %v8159 = vld [vmem:[%s7780 + $0x9c] sm:$0xf]
        %v8160 = vld [vmem:[%s7780 + $0xa0] sm:$0xf]
        %v8161 = vld [vmem:[%s7780 + $0xa8] sm:$0xf]
        %v8162 = vld [vmem:[%s7780 + $0xac] sm:$0xf]
        %v8163 = vld [vmem:[%s7780 + $0xb4] sm:$0xf]
        %v8164 = vld [vmem:[%s7780 + $0xb8] sm:$0xf]
        %v8165 = vld [vmem:[%s7780 + $0xd8] sm:$0xf]
        %v8166 = vld [vmem:[%s7780 + $0xdc] sm:$0xf]
        %v8167 = vld [vmem:[%s7780 + $0xe4] sm:$0xf]
        %v8168 = vld [vmem:[%s7780 + $0xe8] sm:$0xf]
        %v8169 = vld [vmem:[%s7780 + $0xf0] sm:$0xf]
        %v8170 = vld [vmem:[%s7780 + $0xf4] sm:$0xf]
        %v8171 = vld [vmem:[%s7780 + $0xfc] sm:$0xf]
        %v8172 = vld [vmem:[%s7780 + $0x100] sm:$0xf]
        %v8173 = vld [vmem:[%s7780 + $0x108] sm:$0xf]
        %v8174 = vld [vmem:[%s7780 + $0x10c] sm:$0xf]
        %v8175 = vld [vmem:[%s7780 + $0x114] sm:$0xf]
        %v8176 = vld [vmem:[%s7780 + $0x118] sm:$0xf]
        %v8177 = vld [vmem:[%s7780 + $0x120] sm:$0xf]
        %v8178 = vld [vmem:[%s7780 + $0x124] sm:$0xf]
        %v8179 = vld [vmem:[%s7780 + $0x12c] sm:$0xf]
        %v8180 = vld [vmem:[%s7780 + $0x130] sm:$0xf]
        %v8181 = vld [vmem:[%s7780 + $0x138] sm:$0xf]
        %v8182 = vld [vmem:[%s7780 + $0x13c] sm:$0xf]
        %v8183 = vld [vmem:[%s7780 + $0x144] sm:$0xf]
        %v8184 = vld [vmem:[%s7780 + $0x148] sm:$0xf]
        %v8185 = vld [vmem:[%s7780 + $0x150] sm:$0xf]
        %v8186 = vld [vmem:[%s7780 + $0x154] sm:$0xf]
        %v8187 = vld [vmem:[%s7780 + $0x15c] sm:$0xf]
        %v8188 = vld [vmem:[%s7780 + $0x160] sm:$0xf]
        %v8189 = vld [vmem:[%s7780 + $0x168] sm:$0xf]
        %v8190 = vld [vmem:[%s7780 + $0x16c] sm:$0xf]
        %v8191 = vld [vmem:[%s7780 + $0x174] sm:$0xf]
        %v8192 = vld [vmem:[%s7780 + $0x178] sm:$0xf]
        %v8193 = vld [vmem:[%s7780 + $0x180] sm:$0xf]
        %v8194 = vld [vmem:[%s7780 + $0x184] sm:$0xf]
        %v8195 = vld [vmem:[%s7780 + $0x18c] sm:$0xf]
        %v8196 = vld [vmem:[%s7780 + $0x190] sm:$0xf]
        %v8197 = vld [vmem:[%s7780 + $0x8] sm:$0x1]
        %v8198 = vld [vmem:[%s7780 + $0x14] sm:$0x1]
        %v8199 = vld [vmem:[%s7780 + $0x20] sm:$0x1]
        %v8200 = vld [vmem:[%s7780 + $0x2c] sm:$0x1]
        %v8201 = vld [vmem:[%s7780 + $0x38] sm:$0x1]
        %v8202 = vld [vmem:[%s7780 + $0x44] sm:$0x1]
        %v8203 = vld [vmem:[%s7780 + $0x50] sm:$0x1]
        %v8204 = vld [vmem:[%s7780 + $0x5c] sm:$0x1]
        %v8205 = vld [vmem:[%s7780 + $0x68] sm:$0x1]
        %v8206 = vld [vmem:[%s7780 + $0x74] sm:$0x1]
        %v8207 = vld [vmem:[%s7780 + $0x80] sm:$0x1]
        %v8208 = vld [vmem:[%s7780 + $0x8c] sm:$0x1]
        %v8209 = vld [vmem:[%s7780 + $0x98] sm:$0x1]
        %v8210 = vld [vmem:[%s7780 + $0xa4] sm:$0x1]
        %v8211 = vld [vmem:[%s7780 + $0xb0] sm:$0x1]
        %v8212 = vld [vmem:[%s7780 + $0xbc] sm:$0x1]
        %v8213 = vld [vmem:[%s7780 + $0xe0] sm:$0x1]
        %v8214 = vld [vmem:[%s7780 + $0xec] sm:$0x1]
        %v8215 = vld [vmem:[%s7780 + $0xf8] sm:$0x1]
        %v8216 = vld [vmem:[%s7780 + $0x104] sm:$0x1]
        %v8217 = vld [vmem:[%s7780 + $0x110] sm:$0x1]
        %v8218 = vld [vmem:[%s7780 + $0x11c] sm:$0x1]
        %v8219 = vld [vmem:[%s7780 + $0x128] sm:$0x1]
        %v8220 = vld [vmem:[%s7780 + $0x134] sm:$0x1]
        %v8221 = vld [vmem:[%s7780 + $0x140] sm:$0x1]
        %v8222 = vld [vmem:[%s7780 + $0x14c] sm:$0x1]
        %v8223 = vld [vmem:[%s7780 + $0x158] sm:$0x1]
        %v8224 = vld [vmem:[%s7780 + $0x164] sm:$0x1]
        %v8225 = vld [vmem:[%s7780 + $0x170] sm:$0x1]
        %v8226 = vld [vmem:[%s7780 + $0x17c] sm:$0x1]
        %v8227 = vld [vmem:[%s7780 + $0x188] sm:$0x1]
        %v8228 = vld [vmem:[%s7780 + $0x194] sm:$0x1]
        %v8229 = vld [vmem:[%s7780] sm:$0xe]
        %v8230 = vld [vmem:[%s7780 + $0xc] sm:$0xe]
        %v8231 = vld [vmem:[%s7780 + $0x18] sm:$0xe]
        %v8232 = vld [vmem:[%s7780 + $0x24] sm:$0xe]
        %v8233 = vld [vmem:[%s7780 + $0x30] sm:$0xe]
        %v8234 = vld [vmem:[%s7780 + $0x3c] sm:$0xe]
        %v8235 = vld [vmem:[%s7780 + $0x48] sm:$0xe]
        %v8236 = vld [vmem:[%s7780 + $0x54] sm:$0xe]
        %v8237 = vld [vmem:[%s7780 + $0x60] sm:$0xe]
        %v8238 = vld [vmem:[%s7780 + $0x6c] sm:$0xe]
        %v8239 = vld [vmem:[%s7780 + $0x78] sm:$0xe]
        %v8240 = vld [vmem:[%s7780 + $0x84] sm:$0xe]
        %v8241 = vld [vmem:[%s7780 + $0x90] sm:$0xe]
        %v8242 = vld [vmem:[%s7780 + $0x9c] sm:$0xe]
        %v8243 = vld [vmem:[%s7780 + $0xa8] sm:$0xe]
        %v8244 = vld [vmem:[%s7780 + $0xb4] sm:$0xe]
        %v8245 = vld [vmem:[%s7780 + $0xd8] sm:$0xe]
        %v8246 = vld [vmem:[%s7780 + $0xe4] sm:$0xe]
        %v8247 = vld [vmem:[%s7780 + $0xf0] sm:$0xe]
        %v8248 = vld [vmem:[%s7780 + $0xfc] sm:$0xe]
        %v8249 = vld [vmem:[%s7780 + $0x108] sm:$0xe]
        %v8250 = vld [vmem:[%s7780 + $0x114] sm:$0xe]
        %v8251 = vld [vmem:[%s7780 + $0x120] sm:$0xe]
        %v8252 = vld [vmem:[%s7780 + $0x12c] sm:$0xe]
        %v8253 = vld [vmem:[%s7780 + $0x138] sm:$0xe]
        %v8254 = vld [vmem:[%s7780 + $0x144] sm:$0xe]
        %v8255 = vld [vmem:[%s7780 + $0x150] sm:$0xe]
        %v8256 = vld [vmem:[%s7780 + $0x15c] sm:$0xe]
        %v8257 = vld [vmem:[%s7780 + $0x168] sm:$0xe]
        %v8258 = vld [vmem:[%s7780 + $0x174] sm:$0xe]
        %v8259 = vld [vmem:[%s7780 + $0x180] sm:$0xe]
        %v8260 = vld [vmem:[%s7780 + $0x18c] sm:$0xe]
        %s8261 = scalar_lea.vmem [#allocation3], 24
        %v8262 = vld [vmem:[%s8261] sm:$0xf]
        %v8263 = vld [vmem:[%s8261 + $0x4] sm:$0xf]
        %v8264 = vld [vmem:[%s8261 + $0xc] sm:$0xf]
        %v8265 = vld [vmem:[%s8261 + $0x10] sm:$0xf]
        %v8266 = vld [vmem:[%s8261 + $0x18] sm:$0xf]
        %v8267 = vld [vmem:[%s8261 + $0x1c] sm:$0xf]
        %v8268 = vld [vmem:[%s8261 + $0x24] sm:$0xf]
        %v8269 = vld [vmem:[%s8261 + $0x28] sm:$0xf]
        %v8270 = vld [vmem:[%s8261 + $0x30] sm:$0xf]
        %v8271 = vld [vmem:[%s8261 + $0x34] sm:$0xf]
        %v8272 = vld [vmem:[%s8261 + $0x3c] sm:$0xf]
        %v8273 = vld [vmem:[%s8261 + $0x40] sm:$0xf]
        %v8274 = vld [vmem:[%s8261 + $0x48] sm:$0xf]
        %v8275 = vld [vmem:[%s8261 + $0x4c] sm:$0xf]
        %v8276 = vld [vmem:[%s8261 + $0x54] sm:$0xf]
        %v8277 = vld [vmem:[%s8261 + $0x58] sm:$0xf]
        %v8278 = vld [vmem:[%s8261 + $0x60] sm:$0xf]
        %v8279 = vld [vmem:[%s8261 + $0x64] sm:$0xf]
        %v8280 = vld [vmem:[%s8261 + $0x6c] sm:$0xf]
        %v8281 = vld [vmem:[%s8261 + $0x70] sm:$0xf]
        %v8282 = vld [vmem:[%s8261 + $0x78] sm:$0xf]
        %v8283 = vld [vmem:[%s8261 + $0x7c] sm:$0xf]
        %v8284 = vld [vmem:[%s8261 + $0x84] sm:$0xf]
        %v8285 = vld [vmem:[%s8261 + $0x88] sm:$0xf]
        %v8286 = vld [vmem:[%s8261 + $0x90] sm:$0xf]
        %v8287 = vld [vmem:[%s8261 + $0x94] sm:$0xf]
        %v8288 = vld [vmem:[%s8261 + $0x9c] sm:$0xf]
        %v8289 = vld [vmem:[%s8261 + $0xa0] sm:$0xf]
        %v8290 = vld [vmem:[%s8261 + $0xa8] sm:$0xf]
        %v8291 = vld [vmem:[%s8261 + $0xac] sm:$0xf]
        %v8292 = vld [vmem:[%s8261 + $0xb4] sm:$0xf]
        %v8293 = vld [vmem:[%s8261 + $0xb8] sm:$0xf]
        %v8294 = vld [vmem:[%s8261 + $0xd8] sm:$0xf]
        %v8295 = vld [vmem:[%s8261 + $0xdc] sm:$0xf]
        %v8296 = vld [vmem:[%s8261 + $0xe4] sm:$0xf]
        %v8297 = vld [vmem:[%s8261 + $0xe8] sm:$0xf]
        %v8298 = vld [vmem:[%s8261 + $0xf0] sm:$0xf]
        %v8299 = vld [vmem:[%s8261 + $0xf4] sm:$0xf]
        %v8300 = vld [vmem:[%s8261 + $0xfc] sm:$0xf]
        %v8301 = vld [vmem:[%s8261 + $0x100] sm:$0xf]
        %v8302 = vld [vmem:[%s8261 + $0x108] sm:$0xf]
        %v8303 = vld [vmem:[%s8261 + $0x10c] sm:$0xf]
        %v8304 = vld [vmem:[%s8261 + $0x114] sm:$0xf]
        %v8305 = vld [vmem:[%s8261 + $0x118] sm:$0xf]
        %v8306 = vld [vmem:[%s8261 + $0x120] sm:$0xf]
        %v8307 = vld [vmem:[%s8261 + $0x124] sm:$0xf]
        %v8308 = vld [vmem:[%s8261 + $0x12c] sm:$0xf]
        %v8309 = vld [vmem:[%s8261 + $0x130] sm:$0xf]
        %v8310 = vld [vmem:[%s8261 + $0x138] sm:$0xf]
        %v8311 = vld [vmem:[%s8261 + $0x13c] sm:$0xf]
        %v8312 = vld [vmem:[%s8261 + $0x144] sm:$0xf]
        %v8313 = vld [vmem:[%s8261 + $0x148] sm:$0xf]
        %v8314 = vld [vmem:[%s8261 + $0x150] sm:$0xf]
        %v8315 = vld [vmem:[%s8261 + $0x154] sm:$0xf]
        %v8316 = vld [vmem:[%s8261 + $0x15c] sm:$0xf]
        %v8317 = vld [vmem:[%s8261 + $0x160] sm:$0xf]
        %v8318 = vld [vmem:[%s8261 + $0x168] sm:$0xf]
        %v8319 = vld [vmem:[%s8261 + $0x16c] sm:$0xf]
        %v8320 = vld [vmem:[%s8261 + $0x174] sm:$0xf]
        %v8321 = vld [vmem:[%s8261 + $0x178] sm:$0xf]
        %v8322 = vld [vmem:[%s8261 + $0x180] sm:$0xf]
        %v8323 = vld [vmem:[%s8261 + $0x184] sm:$0xf]
        %v8324 = vld [vmem:[%s8261 + $0x18c] sm:$0xf]
        %v8325 = vld [vmem:[%s8261 + $0x190] sm:$0xf]
        %v8326 = vld [vmem:[%s8261 + $0x8] sm:$0x1]
        %v8327 = vld [vmem:[%s8261 + $0x14] sm:$0x1]
        %v8328 = vld [vmem:[%s8261 + $0x20] sm:$0x1]
        %v8329 = vld [vmem:[%s8261 + $0x2c] sm:$0x1]
        %v8330 = vld [vmem:[%s8261 + $0x38] sm:$0x1]
        %v8331 = vld [vmem:[%s8261 + $0x44] sm:$0x1]
        %v8332 = vld [vmem:[%s8261 + $0x50] sm:$0x1]
        %v8333 = vld [vmem:[%s8261 + $0x5c] sm:$0x1]
        %v8334 = vld [vmem:[%s8261 + $0x68] sm:$0x1]
        %v8335 = vld [vmem:[%s8261 + $0x74] sm:$0x1]
        %v8336 = vld [vmem:[%s8261 + $0x80] sm:$0x1]
        %v8337 = vld [vmem:[%s8261 + $0x8c] sm:$0x1]
        %v8338 = vld [vmem:[%s8261 + $0x98] sm:$0x1]
        %v8339 = vld [vmem:[%s8261 + $0xa4] sm:$0x1]
        %v8340 = vld [vmem:[%s8261 + $0xb0] sm:$0x1]
        %v8341 = vld [vmem:[%s8261 + $0xbc] sm:$0x1]
        %v8342 = vld [vmem:[%s8261 + $0xe0] sm:$0x1]
        %v8343 = vld [vmem:[%s8261 + $0xec] sm:$0x1]
        %v8344 = vld [vmem:[%s8261 + $0xf8] sm:$0x1]
        %v8345 = vld [vmem:[%s8261 + $0x104] sm:$0x1]
        %v8346 = vld [vmem:[%s8261 + $0x110] sm:$0x1]
        %v8347 = vld [vmem:[%s8261 + $0x11c] sm:$0x1]
        %v8348 = vld [vmem:[%s8261 + $0x128] sm:$0x1]
        %v8349 = vld [vmem:[%s8261 + $0x134] sm:$0x1]
        %v8350 = vld [vmem:[%s8261 + $0x140] sm:$0x1]
        %v8351 = vld [vmem:[%s8261 + $0x14c] sm:$0x1]
        %v8352 = vld [vmem:[%s8261 + $0x158] sm:$0x1]
        %v8353 = vld [vmem:[%s8261 + $0x164] sm:$0x1]
        %v8354 = vld [vmem:[%s8261 + $0x170] sm:$0x1]
        %v8355 = vld [vmem:[%s8261 + $0x17c] sm:$0x1]
        %v8356 = vld [vmem:[%s8261 + $0x188] sm:$0x1]
        %v8357 = vld [vmem:[%s8261 + $0x194] sm:$0x1]
        %v8358 = vld [vmem:[%s8261] sm:$0xe]
        %v8359 = vld [vmem:[%s8261 + $0xc] sm:$0xe]
        %v8360 = vld [vmem:[%s8261 + $0x18] sm:$0xe]
        %v8361 = vld [vmem:[%s8261 + $0x24] sm:$0xe]
        %v8362 = vld [vmem:[%s8261 + $0x30] sm:$0xe]
        %v8363 = vld [vmem:[%s8261 + $0x3c] sm:$0xe]
        %v8364 = vld [vmem:[%s8261 + $0x48] sm:$0xe]
        %v8365 = vld [vmem:[%s8261 + $0x54] sm:$0xe]
        %v8366 = vld [vmem:[%s8261 + $0x60] sm:$0xe]
        %v8367 = vld [vmem:[%s8261 + $0x6c] sm:$0xe]
        %v8368 = vld [vmem:[%s8261 + $0x78] sm:$0xe]
        %v8369 = vld [vmem:[%s8261 + $0x84] sm:$0xe]
        %v8370 = vld [vmem:[%s8261 + $0x90] sm:$0xe]
        %v8371 = vld [vmem:[%s8261 + $0x9c] sm:$0xe]
        %v8372 = vld [vmem:[%s8261 + $0xa8] sm:$0xe]
        %v8373 = vld [vmem:[%s8261 + $0xb4] sm:$0xe]
        %v8374 = vld [vmem:[%s8261 + $0xd8] sm:$0xe]
        %v8375 = vld [vmem:[%s8261 + $0xe4] sm:$0xe]
        %v8376 = vld [vmem:[%s8261 + $0xf0] sm:$0xe]
        %v8377 = vld [vmem:[%s8261 + $0xfc] sm:$0xe]
        %v8378 = vld [vmem:[%s8261 + $0x108] sm:$0xe]
        %v8379 = vld [vmem:[%s8261 + $0x114] sm:$0xe]
        %v8380 = vld [vmem:[%s8261 + $0x120] sm:$0xe]
        %v8381 = vld [vmem:[%s8261 + $0x12c] sm:$0xe]
        %v8382 = vld [vmem:[%s8261 + $0x138] sm:$0xe]
        %v8383 = vld [vmem:[%s8261 + $0x144] sm:$0xe]
        %v8384 = vld [vmem:[%s8261 + $0x150] sm:$0xe]
        %v8385 = vld [vmem:[%s8261 + $0x15c] sm:$0xe]
        %v8386 = vld [vmem:[%s8261 + $0x168] sm:$0xe]
        %v8387 = vld [vmem:[%s8261 + $0x174] sm:$0xe]
        %v8388 = vld [vmem:[%s8261 + $0x180] sm:$0xe]
        %v8389 = vld [vmem:[%s8261 + $0x18c] sm:$0xe]
        %v8454 = vunpack.c.l.b16 %v8005
        %v8455 = vunpack.c.l.b16 %v8006
        %v8456 = vunpack.c.l.b16 %v8007
        %v8457 = vunpack.c.l.b16 %v8008
        %v8458 = vunpack.c.l.b16 %v8009
        %v8459 = vunpack.c.l.b16 %v8010
        %v8460 = vunpack.c.l.b16 %v8011
        %v8461 = vunpack.c.l.b16 %v8012
        %v8462 = vunpack.c.l.b16 %v8013
        %v8463 = vunpack.c.l.b16 %v8014
        %v8464 = vunpack.c.l.b16 %v8015
        %v8465 = vunpack.c.l.b16 %v8016
        %v8466 = vunpack.c.l.b16 %v8017
        %v8467 = vunpack.c.l.b16 %v8018
        %v8468 = vunpack.c.l.b16 %v8019
        %v8469 = vunpack.c.l.b16 %v8020
        %v8470 = vunpack.c.l.b16 %v8021
        %v8471 = vunpack.c.l.b16 %v8022
        %v8472 = vunpack.c.l.b16 %v8023
        %v8473 = vunpack.c.l.b16 %v8024
        %v8474 = vunpack.c.l.b16 %v8025
        %v8475 = vunpack.c.l.b16 %v8026
        %v8476 = vunpack.c.l.b16 %v8027
        %v8477 = vunpack.c.l.b16 %v8028
        %v8478 = vunpack.c.l.b16 %v8029
        %v8479 = vunpack.c.l.b16 %v8030
        %v8480 = vunpack.c.l.b16 %v8031
        %v8481 = vunpack.c.l.b16 %v8032
        %v8482 = vunpack.c.l.b16 %v8033
        %v8483 = vunpack.c.l.b16 %v8034
        %v8484 = vunpack.c.l.b16 %v8035
        %v8485 = vunpack.c.l.b16 %v8036
        %v8486 = vunpack.c.l.b16 %v8037
        %v8487 = vunpack.c.l.b16 %v8038
        %v8488 = vunpack.c.l.b16 %v8039
        %v8489 = vunpack.c.l.b16 %v8040
        %v8490 = vunpack.c.l.b16 %v8041
        %v8491 = vunpack.c.l.b16 %v8042
        %v8492 = vunpack.c.l.b16 %v8043
        %v8493 = vunpack.c.l.b16 %v8044
        %v8494 = vunpack.c.l.b16 %v8045
        %v8495 = vunpack.c.l.b16 %v8046
        %v8496 = vunpack.c.l.b16 %v8047
        %v8497 = vunpack.c.l.b16 %v8048
        %v8498 = vunpack.c.l.b16 %v8049
        %v8499 = vunpack.c.l.b16 %v8050
        %v8500 = vunpack.c.l.b16 %v8051
        %v8501 = vunpack.c.l.b16 %v8052
        %v8502 = vunpack.c.l.b16 %v8053
        %v8503 = vunpack.c.l.b16 %v8054
        %v8504 = vunpack.c.l.b16 %v8055
        %v8505 = vunpack.c.l.b16 %v8056
        %v8506 = vunpack.c.l.b16 %v8057
        %v8507 = vunpack.c.l.b16 %v8058
        %v8508 = vunpack.c.l.b16 %v8059
        %v8509 = vunpack.c.l.b16 %v8060
        %v8510 = vunpack.c.l.b16 %v8061
        %v8511 = vunpack.c.l.b16 %v8062
        %v8512 = vunpack.c.l.b16 %v8063
        %v8513 = vunpack.c.l.b16 %v8064
        %v8514 = vunpack.c.l.b16 %v8065
        %v8515 = vunpack.c.l.b16 %v8066
        %v8516 = vunpack.c.l.b16 %v8067
        %v8517 = vunpack.c.l.b16 %v8068
        %v8518 = vpack.c.b16 %v8455, %v8454
        %v8519 = vpack.c.b16 %v8457, %v8456
        %v8520 = vpack.c.b16 %v8459, %v8458
        %v8521 = vpack.c.b16 %v8461, %v8460
        %v8522 = vpack.c.b16 %v8463, %v8462
        %v8523 = vpack.c.b16 %v8465, %v8464
        %v8524 = vpack.c.b16 %v8467, %v8466
        %v8525 = vpack.c.b16 %v8469, %v8468
        %v8526 = vpack.c.b16 %v8471, %v8470
        %v8527 = vpack.c.b16 %v8473, %v8472
        %v8528 = vpack.c.b16 %v8475, %v8474
        %v8529 = vpack.c.b16 %v8477, %v8476
        %v8530 = vpack.c.b16 %v8479, %v8478
        %v8531 = vpack.c.b16 %v8481, %v8480
        %v8532 = vpack.c.b16 %v8483, %v8482
        %v8533 = vpack.c.b16 %v8485, %v8484
        %v8534 = vpack.c.b16 %v8487, %v8486
        %v8535 = vpack.c.b16 %v8489, %v8488
        %v8536 = vpack.c.b16 %v8491, %v8490
        %v8537 = vpack.c.b16 %v8493, %v8492
        %v8538 = vpack.c.b16 %v8495, %v8494
        %v8539 = vpack.c.b16 %v8497, %v8496
        %v8540 = vpack.c.b16 %v8499, %v8498
        %v8541 = vpack.c.b16 %v8501, %v8500
        %v8542 = vpack.c.b16 %v8503, %v8502
        %v8543 = vpack.c.b16 %v8505, %v8504
        %v8544 = vpack.c.b16 %v8507, %v8506
        %v8545 = vpack.c.b16 %v8509, %v8508
        %v8546 = vpack.c.b16 %v8511, %v8510
        %v8547 = vpack.c.b16 %v8513, %v8512
        %v8548 = vpack.c.b16 %v8515, %v8514
        %v8549 = vpack.c.b16 %v8517, %v8516
        %v8614 = vunpack.c.l.b16 %v8069
        %v8615 = vunpack.c.l.b16 %v8070
        %v8616 = vunpack.c.l.b16 %v8071
        %v8617 = vunpack.c.l.b16 %v8072
        %v8618 = vunpack.c.l.b16 %v8073
        %v8619 = vunpack.c.l.b16 %v8074
        %v8620 = vunpack.c.l.b16 %v8075
        %v8621 = vunpack.c.l.b16 %v8076
        %v8622 = vunpack.c.l.b16 %v8077
        %v8623 = vunpack.c.l.b16 %v8078
        %v8624 = vunpack.c.l.b16 %v8079
        %v8625 = vunpack.c.l.b16 %v8080
        %v8626 = vunpack.c.l.b16 %v8081
        %v8627 = vunpack.c.l.b16 %v8082
        %v8628 = vunpack.c.l.b16 %v8083
        %v8629 = vunpack.c.l.b16 %v8084
        %v8630 = vunpack.c.l.b16 %v8085
        %v8631 = vunpack.c.l.b16 %v8086
        %v8632 = vunpack.c.l.b16 %v8087
        %v8633 = vunpack.c.l.b16 %v8088
        %v8634 = vunpack.c.l.b16 %v8089
        %v8635 = vunpack.c.l.b16 %v8090
        %v8636 = vunpack.c.l.b16 %v8091
        %v8637 = vunpack.c.l.b16 %v8092
        %v8638 = vunpack.c.l.b16 %v8093
        %v8639 = vunpack.c.l.b16 %v8094
        %v8640 = vunpack.c.l.b16 %v8095
        %v8641 = vunpack.c.l.b16 %v8096
        %v8642 = vunpack.c.l.b16 %v8097
        %v8643 = vunpack.c.l.b16 %v8098
        %v8644 = vunpack.c.l.b16 %v8099
        %v8645 = vunpack.c.l.b16 %v8100
        %v8646 = vpack.c.b16 %v8614, %v8614
        %v8647 = vpack.c.b16 %v8615, %v8615
        %v8648 = vpack.c.b16 %v8616, %v8616
        %v8649 = vpack.c.b16 %v8617, %v8617
        %v8650 = vpack.c.b16 %v8618, %v8618
        %v8651 = vpack.c.b16 %v8619, %v8619
        %v8652 = vpack.c.b16 %v8620, %v8620
        %v8653 = vpack.c.b16 %v8621, %v8621
        %v8654 = vpack.c.b16 %v8622, %v8622
        %v8655 = vpack.c.b16 %v8623, %v8623
        %v8656 = vpack.c.b16 %v8624, %v8624
        %v8657 = vpack.c.b16 %v8625, %v8625
        %v8658 = vpack.c.b16 %v8626, %v8626
        %v8659 = vpack.c.b16 %v8627, %v8627
        %v8660 = vpack.c.b16 %v8628, %v8628
        %v8661 = vpack.c.b16 %v8629, %v8629
        %v8662 = vpack.c.b16 %v8630, %v8630
        %v8663 = vpack.c.b16 %v8631, %v8631
        %v8664 = vpack.c.b16 %v8632, %v8632
        %v8665 = vpack.c.b16 %v8633, %v8633
        %v8666 = vpack.c.b16 %v8634, %v8634
        %v8667 = vpack.c.b16 %v8635, %v8635
        %v8668 = vpack.c.b16 %v8636, %v8636
        %v8669 = vpack.c.b16 %v8637, %v8637
        %v8670 = vpack.c.b16 %v8638, %v8638
        %v8671 = vpack.c.b16 %v8639, %v8639
        %v8672 = vpack.c.b16 %v8640, %v8640
        %v8673 = vpack.c.b16 %v8641, %v8641
        %v8674 = vpack.c.b16 %v8642, %v8642
        %v8675 = vpack.c.b16 %v8643, %v8643
        %v8676 = vpack.c.b16 %v8644, %v8644
        %v8677 = vpack.c.b16 %v8645, %v8645
        %v8679 = vshrl.u32 %v8518, 16
        %v8681 = vshll.u32 %v8518, 16
        %v8683 = vrot.slane %v8681, 1
        %v8684 = vor.u32 %v8679, %v8683
        %v8686 = vshll.u32 %v8646, 16
        %v8688 = vrot.slane %v8686, 1
        %v8689 = vsel %vm2250, %v8684, %v8688
        %v8691 = vshrl.u32 %v8519, 16
        %v8693 = vshll.u32 %v8519, 16
        %v8695 = vrot.slane %v8693, 1
        %v8696 = vor.u32 %v8691, %v8695
        %v8698 = vshll.u32 %v8647, 16
        %v8700 = vrot.slane %v8698, 1
        %v8701 = vsel %vm2250, %v8696, %v8700
        %v8703 = vshrl.u32 %v8520, 16
        %v8705 = vshll.u32 %v8520, 16
        %v8707 = vrot.slane %v8705, 1
        %v8708 = vor.u32 %v8703, %v8707
        %v8710 = vshll.u32 %v8648, 16
        %v8712 = vrot.slane %v8710, 1
        %v8713 = vsel %vm2250, %v8708, %v8712
        %v8715 = vshrl.u32 %v8521, 16
        %v8717 = vshll.u32 %v8521, 16
        %v8719 = vrot.slane %v8717, 1
        %v8720 = vor.u32 %v8715, %v8719
        %v8722 = vshll.u32 %v8649, 16
        %v8724 = vrot.slane %v8722, 1
        %v8725 = vsel %vm2250, %v8720, %v8724
        %v8727 = vshrl.u32 %v8522, 16
        %v8729 = vshll.u32 %v8522, 16
        %v8731 = vrot.slane %v8729, 1
        %v8732 = vor.u32 %v8727, %v8731
        %v8734 = vshll.u32 %v8650, 16
        %v8736 = vrot.slane %v8734, 1
        %v8737 = vsel %vm2250, %v8732, %v8736
        %v8739 = vshrl.u32 %v8523, 16
        %v8741 = vshll.u32 %v8523, 16
        %v8743 = vrot.slane %v8741, 1
        %v8744 = vor.u32 %v8739, %v8743
        %v8746 = vshll.u32 %v8651, 16
        %v8748 = vrot.slane %v8746, 1
        %v8749 = vsel %vm2250, %v8744, %v8748
        %v8751 = vshrl.u32 %v8524, 16
        %v8753 = vshll.u32 %v8524, 16
        %v8755 = vrot.slane %v8753, 1
        %v8756 = vor.u32 %v8751, %v8755
        %v8758 = vshll.u32 %v8652, 16
        %v8760 = vrot.slane %v8758, 1
        %v8761 = vsel %vm2250, %v8756, %v8760
        %v8763 = vshrl.u32 %v8525, 16
        %v8765 = vshll.u32 %v8525, 16
        %v8767 = vrot.slane %v8765, 1
        %v8768 = vor.u32 %v8763, %v8767
        %v8770 = vshll.u32 %v8653, 16
        %v8772 = vrot.slane %v8770, 1
        %v8773 = vsel %vm2250, %v8768, %v8772
        %v8775 = vshrl.u32 %v8526, 16
        %v8777 = vshll.u32 %v8526, 16
        %v8779 = vrot.slane %v8777, 1
        %v8780 = vor.u32 %v8775, %v8779
        %v8782 = vshll.u32 %v8654, 16
        %v8784 = vrot.slane %v8782, 1
        %v8785 = vsel %vm2250, %v8780, %v8784
        %v8787 = vshrl.u32 %v8527, 16
        %v8789 = vshll.u32 %v8527, 16
        %v8791 = vrot.slane %v8789, 1
        %v8792 = vor.u32 %v8787, %v8791
        %v8794 = vshll.u32 %v8655, 16
        %v8796 = vrot.slane %v8794, 1
        %v8797 = vsel %vm2250, %v8792, %v8796
        %v8799 = vshrl.u32 %v8528, 16
        %v8801 = vshll.u32 %v8528, 16
        %v8803 = vrot.slane %v8801, 1
        %v8804 = vor.u32 %v8799, %v8803
        %v8806 = vshll.u32 %v8656, 16
        %v8808 = vrot.slane %v8806, 1
        %v8809 = vsel %vm2250, %v8804, %v8808
        %v8811 = vshrl.u32 %v8529, 16
        %v8813 = vshll.u32 %v8529, 16
        %v8815 = vrot.slane %v8813, 1
        %v8816 = vor.u32 %v8811, %v8815
        %v8818 = vshll.u32 %v8657, 16
        %v8820 = vrot.slane %v8818, 1
        %v8821 = vsel %vm2250, %v8816, %v8820
        %v8823 = vshrl.u32 %v8530, 16
        %v8825 = vshll.u32 %v8530, 16
        %v8827 = vrot.slane %v8825, 1
        %v8828 = vor.u32 %v8823, %v8827
        %v8830 = vshll.u32 %v8658, 16
        %v8832 = vrot.slane %v8830, 1
        %v8833 = vsel %vm2250, %v8828, %v8832
        %v8835 = vshrl.u32 %v8531, 16
        %v8837 = vshll.u32 %v8531, 16
        %v8839 = vrot.slane %v8837, 1
        %v8840 = vor.u32 %v8835, %v8839
        %v8842 = vshll.u32 %v8659, 16
        %v8844 = vrot.slane %v8842, 1
        %v8845 = vsel %vm2250, %v8840, %v8844
        %v8847 = vshrl.u32 %v8532, 16
        %v8849 = vshll.u32 %v8532, 16
        %v8851 = vrot.slane %v8849, 1
        %v8852 = vor.u32 %v8847, %v8851
        %v8854 = vshll.u32 %v8660, 16
        %v8856 = vrot.slane %v8854, 1
        %v8857 = vsel %vm2250, %v8852, %v8856
        %v8859 = vshrl.u32 %v8533, 16
        %v8861 = vshll.u32 %v8533, 16
        %v8863 = vrot.slane %v8861, 1
        %v8864 = vor.u32 %v8859, %v8863
        %v8866 = vshll.u32 %v8661, 16
        %v8868 = vrot.slane %v8866, 1
        %v8869 = vsel %vm2250, %v8864, %v8868
        %v8871 = vshrl.u32 %v8534, 16
        %v8873 = vshll.u32 %v8534, 16
        %v8875 = vrot.slane %v8873, 1
        %v8876 = vor.u32 %v8871, %v8875
        %v8878 = vshll.u32 %v8662, 16
        %v8880 = vrot.slane %v8878, 1
        %v8881 = vsel %vm2250, %v8876, %v8880
        %v8883 = vshrl.u32 %v8535, 16
        %v8885 = vshll.u32 %v8535, 16
        %v8887 = vrot.slane %v8885, 1
        %v8888 = vor.u32 %v8883, %v8887
        %v8890 = vshll.u32 %v8663, 16
        %v8892 = vrot.slane %v8890, 1
        %v8893 = vsel %vm2250, %v8888, %v8892
        %v8895 = vshrl.u32 %v8536, 16
        %v8897 = vshll.u32 %v8536, 16
        %v8899 = vrot.slane %v8897, 1
        %v8900 = vor.u32 %v8895, %v8899
        %v8902 = vshll.u32 %v8664, 16
        %v8904 = vrot.slane %v8902, 1
        %v8905 = vsel %vm2250, %v8900, %v8904
        %v8907 = vshrl.u32 %v8537, 16
        %v8909 = vshll.u32 %v8537, 16
        %v8911 = vrot.slane %v8909, 1
        %v8912 = vor.u32 %v8907, %v8911
        %v8914 = vshll.u32 %v8665, 16
        %v8916 = vrot.slane %v8914, 1
        %v8917 = vsel %vm2250, %v8912, %v8916
        %v8919 = vshrl.u32 %v8538, 16
        %v8921 = vshll.u32 %v8538, 16
        %v8923 = vrot.slane %v8921, 1
        %v8924 = vor.u32 %v8919, %v8923
        %v8926 = vshll.u32 %v8666, 16
        %v8928 = vrot.slane %v8926, 1
        %v8929 = vsel %vm2250, %v8924, %v8928
        %v8931 = vshrl.u32 %v8539, 16
        %v8933 = vshll.u32 %v8539, 16
        %v8935 = vrot.slane %v8933, 1
        %v8936 = vor.u32 %v8931, %v8935
        %v8938 = vshll.u32 %v8667, 16
        %v8940 = vrot.slane %v8938, 1
        %v8941 = vsel %vm2250, %v8936, %v8940
        %v8943 = vshrl.u32 %v8540, 16
        %v8945 = vshll.u32 %v8540, 16
        %v8947 = vrot.slane %v8945, 1
        %v8948 = vor.u32 %v8943, %v8947
        %v8950 = vshll.u32 %v8668, 16
        %v8952 = vrot.slane %v8950, 1
        %v8953 = vsel %vm2250, %v8948, %v8952
        %v8955 = vshrl.u32 %v8541, 16
        %v8957 = vshll.u32 %v8541, 16
        %v8959 = vrot.slane %v8957, 1
        %v8960 = vor.u32 %v8955, %v8959
        %v8962 = vshll.u32 %v8669, 16
        %v8964 = vrot.slane %v8962, 1
        %v8965 = vsel %vm2250, %v8960, %v8964
        %v8967 = vshrl.u32 %v8542, 16
        %v8969 = vshll.u32 %v8542, 16
        %v8971 = vrot.slane %v8969, 1
        %v8972 = vor.u32 %v8967, %v8971
        %v8974 = vshll.u32 %v8670, 16
        %v8976 = vrot.slane %v8974, 1
        %v8977 = vsel %vm2250, %v8972, %v8976
        %v8979 = vshrl.u32 %v8543, 16
        %v8981 = vshll.u32 %v8543, 16
        %v8983 = vrot.slane %v8981, 1
        %v8984 = vor.u32 %v8979, %v8983
        %v8986 = vshll.u32 %v8671, 16
        %v8988 = vrot.slane %v8986, 1
        %v8989 = vsel %vm2250, %v8984, %v8988
        %v8991 = vshrl.u32 %v8544, 16
        %v8993 = vshll.u32 %v8544, 16
        %v8995 = vrot.slane %v8993, 1
        %v8996 = vor.u32 %v8991, %v8995
        %v8998 = vshll.u32 %v8672, 16
        %v9000 = vrot.slane %v8998, 1
        %v9001 = vsel %vm2250, %v8996, %v9000
        %v9003 = vshrl.u32 %v8545, 16
        %v9005 = vshll.u32 %v8545, 16
        %v9007 = vrot.slane %v9005, 1
        %v9008 = vor.u32 %v9003, %v9007
        %v9010 = vshll.u32 %v8673, 16
        %v9012 = vrot.slane %v9010, 1
        %v9013 = vsel %vm2250, %v9008, %v9012
        %v9015 = vshrl.u32 %v8546, 16
        %v9017 = vshll.u32 %v8546, 16
        %v9019 = vrot.slane %v9017, 1
        %v9020 = vor.u32 %v9015, %v9019
        %v9022 = vshll.u32 %v8674, 16
        %v9024 = vrot.slane %v9022, 1
        %v9025 = vsel %vm2250, %v9020, %v9024
        %v9027 = vshrl.u32 %v8547, 16
        %v9029 = vshll.u32 %v8547, 16
        %v9031 = vrot.slane %v9029, 1
        %v9032 = vor.u32 %v9027, %v9031
        %v9034 = vshll.u32 %v8675, 16
        %v9036 = vrot.slane %v9034, 1
        %v9037 = vsel %vm2250, %v9032, %v9036
        %v9039 = vshrl.u32 %v8548, 16
        %v9041 = vshll.u32 %v8548, 16
        %v9043 = vrot.slane %v9041, 1
        %v9044 = vor.u32 %v9039, %v9043
        %v9046 = vshll.u32 %v8676, 16
        %v9048 = vrot.slane %v9046, 1
        %v9049 = vsel %vm2250, %v9044, %v9048
        %v9051 = vshrl.u32 %v8549, 16
        %v9053 = vshll.u32 %v8549, 16
        %v9055 = vrot.slane %v9053, 1
        %v9056 = vor.u32 %v9051, %v9055
        %v9058 = vshll.u32 %v8677, 16
        %v9060 = vrot.slane %v9058, 1
        %v9061 = vsel %vm2250, %v9056, %v9060
        %v9126 = vunpack.c.l.b16 %v8101
        %v9127 = vunpack.c.l.b16 %v8102
        %v9128 = vunpack.c.l.b16 %v8103
        %v9129 = vunpack.c.l.b16 %v8104
        %v9130 = vunpack.c.l.b16 %v8105
        %v9131 = vunpack.c.l.b16 %v8106
        %v9132 = vunpack.c.l.b16 %v8107
        %v9133 = vunpack.c.l.b16 %v8108
        %v9134 = vunpack.c.l.b16 %v8109
        %v9135 = vunpack.c.l.b16 %v8110
        %v9136 = vunpack.c.l.b16 %v8111
        %v9137 = vunpack.c.l.b16 %v8112
        %v9138 = vunpack.c.l.b16 %v8113
        %v9139 = vunpack.c.l.b16 %v8114
        %v9140 = vunpack.c.l.b16 %v8115
        %v9141 = vunpack.c.l.b16 %v8116
        %v9142 = vunpack.c.l.b16 %v8117
        %v9143 = vunpack.c.l.b16 %v8118
        %v9144 = vunpack.c.l.b16 %v8119
        %v9145 = vunpack.c.l.b16 %v8120
        %v9146 = vunpack.c.l.b16 %v8121
        %v9147 = vunpack.c.l.b16 %v8122
        %v9148 = vunpack.c.l.b16 %v8123
        %v9149 = vunpack.c.l.b16 %v8124
        %v9150 = vunpack.c.l.b16 %v8125
        %v9151 = vunpack.c.l.b16 %v8126
        %v9152 = vunpack.c.l.b16 %v8127
        %v9153 = vunpack.c.l.b16 %v8128
        %v9154 = vunpack.c.l.b16 %v8129
        %v9155 = vunpack.c.l.b16 %v8130
        %v9156 = vunpack.c.l.b16 %v8131
        %v9157 = vunpack.c.l.b16 %v8132
        %v9158 = vpack.c.b16 %v8455, %v9126
        %v9159 = vpack.c.b16 %v8457, %v9127
        %v9160 = vpack.c.b16 %v8459, %v9128
        %v9161 = vpack.c.b16 %v8461, %v9129
        %v9162 = vpack.c.b16 %v8463, %v9130
        %v9163 = vpack.c.b16 %v8465, %v9131
        %v9164 = vpack.c.b16 %v8467, %v9132
        %v9165 = vpack.c.b16 %v8469, %v9133
        %v9166 = vpack.c.b16 %v8471, %v9134
        %v9167 = vpack.c.b16 %v8473, %v9135
        %v9168 = vpack.c.b16 %v8475, %v9136
        %v9169 = vpack.c.b16 %v8477, %v9137
        %v9170 = vpack.c.b16 %v8479, %v9138
        %v9171 = vpack.c.b16 %v8481, %v9139
        %v9172 = vpack.c.b16 %v8483, %v9140
        %v9173 = vpack.c.b16 %v8485, %v9141
        %v9174 = vpack.c.b16 %v8487, %v9142
        %v9175 = vpack.c.b16 %v8489, %v9143
        %v9176 = vpack.c.b16 %v8491, %v9144
        %v9177 = vpack.c.b16 %v8493, %v9145
        %v9178 = vpack.c.b16 %v8495, %v9146
        %v9179 = vpack.c.b16 %v8497, %v9147
        %v9180 = vpack.c.b16 %v8499, %v9148
        %v9181 = vpack.c.b16 %v8501, %v9149
        %v9182 = vpack.c.b16 %v8503, %v9150
        %v9183 = vpack.c.b16 %v8505, %v9151
        %v9184 = vpack.c.b16 %v8507, %v9152
        %v9185 = vpack.c.b16 %v8509, %v9153
        %v9186 = vpack.c.b16 %v8511, %v9154
        %v9187 = vpack.c.b16 %v8513, %v9155
        %v9188 = vpack.c.b16 %v8515, %v9156
        %v9189 = vpack.c.b16 %v8517, %v9157
        %v9190 = vrot.slane %v9158, 1
        %v9191 = vrot.slane %v8646, 1
        %v9192 = vsel %vm2763, %v9190, %v9191
        %v9193 = vrot.slane %v9159, 1
        %v9194 = vrot.slane %v8647, 1
        %v9195 = vsel %vm2763, %v9193, %v9194
        %v9196 = vrot.slane %v9160, 1
        %v9197 = vrot.slane %v8648, 1
        %v9198 = vsel %vm2763, %v9196, %v9197
        %v9199 = vrot.slane %v9161, 1
        %v9200 = vrot.slane %v8649, 1
        %v9201 = vsel %vm2763, %v9199, %v9200
        %v9202 = vrot.slane %v9162, 1
        %v9203 = vrot.slane %v8650, 1
        %v9204 = vsel %vm2763, %v9202, %v9203
        %v9205 = vrot.slane %v9163, 1
        %v9206 = vrot.slane %v8651, 1
        %v9207 = vsel %vm2763, %v9205, %v9206
        %v9208 = vrot.slane %v9164, 1
        %v9209 = vrot.slane %v8652, 1
        %v9210 = vsel %vm2763, %v9208, %v9209
        %v9211 = vrot.slane %v9165, 1
        %v9212 = vrot.slane %v8653, 1
        %v9213 = vsel %vm2763, %v9211, %v9212
        %v9214 = vrot.slane %v9166, 1
        %v9215 = vrot.slane %v8654, 1
        %v9216 = vsel %vm2763, %v9214, %v9215
        %v9217 = vrot.slane %v9167, 1
        %v9218 = vrot.slane %v8655, 1
        %v9219 = vsel %vm2763, %v9217, %v9218
        %v9220 = vrot.slane %v9168, 1
        %v9221 = vrot.slane %v8656, 1
        %v9222 = vsel %vm2763, %v9220, %v9221
        %v9223 = vrot.slane %v9169, 1
        %v9224 = vrot.slane %v8657, 1
        %v9225 = vsel %vm2763, %v9223, %v9224
        %v9226 = vrot.slane %v9170, 1
        %v9227 = vrot.slane %v8658, 1
        %v9228 = vsel %vm2763, %v9226, %v9227
        %v9229 = vrot.slane %v9171, 1
        %v9230 = vrot.slane %v8659, 1
        %v9231 = vsel %vm2763, %v9229, %v9230
        %v9232 = vrot.slane %v9172, 1
        %v9233 = vrot.slane %v8660, 1
        %v9234 = vsel %vm2763, %v9232, %v9233
        %v9235 = vrot.slane %v9173, 1
        %v9236 = vrot.slane %v8661, 1
        %v9237 = vsel %vm2763, %v9235, %v9236
        %v9238 = vrot.slane %v9174, 1
        %v9239 = vrot.slane %v8662, 1
        %v9240 = vsel %vm2763, %v9238, %v9239
        %v9241 = vrot.slane %v9175, 1
        %v9242 = vrot.slane %v8663, 1
        %v9243 = vsel %vm2763, %v9241, %v9242
        %v9244 = vrot.slane %v9176, 1
        %v9245 = vrot.slane %v8664, 1
        %v9246 = vsel %vm2763, %v9244, %v9245
        %v9247 = vrot.slane %v9177, 1
        %v9248 = vrot.slane %v8665, 1
        %v9249 = vsel %vm2763, %v9247, %v9248
        %v9250 = vrot.slane %v9178, 1
        %v9251 = vrot.slane %v8666, 1
        %v9252 = vsel %vm2763, %v9250, %v9251
        %v9253 = vrot.slane %v9179, 1
        %v9254 = vrot.slane %v8667, 1
        %v9255 = vsel %vm2763, %v9253, %v9254
        %v9256 = vrot.slane %v9180, 1
        %v9257 = vrot.slane %v8668, 1
        %v9258 = vsel %vm2763, %v9256, %v9257
        %v9259 = vrot.slane %v9181, 1
        %v9260 = vrot.slane %v8669, 1
        %v9261 = vsel %vm2763, %v9259, %v9260
        %v9262 = vrot.slane %v9182, 1
        %v9263 = vrot.slane %v8670, 1
        %v9264 = vsel %vm2763, %v9262, %v9263
        %v9265 = vrot.slane %v9183, 1
        %v9266 = vrot.slane %v8671, 1
        %v9267 = vsel %vm2763, %v9265, %v9266
        %v9268 = vrot.slane %v9184, 1
        %v9269 = vrot.slane %v8672, 1
        %v9270 = vsel %vm2763, %v9268, %v9269
        %v9271 = vrot.slane %v9185, 1
        %v9272 = vrot.slane %v8673, 1
        %v9273 = vsel %vm2763, %v9271, %v9272
        %v9274 = vrot.slane %v9186, 1
        %v9275 = vrot.slane %v8674, 1
        %v9276 = vsel %vm2763, %v9274, %v9275
        %v9277 = vrot.slane %v9187, 1
        %v9278 = vrot.slane %v8675, 1
        %v9279 = vsel %vm2763, %v9277, %v9278
        %v9280 = vrot.slane %v9188, 1
        %v9281 = vrot.slane %v8676, 1
        %v9282 = vsel %vm2763, %v9280, %v9281
        %v9283 = vrot.slane %v9189, 1
        %v9284 = vrot.slane %v8677, 1
        %v9285 = vsel %vm2763, %v9283, %v9284
        %v9382 = vunpack.c.l.b16 %v8133
        %v9383 = vunpack.c.l.b16 %v8134
        %v9384 = vunpack.c.l.b16 %v8135
        %v9385 = vunpack.c.l.b16 %v8136
        %v9386 = vunpack.c.l.b16 %v8137
        %v9387 = vunpack.c.l.b16 %v8138
        %v9388 = vunpack.c.l.b16 %v8139
        %v9389 = vunpack.c.l.b16 %v8140
        %v9390 = vunpack.c.l.b16 %v8141
        %v9391 = vunpack.c.l.b16 %v8142
        %v9392 = vunpack.c.l.b16 %v8143
        %v9393 = vunpack.c.l.b16 %v8144
        %v9394 = vunpack.c.l.b16 %v8145
        %v9395 = vunpack.c.l.b16 %v8146
        %v9396 = vunpack.c.l.b16 %v8147
        %v9397 = vunpack.c.l.b16 %v8148
        %v9398 = vunpack.c.l.b16 %v8149
        %v9399 = vunpack.c.l.b16 %v8150
        %v9400 = vunpack.c.l.b16 %v8151
        %v9401 = vunpack.c.l.b16 %v8152
        %v9402 = vunpack.c.l.b16 %v8153
        %v9403 = vunpack.c.l.b16 %v8154
        %v9404 = vunpack.c.l.b16 %v8155
        %v9405 = vunpack.c.l.b16 %v8156
        %v9406 = vunpack.c.l.b16 %v8157
        %v9407 = vunpack.c.l.b16 %v8158
        %v9408 = vunpack.c.l.b16 %v8159
        %v9409 = vunpack.c.l.b16 %v8160
        %v9410 = vunpack.c.l.b16 %v8161
        %v9411 = vunpack.c.l.b16 %v8162
        %v9412 = vunpack.c.l.b16 %v8163
        %v9413 = vunpack.c.l.b16 %v8164
        %v9414 = vunpack.c.l.b16 %v8165
        %v9415 = vunpack.c.l.b16 %v8166
        %v9416 = vunpack.c.l.b16 %v8167
        %v9417 = vunpack.c.l.b16 %v8168
        %v9418 = vunpack.c.l.b16 %v8169
        %v9419 = vunpack.c.l.b16 %v8170
        %v9420 = vunpack.c.l.b16 %v8171
        %v9421 = vunpack.c.l.b16 %v8172
        %v9422 = vunpack.c.l.b16 %v8173
        %v9423 = vunpack.c.l.b16 %v8174
        %v9424 = vunpack.c.l.b16 %v8175
        %v9425 = vunpack.c.l.b16 %v8176
        %v9426 = vunpack.c.l.b16 %v8177
        %v9427 = vunpack.c.l.b16 %v8178
        %v9428 = vunpack.c.l.b16 %v8179
        %v9429 = vunpack.c.l.b16 %v8180
        %v9430 = vunpack.c.l.b16 %v8181
        %v9431 = vunpack.c.l.b16 %v8182
        %v9432 = vunpack.c.l.b16 %v8183
        %v9433 = vunpack.c.l.b16 %v8184
        %v9434 = vunpack.c.l.b16 %v8185
        %v9435 = vunpack.c.l.b16 %v8186
        %v9436 = vunpack.c.l.b16 %v8187
        %v9437 = vunpack.c.l.b16 %v8188
        %v9438 = vunpack.c.l.b16 %v8189
        %v9439 = vunpack.c.l.b16 %v8190
        %v9440 = vunpack.c.l.b16 %v8191
        %v9441 = vunpack.c.l.b16 %v8192
        %v9442 = vunpack.c.l.b16 %v8193
        %v9443 = vunpack.c.l.b16 %v8194
        %v9444 = vunpack.c.l.b16 %v8195
        %v9445 = vunpack.c.l.b16 %v8196
        %v9446 = vpack.c.b16 %v9383, %v9382
        %v9447 = vpack.c.b16 %v9385, %v9384
        %v9448 = vpack.c.b16 %v9387, %v9386
        %v9449 = vpack.c.b16 %v9389, %v9388
        %v9450 = vpack.c.b16 %v9391, %v9390
        %v9451 = vpack.c.b16 %v9393, %v9392
        %v9452 = vpack.c.b16 %v9395, %v9394
        %v9453 = vpack.c.b16 %v9397, %v9396
        %v9454 = vpack.c.b16 %v9399, %v9398
        %v9455 = vpack.c.b16 %v9401, %v9400
        %v9456 = vpack.c.b16 %v9403, %v9402
        %v9457 = vpack.c.b16 %v9405, %v9404
        %v9458 = vpack.c.b16 %v9407, %v9406
        %v9459 = vpack.c.b16 %v9409, %v9408
        %v9460 = vpack.c.b16 %v9411, %v9410
        %v9461 = vpack.c.b16 %v9413, %v9412
        %v9462 = vpack.c.b16 %v9415, %v9414
        %v9463 = vpack.c.b16 %v9417, %v9416
        %v9464 = vpack.c.b16 %v9419, %v9418
        %v9465 = vpack.c.b16 %v9421, %v9420
        %v9466 = vpack.c.b16 %v9423, %v9422
        %v9467 = vpack.c.b16 %v9425, %v9424
        %v9468 = vpack.c.b16 %v9427, %v9426
        %v9469 = vpack.c.b16 %v9429, %v9428
        %v9470 = vpack.c.b16 %v9431, %v9430
        %v9471 = vpack.c.b16 %v9433, %v9432
        %v9472 = vpack.c.b16 %v9435, %v9434
        %v9473 = vpack.c.b16 %v9437, %v9436
        %v9474 = vpack.c.b16 %v9439, %v9438
        %v9475 = vpack.c.b16 %v9441, %v9440
        %v9476 = vpack.c.b16 %v9443, %v9442
        %v9477 = vpack.c.b16 %v9445, %v9444
        %v9542 = vunpack.c.l.b16 %v8197
        %v9543 = vunpack.c.l.b16 %v8198
        %v9544 = vunpack.c.l.b16 %v8199
        %v9545 = vunpack.c.l.b16 %v8200
        %v9546 = vunpack.c.l.b16 %v8201
        %v9547 = vunpack.c.l.b16 %v8202
        %v9548 = vunpack.c.l.b16 %v8203
        %v9549 = vunpack.c.l.b16 %v8204
        %v9550 = vunpack.c.l.b16 %v8205
        %v9551 = vunpack.c.l.b16 %v8206
        %v9552 = vunpack.c.l.b16 %v8207
        %v9553 = vunpack.c.l.b16 %v8208
        %v9554 = vunpack.c.l.b16 %v8209
        %v9555 = vunpack.c.l.b16 %v8210
        %v9556 = vunpack.c.l.b16 %v8211
        %v9557 = vunpack.c.l.b16 %v8212
        %v9558 = vunpack.c.l.b16 %v8213
        %v9559 = vunpack.c.l.b16 %v8214
        %v9560 = vunpack.c.l.b16 %v8215
        %v9561 = vunpack.c.l.b16 %v8216
        %v9562 = vunpack.c.l.b16 %v8217
        %v9563 = vunpack.c.l.b16 %v8218
        %v9564 = vunpack.c.l.b16 %v8219
        %v9565 = vunpack.c.l.b16 %v8220
        %v9566 = vunpack.c.l.b16 %v8221
        %v9567 = vunpack.c.l.b16 %v8222
        %v9568 = vunpack.c.l.b16 %v8223
        %v9569 = vunpack.c.l.b16 %v8224
        %v9570 = vunpack.c.l.b16 %v8225
        %v9571 = vunpack.c.l.b16 %v8226
        %v9572 = vunpack.c.l.b16 %v8227
        %v9573 = vunpack.c.l.b16 %v8228
        %v9574 = vpack.c.b16 %v9542, %v9542
        %v9575 = vpack.c.b16 %v9543, %v9543
        %v9576 = vpack.c.b16 %v9544, %v9544
        %v9577 = vpack.c.b16 %v9545, %v9545
        %v9578 = vpack.c.b16 %v9546, %v9546
        %v9579 = vpack.c.b16 %v9547, %v9547
        %v9580 = vpack.c.b16 %v9548, %v9548
        %v9581 = vpack.c.b16 %v9549, %v9549
        %v9582 = vpack.c.b16 %v9550, %v9550
        %v9583 = vpack.c.b16 %v9551, %v9551
        %v9584 = vpack.c.b16 %v9552, %v9552
        %v9585 = vpack.c.b16 %v9553, %v9553
        %v9586 = vpack.c.b16 %v9554, %v9554
        %v9587 = vpack.c.b16 %v9555, %v9555
        %v9588 = vpack.c.b16 %v9556, %v9556
        %v9589 = vpack.c.b16 %v9557, %v9557
        %v9590 = vpack.c.b16 %v9558, %v9558
        %v9591 = vpack.c.b16 %v9559, %v9559
        %v9592 = vpack.c.b16 %v9560, %v9560
        %v9593 = vpack.c.b16 %v9561, %v9561
        %v9594 = vpack.c.b16 %v9562, %v9562
        %v9595 = vpack.c.b16 %v9563, %v9563
        %v9596 = vpack.c.b16 %v9564, %v9564
        %v9597 = vpack.c.b16 %v9565, %v9565
        %v9598 = vpack.c.b16 %v9566, %v9566
        %v9599 = vpack.c.b16 %v9567, %v9567
        %v9600 = vpack.c.b16 %v9568, %v9568
        %v9601 = vpack.c.b16 %v9569, %v9569
        %v9602 = vpack.c.b16 %v9570, %v9570
        %v9603 = vpack.c.b16 %v9571, %v9571
        %v9604 = vpack.c.b16 %v9572, %v9572
        %v9605 = vpack.c.b16 %v9573, %v9573
        %v9607 = vshrl.u32 %v9446, 16
        %v9609 = vshll.u32 %v9446, 16
        %v9611 = vrot.slane %v9609, 1
        %v9612 = vor.u32 %v9607, %v9611
        %v9614 = vshll.u32 %v9574, 16
        %v9616 = vrot.slane %v9614, 1
        %v9617 = vsel %vm2250, %v9612, %v9616
        %v9619 = vshrl.u32 %v9447, 16
        %v9621 = vshll.u32 %v9447, 16
        %v9623 = vrot.slane %v9621, 1
        %v9624 = vor.u32 %v9619, %v9623
        %v9626 = vshll.u32 %v9575, 16
        %v9628 = vrot.slane %v9626, 1
        %v9629 = vsel %vm2250, %v9624, %v9628
        %v9631 = vshrl.u32 %v9448, 16
        %v9633 = vshll.u32 %v9448, 16
        %v9635 = vrot.slane %v9633, 1
        %v9636 = vor.u32 %v9631, %v9635
        %v9638 = vshll.u32 %v9576, 16
        %v9640 = vrot.slane %v9638, 1
        %v9641 = vsel %vm2250, %v9636, %v9640
        %v9643 = vshrl.u32 %v9449, 16
        %v9645 = vshll.u32 %v9449, 16
        %v9647 = vrot.slane %v9645, 1
        %v9648 = vor.u32 %v9643, %v9647
        %v9650 = vshll.u32 %v9577, 16
        %v9652 = vrot.slane %v9650, 1
        %v9653 = vsel %vm2250, %v9648, %v9652
        %v9655 = vshrl.u32 %v9450, 16
        %v9657 = vshll.u32 %v9450, 16
        %v9659 = vrot.slane %v9657, 1
        %v9660 = vor.u32 %v9655, %v9659
        %v9662 = vshll.u32 %v9578, 16
        %v9664 = vrot.slane %v9662, 1
        %v9665 = vsel %vm2250, %v9660, %v9664
        %v9667 = vshrl.u32 %v9451, 16
        %v9669 = vshll.u32 %v9451, 16
        %v9671 = vrot.slane %v9669, 1
        %v9672 = vor.u32 %v9667, %v9671
        %v9674 = vshll.u32 %v9579, 16
        %v9676 = vrot.slane %v9674, 1
        %v9677 = vsel %vm2250, %v9672, %v9676
        %v9679 = vshrl.u32 %v9452, 16
        %v9681 = vshll.u32 %v9452, 16
        %v9683 = vrot.slane %v9681, 1
        %v9684 = vor.u32 %v9679, %v9683
        %v9686 = vshll.u32 %v9580, 16
        %v9688 = vrot.slane %v9686, 1
        %v9689 = vsel %vm2250, %v9684, %v9688
        %v9691 = vshrl.u32 %v9453, 16
        %v9693 = vshll.u32 %v9453, 16
        %v9695 = vrot.slane %v9693, 1
        %v9696 = vor.u32 %v9691, %v9695
        %v9698 = vshll.u32 %v9581, 16
        %v9700 = vrot.slane %v9698, 1
        %v9701 = vsel %vm2250, %v9696, %v9700
        %v9703 = vshrl.u32 %v9454, 16
        %v9705 = vshll.u32 %v9454, 16
        %v9707 = vrot.slane %v9705, 1
        %v9708 = vor.u32 %v9703, %v9707
        %v9710 = vshll.u32 %v9582, 16
        %v9712 = vrot.slane %v9710, 1
        %v9713 = vsel %vm2250, %v9708, %v9712
        %v9715 = vshrl.u32 %v9455, 16
        %v9717 = vshll.u32 %v9455, 16
        %v9719 = vrot.slane %v9717, 1
        %v9720 = vor.u32 %v9715, %v9719
        %v9722 = vshll.u32 %v9583, 16
        %v9724 = vrot.slane %v9722, 1
        %v9725 = vsel %vm2250, %v9720, %v9724
        %v9727 = vshrl.u32 %v9456, 16
        %v9729 = vshll.u32 %v9456, 16
        %v9731 = vrot.slane %v9729, 1
        %v9732 = vor.u32 %v9727, %v9731
        %v9734 = vshll.u32 %v9584, 16
        %v9736 = vrot.slane %v9734, 1
        %v9737 = vsel %vm2250, %v9732, %v9736
        %v9739 = vshrl.u32 %v9457, 16
        %v9741 = vshll.u32 %v9457, 16
        %v9743 = vrot.slane %v9741, 1
        %v9744 = vor.u32 %v9739, %v9743
        %v9746 = vshll.u32 %v9585, 16
        %v9748 = vrot.slane %v9746, 1
        %v9749 = vsel %vm2250, %v9744, %v9748
        %v9751 = vshrl.u32 %v9458, 16
        %v9753 = vshll.u32 %v9458, 16
        %v9755 = vrot.slane %v9753, 1
        %v9756 = vor.u32 %v9751, %v9755
        %v9758 = vshll.u32 %v9586, 16
        %v9760 = vrot.slane %v9758, 1
        %v9761 = vsel %vm2250, %v9756, %v9760
        %v9763 = vshrl.u32 %v9459, 16
        %v9765 = vshll.u32 %v9459, 16
        %v9767 = vrot.slane %v9765, 1
        %v9768 = vor.u32 %v9763, %v9767
        %v9770 = vshll.u32 %v9587, 16
        %v9772 = vrot.slane %v9770, 1
        %v9773 = vsel %vm2250, %v9768, %v9772
        %v9775 = vshrl.u32 %v9460, 16
        %v9777 = vshll.u32 %v9460, 16
        %v9779 = vrot.slane %v9777, 1
        %v9780 = vor.u32 %v9775, %v9779
        %v9782 = vshll.u32 %v9588, 16
        %v9784 = vrot.slane %v9782, 1
        %v9785 = vsel %vm2250, %v9780, %v9784
        %v9787 = vshrl.u32 %v9461, 16
        %v9789 = vshll.u32 %v9461, 16
        %v9791 = vrot.slane %v9789, 1
        %v9792 = vor.u32 %v9787, %v9791
        %v9794 = vshll.u32 %v9589, 16
        %v9796 = vrot.slane %v9794, 1
        %v9797 = vsel %vm2250, %v9792, %v9796
        %v9799 = vshrl.u32 %v9462, 16
        %v9801 = vshll.u32 %v9462, 16
        %v9803 = vrot.slane %v9801, 1
        %v9804 = vor.u32 %v9799, %v9803
        %v9806 = vshll.u32 %v9590, 16
        %v9808 = vrot.slane %v9806, 1
        %v9809 = vsel %vm2250, %v9804, %v9808
        %v9811 = vshrl.u32 %v9463, 16
        %v9813 = vshll.u32 %v9463, 16
        %v9815 = vrot.slane %v9813, 1
        %v9816 = vor.u32 %v9811, %v9815
        %v9818 = vshll.u32 %v9591, 16
        %v9820 = vrot.slane %v9818, 1
        %v9821 = vsel %vm2250, %v9816, %v9820
        %v9823 = vshrl.u32 %v9464, 16
        %v9825 = vshll.u32 %v9464, 16
        %v9827 = vrot.slane %v9825, 1
        %v9828 = vor.u32 %v9823, %v9827
        %v9830 = vshll.u32 %v9592, 16
        %v9832 = vrot.slane %v9830, 1
        %v9833 = vsel %vm2250, %v9828, %v9832
        %v9835 = vshrl.u32 %v9465, 16
        %v9837 = vshll.u32 %v9465, 16
        %v9839 = vrot.slane %v9837, 1
        %v9840 = vor.u32 %v9835, %v9839
        %v9842 = vshll.u32 %v9593, 16
        %v9844 = vrot.slane %v9842, 1
        %v9845 = vsel %vm2250, %v9840, %v9844
        %v9847 = vshrl.u32 %v9466, 16
        %v9849 = vshll.u32 %v9466, 16
        %v9851 = vrot.slane %v9849, 1
        %v9852 = vor.u32 %v9847, %v9851
        %v9854 = vshll.u32 %v9594, 16
        %v9856 = vrot.slane %v9854, 1
        %v9857 = vsel %vm2250, %v9852, %v9856
        %v9859 = vshrl.u32 %v9467, 16
        %v9861 = vshll.u32 %v9467, 16
        %v9863 = vrot.slane %v9861, 1
        %v9864 = vor.u32 %v9859, %v9863
        %v9866 = vshll.u32 %v9595, 16
        %v9868 = vrot.slane %v9866, 1
        %v9869 = vsel %vm2250, %v9864, %v9868
        %v9871 = vshrl.u32 %v9468, 16
        %v9873 = vshll.u32 %v9468, 16
        %v9875 = vrot.slane %v9873, 1
        %v9876 = vor.u32 %v9871, %v9875
        %v9878 = vshll.u32 %v9596, 16
        %v9880 = vrot.slane %v9878, 1
        %v9881 = vsel %vm2250, %v9876, %v9880
        %v9883 = vshrl.u32 %v9469, 16
        %v9885 = vshll.u32 %v9469, 16
        %v9887 = vrot.slane %v9885, 1
        %v9888 = vor.u32 %v9883, %v9887
        %v9890 = vshll.u32 %v9597, 16
        %v9892 = vrot.slane %v9890, 1
        %v9893 = vsel %vm2250, %v9888, %v9892
        %v9895 = vshrl.u32 %v9470, 16
        %v9897 = vshll.u32 %v9470, 16
        %v9899 = vrot.slane %v9897, 1
        %v9900 = vor.u32 %v9895, %v9899
        %v9902 = vshll.u32 %v9598, 16
        %v9904 = vrot.slane %v9902, 1
        %v9905 = vsel %vm2250, %v9900, %v9904
        %v9907 = vshrl.u32 %v9471, 16
        %v9909 = vshll.u32 %v9471, 16
        %v9911 = vrot.slane %v9909, 1
        %v9912 = vor.u32 %v9907, %v9911
        %v9914 = vshll.u32 %v9599, 16
        %v9916 = vrot.slane %v9914, 1
        %v9917 = vsel %vm2250, %v9912, %v9916
        %v9919 = vshrl.u32 %v9472, 16
        %v9921 = vshll.u32 %v9472, 16
        %v9923 = vrot.slane %v9921, 1
        %v9924 = vor.u32 %v9919, %v9923
        %v9926 = vshll.u32 %v9600, 16
        %v9928 = vrot.slane %v9926, 1
        %v9929 = vsel %vm2250, %v9924, %v9928
        %v9931 = vshrl.u32 %v9473, 16
        %v9933 = vshll.u32 %v9473, 16
        %v9935 = vrot.slane %v9933, 1
        %v9936 = vor.u32 %v9931, %v9935
        %v9938 = vshll.u32 %v9601, 16
        %v9940 = vrot.slane %v9938, 1
        %v9941 = vsel %vm2250, %v9936, %v9940
        %v9943 = vshrl.u32 %v9474, 16
        %v9945 = vshll.u32 %v9474, 16
        %v9947 = vrot.slane %v9945, 1
        %v9948 = vor.u32 %v9943, %v9947
        %v9950 = vshll.u32 %v9602, 16
        %v9952 = vrot.slane %v9950, 1
        %v9953 = vsel %vm2250, %v9948, %v9952
        %v9955 = vshrl.u32 %v9475, 16
        %v9957 = vshll.u32 %v9475, 16
        %v9959 = vrot.slane %v9957, 1
        %v9960 = vor.u32 %v9955, %v9959
        %v9962 = vshll.u32 %v9603, 16
        %v9964 = vrot.slane %v9962, 1
        %v9965 = vsel %vm2250, %v9960, %v9964
        %v9967 = vshrl.u32 %v9476, 16
        %v9969 = vshll.u32 %v9476, 16
        %v9971 = vrot.slane %v9969, 1
        %v9972 = vor.u32 %v9967, %v9971
        %v9974 = vshll.u32 %v9604, 16
        %v9976 = vrot.slane %v9974, 1
        %v9977 = vsel %vm2250, %v9972, %v9976
        %v9979 = vshrl.u32 %v9477, 16
        %v9981 = vshll.u32 %v9477, 16
        %v9983 = vrot.slane %v9981, 1
        %v9984 = vor.u32 %v9979, %v9983
        %v9986 = vshll.u32 %v9605, 16
        %v9988 = vrot.slane %v9986, 1
        %v9989 = vsel %vm2250, %v9984, %v9988
        %v10054 = vunpack.c.l.b16 %v8229
        %v10055 = vunpack.c.l.b16 %v8230
        %v10056 = vunpack.c.l.b16 %v8231
        %v10057 = vunpack.c.l.b16 %v8232
        %v10058 = vunpack.c.l.b16 %v8233
        %v10059 = vunpack.c.l.b16 %v8234
        %v10060 = vunpack.c.l.b16 %v8235
        %v10061 = vunpack.c.l.b16 %v8236
        %v10062 = vunpack.c.l.b16 %v8237
        %v10063 = vunpack.c.l.b16 %v8238
        %v10064 = vunpack.c.l.b16 %v8239
        %v10065 = vunpack.c.l.b16 %v8240
        %v10066 = vunpack.c.l.b16 %v8241
        %v10067 = vunpack.c.l.b16 %v8242
        %v10068 = vunpack.c.l.b16 %v8243
        %v10069 = vunpack.c.l.b16 %v8244
        %v10070 = vunpack.c.l.b16 %v8245
        %v10071 = vunpack.c.l.b16 %v8246
        %v10072 = vunpack.c.l.b16 %v8247
        %v10073 = vunpack.c.l.b16 %v8248
        %v10074 = vunpack.c.l.b16 %v8249
        %v10075 = vunpack.c.l.b16 %v8250
        %v10076 = vunpack.c.l.b16 %v8251
        %v10077 = vunpack.c.l.b16 %v8252
        %v10078 = vunpack.c.l.b16 %v8253
        %v10079 = vunpack.c.l.b16 %v8254
        %v10080 = vunpack.c.l.b16 %v8255
        %v10081 = vunpack.c.l.b16 %v8256
        %v10082 = vunpack.c.l.b16 %v8257
        %v10083 = vunpack.c.l.b16 %v8258
        %v10084 = vunpack.c.l.b16 %v8259
        %v10085 = vunpack.c.l.b16 %v8260
        %v10086 = vpack.c.b16 %v9383, %v10054
        %v10087 = vpack.c.b16 %v9385, %v10055
        %v10088 = vpack.c.b16 %v9387, %v10056
        %v10089 = vpack.c.b16 %v9389, %v10057
        %v10090 = vpack.c.b16 %v9391, %v10058
        %v10091 = vpack.c.b16 %v9393, %v10059
        %v10092 = vpack.c.b16 %v9395, %v10060
        %v10093 = vpack.c.b16 %v9397, %v10061
        %v10094 = vpack.c.b16 %v9399, %v10062
        %v10095 = vpack.c.b16 %v9401, %v10063
        %v10096 = vpack.c.b16 %v9403, %v10064
        %v10097 = vpack.c.b16 %v9405, %v10065
        %v10098 = vpack.c.b16 %v9407, %v10066
        %v10099 = vpack.c.b16 %v9409, %v10067
        %v10100 = vpack.c.b16 %v9411, %v10068
        %v10101 = vpack.c.b16 %v9413, %v10069
        %v10102 = vpack.c.b16 %v9415, %v10070
        %v10103 = vpack.c.b16 %v9417, %v10071
        %v10104 = vpack.c.b16 %v9419, %v10072
        %v10105 = vpack.c.b16 %v9421, %v10073
        %v10106 = vpack.c.b16 %v9423, %v10074
        %v10107 = vpack.c.b16 %v9425, %v10075
        %v10108 = vpack.c.b16 %v9427, %v10076
        %v10109 = vpack.c.b16 %v9429, %v10077
        %v10110 = vpack.c.b16 %v9431, %v10078
        %v10111 = vpack.c.b16 %v9433, %v10079
        %v10112 = vpack.c.b16 %v9435, %v10080
        %v10113 = vpack.c.b16 %v9437, %v10081
        %v10114 = vpack.c.b16 %v9439, %v10082
        %v10115 = vpack.c.b16 %v9441, %v10083
        %v10116 = vpack.c.b16 %v9443, %v10084
        %v10117 = vpack.c.b16 %v9445, %v10085
        %v10118 = vrot.slane %v10086, 1
        %v10119 = vrot.slane %v9574, 1
        %v10120 = vsel %vm2763, %v10118, %v10119
        %v10121 = vrot.slane %v10087, 1
        %v10122 = vrot.slane %v9575, 1
        %v10123 = vsel %vm2763, %v10121, %v10122
        %v10124 = vrot.slane %v10088, 1
        %v10125 = vrot.slane %v9576, 1
        %v10126 = vsel %vm2763, %v10124, %v10125
        %v10127 = vrot.slane %v10089, 1
        %v10128 = vrot.slane %v9577, 1
        %v10129 = vsel %vm2763, %v10127, %v10128
        %v10130 = vrot.slane %v10090, 1
        %v10131 = vrot.slane %v9578, 1
        %v10132 = vsel %vm2763, %v10130, %v10131
        %v10133 = vrot.slane %v10091, 1
        %v10134 = vrot.slane %v9579, 1
        %v10135 = vsel %vm2763, %v10133, %v10134
        %v10136 = vrot.slane %v10092, 1
        %v10137 = vrot.slane %v9580, 1
        %v10138 = vsel %vm2763, %v10136, %v10137
        %v10139 = vrot.slane %v10093, 1
        %v10140 = vrot.slane %v9581, 1
        %v10141 = vsel %vm2763, %v10139, %v10140
        %v10142 = vrot.slane %v10094, 1
        %v10143 = vrot.slane %v9582, 1
        %v10144 = vsel %vm2763, %v10142, %v10143
        %v10145 = vrot.slane %v10095, 1
        %v10146 = vrot.slane %v9583, 1
        %v10147 = vsel %vm2763, %v10145, %v10146
        %v10148 = vrot.slane %v10096, 1
        %v10149 = vrot.slane %v9584, 1
        %v10150 = vsel %vm2763, %v10148, %v10149
        %v10151 = vrot.slane %v10097, 1
        %v10152 = vrot.slane %v9585, 1
        %v10153 = vsel %vm2763, %v10151, %v10152
        %v10154 = vrot.slane %v10098, 1
        %v10155 = vrot.slane %v9586, 1
        %v10156 = vsel %vm2763, %v10154, %v10155
        %v10157 = vrot.slane %v10099, 1
        %v10158 = vrot.slane %v9587, 1
        %v10159 = vsel %vm2763, %v10157, %v10158
        %v10160 = vrot.slane %v10100, 1
        %v10161 = vrot.slane %v9588, 1
        %v10162 = vsel %vm2763, %v10160, %v10161
        %v10163 = vrot.slane %v10101, 1
        %v10164 = vrot.slane %v9589, 1
        %v10165 = vsel %vm2763, %v10163, %v10164
        %v10166 = vrot.slane %v10102, 1
        %v10167 = vrot.slane %v9590, 1
        %v10168 = vsel %vm2763, %v10166, %v10167
        %v10169 = vrot.slane %v10103, 1
        %v10170 = vrot.slane %v9591, 1
        %v10171 = vsel %vm2763, %v10169, %v10170
        %v10172 = vrot.slane %v10104, 1
        %v10173 = vrot.slane %v9592, 1
        %v10174 = vsel %vm2763, %v10172, %v10173
        %v10175 = vrot.slane %v10105, 1
        %v10176 = vrot.slane %v9593, 1
        %v10177 = vsel %vm2763, %v10175, %v10176
        %v10178 = vrot.slane %v10106, 1
        %v10179 = vrot.slane %v9594, 1
        %v10180 = vsel %vm2763, %v10178, %v10179
        %v10181 = vrot.slane %v10107, 1
        %v10182 = vrot.slane %v9595, 1
        %v10183 = vsel %vm2763, %v10181, %v10182
        %v10184 = vrot.slane %v10108, 1
        %v10185 = vrot.slane %v9596, 1
        %v10186 = vsel %vm2763, %v10184, %v10185
        %v10187 = vrot.slane %v10109, 1
        %v10188 = vrot.slane %v9597, 1
        %v10189 = vsel %vm2763, %v10187, %v10188
        %v10190 = vrot.slane %v10110, 1
        %v10191 = vrot.slane %v9598, 1
        %v10192 = vsel %vm2763, %v10190, %v10191
        %v10193 = vrot.slane %v10111, 1
        %v10194 = vrot.slane %v9599, 1
        %v10195 = vsel %vm2763, %v10193, %v10194
        %v10196 = vrot.slane %v10112, 1
        %v10197 = vrot.slane %v9600, 1
        %v10198 = vsel %vm2763, %v10196, %v10197
        %v10199 = vrot.slane %v10113, 1
        %v10200 = vrot.slane %v9601, 1
        %v10201 = vsel %vm2763, %v10199, %v10200
        %v10202 = vrot.slane %v10114, 1
        %v10203 = vrot.slane %v9602, 1
        %v10204 = vsel %vm2763, %v10202, %v10203
        %v10205 = vrot.slane %v10115, 1
        %v10206 = vrot.slane %v9603, 1
        %v10207 = vsel %vm2763, %v10205, %v10206
        %v10208 = vrot.slane %v10116, 1
        %v10209 = vrot.slane %v9604, 1
        %v10210 = vsel %vm2763, %v10208, %v10209
        %v10211 = vrot.slane %v10117, 1
        %v10212 = vrot.slane %v9605, 1
        %v10213 = vsel %vm2763, %v10211, %v10212
        %v10310 = vunpack.c.l.b16 %v8262
        %v10311 = vunpack.c.l.b16 %v8263
        %v10312 = vunpack.c.l.b16 %v8264
        %v10313 = vunpack.c.l.b16 %v8265
        %v10314 = vunpack.c.l.b16 %v8266
        %v10315 = vunpack.c.l.b16 %v8267
        %v10316 = vunpack.c.l.b16 %v8268
        %v10317 = vunpack.c.l.b16 %v8269
        %v10318 = vunpack.c.l.b16 %v8270
        %v10319 = vunpack.c.l.b16 %v8271
        %v10320 = vunpack.c.l.b16 %v8272
        %v10321 = vunpack.c.l.b16 %v8273
        %v10322 = vunpack.c.l.b16 %v8274
        %v10323 = vunpack.c.l.b16 %v8275
        %v10324 = vunpack.c.l.b16 %v8276
        %v10325 = vunpack.c.l.b16 %v8277
        %v10326 = vunpack.c.l.b16 %v8278
        %v10327 = vunpack.c.l.b16 %v8279
        %v10328 = vunpack.c.l.b16 %v8280
        %v10329 = vunpack.c.l.b16 %v8281
        %v10330 = vunpack.c.l.b16 %v8282
        %v10331 = vunpack.c.l.b16 %v8283
        %v10332 = vunpack.c.l.b16 %v8284
        %v10333 = vunpack.c.l.b16 %v8285
        %v10334 = vunpack.c.l.b16 %v8286
        %v10335 = vunpack.c.l.b16 %v8287
        %v10336 = vunpack.c.l.b16 %v8288
        %v10337 = vunpack.c.l.b16 %v8289
        %v10338 = vunpack.c.l.b16 %v8290
        %v10339 = vunpack.c.l.b16 %v8291
        %v10340 = vunpack.c.l.b16 %v8292
        %v10341 = vunpack.c.l.b16 %v8293
        %v10342 = vunpack.c.l.b16 %v8294
        %v10343 = vunpack.c.l.b16 %v8295
        %v10344 = vunpack.c.l.b16 %v8296
        %v10345 = vunpack.c.l.b16 %v8297
        %v10346 = vunpack.c.l.b16 %v8298
        %v10347 = vunpack.c.l.b16 %v8299
        %v10348 = vunpack.c.l.b16 %v8300
        %v10349 = vunpack.c.l.b16 %v8301
        %v10350 = vunpack.c.l.b16 %v8302
        %v10351 = vunpack.c.l.b16 %v8303
        %v10352 = vunpack.c.l.b16 %v8304
        %v10353 = vunpack.c.l.b16 %v8305
        %v10354 = vunpack.c.l.b16 %v8306
        %v10355 = vunpack.c.l.b16 %v8307
        %v10356 = vunpack.c.l.b16 %v8308
        %v10357 = vunpack.c.l.b16 %v8309
        %v10358 = vunpack.c.l.b16 %v8310
        %v10359 = vunpack.c.l.b16 %v8311
        %v10360 = vunpack.c.l.b16 %v8312
        %v10361 = vunpack.c.l.b16 %v8313
        %v10362 = vunpack.c.l.b16 %v8314
        %v10363 = vunpack.c.l.b16 %v8315
        %v10364 = vunpack.c.l.b16 %v8316
        %v10365 = vunpack.c.l.b16 %v8317
        %v10366 = vunpack.c.l.b16 %v8318
        %v10367 = vunpack.c.l.b16 %v8319
        %v10368 = vunpack.c.l.b16 %v8320
        %v10369 = vunpack.c.l.b16 %v8321
        %v10370 = vunpack.c.l.b16 %v8322
        %v10371 = vunpack.c.l.b16 %v8323
        %v10372 = vunpack.c.l.b16 %v8324
        %v10373 = vunpack.c.l.b16 %v8325
        %v10374 = vpack.c.b16 %v10311, %v10310
        %v10375 = vpack.c.b16 %v10313, %v10312
        %v10376 = vpack.c.b16 %v10315, %v10314
        %v10377 = vpack.c.b16 %v10317, %v10316
        %v10378 = vpack.c.b16 %v10319, %v10318
        %v10379 = vpack.c.b16 %v10321, %v10320
        %v10380 = vpack.c.b16 %v10323, %v10322
        %v10381 = vpack.c.b16 %v10325, %v10324
        %v10382 = vpack.c.b16 %v10327, %v10326
        %v10383 = vpack.c.b16 %v10329, %v10328
        %v10384 = vpack.c.b16 %v10331, %v10330
        %v10385 = vpack.c.b16 %v10333, %v10332
        %v10386 = vpack.c.b16 %v10335, %v10334
        %v10387 = vpack.c.b16 %v10337, %v10336
        %v10388 = vpack.c.b16 %v10339, %v10338
        %v10389 = vpack.c.b16 %v10341, %v10340
        %v10390 = vpack.c.b16 %v10343, %v10342
        %v10391 = vpack.c.b16 %v10345, %v10344
        %v10392 = vpack.c.b16 %v10347, %v10346
        %v10393 = vpack.c.b16 %v10349, %v10348
        %v10394 = vpack.c.b16 %v10351, %v10350
        %v10395 = vpack.c.b16 %v10353, %v10352
        %v10396 = vpack.c.b16 %v10355, %v10354
        %v10397 = vpack.c.b16 %v10357, %v10356
        %v10398 = vpack.c.b16 %v10359, %v10358
        %v10399 = vpack.c.b16 %v10361, %v10360
        %v10400 = vpack.c.b16 %v10363, %v10362
        %v10401 = vpack.c.b16 %v10365, %v10364
        %v10402 = vpack.c.b16 %v10367, %v10366
        %v10403 = vpack.c.b16 %v10369, %v10368
        %v10404 = vpack.c.b16 %v10371, %v10370
        %v10405 = vpack.c.b16 %v10373, %v10372
        %v10470 = vunpack.c.l.b16 %v8326
        %v10471 = vunpack.c.l.b16 %v8327
        %v10472 = vunpack.c.l.b16 %v8328
        %v10473 = vunpack.c.l.b16 %v8329
        %v10474 = vunpack.c.l.b16 %v8330
        %v10475 = vunpack.c.l.b16 %v8331
        %v10476 = vunpack.c.l.b16 %v8332
        %v10477 = vunpack.c.l.b16 %v8333
        %v10478 = vunpack.c.l.b16 %v8334
        %v10479 = vunpack.c.l.b16 %v8335
        %v10480 = vunpack.c.l.b16 %v8336
        %v10481 = vunpack.c.l.b16 %v8337
        %v10482 = vunpack.c.l.b16 %v8338
        %v10483 = vunpack.c.l.b16 %v8339
        %v10484 = vunpack.c.l.b16 %v8340
        %v10485 = vunpack.c.l.b16 %v8341
        %v10486 = vunpack.c.l.b16 %v8342
        %v10487 = vunpack.c.l.b16 %v8343
        %v10488 = vunpack.c.l.b16 %v8344
        %v10489 = vunpack.c.l.b16 %v8345
        %v10490 = vunpack.c.l.b16 %v8346
        %v10491 = vunpack.c.l.b16 %v8347
        %v10492 = vunpack.c.l.b16 %v8348
        %v10493 = vunpack.c.l.b16 %v8349
        %v10494 = vunpack.c.l.b16 %v8350
        %v10495 = vunpack.c.l.b16 %v8351
        %v10496 = vunpack.c.l.b16 %v8352
        %v10497 = vunpack.c.l.b16 %v8353
        %v10498 = vunpack.c.l.b16 %v8354
        %v10499 = vunpack.c.l.b16 %v8355
        %v10500 = vunpack.c.l.b16 %v8356
        %v10501 = vunpack.c.l.b16 %v8357
        %v10502 = vpack.c.b16 %v10470, %v10470
        %v10503 = vpack.c.b16 %v10471, %v10471
        %v10504 = vpack.c.b16 %v10472, %v10472
        %v10505 = vpack.c.b16 %v10473, %v10473
        %v10506 = vpack.c.b16 %v10474, %v10474
        %v10507 = vpack.c.b16 %v10475, %v10475
        %v10508 = vpack.c.b16 %v10476, %v10476
        %v10509 = vpack.c.b16 %v10477, %v10477
        %v10510 = vpack.c.b16 %v10478, %v10478
        %v10511 = vpack.c.b16 %v10479, %v10479
        %v10512 = vpack.c.b16 %v10480, %v10480
        %v10513 = vpack.c.b16 %v10481, %v10481
        %v10514 = vpack.c.b16 %v10482, %v10482
        %v10515 = vpack.c.b16 %v10483, %v10483
        %v10516 = vpack.c.b16 %v10484, %v10484
        %v10517 = vpack.c.b16 %v10485, %v10485
        %v10518 = vpack.c.b16 %v10486, %v10486
        %v10519 = vpack.c.b16 %v10487, %v10487
        %v10520 = vpack.c.b16 %v10488, %v10488
        %v10521 = vpack.c.b16 %v10489, %v10489
        %v10522 = vpack.c.b16 %v10490, %v10490
        %v10523 = vpack.c.b16 %v10491, %v10491
        %v10524 = vpack.c.b16 %v10492, %v10492
        %v10525 = vpack.c.b16 %v10493, %v10493
        %v10526 = vpack.c.b16 %v10494, %v10494
        %v10527 = vpack.c.b16 %v10495, %v10495
        %v10528 = vpack.c.b16 %v10496, %v10496
        %v10529 = vpack.c.b16 %v10497, %v10497
        %v10530 = vpack.c.b16 %v10498, %v10498
        %v10531 = vpack.c.b16 %v10499, %v10499
        %v10532 = vpack.c.b16 %v10500, %v10500
        %v10533 = vpack.c.b16 %v10501, %v10501
        %v10535 = vshrl.u32 %v10374, 16
        %v10537 = vshll.u32 %v10374, 16
        %v10539 = vrot.slane %v10537, 1
        %v10540 = vor.u32 %v10535, %v10539
        %v10542 = vshll.u32 %v10502, 16
        %v10544 = vrot.slane %v10542, 1
        %v10545 = vsel %vm2250, %v10540, %v10544
        %v10547 = vshrl.u32 %v10375, 16
        %v10549 = vshll.u32 %v10375, 16
        %v10551 = vrot.slane %v10549, 1
        %v10552 = vor.u32 %v10547, %v10551
        %v10554 = vshll.u32 %v10503, 16
        %v10556 = vrot.slane %v10554, 1
        %v10557 = vsel %vm2250, %v10552, %v10556
        %v10559 = vshrl.u32 %v10376, 16
        %v10561 = vshll.u32 %v10376, 16
        %v10563 = vrot.slane %v10561, 1
        %v10564 = vor.u32 %v10559, %v10563
        %v10566 = vshll.u32 %v10504, 16
        %v10568 = vrot.slane %v10566, 1
        %v10569 = vsel %vm2250, %v10564, %v10568
        %v10571 = vshrl.u32 %v10377, 16
        %v10573 = vshll.u32 %v10377, 16
        %v10575 = vrot.slane %v10573, 1
        %v10576 = vor.u32 %v10571, %v10575
        %v10578 = vshll.u32 %v10505, 16
        %v10580 = vrot.slane %v10578, 1
        %v10581 = vsel %vm2250, %v10576, %v10580
        %v10583 = vshrl.u32 %v10378, 16
        %v10585 = vshll.u32 %v10378, 16
        %v10587 = vrot.slane %v10585, 1
        %v10588 = vor.u32 %v10583, %v10587
        %v10590 = vshll.u32 %v10506, 16
        %v10592 = vrot.slane %v10590, 1
        %v10593 = vsel %vm2250, %v10588, %v10592
        %v10595 = vshrl.u32 %v10379, 16
        %v10597 = vshll.u32 %v10379, 16
        %v10599 = vrot.slane %v10597, 1
        %v10600 = vor.u32 %v10595, %v10599
        %v10602 = vshll.u32 %v10507, 16
        %v10604 = vrot.slane %v10602, 1
        %v10605 = vsel %vm2250, %v10600, %v10604
        %v10607 = vshrl.u32 %v10380, 16
        %v10609 = vshll.u32 %v10380, 16
        %v10611 = vrot.slane %v10609, 1
        %v10612 = vor.u32 %v10607, %v10611
        %v10614 = vshll.u32 %v10508, 16
        %v10616 = vrot.slane %v10614, 1
        %v10617 = vsel %vm2250, %v10612, %v10616
        %v10619 = vshrl.u32 %v10381, 16
        %v10621 = vshll.u32 %v10381, 16
        %v10623 = vrot.slane %v10621, 1
        %v10624 = vor.u32 %v10619, %v10623
        %v10626 = vshll.u32 %v10509, 16
        %v10628 = vrot.slane %v10626, 1
        %v10629 = vsel %vm2250, %v10624, %v10628
        %v10631 = vshrl.u32 %v10382, 16
        %v10633 = vshll.u32 %v10382, 16
        %v10635 = vrot.slane %v10633, 1
        %v10636 = vor.u32 %v10631, %v10635
        %v10638 = vshll.u32 %v10510, 16
        %v10640 = vrot.slane %v10638, 1
        %v10641 = vsel %vm2250, %v10636, %v10640
        %v10643 = vshrl.u32 %v10383, 16
        %v10645 = vshll.u32 %v10383, 16
        %v10647 = vrot.slane %v10645, 1
        %v10648 = vor.u32 %v10643, %v10647
        %v10650 = vshll.u32 %v10511, 16
        %v10652 = vrot.slane %v10650, 1
        %v10653 = vsel %vm2250, %v10648, %v10652
        %v10655 = vshrl.u32 %v10384, 16
        %v10657 = vshll.u32 %v10384, 16
        %v10659 = vrot.slane %v10657, 1
        %v10660 = vor.u32 %v10655, %v10659
        %v10662 = vshll.u32 %v10512, 16
        %v10664 = vrot.slane %v10662, 1
        %v10665 = vsel %vm2250, %v10660, %v10664
        %v10667 = vshrl.u32 %v10385, 16
        %v10669 = vshll.u32 %v10385, 16
        %v10671 = vrot.slane %v10669, 1
        %v10672 = vor.u32 %v10667, %v10671
        %v10674 = vshll.u32 %v10513, 16
        %v10676 = vrot.slane %v10674, 1
        %v10677 = vsel %vm2250, %v10672, %v10676
        %v10679 = vshrl.u32 %v10386, 16
        %v10681 = vshll.u32 %v10386, 16
        %v10683 = vrot.slane %v10681, 1
        %v10684 = vor.u32 %v10679, %v10683
        %v10686 = vshll.u32 %v10514, 16
        %v10688 = vrot.slane %v10686, 1
        %v10689 = vsel %vm2250, %v10684, %v10688
        %v10691 = vshrl.u32 %v10387, 16
        %v10693 = vshll.u32 %v10387, 16
        %v10695 = vrot.slane %v10693, 1
        %v10696 = vor.u32 %v10691, %v10695
        %v10698 = vshll.u32 %v10515, 16
        %v10700 = vrot.slane %v10698, 1
        %v10701 = vsel %vm2250, %v10696, %v10700
        %v10703 = vshrl.u32 %v10388, 16
        %v10705 = vshll.u32 %v10388, 16
        %v10707 = vrot.slane %v10705, 1
        %v10708 = vor.u32 %v10703, %v10707
        %v10710 = vshll.u32 %v10516, 16
        %v10712 = vrot.slane %v10710, 1
        %v10713 = vsel %vm2250, %v10708, %v10712
        %v10715 = vshrl.u32 %v10389, 16
        %v10717 = vshll.u32 %v10389, 16
        %v10719 = vrot.slane %v10717, 1
        %v10720 = vor.u32 %v10715, %v10719
        %v10722 = vshll.u32 %v10517, 16
        %v10724 = vrot.slane %v10722, 1
        %v10725 = vsel %vm2250, %v10720, %v10724
        %v10727 = vshrl.u32 %v10390, 16
        %v10729 = vshll.u32 %v10390, 16
        %v10731 = vrot.slane %v10729, 1
        %v10732 = vor.u32 %v10727, %v10731
        %v10734 = vshll.u32 %v10518, 16
        %v10736 = vrot.slane %v10734, 1
        %v10737 = vsel %vm2250, %v10732, %v10736
        %v10739 = vshrl.u32 %v10391, 16
        %v10741 = vshll.u32 %v10391, 16
        %v10743 = vrot.slane %v10741, 1
        %v10744 = vor.u32 %v10739, %v10743
        %v10746 = vshll.u32 %v10519, 16
        %v10748 = vrot.slane %v10746, 1
        %v10749 = vsel %vm2250, %v10744, %v10748
        %v10751 = vshrl.u32 %v10392, 16
        %v10753 = vshll.u32 %v10392, 16
        %v10755 = vrot.slane %v10753, 1
        %v10756 = vor.u32 %v10751, %v10755
        %v10758 = vshll.u32 %v10520, 16
        %v10760 = vrot.slane %v10758, 1
        %v10761 = vsel %vm2250, %v10756, %v10760
        %v10763 = vshrl.u32 %v10393, 16
        %v10765 = vshll.u32 %v10393, 16
        %v10767 = vrot.slane %v10765, 1
        %v10768 = vor.u32 %v10763, %v10767
        %v10770 = vshll.u32 %v10521, 16
        %v10772 = vrot.slane %v10770, 1
        %v10773 = vsel %vm2250, %v10768, %v10772
        %v10775 = vshrl.u32 %v10394, 16
        %v10777 = vshll.u32 %v10394, 16
        %v10779 = vrot.slane %v10777, 1
        %v10780 = vor.u32 %v10775, %v10779
        %v10782 = vshll.u32 %v10522, 16
        %v10784 = vrot.slane %v10782, 1
        %v10785 = vsel %vm2250, %v10780, %v10784
        %v10787 = vshrl.u32 %v10395, 16
        %v10789 = vshll.u32 %v10395, 16
        %v10791 = vrot.slane %v10789, 1
        %v10792 = vor.u32 %v10787, %v10791
        %v10794 = vshll.u32 %v10523, 16
        %v10796 = vrot.slane %v10794, 1
        %v10797 = vsel %vm2250, %v10792, %v10796
        %v10799 = vshrl.u32 %v10396, 16
        %v10801 = vshll.u32 %v10396, 16
        %v10803 = vrot.slane %v10801, 1
        %v10804 = vor.u32 %v10799, %v10803
        %v10806 = vshll.u32 %v10524, 16
        %v10808 = vrot.slane %v10806, 1
        %v10809 = vsel %vm2250, %v10804, %v10808
        %v10811 = vshrl.u32 %v10397, 16
        %v10813 = vshll.u32 %v10397, 16
        %v10815 = vrot.slane %v10813, 1
        %v10816 = vor.u32 %v10811, %v10815
        %v10818 = vshll.u32 %v10525, 16
        %v10820 = vrot.slane %v10818, 1
        %v10821 = vsel %vm2250, %v10816, %v10820
        %v10823 = vshrl.u32 %v10398, 16
        %v10825 = vshll.u32 %v10398, 16
        %v10827 = vrot.slane %v10825, 1
        %v10828 = vor.u32 %v10823, %v10827
        %v10830 = vshll.u32 %v10526, 16
        %v10832 = vrot.slane %v10830, 1
        %v10833 = vsel %vm2250, %v10828, %v10832
        %v10835 = vshrl.u32 %v10399, 16
        %v10837 = vshll.u32 %v10399, 16
        %v10839 = vrot.slane %v10837, 1
        %v10840 = vor.u32 %v10835, %v10839
        %v10842 = vshll.u32 %v10527, 16
        %v10844 = vrot.slane %v10842, 1
        %v10845 = vsel %vm2250, %v10840, %v10844
        %v10847 = vshrl.u32 %v10400, 16
        %v10849 = vshll.u32 %v10400, 16
        %v10851 = vrot.slane %v10849, 1
        %v10852 = vor.u32 %v10847, %v10851
        %v10854 = vshll.u32 %v10528, 16
        %v10856 = vrot.slane %v10854, 1
        %v10857 = vsel %vm2250, %v10852, %v10856
        %v10859 = vshrl.u32 %v10401, 16
        %v10861 = vshll.u32 %v10401, 16
        %v10863 = vrot.slane %v10861, 1
        %v10864 = vor.u32 %v10859, %v10863
        %v10866 = vshll.u32 %v10529, 16
        %v10868 = vrot.slane %v10866, 1
        %v10869 = vsel %vm2250, %v10864, %v10868
        %v10871 = vshrl.u32 %v10402, 16
        %v10873 = vshll.u32 %v10402, 16
        %v10875 = vrot.slane %v10873, 1
        %v10876 = vor.u32 %v10871, %v10875
        %v10878 = vshll.u32 %v10530, 16
        %v10880 = vrot.slane %v10878, 1
        %v10881 = vsel %vm2250, %v10876, %v10880
        %v10883 = vshrl.u32 %v10403, 16
        %v10885 = vshll.u32 %v10403, 16
        %v10887 = vrot.slane %v10885, 1
        %v10888 = vor.u32 %v10883, %v10887
        %v10890 = vshll.u32 %v10531, 16
        %v10892 = vrot.slane %v10890, 1
        %v10893 = vsel %vm2250, %v10888, %v10892
        %v10895 = vshrl.u32 %v10404, 16
        %v10897 = vshll.u32 %v10404, 16
        %v10899 = vrot.slane %v10897, 1
        %v10900 = vor.u32 %v10895, %v10899
        %v10902 = vshll.u32 %v10532, 16
        %v10904 = vrot.slane %v10902, 1
        %v10905 = vsel %vm2250, %v10900, %v10904
        %v10907 = vshrl.u32 %v10405, 16
        %v10909 = vshll.u32 %v10405, 16
        %v10911 = vrot.slane %v10909, 1
        %v10912 = vor.u32 %v10907, %v10911
        %v10914 = vshll.u32 %v10533, 16
        %v10916 = vrot.slane %v10914, 1
        %v10917 = vsel %vm2250, %v10912, %v10916
        %v10982 = vunpack.c.l.b16 %v8358
        %v10983 = vunpack.c.l.b16 %v8359
        %v10984 = vunpack.c.l.b16 %v8360
        %v10985 = vunpack.c.l.b16 %v8361
        %v10986 = vunpack.c.l.b16 %v8362
        %v10987 = vunpack.c.l.b16 %v8363
        %v10988 = vunpack.c.l.b16 %v8364
        %v10989 = vunpack.c.l.b16 %v8365
        %v10990 = vunpack.c.l.b16 %v8366
        %v10991 = vunpack.c.l.b16 %v8367
        %v10992 = vunpack.c.l.b16 %v8368
        %v10993 = vunpack.c.l.b16 %v8369
        %v10994 = vunpack.c.l.b16 %v8370
        %v10995 = vunpack.c.l.b16 %v8371
        %v10996 = vunpack.c.l.b16 %v8372
        %v10997 = vunpack.c.l.b16 %v8373
        %v10998 = vunpack.c.l.b16 %v8374
        %v10999 = vunpack.c.l.b16 %v8375
        %v11000 = vunpack.c.l.b16 %v8376
        %v11001 = vunpack.c.l.b16 %v8377
        %v11002 = vunpack.c.l.b16 %v8378
        %v11003 = vunpack.c.l.b16 %v8379
        %v11004 = vunpack.c.l.b16 %v8380
        %v11005 = vunpack.c.l.b16 %v8381
        %v11006 = vunpack.c.l.b16 %v8382
        %v11007 = vunpack.c.l.b16 %v8383
        %v11008 = vunpack.c.l.b16 %v8384
        %v11009 = vunpack.c.l.b16 %v8385
        %v11010 = vunpack.c.l.b16 %v8386
        %v11011 = vunpack.c.l.b16 %v8387
        %v11012 = vunpack.c.l.b16 %v8388
        %v11013 = vunpack.c.l.b16 %v8389
        %v11014 = vpack.c.b16 %v10311, %v10982
        %v11015 = vpack.c.b16 %v10313, %v10983
        %v11016 = vpack.c.b16 %v10315, %v10984
        %v11017 = vpack.c.b16 %v10317, %v10985
        %v11018 = vpack.c.b16 %v10319, %v10986
        %v11019 = vpack.c.b16 %v10321, %v10987
        %v11020 = vpack.c.b16 %v10323, %v10988
        %v11021 = vpack.c.b16 %v10325, %v10989
        %v11022 = vpack.c.b16 %v10327, %v10990
        %v11023 = vpack.c.b16 %v10329, %v10991
        %v11024 = vpack.c.b16 %v10331, %v10992
        %v11025 = vpack.c.b16 %v10333, %v10993
        %v11026 = vpack.c.b16 %v10335, %v10994
        %v11027 = vpack.c.b16 %v10337, %v10995
        %v11028 = vpack.c.b16 %v10339, %v10996
        %v11029 = vpack.c.b16 %v10341, %v10997
        %v11030 = vpack.c.b16 %v10343, %v10998
        %v11031 = vpack.c.b16 %v10345, %v10999
        %v11032 = vpack.c.b16 %v10347, %v11000
        %v11033 = vpack.c.b16 %v10349, %v11001
        %v11034 = vpack.c.b16 %v10351, %v11002
        %v11035 = vpack.c.b16 %v10353, %v11003
        %v11036 = vpack.c.b16 %v10355, %v11004
        %v11037 = vpack.c.b16 %v10357, %v11005
        %v11038 = vpack.c.b16 %v10359, %v11006
        %v11039 = vpack.c.b16 %v10361, %v11007
        %v11040 = vpack.c.b16 %v10363, %v11008
        %v11041 = vpack.c.b16 %v10365, %v11009
        %v11042 = vpack.c.b16 %v10367, %v11010
        %v11043 = vpack.c.b16 %v10369, %v11011
        %v11044 = vpack.c.b16 %v10371, %v11012
        %v11045 = vpack.c.b16 %v10373, %v11013
        %v11046 = vrot.slane %v11014, 1
        %v11047 = vrot.slane %v10502, 1
        %v11048 = vsel %vm2763, %v11046, %v11047
        %v11049 = vrot.slane %v11015, 1
        %v11050 = vrot.slane %v10503, 1
        %v11051 = vsel %vm2763, %v11049, %v11050
        %v11052 = vrot.slane %v11016, 1
        %v11053 = vrot.slane %v10504, 1
        %v11054 = vsel %vm2763, %v11052, %v11053
        %v11055 = vrot.slane %v11017, 1
        %v11056 = vrot.slane %v10505, 1
        %v11057 = vsel %vm2763, %v11055, %v11056
        %v11058 = vrot.slane %v11018, 1
        %v11059 = vrot.slane %v10506, 1
        %v11060 = vsel %vm2763, %v11058, %v11059
        %v11061 = vrot.slane %v11019, 1
        %v11062 = vrot.slane %v10507, 1
        %v11063 = vsel %vm2763, %v11061, %v11062
        %v11064 = vrot.slane %v11020, 1
        %v11065 = vrot.slane %v10508, 1
        %v11066 = vsel %vm2763, %v11064, %v11065
        %v11067 = vrot.slane %v11021, 1
        %v11068 = vrot.slane %v10509, 1
        %v11069 = vsel %vm2763, %v11067, %v11068
        %v11070 = vrot.slane %v11022, 1
        %v11071 = vrot.slane %v10510, 1
        %v11072 = vsel %vm2763, %v11070, %v11071
        %v11073 = vrot.slane %v11023, 1
        %v11074 = vrot.slane %v10511, 1
        %v11075 = vsel %vm2763, %v11073, %v11074
        %v11076 = vrot.slane %v11024, 1
        %v11077 = vrot.slane %v10512, 1
        %v11078 = vsel %vm2763, %v11076, %v11077
        %v11079 = vrot.slane %v11025, 1
        %v11080 = vrot.slane %v10513, 1
        %v11081 = vsel %vm2763, %v11079, %v11080
        %v11082 = vrot.slane %v11026, 1
        %v11083 = vrot.slane %v10514, 1
        %v11084 = vsel %vm2763, %v11082, %v11083
        %v11085 = vrot.slane %v11027, 1
        %v11086 = vrot.slane %v10515, 1
        %v11087 = vsel %vm2763, %v11085, %v11086
        %v11088 = vrot.slane %v11028, 1
        %v11089 = vrot.slane %v10516, 1
        %v11090 = vsel %vm2763, %v11088, %v11089
        %v11091 = vrot.slane %v11029, 1
        %v11092 = vrot.slane %v10517, 1
        %v11093 = vsel %vm2763, %v11091, %v11092
        %v11094 = vrot.slane %v11030, 1
        %v11095 = vrot.slane %v10518, 1
        %v11096 = vsel %vm2763, %v11094, %v11095
        %v11097 = vrot.slane %v11031, 1
        %v11098 = vrot.slane %v10519, 1
        %v11099 = vsel %vm2763, %v11097, %v11098
        %v11100 = vrot.slane %v11032, 1
        %v11101 = vrot.slane %v10520, 1
        %v11102 = vsel %vm2763, %v11100, %v11101
        %v11103 = vrot.slane %v11033, 1
        %v11104 = vrot.slane %v10521, 1
        %v11105 = vsel %vm2763, %v11103, %v11104
        %v11106 = vrot.slane %v11034, 1
        %v11107 = vrot.slane %v10522, 1
        %v11108 = vsel %vm2763, %v11106, %v11107
        %v11109 = vrot.slane %v11035, 1
        %v11110 = vrot.slane %v10523, 1
        %v11111 = vsel %vm2763, %v11109, %v11110
        %v11112 = vrot.slane %v11036, 1
        %v11113 = vrot.slane %v10524, 1
        %v11114 = vsel %vm2763, %v11112, %v11113
        %v11115 = vrot.slane %v11037, 1
        %v11116 = vrot.slane %v10525, 1
        %v11117 = vsel %vm2763, %v11115, %v11116
        %v11118 = vrot.slane %v11038, 1
        %v11119 = vrot.slane %v10526, 1
        %v11120 = vsel %vm2763, %v11118, %v11119
        %v11121 = vrot.slane %v11039, 1
        %v11122 = vrot.slane %v10527, 1
        %v11123 = vsel %vm2763, %v11121, %v11122
        %v11124 = vrot.slane %v11040, 1
        %v11125 = vrot.slane %v10528, 1
        %v11126 = vsel %vm2763, %v11124, %v11125
        %v11127 = vrot.slane %v11041, 1
        %v11128 = vrot.slane %v10529, 1
        %v11129 = vsel %vm2763, %v11127, %v11128
        %v11130 = vrot.slane %v11042, 1
        %v11131 = vrot.slane %v10530, 1
        %v11132 = vsel %vm2763, %v11130, %v11131
        %v11133 = vrot.slane %v11043, 1
        %v11134 = vrot.slane %v10531, 1
        %v11135 = vsel %vm2763, %v11133, %v11134
        %v11136 = vrot.slane %v11044, 1
        %v11137 = vrot.slane %v10532, 1
        %v11138 = vsel %vm2763, %v11136, %v11137
        %v11139 = vrot.slane %v11045, 1
        %v11140 = vrot.slane %v10533, 1
        %v11141 = vsel %vm2763, %v11139, %v11140
        %v11174 = vld [vmem:[#allocation9] sm:$0xf]
        %v11175 = vld [vmem:[#allocation9 + $0x4] sm:$0xf]
        %v11176 = vld [vmem:[#allocation9 + $0x8] sm:$0xf]
        %v11177 = vld [vmem:[#allocation9 + $0xc] sm:$0xf]
        %v11178 = vld [vmem:[#allocation9 + $0x10] sm:$0xf]
        %v11179 = vld [vmem:[#allocation9 + $0x14] sm:$0xf]
        %v11180 = vld [vmem:[#allocation9 + $0x18] sm:$0xf]
        %v11181 = vld [vmem:[#allocation9 + $0x1c] sm:$0xf]
        %v11182 = vld [vmem:[#allocation9 + $0x20] sm:$0xf]
        %v11183 = vld [vmem:[#allocation9 + $0x24] sm:$0xf]
        %v11184 = vld [vmem:[#allocation9 + $0x28] sm:$0xf]
        %v11185 = vld [vmem:[#allocation9 + $0x2c] sm:$0xf]
        %v11186 = vld [vmem:[#allocation9 + $0x30] sm:$0xf]
        %v11187 = vld [vmem:[#allocation9 + $0x34] sm:$0xf]
        %v11188 = vld [vmem:[#allocation9 + $0x38] sm:$0xf]
        %v11189 = vld [vmem:[#allocation9 + $0x3c] sm:$0xf]
        %v11190 = vld [vmem:[#allocation9 + $0x40] sm:$0xf]
        %v11191 = vld [vmem:[#allocation9 + $0x44] sm:$0xf]
        %v11192 = vld [vmem:[#allocation9 + $0x48] sm:$0xf]
        %v11193 = vld [vmem:[#allocation9 + $0x4c] sm:$0xf]
        %v11194 = vld [vmem:[#allocation9 + $0x50] sm:$0xf]
        %v11195 = vld [vmem:[#allocation9 + $0x54] sm:$0xf]
        %v11196 = vld [vmem:[#allocation9 + $0x58] sm:$0xf]
        %v11197 = vld [vmem:[#allocation9 + $0x5c] sm:$0xf]
        %v11198 = vld [vmem:[#allocation9 + $0x60] sm:$0xf]
        %v11199 = vld [vmem:[#allocation9 + $0x64] sm:$0xf]
        %v11200 = vld [vmem:[#allocation9 + $0x68] sm:$0xf]
        %v11201 = vld [vmem:[#allocation9 + $0x6c] sm:$0xf]
        %v11202 = vld [vmem:[#allocation9 + $0x70] sm:$0xf]
        %v11203 = vld [vmem:[#allocation9 + $0x74] sm:$0xf]
        %v11204 = vld [vmem:[#allocation9 + $0x78] sm:$0xf]
        %v11205 = vld [vmem:[#allocation9 + $0x7c] sm:$0xf]
        %v11206 = vld [vmem:[#allocation9 + $0x80] sm:$0xf]
        %v11207 = vld [vmem:[#allocation9 + $0x84] sm:$0xf]
        %v11208 = vld [vmem:[#allocation9 + $0x88] sm:$0xf]
        %v11209 = vld [vmem:[#allocation9 + $0x8c] sm:$0xf]
        %v11210 = vld [vmem:[#allocation9 + $0x90] sm:$0xf]
        %v11211 = vld [vmem:[#allocation9 + $0x94] sm:$0xf]
        %v11212 = vld [vmem:[#allocation9 + $0x98] sm:$0xf]
        %v11213 = vld [vmem:[#allocation9 + $0x9c] sm:$0xf]
        %v11214 = vld [vmem:[#allocation9 + $0xa0] sm:$0xf]
        %v11215 = vld [vmem:[#allocation9 + $0xa4] sm:$0xf]
        %v11216 = vld [vmem:[#allocation9 + $0xa8] sm:$0xf]
        %v11217 = vld [vmem:[#allocation9 + $0xac] sm:$0xf]
        %v11218 = vld [vmem:[#allocation9 + $0xb0] sm:$0xf]
        %v11219 = vld [vmem:[#allocation9 + $0xb4] sm:$0xf]
        %v11220 = vld [vmem:[#allocation9 + $0xb8] sm:$0xf]
        %v11221 = vld [vmem:[#allocation9 + $0xbc] sm:$0xf]
        %v11222 = vld [vmem:[#allocation9 + $0xc0] sm:$0xf]
        %v11223 = vld [vmem:[#allocation9 + $0xc4] sm:$0xf]
        %v11224 = vld [vmem:[#allocation9 + $0xc8] sm:$0xf]
        %v11225 = vld [vmem:[#allocation9 + $0xcc] sm:$0xf]
        %v11226 = vld [vmem:[#allocation9 + $0xd0] sm:$0xf]
        %v11227 = vld [vmem:[#allocation9 + $0xd4] sm:$0xf]
        %v11228 = vld [vmem:[#allocation9 + $0xd8] sm:$0xf]
        %v11229 = vld [vmem:[#allocation9 + $0xdc] sm:$0xf]
        %v11230 = vld [vmem:[#allocation9 + $0xe0] sm:$0xf]
        %v11231 = vld [vmem:[#allocation9 + $0xe4] sm:$0xf]
        %v11232 = vld [vmem:[#allocation9 + $0xe8] sm:$0xf]
        %v11233 = vld [vmem:[#allocation9 + $0xec] sm:$0xf]
        %v11234 = vld [vmem:[#allocation9 + $0xf0] sm:$0xf]
        %v11235 = vld [vmem:[#allocation9 + $0xf4] sm:$0xf]
        %v11236 = vld [vmem:[#allocation9 + $0xf8] sm:$0xf]
        %v11237 = vld [vmem:[#allocation9 + $0xfc] sm:$0xf]
        %v11238 = vld [vmem:[#allocation9 + $0x100] sm:$0xf]
        %v11239 = vld [vmem:[#allocation9 + $0x104] sm:$0xf]
        %v11240 = vld [vmem:[#allocation9 + $0x108] sm:$0xf]
        %v11241 = vld [vmem:[#allocation9 + $0x10c] sm:$0xf]
        %v11242 = vld [vmem:[#allocation9 + $0x110] sm:$0xf]
        %v11243 = vld [vmem:[#allocation9 + $0x114] sm:$0xf]
        %v11244 = vld [vmem:[#allocation9 + $0x118] sm:$0xf]
        %v11245 = vld [vmem:[#allocation9 + $0x11c] sm:$0xf]
        %v11246 = vld [vmem:[#allocation9 + $0x120] sm:$0xf]
        %v11247 = vld [vmem:[#allocation9 + $0x124] sm:$0xf]
        %v11248 = vld [vmem:[#allocation9 + $0x128] sm:$0xf]
        %v11249 = vld [vmem:[#allocation9 + $0x12c] sm:$0xf]
        %v11250 = vld [vmem:[#allocation9 + $0x130] sm:$0xf]
        %v11251 = vld [vmem:[#allocation9 + $0x134] sm:$0xf]
        %v11252 = vld [vmem:[#allocation9 + $0x138] sm:$0xf]
        %v11253 = vld [vmem:[#allocation9 + $0x13c] sm:$0xf]
        %v11254 = vld [vmem:[#allocation9 + $0x140] sm:$0xf]
        %v11255 = vld [vmem:[#allocation9 + $0x144] sm:$0xf]
        %v11256 = vld [vmem:[#allocation9 + $0x148] sm:$0xf]
        %v11257 = vld [vmem:[#allocation9 + $0x14c] sm:$0xf]
        %v11258 = vld [vmem:[#allocation9 + $0x150] sm:$0xf]
        %v11259 = vld [vmem:[#allocation9 + $0x154] sm:$0xf]
        %v11260 = vld [vmem:[#allocation9 + $0x158] sm:$0xf]
        %v11261 = vld [vmem:[#allocation9 + $0x15c] sm:$0xf]
        %v11262 = vld [vmem:[#allocation9 + $0x160] sm:$0xf]
        %v11263 = vld [vmem:[#allocation9 + $0x164] sm:$0xf]
        %v11264 = vld [vmem:[#allocation9 + $0x168] sm:$0xf]
        %v11265 = vld [vmem:[#allocation9 + $0x16c] sm:$0xf]
        %v11266 = vld [vmem:[#allocation9 + $0x170] sm:$0xf]
        %v11267 = vld [vmem:[#allocation9 + $0x174] sm:$0xf]
        %v11268 = vld [vmem:[#allocation9 + $0x178] sm:$0xf]
        %v11269 = vld [vmem:[#allocation9 + $0x17c] sm:$0xf]
        %v11270 = vld [vmem:[#allocation9 + $0x180] sm:$0xf]
        %v11271 = vld [vmem:[#allocation9 + $0x184] sm:$0xf]
        %v11272 = vld [vmem:[#allocation9 + $0x188] sm:$0xf]
        %v11273 = vld [vmem:[#allocation9 + $0x18c] sm:$0xf]
        %v11274 = vld [vmem:[#allocation9 + $0x190] sm:$0xf]
        %v11275 = vld [vmem:[#allocation9 + $0x194] sm:$0xf]
        %v11276 = vld [vmem:[#allocation9 + $0x198] sm:$0xf]
        %v11277 = vld [vmem:[#allocation9 + $0x19c] sm:$0xf]
        %v11278 = vld [vmem:[#allocation9 + $0x1a0] sm:$0xf]
        %v11279 = vld [vmem:[#allocation9 + $0x1a4] sm:$0xf]
        %v11280 = vld [vmem:[#allocation9 + $0x1a8] sm:$0xf]
        %v11281 = vld [vmem:[#allocation9 + $0x1ac] sm:$0xf]
        %v11282 = vld [vmem:[#allocation9 + $0x1b0] sm:$0xf]
        %v11283 = vld [vmem:[#allocation9 + $0x1b4] sm:$0xf]
        %v11284 = vld [vmem:[#allocation9 + $0x1b8] sm:$0xf]
        %v11285 = vld [vmem:[#allocation9 + $0x1bc] sm:$0xf]
        %v11286 = vld [vmem:[#allocation9 + $0x1c0] sm:$0xf]
        %v11287 = vld [vmem:[#allocation9 + $0x1c4] sm:$0xf]
        %v11288 = vld [vmem:[#allocation9 + $0x1c8] sm:$0xf]
        %v11289 = vld [vmem:[#allocation9 + $0x1cc] sm:$0xf]
        %v11290 = vld [vmem:[#allocation9 + $0x1d0] sm:$0xf]
        %v11291 = vld [vmem:[#allocation9 + $0x1d4] sm:$0xf]
        %v11292 = vld [vmem:[#allocation9 + $0x1d8] sm:$0xf]
        %v11293 = vld [vmem:[#allocation9 + $0x1dc] sm:$0xf]
        %v11294 = vld [vmem:[#allocation9 + $0x1e0] sm:$0xf]
        %v11295 = vld [vmem:[#allocation9 + $0x1e4] sm:$0xf]
        %v11296 = vld [vmem:[#allocation9 + $0x1e8] sm:$0xf]
        %v11297 = vld [vmem:[#allocation9 + $0x1ec] sm:$0xf]
        %v11298 = vld [vmem:[#allocation9 + $0x1f0] sm:$0xf]
        %v11299 = vld [vmem:[#allocation9 + $0x1f4] sm:$0xf]
        %v11300 = vld [vmem:[#allocation9 + $0x1f8] sm:$0xf]
        %v11301 = vld [vmem:[#allocation9 + $0x1fc] sm:$0xf]
        %v11302 = vld [vmem:[#allocation9 + $0x200] sm:$0xf]
        %v11303 = vld [vmem:[#allocation9 + $0x204] sm:$0xf]
        %v11304 = vld [vmem:[#allocation9 + $0x208] sm:$0xf]
        %v11305 = vld [vmem:[#allocation9 + $0x20c] sm:$0xf]
        %v11306 = vld [vmem:[#allocation9 + $0x210] sm:$0xf]
        %v11307 = vld [vmem:[#allocation9 + $0x214] sm:$0xf]
        %v11308 = vld [vmem:[#allocation9 + $0x218] sm:$0xf]
        %v11309 = vld [vmem:[#allocation9 + $0x21c] sm:$0xf]
        %v11310 = vld [vmem:[#allocation9 + $0x220] sm:$0xf]
        %v11311 = vld [vmem:[#allocation9 + $0x224] sm:$0xf]
        %v11312 = vld [vmem:[#allocation9 + $0x228] sm:$0xf]
        %v11313 = vld [vmem:[#allocation9 + $0x22c] sm:$0xf]
        %v11314 = vld [vmem:[#allocation9 + $0x230] sm:$0xf]
        %v11315 = vld [vmem:[#allocation9 + $0x234] sm:$0xf]
        %v11316 = vld [vmem:[#allocation9 + $0x238] sm:$0xf]
        %v11317 = vld [vmem:[#allocation9 + $0x23c] sm:$0xf]
        %v11318 = vld [vmem:[%s4] sm:$0x1]
        %v11320 = vlaneseq
        %v11321 = vshrl.u32 %v11320, 7
        %v11322 = vsub.s32 0, %v11321
        %v11323 = vrot.slane %v11318, %v11322
        %v11469 = vunpack.c.l.b16 %v11174
        %v11470 = vunpack.c.l.b16 %v11175
        %v11471 = vunpack.c.l.b16 %v11176
        %v11472 = vunpack.c.l.b16 %v11177
        %v11473 = vunpack.c.l.b16 %v11178
        %v11474 = vunpack.c.l.b16 %v11179
        %v11475 = vunpack.c.l.b16 %v11180
        %v11476 = vunpack.c.l.b16 %v11181
        %v11477 = vunpack.c.l.b16 %v11182
        %v11478 = vunpack.c.l.b16 %v11183
        %v11479 = vunpack.c.l.b16 %v11184
        %v11480 = vunpack.c.l.b16 %v11185
        %v11481 = vunpack.c.l.b16 %v11186
        %v11482 = vunpack.c.l.b16 %v11187
        %v11483 = vunpack.c.l.b16 %v11188
        %v11484 = vunpack.c.l.b16 %v11189
        %v11485 = vunpack.c.l.b16 %v11190
        %v11486 = vunpack.c.l.b16 %v11191
        %v11487 = vunpack.c.l.b16 %v11192
        %v11488 = vunpack.c.l.b16 %v11193
        %v11489 = vunpack.c.l.b16 %v11194
        %v11490 = vunpack.c.l.b16 %v11195
        %v11491 = vunpack.c.l.b16 %v11196
        %v11492 = vunpack.c.l.b16 %v11197
        %v11493 = vunpack.c.l.b16 %v11198
        %v11494 = vunpack.c.l.b16 %v11199
        %v11495 = vunpack.c.l.b16 %v11200
        %v11496 = vunpack.c.l.b16 %v11201
        %v11497 = vunpack.c.l.b16 %v11202
        %v11498 = vunpack.c.l.b16 %v11203
        %v11499 = vunpack.c.l.b16 %v11204
        %v11500 = vunpack.c.l.b16 %v11205
        %v11501 = vunpack.c.l.b16 %v11206
        %v11502 = vunpack.c.l.b16 %v11207
        %v11503 = vunpack.c.l.b16 %v11208
        %v11504 = vunpack.c.l.b16 %v11209
        %v11505 = vunpack.c.l.b16 %v11210
        %v11506 = vunpack.c.l.b16 %v11211
        %v11507 = vunpack.c.l.b16 %v11212
        %v11508 = vunpack.c.l.b16 %v11213
        %v11509 = vunpack.c.l.b16 %v11214
        %v11510 = vunpack.c.l.b16 %v11215
        %v11511 = vunpack.c.l.b16 %v11216
        %v11512 = vunpack.c.l.b16 %v11217
        %v11513 = vunpack.c.l.b16 %v11218
        %v11514 = vunpack.c.l.b16 %v11219
        %v11515 = vunpack.c.l.b16 %v11220
        %v11516 = vunpack.c.l.b16 %v11221
        %v11517 = vunpack.c.l.b16 %v11222
        %v11518 = vunpack.c.l.b16 %v11223
        %v11519 = vunpack.c.l.b16 %v11224
        %v11520 = vunpack.c.l.b16 %v11225
        %v11521 = vunpack.c.l.b16 %v11226
        %v11522 = vunpack.c.l.b16 %v11227
        %v11523 = vunpack.c.l.b16 %v11228
        %v11524 = vunpack.c.l.b16 %v11229
        %v11525 = vunpack.c.l.b16 %v11230
        %v11526 = vunpack.c.l.b16 %v11231
        %v11527 = vunpack.c.l.b16 %v11232
        %v11528 = vunpack.c.l.b16 %v11233
        %v11529 = vunpack.c.l.b16 %v11234
        %v11530 = vunpack.c.l.b16 %v11235
        %v11531 = vunpack.c.l.b16 %v11236
        %v11532 = vunpack.c.l.b16 %v11237
        %v11533 = vunpack.c.l.b16 %v11238
        %v11534 = vunpack.c.l.b16 %v11239
        %v11535 = vunpack.c.l.b16 %v11240
        %v11536 = vunpack.c.l.b16 %v11241
        %v11537 = vunpack.c.l.b16 %v11242
        %v11538 = vunpack.c.l.b16 %v11243
        %v11539 = vunpack.c.l.b16 %v11244
        %v11540 = vunpack.c.l.b16 %v11245
        %v11541 = vunpack.c.l.b16 %v11246
        %v11542 = vunpack.c.l.b16 %v11247
        %v11543 = vunpack.c.l.b16 %v11248
        %v11544 = vunpack.c.l.b16 %v11249
        %v11545 = vunpack.c.l.b16 %v11250
        %v11546 = vunpack.c.l.b16 %v11251
        %v11547 = vunpack.c.l.b16 %v11252
        %v11548 = vunpack.c.l.b16 %v11253
        %v11549 = vunpack.c.l.b16 %v11254
        %v11550 = vunpack.c.l.b16 %v11255
        %v11551 = vunpack.c.l.b16 %v11256
        %v11552 = vunpack.c.l.b16 %v11257
        %v11553 = vunpack.c.l.b16 %v11258
        %v11554 = vunpack.c.l.b16 %v11259
        %v11555 = vunpack.c.l.b16 %v11260
        %v11556 = vunpack.c.l.b16 %v11261
        %v11557 = vunpack.c.l.b16 %v11262
        %v11558 = vunpack.c.l.b16 %v11263
        %v11559 = vunpack.c.l.b16 %v11264
        %v11560 = vunpack.c.l.b16 %v11265
        %v11561 = vunpack.c.l.b16 %v11266
        %v11562 = vunpack.c.l.b16 %v11267
        %v11563 = vunpack.c.l.b16 %v11268
        %v11564 = vunpack.c.l.b16 %v11269
        %v11565 = vunpack.c.l.b16 %v11270
        %v11566 = vunpack.c.l.b16 %v11271
        %v11567 = vunpack.c.l.b16 %v11272
        %v11568 = vunpack.c.l.b16 %v11273
        %v11569 = vunpack.c.l.b16 %v11274
        %v11570 = vunpack.c.l.b16 %v11275
        %v11571 = vunpack.c.l.b16 %v11276
        %v11572 = vunpack.c.l.b16 %v11277
        %v11573 = vunpack.c.l.b16 %v11278
        %v11574 = vunpack.c.l.b16 %v11279
        %v11575 = vunpack.c.l.b16 %v11280
        %v11576 = vunpack.c.l.b16 %v11281
        %v11577 = vunpack.c.l.b16 %v11282
        %v11578 = vunpack.c.l.b16 %v11283
        %v11579 = vunpack.c.l.b16 %v11284
        %v11580 = vunpack.c.l.b16 %v11285
        %v11581 = vunpack.c.l.b16 %v11286
        %v11582 = vunpack.c.l.b16 %v11287
        %v11583 = vunpack.c.l.b16 %v11288
        %v11584 = vunpack.c.l.b16 %v11289
        %v11585 = vunpack.c.l.b16 %v11290
        %v11586 = vunpack.c.l.b16 %v11291
        %v11587 = vunpack.c.l.b16 %v11292
        %v11588 = vunpack.c.l.b16 %v11293
        %v11589 = vunpack.c.l.b16 %v11294
        %v11590 = vunpack.c.l.b16 %v11295
        %v11591 = vunpack.c.l.b16 %v11296
        %v11592 = vunpack.c.l.b16 %v11297
        %v11593 = vunpack.c.l.b16 %v11298
        %v11594 = vunpack.c.l.b16 %v11299
        %v11595 = vunpack.c.l.b16 %v11300
        %v11596 = vunpack.c.l.b16 %v11301
        %v11597 = vunpack.c.l.b16 %v11302
        %v11598 = vunpack.c.l.b16 %v11303
        %v11599 = vunpack.c.l.b16 %v11304
        %v11600 = vunpack.c.l.b16 %v11305
        %v11601 = vunpack.c.l.b16 %v11306
        %v11602 = vunpack.c.l.b16 %v11307
        %v11603 = vunpack.c.l.b16 %v11308
        %v11604 = vunpack.c.l.b16 %v11309
        %v11605 = vunpack.c.l.b16 %v11310
        %v11606 = vunpack.c.l.b16 %v11311
        %v11607 = vunpack.c.l.b16 %v11312
        %v11608 = vunpack.c.l.b16 %v11313
        %v11609 = vunpack.c.l.b16 %v11314
        %v11610 = vunpack.c.l.b16 %v11315
        %v11611 = vunpack.c.l.b16 %v11316
        %v11612 = vunpack.c.l.b16 %v11317
        %v11613 = vpack.c.b16 %v11470, %v11469
        %v11614 = vpack.c.b16 %v11472, %v11471
        %v11615 = vpack.c.b16 %v11474, %v11473
        %v11616 = vpack.c.b16 %v11476, %v11475
        %v11617 = vpack.c.b16 %v11478, %v11477
        %v11618 = vpack.c.b16 %v11480, %v11479
        %v11619 = vpack.c.b16 %v11482, %v11481
        %v11620 = vpack.c.b16 %v11484, %v11483
        %v11621 = vpack.c.b16 %v11486, %v11485
        %v11622 = vpack.c.b16 %v11488, %v11487
        %v11623 = vpack.c.b16 %v11490, %v11489
        %v11624 = vpack.c.b16 %v11492, %v11491
        %v11625 = vpack.c.b16 %v11494, %v11493
        %v11626 = vpack.c.b16 %v11496, %v11495
        %v11627 = vpack.c.b16 %v11498, %v11497
        %v11628 = vpack.c.b16 %v11500, %v11499
        %v11629 = vpack.c.b16 %v11502, %v11501
        %v11630 = vpack.c.b16 %v11504, %v11503
        %v11631 = vpack.c.b16 %v11506, %v11505
        %v11632 = vpack.c.b16 %v11508, %v11507
        %v11633 = vpack.c.b16 %v11510, %v11509
        %v11634 = vpack.c.b16 %v11512, %v11511
        %v11635 = vpack.c.b16 %v11514, %v11513
        %v11636 = vpack.c.b16 %v11516, %v11515
        %v11637 = vpack.c.b16 %v11518, %v11517
        %v11638 = vpack.c.b16 %v11520, %v11519
        %v11639 = vpack.c.b16 %v11522, %v11521
        %v11640 = vpack.c.b16 %v11524, %v11523
        %v11641 = vpack.c.b16 %v11526, %v11525
        %v11642 = vpack.c.b16 %v11528, %v11527
        %v11643 = vpack.c.b16 %v11530, %v11529
        %v11644 = vpack.c.b16 %v11532, %v11531
        %v11645 = vpack.c.b16 %v11534, %v11533
        %v11646 = vpack.c.b16 %v11536, %v11535
        %v11647 = vpack.c.b16 %v11538, %v11537
        %v11648 = vpack.c.b16 %v11540, %v11539
        %v11649 = vpack.c.b16 %v11542, %v11541
        %v11650 = vpack.c.b16 %v11544, %v11543
        %v11651 = vpack.c.b16 %v11546, %v11545
        %v11652 = vpack.c.b16 %v11548, %v11547
        %v11653 = vpack.c.b16 %v11550, %v11549
        %v11654 = vpack.c.b16 %v11552, %v11551
        %v11655 = vpack.c.b16 %v11554, %v11553
        %v11656 = vpack.c.b16 %v11556, %v11555
        %v11657 = vpack.c.b16 %v11558, %v11557
        %v11658 = vpack.c.b16 %v11560, %v11559
        %v11659 = vpack.c.b16 %v11562, %v11561
        %v11660 = vpack.c.b16 %v11564, %v11563
        %v11661 = vpack.c.b16 %v11566, %v11565
        %v11662 = vpack.c.b16 %v11568, %v11567
        %v11663 = vpack.c.b16 %v11570, %v11569
        %v11664 = vpack.c.b16 %v11572, %v11571
        %v11665 = vpack.c.b16 %v11574, %v11573
        %v11666 = vpack.c.b16 %v11576, %v11575
        %v11667 = vpack.c.b16 %v11578, %v11577
        %v11668 = vpack.c.b16 %v11580, %v11579
        %v11669 = vpack.c.b16 %v11582, %v11581
        %v11670 = vpack.c.b16 %v11584, %v11583
        %v11671 = vpack.c.b16 %v11586, %v11585
        %v11672 = vpack.c.b16 %v11588, %v11587
        %v11673 = vpack.c.b16 %v11590, %v11589
        %v11674 = vpack.c.b16 %v11592, %v11591
        %v11675 = vpack.c.b16 %v11594, %v11593
        %v11676 = vpack.c.b16 %v11596, %v11595
        %v11677 = vpack.c.b16 %v11598, %v11597
        %v11678 = vpack.c.b16 %v11600, %v11599
        %v11679 = vpack.c.b16 %v11602, %v11601
        %v11680 = vpack.c.b16 %v11604, %v11603
        %v11681 = vpack.c.b16 %v11606, %v11605
        %v11682 = vpack.c.b16 %v11608, %v11607
        %v11683 = vpack.c.b16 %v11610, %v11609
        %v11684 = vpack.c.b16 %v11612, %v11611
        %11757 = vmatprep.subr.bf16.mxu0 0
        %11758 = vmatpush1.bf16.msra.mxu0 %v11613
        %11759 = vmatprep.subr.bf16.mxu0 0
        %11760 = vmatpush1.bf16.msra.mxu0 %v11614
        %11761 = vmatprep.subr.bf16.mxu0 0
        %11762 = vmatpush1.bf16.msra.mxu0 %v11615
        %11763 = vmatprep.subr.bf16.mxu0 0
        %11764 = vmatpush1.bf16.msra.mxu0 %v11616
        %11765 = vmatprep.subr.bf16.mxu0 0
        %11766 = vmatpush1.bf16.msra.mxu0 %v11617
        %11767 = vmatprep.subr.bf16.mxu0 0
        %11768 = vmatpush1.bf16.msra.mxu0 %v11618
        %11769 = vmatprep.subr.bf16.mxu0 0
        %11770 = vmatpush1.bf16.msra.mxu0 %v11619
        %11771 = vmatprep.subr.bf16.mxu0 0
        %11772 = vmatpush1.bf16.msra.mxu0 %v11620
        %11773 = vmatprep.subr.bf16.mxu0 0
        %11774 = vmatpush1.bf16.msra.mxu0 %v11621
        %11775 = vmatprep.subr.bf16.mxu0 0
        %11776 = vmatpush1.bf16.msra.mxu0 %v11622
        %11777 = vmatprep.subr.bf16.mxu0 0
        %11778 = vmatpush1.bf16.msra.mxu0 %v11623
        %11779 = vmatprep.subr.bf16.mxu0 0
        %11780 = vmatpush1.bf16.msra.mxu0 %v11624
        %11781 = vmatprep.subr.bf16.mxu0 0
        %11782 = vmatpush1.bf16.msra.mxu0 %v11625
        %11783 = vmatprep.subr.bf16.mxu0 0
        %11784 = vmatpush1.bf16.msra.mxu0 %v11626
        %11785 = vmatprep.subr.bf16.mxu0 0
        %11786 = vmatpush1.bf16.msra.mxu0 %v11627
        %11787 = vmatprep.subr.bf16.mxu0 0
        %11788 = vmatpush1.bf16.msra.mxu0 %v11628
        %11789 = vmatprep.mubr.bf16.mxu0 %v8689
        %11790 = vmatmul.mubr.bf16.gmra.mrb[0].mxu0 %v8518
        %v11791 = vpop.f32.mrb[0].mxu0
        %v11792 = vadd.f32 %v11323, %v11791
        %v11793 = vpop.f32.mrb[0].mxu0
        %v11794 = vpop.f32.mrb[0].mxu0
        %v11795 = vadd.f32 %v11323, %v11794
        %v11796 = vpop.f32.mrb[0].mxu0
        %11797 = vmatprep.mubr.bf16.mxu0 %v8701
        %11798 = vmatmul.mubr.bf16.gmra.mrb[0].mxu0 %v8519
        %v11799 = vpop.f32.mrb[0].mxu0
        %v11800 = vadd.f32 %v11323, %v11799
        %v11801 = vpop.f32.mrb[0].mxu0
        %v11802 = vpop.f32.mrb[0].mxu0
        %v11803 = vadd.f32 %v11323, %v11802
        %v11804 = vpop.f32.mrb[0].mxu0
        %11805 = vmatprep.mubr.bf16.mxu0 %v8713
        %11806 = vmatmul.mubr.bf16.gmra.mrb[0].mxu0 %v8520
        %v11807 = vpop.f32.mrb[0].mxu0
        %v11808 = vadd.f32 %v11323, %v11807
        %v11809 = vpop.f32.mrb[0].mxu0
        %v11810 = vpop.f32.mrb[0].mxu0
        %v11811 = vadd.f32 %v11323, %v11810
        %v11812 = vpop.f32.mrb[0].mxu0
        %11813 = vmatprep.mubr.bf16.mxu0 %v8725
        %11814 = vmatmul.mubr.bf16.gmra.mrb[0].mxu0 %v8521
        %v11815 = vpop.f32.mrb[0].mxu0
        %v11816 = vadd.f32 %v11323, %v11815
        %v11817 = vpop.f32.mrb[0].mxu0
        %v11818 = vpop.f32.mrb[0].mxu0
        %v11819 = vadd.f32 %v11323, %v11818
        %v11820 = vpop.f32.mrb[0].mxu0
        %11821 = vmatprep.mubr.bf16.mxu0 %v8737
        %11822 = vmatmul.mubr.bf16.gmra.mrb[0].mxu0 %v8522
        %v11823 = vpop.f32.mrb[0].mxu0
        %v11824 = vadd.f32 %v11323, %v11823
        %v11825 = vpop.f32.mrb[0].mxu0
        %v11826 = vpop.f32.mrb[0].mxu0
        %v11827 = vadd.f32 %v11323, %v11826
        %v11828 = vpop.f32.mrb[0].mxu0
        %11829 = vmatprep.mubr.bf16.mxu0 %v8749
        %11830 = vmatmul.mubr.bf16.gmra.mrb[0].mxu0 %v8523
        %v11831 = vpop.f32.mrb[0].mxu0
        %v11832 = vadd.f32 %v11323, %v11831
        %v11833 = vpop.f32.mrb[0].mxu0
        %v11834 = vpop.f32.mrb[0].mxu0
        %v11835 = vadd.f32 %v11323, %v11834
        %v11836 = vpop.f32.mrb[0].mxu0
        %11837 = vmatprep.mubr.bf16.mxu0 %v8761
        %11838 = vmatmul.mubr.bf16.gmra.mrb[0].mxu0 %v8524
        %v11839 = vpop.f32.mrb[0].mxu0
        %v11840 = vadd.f32 %v11323, %v11839
        %v11841 = vpop.f32.mrb[0].mxu0
        %v11842 = vpop.f32.mrb[0].mxu0
        %v11843 = vadd.f32 %v11323, %v11842
        %v11844 = vpop.f32.mrb[0].mxu0
        %11845 = vmatprep.mubr.bf16.mxu0 %v8773
        %11846 = vmatmul.mubr.bf16.gmra.mrb[0].mxu0 %v8525
        %v11847 = vpop.f32.mrb[0].mxu0
        %v11848 = vadd.f32 %v11323, %v11847
        %v11849 = vpop.f32.mrb[0].mxu0
        %v11850 = vpop.f32.mrb[0].mxu0
        %v11851 = vadd.f32 %v11323, %v11850
        %v11852 = vpop.f32.mrb[0].mxu0
        %11853 = vmatprep.mubr.bf16.mxu0 %v8785
        %11854 = vmatmul.mubr.bf16.gmra.mrb[0].mxu0 %v8526
        %v11855 = vpop.f32.mrb[0].mxu0
        %v11856 = vadd.f32 %v11323, %v11855
        %v11857 = vpop.f32.mrb[0].mxu0
        %v11858 = vpop.f32.mrb[0].mxu0
        %v11859 = vadd.f32 %v11323, %v11858
        %v11860 = vpop.f32.mrb[0].mxu0
        %11861 = vmatprep.mubr.bf16.mxu0 %v8797
        %11862 = vmatmul.mubr.bf16.gmra.mrb[0].mxu0 %v8527
        %v11863 = vpop.f32.mrb[0].mxu0
        %v11864 = vadd.f32 %v11323, %v11863
        %v11865 = vpop.f32.mrb[0].mxu0
        %v11866 = vpop.f32.mrb[0].mxu0
        %v11867 = vadd.f32 %v11323, %v11866
        %v11868 = vpop.f32.mrb[0].mxu0
        %11869 = vmatprep.mubr.bf16.mxu0 %v8809
        %11870 = vmatmul.mubr.bf16.gmra.mrb[0].mxu0 %v8528
        %v11871 = vpop.f32.mrb[0].mxu0
        %v11872 = vadd.f32 %v11323, %v11871
        %v11873 = vpop.f32.mrb[0].mxu0
        %v11874 = vpop.f32.mrb[0].mxu0
        %v11875 = vadd.f32 %v11323, %v11874
        %v11876 = vpop.f32.mrb[0].mxu0
        %11877 = vmatprep.mubr.bf16.mxu0 %v8821
        %11878 = vmatmul.mubr.bf16.gmra.mrb[0].mxu0 %v8529
        %v11879 = vpop.f32.mrb[0].mxu0
        %v11880 = vadd.f32 %v11323, %v11879
        %v11881 = vpop.f32.mrb[0].mxu0
        %v11882 = vpop.f32.mrb[0].mxu0
        %v11883 = vadd.f32 %v11323, %v11882
        %v11884 = vpop.f32.mrb[0].mxu0
        %11885 = vmatprep.mubr.bf16.mxu0 %v8833
        %11886 = vmatmul.mubr.bf16.gmra.mrb[0].mxu0 %v8530
        %v11887 = vpop.f32.mrb[0].mxu0
        %v11888 = vadd.f32 %v11323, %v11887
        %v11889 = vpop.f32.mrb[0].mxu0
        %v11890 = vpop.f32.mrb[0].mxu0
        %v11891 = vadd.f32 %v11323, %v11890
        %v11892 = vpop.f32.mrb[0].mxu0
        %11893 = vmatprep.mubr.bf16.mxu0 %v8845
        %11894 = vmatmul.mubr.bf16.gmra.mrb[0].mxu0 %v8531
        %v11895 = vpop.f32.mrb[0].mxu0
        %v11896 = vadd.f32 %v11323, %v11895
        %v11897 = vpop.f32.mrb[0].mxu0
        %v11898 = vpop.f32.mrb[0].mxu0
        %v11899 = vadd.f32 %v11323, %v11898
        %v11900 = vpop.f32.mrb[0].mxu0
        %11901 = vmatprep.mubr.bf16.mxu0 %v8857
        %11902 = vmatmul.mubr.bf16.gmra.mrb[0].mxu0 %v8532
        %v11903 = vpop.f32.mrb[0].mxu0
        %v11904 = vadd.f32 %v11323, %v11903
        %v11905 = vpop.f32.mrb[0].mxu0
        %v11906 = vpop.f32.mrb[0].mxu0
        %v11907 = vadd.f32 %v11323, %v11906
        %v11908 = vpop.f32.mrb[0].mxu0
        %11909 = vmatprep.mubr.bf16.mxu0 %v8869
        %11910 = vmatmul.mubr.bf16.gmra.mrb[0].mxu0 %v8533
        %v11911 = vpop.f32.mrb[0].mxu0
        %v11912 = vadd.f32 %v11323, %v11911
        %v11913 = vpop.f32.mrb[0].mxu0
        %v11914 = vpop.f32.mrb[0].mxu0
        %v11915 = vadd.f32 %v11323, %v11914
        %v11916 = vpop.f32.mrb[0].mxu0
        %11917 = vmatprep.mubr.bf16.mxu0 %v8881
        %11918 = vmatmul.mubr.bf16.gmra.mrb[0].mxu0 %v8534
        %v11919 = vpop.f32.mrb[0].mxu0
        %v11920 = vadd.f32 %v11323, %v11919
        %v11921 = vpop.f32.mrb[0].mxu0
        %v11922 = vpop.f32.mrb[0].mxu0
        %v11923 = vadd.f32 %v11323, %v11922
        %v11924 = vpop.f32.mrb[0].mxu0
        %11925 = vmatprep.mubr.bf16.mxu0 %v8893
        %11926 = vmatmul.mubr.bf16.gmra.mrb[0].mxu0 %v8535
        %v11927 = vpop.f32.mrb[0].mxu0
        %v11928 = vadd.f32 %v11323, %v11927
        %v11929 = vpop.f32.mrb[0].mxu0
        %v11930 = vpop.f32.mrb[0].mxu0
        %v11931 = vadd.f32 %v11323, %v11930
        %v11932 = vpop.f32.mrb[0].mxu0
        %11933 = vmatprep.mubr.bf16.mxu0 %v8905
        %11934 = vmatmul.mubr.bf16.gmra.mrb[0].mxu0 %v8536
        %v11935 = vpop.f32.mrb[0].mxu0
        %v11936 = vadd.f32 %v11323, %v11935
        %v11937 = vpop.f32.mrb[0].mxu0
        %v11938 = vpop.f32.mrb[0].mxu0
        %v11939 = vadd.f32 %v11323, %v11938
        %v11940 = vpop.f32.mrb[0].mxu0
        %11941 = vmatprep.mubr.bf16.mxu0 %v8917
        %11942 = vmatmul.mubr.bf16.gmra.mrb[0].mxu0 %v8537
        %v11943 = vpop.f32.mrb[0].mxu0
        %v11944 = vadd.f32 %v11323, %v11943
        %v11945 = vpop.f32.mrb[0].mxu0
        %v11946 = vpop.f32.mrb[0].mxu0
        %v11947 = vadd.f32 %v11323, %v11946
        %v11948 = vpop.f32.mrb[0].mxu0
        %11949 = vmatprep.mubr.bf16.mxu0 %v8929
        %11950 = vmatmul.mubr.bf16.gmra.mrb[0].mxu0 %v8538
        %v11951 = vpop.f32.mrb[0].mxu0
        %v11952 = vadd.f32 %v11323, %v11951
        %v11953 = vpop.f32.mrb[0].mxu0
        %v11954 = vpop.f32.mrb[0].mxu0
        %v11955 = vadd.f32 %v11323, %v11954
        %v11956 = vpop.f32.mrb[0].mxu0
        %11957 = vmatprep.mubr.bf16.mxu0 %v8941
        %11958 = vmatmul.mubr.bf16.gmra.mrb[0].mxu0 %v8539
        %v11959 = vpop.f32.mrb[0].mxu0
        %v11960 = vadd.f32 %v11323, %v11959
        %v11961 = vpop.f32.mrb[0].mxu0
        %v11962 = vpop.f32.mrb[0].mxu0
        %v11963 = vadd.f32 %v11323, %v11962
        %v11964 = vpop.f32.mrb[0].mxu0
        %11965 = vmatprep.mubr.bf16.mxu0 %v8953
        %11966 = vmatmul.mubr.bf16.gmra.mrb[0].mxu0 %v8540
        %v11967 = vpop.f32.mrb[0].mxu0
        %v11968 = vadd.f32 %v11323, %v11967
        %v11969 = vpop.f32.mrb[0].mxu0
        %v11970 = vpop.f32.mrb[0].mxu0
        %v11971 = vadd.f32 %v11323, %v11970
        %v11972 = vpop.f32.mrb[0].mxu0
        %11973 = vmatprep.mubr.bf16.mxu0 %v8965
        %11974 = vmatmul.mubr.bf16.gmra.mrb[0].mxu0 %v8541
        %v11975 = vpop.f32.mrb[0].mxu0
        %v11976 = vadd.f32 %v11323, %v11975
        %v11977 = vpop.f32.mrb[0].mxu0
        %v11978 = vpop.f32.mrb[0].mxu0
        %v11979 = vadd.f32 %v11323, %v11978
        %v11980 = vpop.f32.mrb[0].mxu0
        %11981 = vmatprep.mubr.bf16.mxu0 %v8977
        %11982 = vmatmul.mubr.bf16.gmra.mrb[0].mxu0 %v8542
        %v11983 = vpop.f32.mrb[0].mxu0
        %v11984 = vadd.f32 %v11323, %v11983
        %v11985 = vpop.f32.mrb[0].mxu0
        %v11986 = vpop.f32.mrb[0].mxu0
        %v11987 = vadd.f32 %v11323, %v11986
        %v11988 = vpop.f32.mrb[0].mxu0
        %11989 = vmatprep.mubr.bf16.mxu0 %v8989
        %11990 = vmatmul.mubr.bf16.gmra.mrb[0].mxu0 %v8543
        %v11991 = vpop.f32.mrb[0].mxu0
        %v11992 = vadd.f32 %v11323, %v11991
        %v11993 = vpop.f32.mrb[0].mxu0
        %v11994 = vpop.f32.mrb[0].mxu0
        %v11995 = vadd.f32 %v11323, %v11994
        %v11996 = vpop.f32.mrb[0].mxu0
        %11997 = vmatprep.mubr.bf16.mxu0 %v9001
        %11998 = vmatmul.mubr.bf16.gmra.mrb[0].mxu0 %v8544
        %v11999 = vpop.f32.mrb[0].mxu0
        %v12000 = vadd.f32 %v11323, %v11999
        %v12001 = vpop.f32.mrb[0].mxu0
        %v12002 = vpop.f32.mrb[0].mxu0
        %v12003 = vadd.f32 %v11323, %v12002
        %v12004 = vpop.f32.mrb[0].mxu0
        %12005 = vmatprep.mubr.bf16.mxu0 %v9013
        %12006 = vmatmul.mubr.bf16.gmra.mrb[0].mxu0 %v8545
        %v12007 = vpop.f32.mrb[0].mxu0
        %v12008 = vadd.f32 %v11323, %v12007
        %v12009 = vpop.f32.mrb[0].mxu0
        %v12010 = vpop.f32.mrb[0].mxu0
        %v12011 = vadd.f32 %v11323, %v12010
        %v12012 = vpop.f32.mrb[0].mxu0
        %12013 = vmatprep.mubr.bf16.mxu0 %v9025
        %12014 = vmatmul.mubr.bf16.gmra.mrb[0].mxu0 %v8546
        %v12015 = vpop.f32.mrb[0].mxu0
        %v12016 = vadd.f32 %v11323, %v12015
        %v12017 = vpop.f32.mrb[0].mxu0
        %v12018 = vpop.f32.mrb[0].mxu0
        %v12019 = vadd.f32 %v11323, %v12018
        %v12020 = vpop.f32.mrb[0].mxu0
        %12021 = vmatprep.mubr.bf16.mxu0 %v9037
        %12022 = vmatmul.mubr.bf16.gmra.mrb[0].mxu0 %v8547
        %v12023 = vpop.f32.mrb[0].mxu0
        %v12024 = vadd.f32 %v11323, %v12023
        %v12025 = vpop.f32.mrb[0].mxu0
        %v12026 = vpop.f32.mrb[0].mxu0
        %v12027 = vadd.f32 %v11323, %v12026
        %v12028 = vpop.f32.mrb[0].mxu0
        %12029 = vmatprep.mubr.bf16.mxu0 %v9049
        %12030 = vmatmul.mubr.bf16.gmra.mrb[0].mxu0 %v8548
        %v12031 = vpop.f32.mrb[0].mxu0
        %v12032 = vadd.f32 %v11323, %v12031
        %v12033 = vpop.f32.mrb[0].mxu0
        %v12034 = vpop.f32.mrb[0].mxu0
        %v12035 = vadd.f32 %v11323, %v12034
        %v12036 = vpop.f32.mrb[0].mxu0
        %12037 = vmatprep.mubr.bf16.mxu0 %v9061
        %12038 = vmatmul.mubr.bf16.gmra.mrb[0].mxu0 %v8549
        %v12039 = vpop.f32.mrb[0].mxu0
        %v12040 = vadd.f32 %v11323, %v12039
        %v12041 = vpop.f32.mrb[0].mxu0
        %v12042 = vpop.f32.mrb[0].mxu0
        %v12043 = vadd.f32 %v11323, %v12042
        %v12044 = vpop.f32.mrb[0].mxu0
        %12045 = vdwg.mxu0
        %12046 = vmatprep.subr.bf16.mxu0 0
        %12047 = vmatpush1.bf16.msra.mxu0 %v11629
        %12048 = vmatprep.subr.bf16.mxu0 0
        %12049 = vmatpush1.bf16.msra.mxu0 %v11630
        %12050 = vmatprep.subr.bf16.mxu0 0
        %12051 = vmatpush1.bf16.msra.mxu0 %v11631
        %12052 = vmatprep.subr.bf16.mxu0 0
        %12053 = vmatpush1.bf16.msra.mxu0 %v11632
        %12054 = vmatprep.subr.bf16.mxu0 0
        %12055 = vmatpush1.bf16.msra.mxu0 %v11633
        %12056 = vmatprep.subr.bf16.mxu0 0
        %12057 = vmatpush1.bf16.msra.mxu0 %v11634
        %12058 = vmatprep.subr.bf16.mxu0 0
        %12059 = vmatpush1.bf16.msra.mxu0 %v11635
        %12060 = vmatprep.subr.bf16.mxu0 0
        %12061 = vmatpush1.bf16.msra.mxu0 %v11636
        %12062 = vmatprep.subr.bf16.mxu0 0
        %12063 = vmatpush1.bf16.msra.mxu0 %v11637
        %12064 = vmatprep.subr.bf16.mxu0 0
        %12065 = vmatpush1.bf16.msra.mxu0 %v11638
        %12066 = vmatprep.subr.bf16.mxu0 0
        %12067 = vmatpush1.bf16.msra.mxu0 %v11639
        %12068 = vmatprep.subr.bf16.mxu0 0
        %12069 = vmatpush1.bf16.msra.mxu0 %v11640
        %12070 = vmatprep.subr.bf16.mxu0 0
        %12071 = vmatpush1.bf16.msra.mxu0 %v11641
        %12072 = vmatprep.subr.bf16.mxu0 0
        %12073 = vmatpush1.bf16.msra.mxu0 %v11642
        %12074 = vmatprep.subr.bf16.mxu0 0
        %12075 = vmatpush1.bf16.msra.mxu0 %v11643
        %12076 = vmatprep.subr.bf16.mxu0 0
        %12077 = vmatpush1.bf16.msra.mxu0 %v11644
        %12078 = vmatprep.mubr.bf16.mxu0 %v9446
        %12079 = vmatmul.mubr.bf16.gmra.mrb[0].mxu0 %v9192
        %v12080 = vpop.f32.mrb[0].mxu0
        %v12081 = vadd.f32 %v11792, %v12080
        %v12082 = vpop.f32.mrb[0].mxu0
        %v12083 = vpop.f32.mrb[0].mxu0
        %v12084 = vadd.f32 %v11795, %v12083
        %v12085 = vpop.f32.mrb[0].mxu0
        %12086 = vmatprep.mubr.bf16.mxu0 %v9447
        %12087 = vmatmul.mubr.bf16.gmra.mrb[0].mxu0 %v9195
        %v12088 = vpop.f32.mrb[0].mxu0
        %v12089 = vadd.f32 %v11800, %v12088
        %v12090 = vpop.f32.mrb[0].mxu0
        %v12091 = vpop.f32.mrb[0].mxu0
        %v12092 = vadd.f32 %v11803, %v12091
        %v12093 = vpop.f32.mrb[0].mxu0
        %12094 = vmatprep.mubr.bf16.mxu0 %v9448
        %12095 = vmatmul.mubr.bf16.gmra.mrb[0].mxu0 %v9198
        %v12096 = vpop.f32.mrb[0].mxu0
        %v12097 = vadd.f32 %v11808, %v12096
        %v12098 = vpop.f32.mrb[0].mxu0
        %v12099 = vpop.f32.mrb[0].mxu0
        %v12100 = vadd.f32 %v11811, %v12099
        %v12101 = vpop.f32.mrb[0].mxu0
        %12102 = vmatprep.mubr.bf16.mxu0 %v9449
        %12103 = vmatmul.mubr.bf16.gmra.mrb[0].mxu0 %v9201
        %v12104 = vpop.f32.mrb[0].mxu0
        %v12105 = vadd.f32 %v11816, %v12104
        %v12106 = vpop.f32.mrb[0].mxu0
        %v12107 = vpop.f32.mrb[0].mxu0
        %v12108 = vadd.f32 %v11819, %v12107
        %v12109 = vpop.f32.mrb[0].mxu0
        %12110 = vmatprep.mubr.bf16.mxu0 %v9450
        %12111 = vmatmul.mubr.bf16.gmra.mrb[0].mxu0 %v9204
        %v12112 = vpop.f32.mrb[0].mxu0
        %v12113 = vadd.f32 %v11824, %v12112
        %v12114 = vpop.f32.mrb[0].mxu0
        %v12115 = vpop.f32.mrb[0].mxu0
        %v12116 = vadd.f32 %v11827, %v12115
        %v12117 = vpop.f32.mrb[0].mxu0
        %12118 = vmatprep.mubr.bf16.mxu0 %v9451
        %12119 = vmatmul.mubr.bf16.gmra.mrb[0].mxu0 %v9207
        %v12120 = vpop.f32.mrb[0].mxu0
        %v12121 = vadd.f32 %v11832, %v12120
        %v12122 = vpop.f32.mrb[0].mxu0
        %v12123 = vpop.f32.mrb[0].mxu0
        %v12124 = vadd.f32 %v11835, %v12123
        %v12125 = vpop.f32.mrb[0].mxu0
        %12126 = vmatprep.mubr.bf16.mxu0 %v9452
        %12127 = vmatmul.mubr.bf16.gmra.mrb[0].mxu0 %v9210
        %v12128 = vpop.f32.mrb[0].mxu0
        %v12129 = vadd.f32 %v11840, %v12128
        %v12130 = vpop.f32.mrb[0].mxu0
        %v12131 = vpop.f32.mrb[0].mxu0
        %v12132 = vadd.f32 %v11843, %v12131
        %v12133 = vpop.f32.mrb[0].mxu0
        %12134 = vmatprep.mubr.bf16.mxu0 %v9453
        %12135 = vmatmul.mubr.bf16.gmra.mrb[0].mxu0 %v9213
        %v12136 = vpop.f32.mrb[0].mxu0
        %v12137 = vadd.f32 %v11848, %v12136
        %v12138 = vpop.f32.mrb[0].mxu0
        %v12139 = vpop.f32.mrb[0].mxu0
        %v12140 = vadd.f32 %v11851, %v12139
        %v12141 = vpop.f32.mrb[0].mxu0
        %12142 = vmatprep.mubr.bf16.mxu0 %v9454
        %12143 = vmatmul.mubr.bf16.gmra.mrb[0].mxu0 %v9216
        %v12144 = vpop.f32.mrb[0].mxu0
        %v12145 = vadd.f32 %v11856, %v12144
        %v12146 = vpop.f32.mrb[0].mxu0
        %v12147 = vpop.f32.mrb[0].mxu0
        %v12148 = vadd.f32 %v11859, %v12147
        %v12149 = vpop.f32.mrb[0].mxu0
        %12150 = vmatprep.mubr.bf16.mxu0 %v9455
        %12151 = vmatmul.mubr.bf16.gmra.mrb[0].mxu0 %v9219
        %v12152 = vpop.f32.mrb[0].mxu0
        %v12153 = vadd.f32 %v11864, %v12152
        %v12154 = vpop.f32.mrb[0].mxu0
        %v12155 = vpop.f32.mrb[0].mxu0
        %v12156 = vadd.f32 %v11867, %v12155
        %v12157 = vpop.f32.mrb[0].mxu0
        %12158 = vmatprep.mubr.bf16.mxu0 %v9456
        %12159 = vmatmul.mubr.bf16.gmra.mrb[0].mxu0 %v9222
        %v12160 = vpop.f32.mrb[0].mxu0
        %v12161 = vadd.f32 %v11872, %v12160
        %v12162 = vpop.f32.mrb[0].mxu0
        %v12163 = vpop.f32.mrb[0].mxu0
        %v12164 = vadd.f32 %v11875, %v12163
        %v12165 = vpop.f32.mrb[0].mxu0
        %12166 = vmatprep.mubr.bf16.mxu0 %v9457
        %12167 = vmatmul.mubr.bf16.gmra.mrb[0].mxu0 %v9225
        %v12168 = vpop.f32.mrb[0].mxu0
        %v12169 = vadd.f32 %v11880, %v12168
        %v12170 = vpop.f32.mrb[0].mxu0
        %v12171 = vpop.f32.mrb[0].mxu0
        %v12172 = vadd.f32 %v11883, %v12171
        %v12173 = vpop.f32.mrb[0].mxu0
        %12174 = vmatprep.mubr.bf16.mxu0 %v9458
        %12175 = vmatmul.mubr.bf16.gmra.mrb[0].mxu0 %v9228
        %v12176 = vpop.f32.mrb[0].mxu0
        %v12177 = vadd.f32 %v11888, %v12176
        %v12178 = vpop.f32.mrb[0].mxu0
        %v12179 = vpop.f32.mrb[0].mxu0
        %v12180 = vadd.f32 %v11891, %v12179
        %v12181 = vpop.f32.mrb[0].mxu0
        %12182 = vmatprep.mubr.bf16.mxu0 %v9459
        %12183 = vmatmul.mubr.bf16.gmra.mrb[0].mxu0 %v9231
        %v12184 = vpop.f32.mrb[0].mxu0
        %v12185 = vadd.f32 %v11896, %v12184
        %v12186 = vpop.f32.mrb[0].mxu0
        %v12187 = vpop.f32.mrb[0].mxu0
        %v12188 = vadd.f32 %v11899, %v12187
        %v12189 = vpop.f32.mrb[0].mxu0
        %12190 = vmatprep.mubr.bf16.mxu0 %v9460
        %12191 = vmatmul.mubr.bf16.gmra.mrb[0].mxu0 %v9234
        %v12192 = vpop.f32.mrb[0].mxu0
        %v12193 = vadd.f32 %v11904, %v12192
        %v12194 = vpop.f32.mrb[0].mxu0
        %v12195 = vpop.f32.mrb[0].mxu0
        %v12196 = vadd.f32 %v11907, %v12195
        %v12197 = vpop.f32.mrb[0].mxu0
        %12198 = vmatprep.mubr.bf16.mxu0 %v9461
        %12199 = vmatmul.mubr.bf16.gmra.mrb[0].mxu0 %v9237
        %v12200 = vpop.f32.mrb[0].mxu0
        %v12201 = vadd.f32 %v11912, %v12200
        %v12202 = vpop.f32.mrb[0].mxu0
        %v12203 = vpop.f32.mrb[0].mxu0
        %v12204 = vadd.f32 %v11915, %v12203
        %v12205 = vpop.f32.mrb[0].mxu0
        %12206 = vmatprep.mubr.bf16.mxu0 %v9462
        %12207 = vmatmul.mubr.bf16.gmra.mrb[0].mxu0 %v9240
        %v12208 = vpop.f32.mrb[0].mxu0
        %v12209 = vadd.f32 %v11920, %v12208
        %v12210 = vpop.f32.mrb[0].mxu0
        %v12211 = vpop.f32.mrb[0].mxu0
        %v12212 = vadd.f32 %v11923, %v12211
        %v12213 = vpop.f32.mrb[0].mxu0
        %12214 = vmatprep.mubr.bf16.mxu0 %v9463
        %12215 = vmatmul.mubr.bf16.gmra.mrb[0].mxu0 %v9243
        %v12216 = vpop.f32.mrb[0].mxu0
        %v12217 = vadd.f32 %v11928, %v12216
        %v12218 = vpop.f32.mrb[0].mxu0
        %v12219 = vpop.f32.mrb[0].mxu0
        %v12220 = vadd.f32 %v11931, %v12219
        %v12221 = vpop.f32.mrb[0].mxu0
        %12222 = vmatprep.mubr.bf16.mxu0 %v9464
        %12223 = vmatmul.mubr.bf16.gmra.mrb[0].mxu0 %v9246
        %v12224 = vpop.f32.mrb[0].mxu0
        %v12225 = vadd.f32 %v11936, %v12224
        %v12226 = vpop.f32.mrb[0].mxu0
        %v12227 = vpop.f32.mrb[0].mxu0
        %v12228 = vadd.f32 %v11939, %v12227
        %v12229 = vpop.f32.mrb[0].mxu0
        %12230 = vmatprep.mubr.bf16.mxu0 %v9465
        %12231 = vmatmul.mubr.bf16.gmra.mrb[0].mxu0 %v9249
        %v12232 = vpop.f32.mrb[0].mxu0
        %v12233 = vadd.f32 %v11944, %v12232
        %v12234 = vpop.f32.mrb[0].mxu0
        %v12235 = vpop.f32.mrb[0].mxu0
        %v12236 = vadd.f32 %v11947, %v12235
        %v12237 = vpop.f32.mrb[0].mxu0
        %12238 = vmatprep.mubr.bf16.mxu0 %v9466
        %12239 = vmatmul.mubr.bf16.gmra.mrb[0].mxu0 %v9252
        %v12240 = vpop.f32.mrb[0].mxu0
        %v12241 = vadd.f32 %v11952, %v12240
        %v12242 = vpop.f32.mrb[0].mxu0
        %v12243 = vpop.f32.mrb[0].mxu0
        %v12244 = vadd.f32 %v11955, %v12243
        %v12245 = vpop.f32.mrb[0].mxu0
        %12246 = vmatprep.mubr.bf16.mxu0 %v9467
        %12247 = vmatmul.mubr.bf16.gmra.mrb[0].mxu0 %v9255
        %v12248 = vpop.f32.mrb[0].mxu0
        %v12249 = vadd.f32 %v11960, %v12248
        %v12250 = vpop.f32.mrb[0].mxu0
        %v12251 = vpop.f32.mrb[0].mxu0
        %v12252 = vadd.f32 %v11963, %v12251
        %v12253 = vpop.f32.mrb[0].mxu0
        %12254 = vmatprep.mubr.bf16.mxu0 %v9468
        %12255 = vmatmul.mubr.bf16.gmra.mrb[0].mxu0 %v9258
        %v12256 = vpop.f32.mrb[0].mxu0
        %v12257 = vadd.f32 %v11968, %v12256
        %v12258 = vpop.f32.mrb[0].mxu0
        %v12259 = vpop.f32.mrb[0].mxu0
        %v12260 = vadd.f32 %v11971, %v12259
        %v12261 = vpop.f32.mrb[0].mxu0
        %12262 = vmatprep.mubr.bf16.mxu0 %v9469
        %12263 = vmatmul.mubr.bf16.gmra.mrb[0].mxu0 %v9261
        %v12264 = vpop.f32.mrb[0].mxu0
        %v12265 = vadd.f32 %v11976, %v12264
        %v12266 = vpop.f32.mrb[0].mxu0
        %v12267 = vpop.f32.mrb[0].mxu0
        %v12268 = vadd.f32 %v11979, %v12267
        %v12269 = vpop.f32.mrb[0].mxu0
        %12270 = vmatprep.mubr.bf16.mxu0 %v9470
        %12271 = vmatmul.mubr.bf16.gmra.mrb[0].mxu0 %v9264
        %v12272 = vpop.f32.mrb[0].mxu0
        %v12273 = vadd.f32 %v11984, %v12272
        %v12274 = vpop.f32.mrb[0].mxu0
        %v12275 = vpop.f32.mrb[0].mxu0
        %v12276 = vadd.f32 %v11987, %v12275
        %v12277 = vpop.f32.mrb[0].mxu0
        %12278 = vmatprep.mubr.bf16.mxu0 %v9471
        %12279 = vmatmul.mubr.bf16.gmra.mrb[0].mxu0 %v9267
        %v12280 = vpop.f32.mrb[0].mxu0
        %v12281 = vadd.f32 %v11992, %v12280
        %v12282 = vpop.f32.mrb[0].mxu0
        %v12283 = vpop.f32.mrb[0].mxu0
        %v12284 = vadd.f32 %v11995, %v12283
        %v12285 = vpop.f32.mrb[0].mxu0
        %12286 = vmatprep.mubr.bf16.mxu0 %v9472
        %12287 = vmatmul.mubr.bf16.gmra.mrb[0].mxu0 %v9270
        %v12288 = vpop.f32.mrb[0].mxu0
        %v12289 = vadd.f32 %v12000, %v12288
        %v12290 = vpop.f32.mrb[0].mxu0
        %v12291 = vpop.f32.mrb[0].mxu0
        %v12292 = vadd.f32 %v12003, %v12291
        %v12293 = vpop.f32.mrb[0].mxu0
        %12294 = vmatprep.mubr.bf16.mxu0 %v9473
        %12295 = vmatmul.mubr.bf16.gmra.mrb[0].mxu0 %v9273
        %v12296 = vpop.f32.mrb[0].mxu0
        %v12297 = vadd.f32 %v12008, %v12296
        %v12298 = vpop.f32.mrb[0].mxu0
        %v12299 = vpop.f32.mrb[0].mxu0
        %v12300 = vadd.f32 %v12011, %v12299
        %v12301 = vpop.f32.mrb[0].mxu0
        %12302 = vmatprep.mubr.bf16.mxu0 %v9474
        %12303 = vmatmul.mubr.bf16.gmra.mrb[0].mxu0 %v9276
        %v12304 = vpop.f32.mrb[0].mxu0
        %v12305 = vadd.f32 %v12016, %v12304
        %v12306 = vpop.f32.mrb[0].mxu0
        %v12307 = vpop.f32.mrb[0].mxu0
        %v12308 = vadd.f32 %v12019, %v12307
        %v12309 = vpop.f32.mrb[0].mxu0
        %12310 = vmatprep.mubr.bf16.mxu0 %v9475
        %12311 = vmatmul.mubr.bf16.gmra.mrb[0].mxu0 %v9279
        %v12312 = vpop.f32.mrb[0].mxu0
        %v12313 = vadd.f32 %v12024, %v12312
        %v12314 = vpop.f32.mrb[0].mxu0
        %v12315 = vpop.f32.mrb[0].mxu0
        %v12316 = vadd.f32 %v12027, %v12315
        %v12317 = vpop.f32.mrb[0].mxu0
        %12318 = vmatprep.mubr.bf16.mxu0 %v9476
        %12319 = vmatmul.mubr.bf16.gmra.mrb[0].mxu0 %v9282
        %v12320 = vpop.f32.mrb[0].mxu0
        %v12321 = vadd.f32 %v12032, %v12320
        %v12322 = vpop.f32.mrb[0].mxu0
        %v12323 = vpop.f32.mrb[0].mxu0
        %v12324 = vadd.f32 %v12035, %v12323
        %v12325 = vpop.f32.mrb[0].mxu0
        %12326 = vmatprep.mubr.bf16.mxu0 %v9477
        %12327 = vmatmul.mubr.bf16.gmra.mrb[0].mxu0 %v9285
        %v12328 = vpop.f32.mrb[0].mxu0
        %v12329 = vadd.f32 %v12040, %v12328
        %v12330 = vpop.f32.mrb[0].mxu0
        %v12331 = vpop.f32.mrb[0].mxu0
        %v12332 = vadd.f32 %v12043, %v12331
        %v12333 = vpop.f32.mrb[0].mxu0
        %12334 = vdwg.mxu0
        %12335 = vmatprep.subr.bf16.mxu0 0
        %12336 = vmatpush1.bf16.msra.mxu0 %v11645
        %12337 = vmatprep.subr.bf16.mxu0 0
        %12338 = vmatpush1.bf16.msra.mxu0 %v11646
        %12339 = vmatprep.subr.bf16.mxu0 0
        %12340 = vmatpush1.bf16.msra.mxu0 %v11647
        %12341 = vmatprep.subr.bf16.mxu0 0
        %12342 = vmatpush1.bf16.msra.mxu0 %v11648
        %12343 = vmatprep.subr.bf16.mxu0 0
        %12344 = vmatpush1.bf16.msra.mxu0 %v11649
        %12345 = vmatprep.subr.bf16.mxu0 0
        %12346 = vmatpush1.bf16.msra.mxu0 %v11650
        %12347 = vmatprep.subr.bf16.mxu0 0
        %12348 = vmatpush1.bf16.msra.mxu0 %v11651
        %12349 = vmatprep.subr.bf16.mxu0 0
        %12350 = vmatpush1.bf16.msra.mxu0 %v11652
        %12351 = vmatprep.subr.bf16.mxu0 0
        %12352 = vmatpush1.bf16.msra.mxu0 %v11653
        %12353 = vmatprep.subr.bf16.mxu0 0
        %12354 = vmatpush1.bf16.msra.mxu0 %v11654
        %12355 = vmatprep.subr.bf16.mxu0 0
        %12356 = vmatpush1.bf16.msra.mxu0 %v11655
        %12357 = vmatprep.subr.bf16.mxu0 0
        %12358 = vmatpush1.bf16.msra.mxu0 %v11656
        %12359 = vmatprep.subr.bf16.mxu0 0
        %12360 = vmatpush1.bf16.msra.mxu0 %v11657
        %12361 = vmatprep.subr.bf16.mxu0 0
        %12362 = vmatpush1.bf16.msra.mxu0 %v11658
        %12363 = vmatprep.subr.bf16.mxu0 0
        %12364 = vmatpush1.bf16.msra.mxu0 %v11659
        %12365 = vmatprep.subr.bf16.mxu0 0
        %12366 = vmatpush1.bf16.msra.mxu0 %v11660
        %12367 = vmatprep.mubr.bf16.mxu0 %v10120
        %12368 = vmatmul.mubr.bf16.gmra.mrb[0].mxu0 %v9617
        %v12369 = vpop.f32.mrb[0].mxu0
        %v12370 = vadd.f32 %v12081, %v12369
        %v12371 = vpop.f32.mrb[0].mxu0
        %v12372 = vpop.f32.mrb[0].mxu0
        %v12373 = vadd.f32 %v12084, %v12372
        %v12374 = vpop.f32.mrb[0].mxu0
        %12375 = vmatprep.mubr.bf16.mxu0 %v10123
        %12376 = vmatmul.mubr.bf16.gmra.mrb[0].mxu0 %v9629
        %v12377 = vpop.f32.mrb[0].mxu0
        %v12378 = vadd.f32 %v12089, %v12377
        %v12379 = vpop.f32.mrb[0].mxu0
        %v12380 = vpop.f32.mrb[0].mxu0
        %v12381 = vadd.f32 %v12092, %v12380
        %v12382 = vpop.f32.mrb[0].mxu0
        %12383 = vmatprep.mubr.bf16.mxu0 %v10126
        %12384 = vmatmul.mubr.bf16.gmra.mrb[0].mxu0 %v9641
        %v12385 = vpop.f32.mrb[0].mxu0
        %v12386 = vadd.f32 %v12097, %v12385
        %v12387 = vpop.f32.mrb[0].mxu0
        %v12388 = vpop.f32.mrb[0].mxu0
        %v12389 = vadd.f32 %v12100, %v12388
        %v12390 = vpop.f32.mrb[0].mxu0
        %12391 = vmatprep.mubr.bf16.mxu0 %v10129
        %12392 = vmatmul.mubr.bf16.gmra.mrb[0].mxu0 %v9653
        %v12393 = vpop.f32.mrb[0].mxu0
        %v12394 = vadd.f32 %v12105, %v12393
        %v12395 = vpop.f32.mrb[0].mxu0
        %v12396 = vpop.f32.mrb[0].mxu0
        %v12397 = vadd.f32 %v12108, %v12396
        %v12398 = vpop.f32.mrb[0].mxu0
        %12399 = vmatprep.mubr.bf16.mxu0 %v10132
        %12400 = vmatmul.mubr.bf16.gmra.mrb[0].mxu0 %v9665
        %v12401 = vpop.f32.mrb[0].mxu0
        %v12402 = vadd.f32 %v12113, %v12401
        %v12403 = vpop.f32.mrb[0].mxu0
        %v12404 = vpop.f32.mrb[0].mxu0
        %v12405 = vadd.f32 %v12116, %v12404
        %v12406 = vpop.f32.mrb[0].mxu0
        %12407 = vmatprep.mubr.bf16.mxu0 %v10135
        %12408 = vmatmul.mubr.bf16.gmra.mrb[0].mxu0 %v9677
        %v12409 = vpop.f32.mrb[0].mxu0
        %v12410 = vadd.f32 %v12121, %v12409
        %v12411 = vpop.f32.mrb[0].mxu0
        %v12412 = vpop.f32.mrb[0].mxu0
        %v12413 = vadd.f32 %v12124, %v12412
        %v12414 = vpop.f32.mrb[0].mxu0
        %12415 = vmatprep.mubr.bf16.mxu0 %v10138
        %12416 = vmatmul.mubr.bf16.gmra.mrb[0].mxu0 %v9689
        %v12417 = vpop.f32.mrb[0].mxu0
        %v12418 = vadd.f32 %v12129, %v12417
        %v12419 = vpop.f32.mrb[0].mxu0
        %v12420 = vpop.f32.mrb[0].mxu0
        %v12421 = vadd.f32 %v12132, %v12420
        %v12422 = vpop.f32.mrb[0].mxu0
        %12423 = vmatprep.mubr.bf16.mxu0 %v10141
        %12424 = vmatmul.mubr.bf16.gmra.mrb[0].mxu0 %v9701
        %v12425 = vpop.f32.mrb[0].mxu0
        %v12426 = vadd.f32 %v12137, %v12425
        %v12427 = vpop.f32.mrb[0].mxu0
        %v12428 = vpop.f32.mrb[0].mxu0
        %v12429 = vadd.f32 %v12140, %v12428
        %v12430 = vpop.f32.mrb[0].mxu0
        %12431 = vmatprep.mubr.bf16.mxu0 %v10144
        %12432 = vmatmul.mubr.bf16.gmra.mrb[0].mxu0 %v9713
        %v12433 = vpop.f32.mrb[0].mxu0
        %v12434 = vadd.f32 %v12145, %v12433
        %v12435 = vpop.f32.mrb[0].mxu0
        %v12436 = vpop.f32.mrb[0].mxu0
        %v12437 = vadd.f32 %v12148, %v12436
        %v12438 = vpop.f32.mrb[0].mxu0
        %12439 = vmatprep.mubr.bf16.mxu0 %v10147
        %12440 = vmatmul.mubr.bf16.gmra.mrb[0].mxu0 %v9725
        %v12441 = vpop.f32.mrb[0].mxu0
        %v12442 = vadd.f32 %v12153, %v12441
        %v12443 = vpop.f32.mrb[0].mxu0
        %v12444 = vpop.f32.mrb[0].mxu0
        %v12445 = vadd.f32 %v12156, %v12444
        %v12446 = vpop.f32.mrb[0].mxu0
        %12447 = vmatprep.mubr.bf16.mxu0 %v10150
        %12448 = vmatmul.mubr.bf16.gmra.mrb[0].mxu0 %v9737
        %v12449 = vpop.f32.mrb[0].mxu0
        %v12450 = vadd.f32 %v12161, %v12449
        %v12451 = vpop.f32.mrb[0].mxu0
        %v12452 = vpop.f32.mrb[0].mxu0
        %v12453 = vadd.f32 %v12164, %v12452
        %v12454 = vpop.f32.mrb[0].mxu0
        %12455 = vmatprep.mubr.bf16.mxu0 %v10153
        %12456 = vmatmul.mubr.bf16.gmra.mrb[0].mxu0 %v9749
        %v12457 = vpop.f32.mrb[0].mxu0
        %v12458 = vadd.f32 %v12169, %v12457
        %v12459 = vpop.f32.mrb[0].mxu0
        %v12460 = vpop.f32.mrb[0].mxu0
        %v12461 = vadd.f32 %v12172, %v12460
        %v12462 = vpop.f32.mrb[0].mxu0
        %12463 = vmatprep.mubr.bf16.mxu0 %v10156
        %12464 = vmatmul.mubr.bf16.gmra.mrb[0].mxu0 %v9761
        %v12465 = vpop.f32.mrb[0].mxu0
        %v12466 = vadd.f32 %v12177, %v12465
        %v12467 = vpop.f32.mrb[0].mxu0
        %v12468 = vpop.f32.mrb[0].mxu0
        %v12469 = vadd.f32 %v12180, %v12468
        %v12470 = vpop.f32.mrb[0].mxu0
        %12471 = vmatprep.mubr.bf16.mxu0 %v10159
        %12472 = vmatmul.mubr.bf16.gmra.mrb[0].mxu0 %v9773
        %v12473 = vpop.f32.mrb[0].mxu0
        %v12474 = vadd.f32 %v12185, %v12473
        %v12475 = vpop.f32.mrb[0].mxu0
        %v12476 = vpop.f32.mrb[0].mxu0
        %v12477 = vadd.f32 %v12188, %v12476
        %v12478 = vpop.f32.mrb[0].mxu0
        %12479 = vmatprep.mubr.bf16.mxu0 %v10162
        %12480 = vmatmul.mubr.bf16.gmra.mrb[0].mxu0 %v9785
        %v12481 = vpop.f32.mrb[0].mxu0
        %v12482 = vadd.f32 %v12193, %v12481
        %v12483 = vpop.f32.mrb[0].mxu0
        %v12484 = vpop.f32.mrb[0].mxu0
        %v12485 = vadd.f32 %v12196, %v12484
        %v12486 = vpop.f32.mrb[0].mxu0
        %12487 = vmatprep.mubr.bf16.mxu0 %v10165
        %12488 = vmatmul.mubr.bf16.gmra.mrb[0].mxu0 %v9797
        %v12489 = vpop.f32.mrb[0].mxu0
        %v12490 = vadd.f32 %v12201, %v12489
        %v12491 = vpop.f32.mrb[0].mxu0
        %v12492 = vpop.f32.mrb[0].mxu0
        %v12493 = vadd.f32 %v12204, %v12492
        %v12494 = vpop.f32.mrb[0].mxu0
        %12495 = vmatprep.mubr.bf16.mxu0 %v10168
        %12496 = vmatmul.mubr.bf16.gmra.mrb[0].mxu0 %v9809
        %v12497 = vpop.f32.mrb[0].mxu0
        %v12498 = vadd.f32 %v12209, %v12497
        %v12499 = vpop.f32.mrb[0].mxu0
        %v12500 = vpop.f32.mrb[0].mxu0
        %v12501 = vadd.f32 %v12212, %v12500
        %v12502 = vpop.f32.mrb[0].mxu0
        %12503 = vmatprep.mubr.bf16.mxu0 %v10171
        %12504 = vmatmul.mubr.bf16.gmra.mrb[0].mxu0 %v9821
        %v12505 = vpop.f32.mrb[0].mxu0
        %v12506 = vadd.f32 %v12217, %v12505
        %v12507 = vpop.f32.mrb[0].mxu0
        %v12508 = vpop.f32.mrb[0].mxu0
        %v12509 = vadd.f32 %v12220, %v12508
        %v12510 = vpop.f32.mrb[0].mxu0
        %12511 = vmatprep.mubr.bf16.mxu0 %v10174
        %12512 = vmatmul.mubr.bf16.gmra.mrb[0].mxu0 %v9833
        %v12513 = vpop.f32.mrb[0].mxu0
        %v12514 = vadd.f32 %v12225, %v12513
        %v12515 = vpop.f32.mrb[0].mxu0
        %v12516 = vpop.f32.mrb[0].mxu0
        %v12517 = vadd.f32 %v12228, %v12516
        %v12518 = vpop.f32.mrb[0].mxu0
        %12519 = vmatprep.mubr.bf16.mxu0 %v10177
        %12520 = vmatmul.mubr.bf16.gmra.mrb[0].mxu0 %v9845
        %v12521 = vpop.f32.mrb[0].mxu0
        %v12522 = vadd.f32 %v12233, %v12521
        %v12523 = vpop.f32.mrb[0].mxu0
        %v12524 = vpop.f32.mrb[0].mxu0
        %v12525 = vadd.f32 %v12236, %v12524
        %v12526 = vpop.f32.mrb[0].mxu0
        %12527 = vmatprep.mubr.bf16.mxu0 %v10180
        %12528 = vmatmul.mubr.bf16.gmra.mrb[0].mxu0 %v9857
        %v12529 = vpop.f32.mrb[0].mxu0
        %v12530 = vadd.f32 %v12241, %v12529
        %v12531 = vpop.f32.mrb[0].mxu0
        %v12532 = vpop.f32.mrb[0].mxu0
        %v12533 = vadd.f32 %v12244, %v12532
        %v12534 = vpop.f32.mrb[0].mxu0
        %12535 = vmatprep.mubr.bf16.mxu0 %v10183
        %12536 = vmatmul.mubr.bf16.gmra.mrb[0].mxu0 %v9869
        %v12537 = vpop.f32.mrb[0].mxu0
        %v12538 = vadd.f32 %v12249, %v12537
        %v12539 = vpop.f32.mrb[0].mxu0
        %v12540 = vpop.f32.mrb[0].mxu0
        %v12541 = vadd.f32 %v12252, %v12540
        %v12542 = vpop.f32.mrb[0].mxu0
        %12543 = vmatprep.mubr.bf16.mxu0 %v10186
        %12544 = vmatmul.mubr.bf16.gmra.mrb[0].mxu0 %v9881
        %v12545 = vpop.f32.mrb[0].mxu0
        %v12546 = vadd.f32 %v12257, %v12545
        %v12547 = vpop.f32.mrb[0].mxu0
        %v12548 = vpop.f32.mrb[0].mxu0
        %v12549 = vadd.f32 %v12260, %v12548
        %v12550 = vpop.f32.mrb[0].mxu0
        %12551 = vmatprep.mubr.bf16.mxu0 %v10189
        %12552 = vmatmul.mubr.bf16.gmra.mrb[0].mxu0 %v9893
        %v12553 = vpop.f32.mrb[0].mxu0
        %v12554 = vadd.f32 %v12265, %v12553
        %v12555 = vpop.f32.mrb[0].mxu0
        %v12556 = vpop.f32.mrb[0].mxu0
        %v12557 = vadd.f32 %v12268, %v12556
        %v12558 = vpop.f32.mrb[0].mxu0
        %12559 = vmatprep.mubr.bf16.mxu0 %v10192
        %12560 = vmatmul.mubr.bf16.gmra.mrb[0].mxu0 %v9905
        %v12561 = vpop.f32.mrb[0].mxu0
        %v12562 = vadd.f32 %v12273, %v12561
        %v12563 = vpop.f32.mrb[0].mxu0
        %v12564 = vpop.f32.mrb[0].mxu0
        %v12565 = vadd.f32 %v12276, %v12564
        %v12566 = vpop.f32.mrb[0].mxu0
        %12567 = vmatprep.mubr.bf16.mxu0 %v10195
        %12568 = vmatmul.mubr.bf16.gmra.mrb[0].mxu0 %v9917
        %v12569 = vpop.f32.mrb[0].mxu0
        %v12570 = vadd.f32 %v12281, %v12569
        %v12571 = vpop.f32.mrb[0].mxu0
        %v12572 = vpop.f32.mrb[0].mxu0
        %v12573 = vadd.f32 %v12284, %v12572
        %v12574 = vpop.f32.mrb[0].mxu0
        %12575 = vmatprep.mubr.bf16.mxu0 %v10198
        %12576 = vmatmul.mubr.bf16.gmra.mrb[0].mxu0 %v9929
        %v12577 = vpop.f32.mrb[0].mxu0
        %v12578 = vadd.f32 %v12289, %v12577
        %v12579 = vpop.f32.mrb[0].mxu0
        %v12580 = vpop.f32.mrb[0].mxu0
        %v12581 = vadd.f32 %v12292, %v12580
        %v12582 = vpop.f32.mrb[0].mxu0
        %12583 = vmatprep.mubr.bf16.mxu0 %v10201
        %12584 = vmatmul.mubr.bf16.gmra.mrb[0].mxu0 %v9941
        %v12585 = vpop.f32.mrb[0].mxu0
        %v12586 = vadd.f32 %v12297, %v12585
        %v12587 = vpop.f32.mrb[0].mxu0
        %v12588 = vpop.f32.mrb[0].mxu0
        %v12589 = vadd.f32 %v12300, %v12588
        %v12590 = vpop.f32.mrb[0].mxu0
        %12591 = vmatprep.mubr.bf16.mxu0 %v10204
        %12592 = vmatmul.mubr.bf16.gmra.mrb[0].mxu0 %v9953
        %v12593 = vpop.f32.mrb[0].mxu0
        %v12594 = vadd.f32 %v12305, %v12593
        %v12595 = vpop.f32.mrb[0].mxu0
        %v12596 = vpop.f32.mrb[0].mxu0
        %v12597 = vadd.f32 %v12308, %v12596
        %v12598 = vpop.f32.mrb[0].mxu0
        %12599 = vmatprep.mubr.bf16.mxu0 %v10207
        %12600 = vmatmul.mubr.bf16.gmra.mrb[0].mxu0 %v9965
        %v12601 = vpop.f32.mrb[0].mxu0
        %v12602 = vadd.f32 %v12313, %v12601
        %v12603 = vpop.f32.mrb[0].mxu0
        %v12604 = vpop.f32.mrb[0].mxu0
        %v12605 = vadd.f32 %v12316, %v12604
        %v12606 = vpop.f32.mrb[0].mxu0
        %12607 = vmatprep.mubr.bf16.mxu0 %v10210
        %12608 = vmatmul.mubr.bf16.gmra.mrb[0].mxu0 %v9977
        %v12609 = vpop.f32.mrb[0].mxu0
        %v12610 = vadd.f32 %v12321, %v12609
        %v12611 = vpop.f32.mrb[0].mxu0
        %v12612 = vpop.f32.mrb[0].mxu0
        %v12613 = vadd.f32 %v12324, %v12612
        %v12614 = vpop.f32.mrb[0].mxu0
        %12615 = vmatprep.mubr.bf16.mxu0 %v10213
        %12616 = vmatmul.mubr.bf16.gmra.mrb[0].mxu0 %v9989
        %v12617 = vpop.f32.mrb[0].mxu0
        %v12618 = vadd.f32 %v12329, %v12617
        %v12619 = vpop.f32.mrb[0].mxu0
        %v12620 = vpop.f32.mrb[0].mxu0
        %v12621 = vadd.f32 %v12332, %v12620
        %v12622 = vpop.f32.mrb[0].mxu0
        %12623 = vdwg.mxu0
        %12624 = vmatprep.subr.bf16.mxu0 0
        %12625 = vmatpush1.bf16.msra.mxu0 %v11661
        %12626 = vmatprep.subr.bf16.mxu0 0
        %12627 = vmatpush1.bf16.msra.mxu0 %v11662
        %12628 = vmatprep.subr.bf16.mxu0 0
        %12629 = vmatpush1.bf16.msra.mxu0 %v11663
        %12630 = vmatprep.subr.bf16.mxu0 0
        %12631 = vmatpush1.bf16.msra.mxu0 %v11664
        %12632 = vmatprep.subr.bf16.mxu0 0
        %12633 = vmatpush1.bf16.msra.mxu0 %v11665
        %12634 = vmatprep.subr.bf16.mxu0 0
        %12635 = vmatpush1.bf16.msra.mxu0 %v11666
        %12636 = vmatprep.subr.bf16.mxu0 0
        %12637 = vmatpush1.bf16.msra.mxu0 %v11667
        %12638 = vmatprep.subr.bf16.mxu0 0
        %12639 = vmatpush1.bf16.msra.mxu0 %v11668
        %12640 = vmatprep.subr.bf16.mxu0 0
        %12641 = vmatpush1.bf16.msra.mxu0 %v11669
        %12642 = vmatprep.subr.bf16.mxu0 0
        %12643 = vmatpush1.bf16.msra.mxu0 %v11670
        %12644 = vmatprep.subr.bf16.mxu0 0
        %12645 = vmatpush1.bf16.msra.mxu0 %v11671
        %12646 = vmatprep.subr.bf16.mxu0 0
        %12647 = vmatpush1.bf16.msra.mxu0 %v11672
        %12648 = vmatprep.subr.bf16.mxu0 0
        %12649 = vmatpush1.bf16.msra.mxu0 %v11673
        %12650 = vmatprep.subr.bf16.mxu0 0
        %12651 = vmatpush1.bf16.msra.mxu0 %v11674
        %12652 = vmatprep.subr.bf16.mxu0 0
        %12653 = vmatpush1.bf16.msra.mxu0 %v11675
        %12654 = vmatprep.subr.bf16.mxu0 0
        %12655 = vmatpush1.bf16.msra.mxu0 %v11676
        %12656 = vmatprep.mubr.bf16.mxu0 %v10545
        %12657 = vmatmul.mubr.bf16.gmra.mrb[0].mxu0 %v10374
        %v12658 = vpop.f32.mrb[0].mxu0
        %v12659 = vadd.f32 %v12370, %v12658
        %v12660 = vpop.f32.mrb[0].mxu0
        %v12661 = vpop.f32.mrb[0].mxu0
        %v12662 = vadd.f32 %v12373, %v12661
        %v12663 = vpop.f32.mrb[0].mxu0
        %12664 = vmatprep.mubr.bf16.mxu0 %v10557
        %12665 = vmatmul.mubr.bf16.gmra.mrb[0].mxu0 %v10375
        %v12666 = vpop.f32.mrb[0].mxu0
        %v12667 = vadd.f32 %v12378, %v12666
        %v12668 = vpop.f32.mrb[0].mxu0
        %v12669 = vpop.f32.mrb[0].mxu0
        %v12670 = vadd.f32 %v12381, %v12669
        %v12671 = vpop.f32.mrb[0].mxu0
        %12672 = vmatprep.mubr.bf16.mxu0 %v10569
        %12673 = vmatmul.mubr.bf16.gmra.mrb[0].mxu0 %v10376
        %v12674 = vpop.f32.mrb[0].mxu0
        %v12675 = vadd.f32 %v12386, %v12674
        %v12676 = vpop.f32.mrb[0].mxu0
        %v12677 = vpop.f32.mrb[0].mxu0
        %v12678 = vadd.f32 %v12389, %v12677
        %v12679 = vpop.f32.mrb[0].mxu0
        %12680 = vmatprep.mubr.bf16.mxu0 %v10581
        %12681 = vmatmul.mubr.bf16.gmra.mrb[0].mxu0 %v10377
        %v12682 = vpop.f32.mrb[0].mxu0
        %v12683 = vadd.f32 %v12394, %v12682
        %v12684 = vpop.f32.mrb[0].mxu0
        %v12685 = vpop.f32.mrb[0].mxu0
        %v12686 = vadd.f32 %v12397, %v12685
        %v12687 = vpop.f32.mrb[0].mxu0
        %12688 = vmatprep.mubr.bf16.mxu0 %v10593
        %12689 = vmatmul.mubr.bf16.gmra.mrb[0].mxu0 %v10378
        %v12690 = vpop.f32.mrb[0].mxu0
        %v12691 = vadd.f32 %v12402, %v12690
        %v12692 = vpop.f32.mrb[0].mxu0
        %v12693 = vpop.f32.mrb[0].mxu0
        %v12694 = vadd.f32 %v12405, %v12693
        %v12695 = vpop.f32.mrb[0].mxu0
        %12696 = vmatprep.mubr.bf16.mxu0 %v10605
        %12697 = vmatmul.mubr.bf16.gmra.mrb[0].mxu0 %v10379
        %v12698 = vpop.f32.mrb[0].mxu0
        %v12699 = vadd.f32 %v12410, %v12698
        %v12700 = vpop.f32.mrb[0].mxu0
        %v12701 = vpop.f32.mrb[0].mxu0
        %v12702 = vadd.f32 %v12413, %v12701
        %v12703 = vpop.f32.mrb[0].mxu0
        %12704 = vmatprep.mubr.bf16.mxu0 %v10617
        %12705 = vmatmul.mubr.bf16.gmra.mrb[0].mxu0 %v10380
        %v12706 = vpop.f32.mrb[0].mxu0
        %v12707 = vadd.f32 %v12418, %v12706
        %v12708 = vpop.f32.mrb[0].mxu0
        %v12709 = vpop.f32.mrb[0].mxu0
        %v12710 = vadd.f32 %v12421, %v12709
        %v12711 = vpop.f32.mrb[0].mxu0
        %12712 = vmatprep.mubr.bf16.mxu0 %v10629
        %12713 = vmatmul.mubr.bf16.gmra.mrb[0].mxu0 %v10381
        %v12714 = vpop.f32.mrb[0].mxu0
        %v12715 = vadd.f32 %v12426, %v12714
        %v12716 = vpop.f32.mrb[0].mxu0
        %v12717 = vpop.f32.mrb[0].mxu0
        %v12718 = vadd.f32 %v12429, %v12717
        %v12719 = vpop.f32.mrb[0].mxu0
        %12720 = vmatprep.mubr.bf16.mxu0 %v10641
        %12721 = vmatmul.mubr.bf16.gmra.mrb[0].mxu0 %v10382
        %v12722 = vpop.f32.mrb[0].mxu0
        %v12723 = vadd.f32 %v12434, %v12722
        %v12724 = vpop.f32.mrb[0].mxu0
        %v12725 = vpop.f32.mrb[0].mxu0
        %v12726 = vadd.f32 %v12437, %v12725
        %v12727 = vpop.f32.mrb[0].mxu0
        %12728 = vmatprep.mubr.bf16.mxu0 %v10653
        %12729 = vmatmul.mubr.bf16.gmra.mrb[0].mxu0 %v10383
        %v12730 = vpop.f32.mrb[0].mxu0
        %v12731 = vadd.f32 %v12442, %v12730
        %v12732 = vpop.f32.mrb[0].mxu0
        %v12733 = vpop.f32.mrb[0].mxu0
        %v12734 = vadd.f32 %v12445, %v12733
        %v12735 = vpop.f32.mrb[0].mxu0
        %12736 = vmatprep.mubr.bf16.mxu0 %v10665
        %12737 = vmatmul.mubr.bf16.gmra.mrb[0].mxu0 %v10384
        %v12738 = vpop.f32.mrb[0].mxu0
        %v12739 = vadd.f32 %v12450, %v12738
        %v12740 = vpop.f32.mrb[0].mxu0
        %v12741 = vpop.f32.mrb[0].mxu0
        %v12742 = vadd.f32 %v12453, %v12741
        %v12743 = vpop.f32.mrb[0].mxu0
        %12744 = vmatprep.mubr.bf16.mxu0 %v10677
        %12745 = vmatmul.mubr.bf16.gmra.mrb[0].mxu0 %v10385
        %v12746 = vpop.f32.mrb[0].mxu0
        %v12747 = vadd.f32 %v12458, %v12746
        %v12748 = vpop.f32.mrb[0].mxu0
        %v12749 = vpop.f32.mrb[0].mxu0
        %v12750 = vadd.f32 %v12461, %v12749
        %v12751 = vpop.f32.mrb[0].mxu0
        %12752 = vmatprep.mubr.bf16.mxu0 %v10689
        %12753 = vmatmul.mubr.bf16.gmra.mrb[0].mxu0 %v10386
        %v12754 = vpop.f32.mrb[0].mxu0
        %v12755 = vadd.f32 %v12466, %v12754
        %v12756 = vpop.f32.mrb[0].mxu0
        %v12757 = vpop.f32.mrb[0].mxu0
        %v12758 = vadd.f32 %v12469, %v12757
        %v12759 = vpop.f32.mrb[0].mxu0
        %12760 = vmatprep.mubr.bf16.mxu0 %v10701
        %12761 = vmatmul.mubr.bf16.gmra.mrb[0].mxu0 %v10387
        %v12762 = vpop.f32.mrb[0].mxu0
        %v12763 = vadd.f32 %v12474, %v12762
        %v12764 = vpop.f32.mrb[0].mxu0
        %v12765 = vpop.f32.mrb[0].mxu0
        %v12766 = vadd.f32 %v12477, %v12765
        %v12767 = vpop.f32.mrb[0].mxu0
        %12768 = vmatprep.mubr.bf16.mxu0 %v10713
        %12769 = vmatmul.mubr.bf16.gmra.mrb[0].mxu0 %v10388
        %v12770 = vpop.f32.mrb[0].mxu0
        %v12771 = vadd.f32 %v12482, %v12770
        %v12772 = vpop.f32.mrb[0].mxu0
        %v12773 = vpop.f32.mrb[0].mxu0
        %v12774 = vadd.f32 %v12485, %v12773
        %v12775 = vpop.f32.mrb[0].mxu0
        %12776 = vmatprep.mubr.bf16.mxu0 %v10725
        %12777 = vmatmul.mubr.bf16.gmra.mrb[0].mxu0 %v10389
        %v12778 = vpop.f32.mrb[0].mxu0
        %v12779 = vadd.f32 %v12490, %v12778
        %v12780 = vpop.f32.mrb[0].mxu0
        %v12781 = vpop.f32.mrb[0].mxu0
        %v12782 = vadd.f32 %v12493, %v12781
        %v12783 = vpop.f32.mrb[0].mxu0
        %12784 = vmatprep.mubr.bf16.mxu0 %v10737
        %12785 = vmatmul.mubr.bf16.gmra.mrb[0].mxu0 %v10390
        %v12786 = vpop.f32.mrb[0].mxu0
        %v12787 = vadd.f32 %v12498, %v12786
        %v12788 = vpop.f32.mrb[0].mxu0
        %v12789 = vpop.f32.mrb[0].mxu0
        %v12790 = vadd.f32 %v12501, %v12789
        %v12791 = vpop.f32.mrb[0].mxu0
        %12792 = vmatprep.mubr.bf16.mxu0 %v10749
        %12793 = vmatmul.mubr.bf16.gmra.mrb[0].mxu0 %v10391
        %v12794 = vpop.f32.mrb[0].mxu0
        %v12795 = vadd.f32 %v12506, %v12794
        %v12796 = vpop.f32.mrb[0].mxu0
        %v12797 = vpop.f32.mrb[0].mxu0
        %v12798 = vadd.f32 %v12509, %v12797
        %v12799 = vpop.f32.mrb[0].mxu0
        %12800 = vmatprep.mubr.bf16.mxu0 %v10761
        %12801 = vmatmul.mubr.bf16.gmra.mrb[0].mxu0 %v10392
        %v12802 = vpop.f32.mrb[0].mxu0
        %v12803 = vadd.f32 %v12514, %v12802
        %v12804 = vpop.f32.mrb[0].mxu0
        %v12805 = vpop.f32.mrb[0].mxu0
        %v12806 = vadd.f32 %v12517, %v12805
        %v12807 = vpop.f32.mrb[0].mxu0
        %12808 = vmatprep.mubr.bf16.mxu0 %v10773
        %12809 = vmatmul.mubr.bf16.gmra.mrb[0].mxu0 %v10393
        %v12810 = vpop.f32.mrb[0].mxu0
        %v12811 = vadd.f32 %v12522, %v12810
        %v12812 = vpop.f32.mrb[0].mxu0
        %v12813 = vpop.f32.mrb[0].mxu0
        %v12814 = vadd.f32 %v12525, %v12813
        %v12815 = vpop.f32.mrb[0].mxu0
        %12816 = vmatprep.mubr.bf16.mxu0 %v10785
        %12817 = vmatmul.mubr.bf16.gmra.mrb[0].mxu0 %v10394
        %v12818 = vpop.f32.mrb[0].mxu0
        %v12819 = vadd.f32 %v12530, %v12818
        %v12820 = vpop.f32.mrb[0].mxu0
        %v12821 = vpop.f32.mrb[0].mxu0
        %v12822 = vadd.f32 %v12533, %v12821
        %v12823 = vpop.f32.mrb[0].mxu0
        %12824 = vmatprep.mubr.bf16.mxu0 %v10797
        %12825 = vmatmul.mubr.bf16.gmra.mrb[0].mxu0 %v10395
        %v12826 = vpop.f32.mrb[0].mxu0
        %v12827 = vadd.f32 %v12538, %v12826
        %v12828 = vpop.f32.mrb[0].mxu0
        %v12829 = vpop.f32.mrb[0].mxu0
        %v12830 = vadd.f32 %v12541, %v12829
        %v12831 = vpop.f32.mrb[0].mxu0
        %12832 = vmatprep.mubr.bf16.mxu0 %v10809
        %12833 = vmatmul.mubr.bf16.gmra.mrb[0].mxu0 %v10396
        %v12834 = vpop.f32.mrb[0].mxu0
        %v12835 = vadd.f32 %v12546, %v12834
        %v12836 = vpop.f32.mrb[0].mxu0
        %v12837 = vpop.f32.mrb[0].mxu0
        %v12838 = vadd.f32 %v12549, %v12837
        %v12839 = vpop.f32.mrb[0].mxu0
        %12840 = vmatprep.mubr.bf16.mxu0 %v10821
        %12841 = vmatmul.mubr.bf16.gmra.mrb[0].mxu0 %v10397
        %v12842 = vpop.f32.mrb[0].mxu0
        %v12843 = vadd.f32 %v12554, %v12842
        %v12844 = vpop.f32.mrb[0].mxu0
        %v12845 = vpop.f32.mrb[0].mxu0
        %v12846 = vadd.f32 %v12557, %v12845
        %v12847 = vpop.f32.mrb[0].mxu0
        %12848 = vmatprep.mubr.bf16.mxu0 %v10833
        %12849 = vmatmul.mubr.bf16.gmra.mrb[0].mxu0 %v10398
        %v12850 = vpop.f32.mrb[0].mxu0
        %v12851 = vadd.f32 %v12562, %v12850
        %v12852 = vpop.f32.mrb[0].mxu0
        %v12853 = vpop.f32.mrb[0].mxu0
        %v12854 = vadd.f32 %v12565, %v12853
        %v12855 = vpop.f32.mrb[0].mxu0
        %12856 = vmatprep.mubr.bf16.mxu0 %v10845
        %12857 = vmatmul.mubr.bf16.gmra.mrb[0].mxu0 %v10399
        %v12858 = vpop.f32.mrb[0].mxu0
        %v12859 = vadd.f32 %v12570, %v12858
        %v12860 = vpop.f32.mrb[0].mxu0
        %v12861 = vpop.f32.mrb[0].mxu0
        %v12862 = vadd.f32 %v12573, %v12861
        %v12863 = vpop.f32.mrb[0].mxu0
        %12864 = vmatprep.mubr.bf16.mxu0 %v10857
        %12865 = vmatmul.mubr.bf16.gmra.mrb[0].mxu0 %v10400
        %v12866 = vpop.f32.mrb[0].mxu0
        %v12867 = vadd.f32 %v12578, %v12866
        %v12868 = vpop.f32.mrb[0].mxu0
        %v12869 = vpop.f32.mrb[0].mxu0
        %v12870 = vadd.f32 %v12581, %v12869
        %v12871 = vpop.f32.mrb[0].mxu0
        %12872 = vmatprep.mubr.bf16.mxu0 %v10869
        %12873 = vmatmul.mubr.bf16.gmra.mrb[0].mxu0 %v10401
        %v12874 = vpop.f32.mrb[0].mxu0
        %v12875 = vadd.f32 %v12586, %v12874
        %v12876 = vpop.f32.mrb[0].mxu0
        %v12877 = vpop.f32.mrb[0].mxu0
        %v12878 = vadd.f32 %v12589, %v12877
        %v12879 = vpop.f32.mrb[0].mxu0
        %12880 = vmatprep.mubr.bf16.mxu0 %v10881
        %12881 = vmatmul.mubr.bf16.gmra.mrb[0].mxu0 %v10402
        %v12882 = vpop.f32.mrb[0].mxu0
        %v12883 = vadd.f32 %v12594, %v12882
        %v12884 = vpop.f32.mrb[0].mxu0
        %v12885 = vpop.f32.mrb[0].mxu0
        %v12886 = vadd.f32 %v12597, %v12885
        %v12887 = vpop.f32.mrb[0].mxu0
        %12888 = vmatprep.mubr.bf16.mxu0 %v10893
        %12889 = vmatmul.mubr.bf16.gmra.mrb[0].mxu0 %v10403
        %v12890 = vpop.f32.mrb[0].mxu0
        %v12891 = vadd.f32 %v12602, %v12890
        %v12892 = vpop.f32.mrb[0].mxu0
        %v12893 = vpop.f32.mrb[0].mxu0
        %v12894 = vadd.f32 %v12605, %v12893
        %v12895 = vpop.f32.mrb[0].mxu0
        %12896 = vmatprep.mubr.bf16.mxu0 %v10905
        %12897 = vmatmul.mubr.bf16.gmra.mrb[0].mxu0 %v10404
        %v12898 = vpop.f32.mrb[0].mxu0
        %v12899 = vadd.f32 %v12610, %v12898
        %v12900 = vpop.f32.mrb[0].mxu0
        %v12901 = vpop.f32.mrb[0].mxu0
        %v12902 = vadd.f32 %v12613, %v12901
        %v12903 = vpop.f32.mrb[0].mxu0
        %12904 = vmatprep.mubr.bf16.mxu0 %v10917
        %12905 = vmatmul.mubr.bf16.gmra.mrb[0].mxu0 %v10405
        %v12906 = vpop.f32.mrb[0].mxu0
        %v12907 = vadd.f32 %v12618, %v12906
        %v12908 = vpop.f32.mrb[0].mxu0
        %v12909 = vpop.f32.mrb[0].mxu0
        %v12910 = vadd.f32 %v12621, %v12909
        %v12911 = vpop.f32.mrb[0].mxu0
        %12912 = vdwg.mxu0
        %12913 = vmatprep.subr.bf16.mxu0 0
        %12914 = vmatpush1.bf16.msra.mxu0 %v11677
        %12915 = vmatprep.subr.bf16.mxu0 0
        %12916 = vmatpush1.bf16.msra.mxu0 %v11678
        %12917 = vmatprep.subr.bf16.mxu0 0
        %12918 = vmatpush1.bf16.msra.mxu0 %v11679
        %12919 = vmatprep.subr.bf16.mxu0 0
        %12920 = vmatpush1.bf16.msra.mxu0 %v11680
        %12921 = vmatprep.subr.bf16.mxu0 0
        %12922 = vmatpush1.bf16.msra.mxu0 %v11681
        %12923 = vmatprep.subr.bf16.mxu0 0
        %12924 = vmatpush1.bf16.msra.mxu0 %v11682
        %12925 = vmatprep.subr.bf16.mxu0 0
        %12926 = vmatpush1.bf16.msra.mxu0 %v11683
        %12927 = vmatprep.subr.bf16.mxu0 0
        %12928 = vmatpush1.bf16.msra.mxu0 %v11684
        %12929 = vmatprep.subr.bf16.mxu0 0
        %12930 = vmatpush1.bf16.msra.mxu0 0
        %12931 = vmatprep.subr.bf16.mxu0 0
        %12932 = vmatpush1.bf16.msra.mxu0 0
        %12933 = vmatprep.subr.bf16.mxu0 0
        %12934 = vmatpush1.bf16.msra.mxu0 0
        %12935 = vmatprep.subr.bf16.mxu0 0
        %12936 = vmatpush1.bf16.msra.mxu0 0
        %12937 = vmatprep.subr.bf16.mxu0 0
        %12938 = vmatpush1.bf16.msra.mxu0 0
        %12939 = vmatprep.subr.bf16.mxu0 0
        %12940 = vmatpush1.bf16.msra.mxu0 0
        %12941 = vmatprep.subr.bf16.mxu0 0
        %12942 = vmatpush1.bf16.msra.mxu0 0
        %12943 = vmatprep.subr.bf16.mxu0 0
        %12944 = vmatpush1.bf16.msra.mxu0 0
        %12945 = vmatprep.mubr.bf16.mxu0 0
        %12946 = vmatmul.mubr.bf16.gmra.mrb[0].mxu0 %v11048
        %v12947 = vpop.f32.mrb[0].mxu0
        %v12948 = vadd.f32 %v12659, %v12947
        %v12949 = vpop.f32.mrb[0].mxu0
        %v12950 = vpop.f32.mrb[0].mxu0
        %v12951 = vadd.f32 %v12662, %v12950
        %v12952 = vpop.f32.mrb[0].mxu0
        %12953 = vmatprep.mubr.bf16.mxu0 0
        %12954 = vmatmul.mubr.bf16.gmra.mrb[0].mxu0 %v11051
        %v12955 = vpop.f32.mrb[0].mxu0
        %v12956 = vadd.f32 %v12667, %v12955
        %v12957 = vpop.f32.mrb[0].mxu0
        %v12958 = vpop.f32.mrb[0].mxu0
        %v12959 = vadd.f32 %v12670, %v12958
        %v12960 = vpop.f32.mrb[0].mxu0
        %12961 = vmatprep.mubr.bf16.mxu0 0
        %12962 = vmatmul.mubr.bf16.gmra.mrb[0].mxu0 %v11054
        %v12963 = vpop.f32.mrb[0].mxu0
        %v12964 = vadd.f32 %v12675, %v12963
        %v12965 = vpop.f32.mrb[0].mxu0
        %v12966 = vpop.f32.mrb[0].mxu0
        %v12967 = vadd.f32 %v12678, %v12966
        %v12968 = vpop.f32.mrb[0].mxu0
        %12969 = vmatprep.mubr.bf16.mxu0 0
        %12970 = vmatmul.mubr.bf16.gmra.mrb[0].mxu0 %v11057
        %v12971 = vpop.f32.mrb[0].mxu0
        %v12972 = vadd.f32 %v12683, %v12971
        %v12973 = vpop.f32.mrb[0].mxu0
        %v12974 = vpop.f32.mrb[0].mxu0
        %v12975 = vadd.f32 %v12686, %v12974
        %v12976 = vpop.f32.mrb[0].mxu0
        %12977 = vmatprep.mubr.bf16.mxu0 0
        %12978 = vmatmul.mubr.bf16.gmra.mrb[0].mxu0 %v11060
        %v12979 = vpop.f32.mrb[0].mxu0
        %v12980 = vadd.f32 %v12691, %v12979
        %v12981 = vpop.f32.mrb[0].mxu0
        %v12982 = vpop.f32.mrb[0].mxu0
        %v12983 = vadd.f32 %v12694, %v12982
        %v12984 = vpop.f32.mrb[0].mxu0
        %12985 = vmatprep.mubr.bf16.mxu0 0
        %12986 = vmatmul.mubr.bf16.gmra.mrb[0].mxu0 %v11063
        %v12987 = vpop.f32.mrb[0].mxu0
        %v12988 = vadd.f32 %v12699, %v12987
        %v12989 = vpop.f32.mrb[0].mxu0
        %v12990 = vpop.f32.mrb[0].mxu0
        %v12991 = vadd.f32 %v12702, %v12990
        %v12992 = vpop.f32.mrb[0].mxu0
        %12993 = vmatprep.mubr.bf16.mxu0 0
        %12994 = vmatmul.mubr.bf16.gmra.mrb[0].mxu0 %v11066
        %v12995 = vpop.f32.mrb[0].mxu0
        %v12996 = vadd.f32 %v12707, %v12995
        %v12997 = vpop.f32.mrb[0].mxu0
        %v12998 = vpop.f32.mrb[0].mxu0
        %v12999 = vadd.f32 %v12710, %v12998
        %v13000 = vpop.f32.mrb[0].mxu0
        %13001 = vmatprep.mubr.bf16.mxu0 0
        %13002 = vmatmul.mubr.bf16.gmra.mrb[0].mxu0 %v11069
        %v13003 = vpop.f32.mrb[0].mxu0
        %v13004 = vadd.f32 %v12715, %v13003
        %v13005 = vpop.f32.mrb[0].mxu0
        %v13006 = vpop.f32.mrb[0].mxu0
        %v13007 = vadd.f32 %v12718, %v13006
        %v13008 = vpop.f32.mrb[0].mxu0
        %13009 = vmatprep.mubr.bf16.mxu0 0
        %13010 = vmatmul.mubr.bf16.gmra.mrb[0].mxu0 %v11072
        %v13011 = vpop.f32.mrb[0].mxu0
        %v13012 = vadd.f32 %v12723, %v13011
        %v13013 = vpop.f32.mrb[0].mxu0
        %v13014 = vpop.f32.mrb[0].mxu0
        %v13015 = vadd.f32 %v12726, %v13014
        %v13016 = vpop.f32.mrb[0].mxu0
        %13017 = vmatprep.mubr.bf16.mxu0 0
        %13018 = vmatmul.mubr.bf16.gmra.mrb[0].mxu0 %v11075
        %v13019 = vpop.f32.mrb[0].mxu0
        %v13020 = vadd.f32 %v12731, %v13019
        %v13021 = vpop.f32.mrb[0].mxu0
        %v13022 = vpop.f32.mrb[0].mxu0
        %v13023 = vadd.f32 %v12734, %v13022
        %v13024 = vpop.f32.mrb[0].mxu0
        %13025 = vmatprep.mubr.bf16.mxu0 0
        %13026 = vmatmul.mubr.bf16.gmra.mrb[0].mxu0 %v11078
        %v13027 = vpop.f32.mrb[0].mxu0
        %v13028 = vadd.f32 %v12739, %v13027
        %v13029 = vpop.f32.mrb[0].mxu0
        %v13030 = vpop.f32.mrb[0].mxu0
        %v13031 = vadd.f32 %v12742, %v13030
        %v13032 = vpop.f32.mrb[0].mxu0
        %13033 = vmatprep.mubr.bf16.mxu0 0
        %13034 = vmatmul.mubr.bf16.gmra.mrb[0].mxu0 %v11081
        %v13035 = vpop.f32.mrb[0].mxu0
        %v13036 = vadd.f32 %v12747, %v13035
        %v13037 = vpop.f32.mrb[0].mxu0
        %v13038 = vpop.f32.mrb[0].mxu0
        %v13039 = vadd.f32 %v12750, %v13038
        %v13040 = vpop.f32.mrb[0].mxu0
        %13041 = vmatprep.mubr.bf16.mxu0 0
        %13042 = vmatmul.mubr.bf16.gmra.mrb[0].mxu0 %v11084
        %v13043 = vpop.f32.mrb[0].mxu0
        %v13044 = vadd.f32 %v12755, %v13043
        %v13045 = vpop.f32.mrb[0].mxu0
        %v13046 = vpop.f32.mrb[0].mxu0
        %v13047 = vadd.f32 %v12758, %v13046
        %v13048 = vpop.f32.mrb[0].mxu0
        %13049 = vmatprep.mubr.bf16.mxu0 0
        %13050 = vmatmul.mubr.bf16.gmra.mrb[0].mxu0 %v11087
        %v13051 = vpop.f32.mrb[0].mxu0
        %v13052 = vadd.f32 %v12763, %v13051
        %v13053 = vpop.f32.mrb[0].mxu0
        %v13054 = vpop.f32.mrb[0].mxu0
        %v13055 = vadd.f32 %v12766, %v13054
        %v13056 = vpop.f32.mrb[0].mxu0
        %13057 = vmatprep.mubr.bf16.mxu0 0
        %13058 = vmatmul.mubr.bf16.gmra.mrb[0].mxu0 %v11090
        %v13059 = vpop.f32.mrb[0].mxu0
        %v13060 = vadd.f32 %v12771, %v13059
        %v13061 = vpop.f32.mrb[0].mxu0
        %v13062 = vpop.f32.mrb[0].mxu0
        %v13063 = vadd.f32 %v12774, %v13062
        %v13064 = vpop.f32.mrb[0].mxu0
        %13065 = vmatprep.mubr.bf16.mxu0 0
        %13066 = vmatmul.mubr.bf16.gmra.mrb[0].mxu0 %v11093
        %v13067 = vpop.f32.mrb[0].mxu0
        %v13068 = vadd.f32 %v12779, %v13067
        %v13069 = vpop.f32.mrb[0].mxu0
        %v13070 = vpop.f32.mrb[0].mxu0
        %v13071 = vadd.f32 %v12782, %v13070
        %v13072 = vpop.f32.mrb[0].mxu0
        %13073 = vmatprep.mubr.bf16.mxu0 0
        %13074 = vmatmul.mubr.bf16.gmra.mrb[0].mxu0 %v11096
        %v13075 = vpop.f32.mrb[0].mxu0
        %v13076 = vadd.f32 %v12787, %v13075
        %v13077 = vpop.f32.mrb[0].mxu0
        %v13078 = vpop.f32.mrb[0].mxu0
        %v13079 = vadd.f32 %v12790, %v13078
        %v13080 = vpop.f32.mrb[0].mxu0
        %13081 = vmatprep.mubr.bf16.mxu0 0
        %13082 = vmatmul.mubr.bf16.gmra.mrb[0].mxu0 %v11099
        %v13083 = vpop.f32.mrb[0].mxu0
        %v13084 = vadd.f32 %v12795, %v13083
        %v13085 = vpop.f32.mrb[0].mxu0
        %v13086 = vpop.f32.mrb[0].mxu0
        %v13087 = vadd.f32 %v12798, %v13086
        %v13088 = vpop.f32.mrb[0].mxu0
        %13089 = vmatprep.mubr.bf16.mxu0 0
        %13090 = vmatmul.mubr.bf16.gmra.mrb[0].mxu0 %v11102
        %v13091 = vpop.f32.mrb[0].mxu0
        %v13092 = vadd.f32 %v12803, %v13091
        %v13093 = vpop.f32.mrb[0].mxu0
        %v13094 = vpop.f32.mrb[0].mxu0
        %v13095 = vadd.f32 %v12806, %v13094
        %v13096 = vpop.f32.mrb[0].mxu0
        %13097 = vmatprep.mubr.bf16.mxu0 0
        %13098 = vmatmul.mubr.bf16.gmra.mrb[0].mxu0 %v11105
        %v13099 = vpop.f32.mrb[0].mxu0
        %v13100 = vadd.f32 %v12811, %v13099
        %v13101 = vpop.f32.mrb[0].mxu0
        %v13102 = vpop.f32.mrb[0].mxu0
        %v13103 = vadd.f32 %v12814, %v13102
        %v13104 = vpop.f32.mrb[0].mxu0
        %13105 = vmatprep.mubr.bf16.mxu0 0
        %13106 = vmatmul.mubr.bf16.gmra.mrb[0].mxu0 %v11108
        %v13107 = vpop.f32.mrb[0].mxu0
        %v13108 = vadd.f32 %v12819, %v13107
        %v13109 = vpop.f32.mrb[0].mxu0
        %v13110 = vpop.f32.mrb[0].mxu0
        %v13111 = vadd.f32 %v12822, %v13110
        %v13112 = vpop.f32.mrb[0].mxu0
        %13113 = vmatprep.mubr.bf16.mxu0 0
        %13114 = vmatmul.mubr.bf16.gmra.mrb[0].mxu0 %v11111
        %v13115 = vpop.f32.mrb[0].mxu0
        %v13116 = vadd.f32 %v12827, %v13115
        %v13117 = vpop.f32.mrb[0].mxu0
        %v13118 = vpop.f32.mrb[0].mxu0
        %v13119 = vadd.f32 %v12830, %v13118
        %v13120 = vpop.f32.mrb[0].mxu0
        %13121 = vmatprep.mubr.bf16.mxu0 0
        %13122 = vmatmul.mubr.bf16.gmra.mrb[0].mxu0 %v11114
        %v13123 = vpop.f32.mrb[0].mxu0
        %v13124 = vadd.f32 %v12835, %v13123
        %v13125 = vpop.f32.mrb[0].mxu0
        %v13126 = vpop.f32.mrb[0].mxu0
        %v13127 = vadd.f32 %v12838, %v13126
        %v13128 = vpop.f32.mrb[0].mxu0
        %13129 = vmatprep.mubr.bf16.mxu0 0
        %13130 = vmatmul.mubr.bf16.gmra.mrb[0].mxu0 %v11117
        %v13131 = vpop.f32.mrb[0].mxu0
        %v13132 = vadd.f32 %v12843, %v13131
        %v13133 = vpop.f32.mrb[0].mxu0
        %v13134 = vpop.f32.mrb[0].mxu0
        %v13135 = vadd.f32 %v12846, %v13134
        %v13136 = vpop.f32.mrb[0].mxu0
        %13137 = vmatprep.mubr.bf16.mxu0 0
        %13138 = vmatmul.mubr.bf16.gmra.mrb[0].mxu0 %v11120
        %v13139 = vpop.f32.mrb[0].mxu0
        %v13140 = vadd.f32 %v12851, %v13139
        %v13141 = vpop.f32.mrb[0].mxu0
        %v13142 = vpop.f32.mrb[0].mxu0
        %v13143 = vadd.f32 %v12854, %v13142
        %v13144 = vpop.f32.mrb[0].mxu0
        %13145 = vmatprep.mubr.bf16.mxu0 0
        %13146 = vmatmul.mubr.bf16.gmra.mrb[0].mxu0 %v11123
        %v13147 = vpop.f32.mrb[0].mxu0
        %v13148 = vadd.f32 %v12859, %v13147
        %v13149 = vpop.f32.mrb[0].mxu0
        %v13150 = vpop.f32.mrb[0].mxu0
        %v13151 = vadd.f32 %v12862, %v13150
        %v13152 = vpop.f32.mrb[0].mxu0
        %13153 = vmatprep.mubr.bf16.mxu0 0
        %13154 = vmatmul.mubr.bf16.gmra.mrb[0].mxu0 %v11126
        %v13155 = vpop.f32.mrb[0].mxu0
        %v13156 = vadd.f32 %v12867, %v13155
        %v13157 = vpop.f32.mrb[0].mxu0
        %v13158 = vpop.f32.mrb[0].mxu0
        %v13159 = vadd.f32 %v12870, %v13158
        %v13160 = vpop.f32.mrb[0].mxu0
        %13161 = vmatprep.mubr.bf16.mxu0 0
        %13162 = vmatmul.mubr.bf16.gmra.mrb[0].mxu0 %v11129
        %v13163 = vpop.f32.mrb[0].mxu0
        %v13164 = vadd.f32 %v12875, %v13163
        %v13165 = vpop.f32.mrb[0].mxu0
        %v13166 = vpop.f32.mrb[0].mxu0
        %v13167 = vadd.f32 %v12878, %v13166
        %v13168 = vpop.f32.mrb[0].mxu0
        %13169 = vmatprep.mubr.bf16.mxu0 0
        %13170 = vmatmul.mubr.bf16.gmra.mrb[0].mxu0 %v11132
        %v13171 = vpop.f32.mrb[0].mxu0
        %v13172 = vadd.f32 %v12883, %v13171
        %v13173 = vpop.f32.mrb[0].mxu0
        %v13174 = vpop.f32.mrb[0].mxu0
        %v13175 = vadd.f32 %v12886, %v13174
        %v13176 = vpop.f32.mrb[0].mxu0
        %13177 = vmatprep.mubr.bf16.mxu0 0
        %13178 = vmatmul.mubr.bf16.gmra.mrb[0].mxu0 %v11135
        %v13179 = vpop.f32.mrb[0].mxu0
        %v13180 = vadd.f32 %v12891, %v13179
        %v13181 = vpop.f32.mrb[0].mxu0
        %v13182 = vpop.f32.mrb[0].mxu0
        %v13183 = vadd.f32 %v12894, %v13182
        %v13184 = vpop.f32.mrb[0].mxu0
        %13185 = vmatprep.mubr.bf16.mxu0 0
        %13186 = vmatmul.mubr.bf16.gmra.mrb[0].mxu0 %v11138
        %v13187 = vpop.f32.mrb[0].mxu0
        %v13188 = vadd.f32 %v12899, %v13187
        %v13189 = vpop.f32.mrb[0].mxu0
        %v13190 = vpop.f32.mrb[0].mxu0
        %v13191 = vadd.f32 %v12902, %v13190
        %v13192 = vpop.f32.mrb[0].mxu0
        %13193 = vmatprep.mubr.bf16.mxu0 0
        %13194 = vmatmul.mubr.bf16.gmra.mrb[0].mxu0 %v11141
        %v13195 = vpop.f32.mrb[0].mxu0
        %v13196 = vadd.f32 %v12907, %v13195
        %v13197 = vpop.f32.mrb[0].mxu0
        %v13198 = vpop.f32.mrb[0].mxu0
        %v13199 = vadd.f32 %v12910, %v13198
        %v13200 = vpop.f32.mrb[0].mxu0
        %13201 = vdwg.mxu0
        %v13202 = vld [vmem:[%s238] sm:$0xff]
        %v13203 = vld [vmem:[%s238 + $0x8] sm:$0xff]
        %v13204 = vld [vmem:[%s238 + $0x10] sm:$0xff]
        %v13205 = vld [vmem:[%s238 + $0x18] sm:$0xff]
        %v13206 = vld [vmem:[%s238 + $0x20] sm:$0xff]
        %v13207 = vld [vmem:[%s238 + $0x28] sm:$0xff]
        %v13208 = vld [vmem:[%s238 + $0x30] sm:$0xff]
        %v13209 = vld [vmem:[%s238 + $0x38] sm:$0xff]
        %v13210 = vld [vmem:[%s238 + $0x40] sm:$0xff]
        %v13211 = vld [vmem:[%s238 + $0x48] sm:$0xff]
        %v13212 = vld [vmem:[%s238 + $0x50] sm:$0xff]
        %v13213 = vld [vmem:[%s238 + $0x58] sm:$0xff]
        %v13214 = vld [vmem:[%s238 + $0x60] sm:$0xff]
        %v13215 = vld [vmem:[%s238 + $0x68] sm:$0xff]
        %v13216 = vld [vmem:[%s238 + $0x70] sm:$0xff]
        %v13217 = vld [vmem:[%s238 + $0x78] sm:$0xff]
        %v13218 = vld [vmem:[%s238 + $0x80] sm:$0xff]
        %v13219 = vld [vmem:[%s238 + $0x88] sm:$0xff]
        %v13220 = vld [vmem:[%s238 + $0x90] sm:$0xff]
        %v13221 = vld [vmem:[%s238 + $0x98] sm:$0xff]
        %v13222 = vld [vmem:[%s238 + $0xa0] sm:$0xff]
        %v13223 = vld [vmem:[%s238 + $0xa8] sm:$0xff]
        %v13224 = vld [vmem:[%s238 + $0xb0] sm:$0xff]
        %v13225 = vld [vmem:[%s238 + $0xb8] sm:$0xff]
        %v13226 = vld [vmem:[%s238 + $0xc0] sm:$0xff]
        %v13227 = vld [vmem:[%s238 + $0xc8] sm:$0xff]
        %v13228 = vld [vmem:[%s238 + $0xd0] sm:$0xff]
        %v13229 = vld [vmem:[%s238 + $0xd8] sm:$0xff]
        %v13230 = vld [vmem:[%s238 + $0xe0] sm:$0xff]
        %v13231 = vld [vmem:[%s238 + $0xe8] sm:$0xff]
        %v13232 = vld [vmem:[%s238 + $0xf0] sm:$0xff]
        %v13233 = vld [vmem:[%s238 + $0xf8] sm:$0xff]
        %v13234 = vld [vmem:[%s238 + $0x100] sm:$0xff]
        %v13235 = vld [vmem:[%s238 + $0x108] sm:$0xff]
        %v13236 = vld [vmem:[%s238 + $0x110] sm:$0xff]
        %v13237 = vld [vmem:[%s238 + $0x118] sm:$0xff]
        %v13238 = vld [vmem:[%s238 + $0x120] sm:$0xff]
        %v13239 = vld [vmem:[%s238 + $0x128] sm:$0xff]
        %v13240 = vld [vmem:[%s238 + $0x130] sm:$0xff]
        %v13241 = vld [vmem:[%s238 + $0x138] sm:$0xff]
        %v13242 = vld [vmem:[%s238 + $0x140] sm:$0xff]
        %v13243 = vld [vmem:[%s238 + $0x148] sm:$0xff]
        %v13244 = vld [vmem:[%s238 + $0x150] sm:$0xff]
        %v13245 = vld [vmem:[%s238 + $0x158] sm:$0xff]
        %v13246 = vld [vmem:[%s238 + $0x160] sm:$0xff]
        %v13247 = vld [vmem:[%s238 + $0x168] sm:$0xff]
        %v13248 = vld [vmem:[%s238 + $0x170] sm:$0xff]
        %v13249 = vld [vmem:[%s238 + $0x178] sm:$0xff]
        %v13250 = vld [vmem:[%s238 + $0x180] sm:$0xff]
        %v13251 = vld [vmem:[%s238 + $0x188] sm:$0xff]
        %v13252 = vld [vmem:[%s238 + $0x190] sm:$0xff]
        %v13253 = vld [vmem:[%s238 + $0x198] sm:$0xff]
        %v13254 = vld [vmem:[%s238 + $0x1a0] sm:$0xff]
        %v13255 = vld [vmem:[%s238 + $0x1a8] sm:$0xff]
        %v13256 = vld [vmem:[%s238 + $0x1b0] sm:$0xff]
        %v13257 = vld [vmem:[%s238 + $0x1b8] sm:$0xff]
        %v13258 = vld [vmem:[%s238 + $0x1c0] sm:$0xff]
        %v13259 = vld [vmem:[%s238 + $0x1c8] sm:$0xff]
        %v13260 = vld [vmem:[%s238 + $0x1d0] sm:$0xff]
        %v13261 = vld [vmem:[%s238 + $0x1d8] sm:$0xff]
        %v13262 = vld [vmem:[%s238 + $0x1e0] sm:$0xff]
        %v13263 = vld [vmem:[%s238 + $0x1e8] sm:$0xff]
        %v13264 = vld [vmem:[%s238 + $0x1f0] sm:$0xff]
        %v13265 = vld [vmem:[%s238 + $0x1f8] sm:$0xff]
        %v13266 = vadd.f32 %v12948, %v13202
        %v13267 = vadd.f32 %v12951, %v13203
        %v13268 = vadd.f32 %v12956, %v13204
        %v13269 = vadd.f32 %v12959, %v13205
        %v13270 = vadd.f32 %v12964, %v13206
        %v13271 = vadd.f32 %v12967, %v13207
        %v13272 = vadd.f32 %v12972, %v13208
        %v13273 = vadd.f32 %v12975, %v13209
        %v13274 = vadd.f32 %v12980, %v13210
        %v13275 = vadd.f32 %v12983, %v13211
        %v13276 = vadd.f32 %v12988, %v13212
        %v13277 = vadd.f32 %v12991, %v13213
        %v13278 = vadd.f32 %v12996, %v13214
        %v13279 = vadd.f32 %v12999, %v13215
        %v13280 = vadd.f32 %v13004, %v13216
        %v13281 = vadd.f32 %v13007, %v13217
        %v13282 = vadd.f32 %v13012, %v13218
        %v13283 = vadd.f32 %v13015, %v13219
        %v13284 = vadd.f32 %v13020, %v13220
        %v13285 = vadd.f32 %v13023, %v13221
        %v13286 = vadd.f32 %v13028, %v13222
        %v13287 = vadd.f32 %v13031, %v13223
        %v13288 = vadd.f32 %v13036, %v13224
        %v13289 = vadd.f32 %v13039, %v13225
        %v13290 = vadd.f32 %v13044, %v13226
        %v13291 = vadd.f32 %v13047, %v13227
        %v13292 = vadd.f32 %v13052, %v13228
        %v13293 = vadd.f32 %v13055, %v13229
        %v13294 = vadd.f32 %v13060, %v13230
        %v13295 = vadd.f32 %v13063, %v13231
        %v13296 = vadd.f32 %v13068, %v13232
        %v13297 = vadd.f32 %v13071, %v13233
        %v13298 = vadd.f32 %v13076, %v13234
        %v13299 = vadd.f32 %v13079, %v13235
        %v13300 = vadd.f32 %v13084, %v13236
        %v13301 = vadd.f32 %v13087, %v13237
        %v13302 = vadd.f32 %v13092, %v13238
        %v13303 = vadd.f32 %v13095, %v13239
        %v13304 = vadd.f32 %v13100, %v13240
        %v13305 = vadd.f32 %v13103, %v13241
        %v13306 = vadd.f32 %v13108, %v13242
        %v13307 = vadd.f32 %v13111, %v13243
        %v13308 = vadd.f32 %v13116, %v13244
        %v13309 = vadd.f32 %v13119, %v13245
        %v13310 = vadd.f32 %v13124, %v13246
        %v13311 = vadd.f32 %v13127, %v13247
        %v13312 = vadd.f32 %v13132, %v13248
        %v13313 = vadd.f32 %v13135, %v13249
        %v13314 = vadd.f32 %v13140, %v13250
        %v13315 = vadd.f32 %v13143, %v13251
        %v13316 = vadd.f32 %v13148, %v13252
        %v13317 = vadd.f32 %v13151, %v13253
        %v13318 = vadd.f32 %v13156, %v13254
        %v13319 = vadd.f32 %v13159, %v13255
        %v13320 = vadd.f32 %v13164, %v13256
        %v13321 = vadd.f32 %v13167, %v13257
        %v13322 = vadd.f32 %v13172, %v13258
        %v13323 = vadd.f32 %v13175, %v13259
        %v13324 = vadd.f32 %v13180, %v13260
        %v13325 = vadd.f32 %v13183, %v13261
        %v13326 = vadd.f32 %v13188, %v13262
        %v13327 = vadd.f32 %v13191, %v13263
        %v13328 = vadd.f32 %v13196, %v13264
        %v13329 = vadd.f32 %v13199, %v13265
        %13330 = vst [vmem:[%s272] sm:$0xff] %v13266
        %13331 = vst [vmem:[%s272 + $0x8] sm:$0xff] %v13267
        %13332 = vst [vmem:[%s272 + $0x10] sm:$0xff] %v13268
        %13333 = vst [vmem:[%s272 + $0x18] sm:$0xff] %v13269
        %13334 = vst [vmem:[%s272 + $0x20] sm:$0xff] %v13270
        %13335 = vst [vmem:[%s272 + $0x28] sm:$0xff] %v13271
        %13336 = vst [vmem:[%s272 + $0x30] sm:$0xff] %v13272
        %13337 = vst [vmem:[%s272 + $0x38] sm:$0xff] %v13273
        %13338 = vst [vmem:[%s272 + $0x40] sm:$0xff] %v13274
        %13339 = vst [vmem:[%s272 + $0x48] sm:$0xff] %v13275
        %13340 = vst [vmem:[%s272 + $0x50] sm:$0xff] %v13276
        %13341 = vst [vmem:[%s272 + $0x58] sm:$0xff] %v13277
        %13342 = vst [vmem:[%s272 + $0x60] sm:$0xff] %v13278
        %13343 = vst [vmem:[%s272 + $0x68] sm:$0xff] %v13279
        %13344 = vst [vmem:[%s272 + $0x70] sm:$0xff] %v13280
        %13345 = vst [vmem:[%s272 + $0x78] sm:$0xff] %v13281
        %13346 = vst [vmem:[%s272 + $0x80] sm:$0xff] %v13282
        %13347 = vst [vmem:[%s272 + $0x88] sm:$0xff] %v13283
        %13348 = vst [vmem:[%s272 + $0x90] sm:$0xff] %v13284
        %13349 = vst [vmem:[%s272 + $0x98] sm:$0xff] %v13285
        %13350 = vst [vmem:[%s272 + $0xa0] sm:$0xff] %v13286
        %13351 = vst [vmem:[%s272 + $0xa8] sm:$0xff] %v13287
        %13352 = vst [vmem:[%s272 + $0xb0] sm:$0xff] %v13288
        %13353 = vst [vmem:[%s272 + $0xb8] sm:$0xff] %v13289
        %13354 = vst [vmem:[%s272 + $0xc0] sm:$0xff] %v13290
        %13355 = vst [vmem:[%s272 + $0xc8] sm:$0xff] %v13291
        %13356 = vst [vmem:[%s272 + $0xd0] sm:$0xff] %v13292
        %13357 = vst [vmem:[%s272 + $0xd8] sm:$0xff] %v13293
        %13358 = vst [vmem:[%s272 + $0xe0] sm:$0xff] %v13294
        %13359 = vst [vmem:[%s272 + $0xe8] sm:$0xff] %v13295
        %13360 = vst [vmem:[%s272 + $0xf0] sm:$0xff] %v13296
        %13361 = vst [vmem:[%s272 + $0xf8] sm:$0xff] %v13297
        %13362 = vst [vmem:[%s272 + $0x100] sm:$0xff] %v13298
        %13363 = vst [vmem:[%s272 + $0x108] sm:$0xff] %v13299
        %13364 = vst [vmem:[%s272 + $0x110] sm:$0xff] %v13300
        %13365 = vst [vmem:[%s272 + $0x118] sm:$0xff] %v13301
        %13366 = vst [vmem:[%s272 + $0x120] sm:$0xff] %v13302
        %13367 = vst [vmem:[%s272 + $0x128] sm:$0xff] %v13303
        %13368 = vst [vmem:[%s272 + $0x130] sm:$0xff] %v13304
        %13369 = vst [vmem:[%s272 + $0x138] sm:$0xff] %v13305
        %13370 = vst [vmem:[%s272 + $0x140] sm:$0xff] %v13306
        %13371 = vst [vmem:[%s272 + $0x148] sm:$0xff] %v13307
        %13372 = vst [vmem:[%s272 + $0x150] sm:$0xff] %v13308
        %13373 = vst [vmem:[%s272 + $0x158] sm:$0xff] %v13309
        %13374 = vst [vmem:[%s272 + $0x160] sm:$0xff] %v13310
        %13375 = vst [vmem:[%s272 + $0x168] sm:$0xff] %v13311
        %13376 = vst [vmem:[%s272 + $0x170] sm:$0xff] %v13312
        %13377 = vst [vmem:[%s272 + $0x178] sm:$0xff] %v13313
        %13378 = vst [vmem:[%s272 + $0x180] sm:$0xff] %v13314
        %13379 = vst [vmem:[%s272 + $0x188] sm:$0xff] %v13315
        %13380 = vst [vmem:[%s272 + $0x190] sm:$0xff] %v13316
        %13381 = vst [vmem:[%s272 + $0x198] sm:$0xff] %v13317
        %13382 = vst [vmem:[%s272 + $0x1a0] sm:$0xff] %v13318
        %13383 = vst [vmem:[%s272 + $0x1a8] sm:$0xff] %v13319
        %13384 = vst [vmem:[%s272 + $0x1b0] sm:$0xff] %v13320
        %13385 = vst [vmem:[%s272 + $0x1b8] sm:$0xff] %v13321
        %13386 = vst [vmem:[%s272 + $0x1c0] sm:$0xff] %v13322
        %13387 = vst [vmem:[%s272 + $0x1c8] sm:$0xff] %v13323
        %13388 = vst [vmem:[%s272 + $0x1d0] sm:$0xff] %v13324
        %13389 = vst [vmem:[%s272 + $0x1d8] sm:$0xff] %v13325
        %13390 = vst [vmem:[%s272 + $0x1e0] sm:$0xff] %v13326
        %13391 = vst [vmem:[%s272 + $0x1e8] sm:$0xff] %v13327
        %13392 = vst [vmem:[%s272 + $0x1f0] sm:$0xff] %v13328
        %13393 = vst [vmem:[%s272 + $0x1f8] sm:$0xff] %v13329
        %s13394 = sand.u32 %s141, 1
        %s13395 = scalar_lea.sflag [#allocation6], %s13394
        %s13396 = sand.u32 %s141, 1
        %s13397 = smul.addr %s13396, 512
        %s13398 = scalar_lea.vmem [#allocation10], %s13397
        // Predicated region
        $region53: #{tpu_custom_call.1} parent=39 // pred_check
          %p13399 = pneg %p151
        $region54: #{tpu_custom_call.1} parent=39 // pred_check_branch
          %13401 = sbr.rel (%p13399) target = $region56
        $region55: #{tpu_custom_call.1} parent=39 // pred_region
          %s13402 = smul.u32 2, %s23
          %s13404 = ssub.s32 8192, 8192
          %13405 = vsyncadd %s13395, %s13404
          %s13406 = smul.addr %s13402, 32
          %s13407 = smul.addr %s13406, 128
          %s13408 = scalar_lea.hbm %s5, %s13407
          %s13409 = sshll.u32 %s13398, 4
          %s13410 = int_to_ptr.vmem [resolvable:$true] %s13409
          %13415 = dma.vmem_to_hbm [thread:$0]  %s13410, 8192, %s13408, %s13395, 128, 128, 8
        $region56: #{tpu_custom_call.1} parent=39 // pred_fallthru
          _
      $region40: #{tpu_custom_call.1} parent=5 // pred_fallthru
        _
      %p13416 = scmp.le.s32.totalorder 2, %s18
      // Predicated region
      $region57: #{tpu_custom_call.1} parent=5 // pred_check
        %p13417 = pneg %p13416
      $region58: #{tpu_custom_call.1} parent=5 // pred_check_branch
        %13419 = sbr.rel (%p13417) target = $region60
      $region59: #{tpu_custom_call.1} parent=5 // pred_region
        %s13420 = ssub.s32 %s18, 2
        // Predicated region
        $region61: #{tpu_custom_call.1} parent=59 // pred_check
          %p13421 = pneg %p157
        $region62: #{tpu_custom_call.1} parent=59 // pred_check_branch
          %13423 = sbr.rel (%p13421) target = $region64
        $region63: #{tpu_custom_call.1} parent=59 // pred_region
          %s13424 = sand.u32 %s142, 1
          %s13425 = scalar_lea.sflag [#allocation6], %s13424
          %s13426 = sand.u32 %s142, 1
          %s13427 = smul.addr %s13426, 512
          %s13428 = scalar_lea.vmem [#allocation10], %s13427
          %13429 = dma.done %s13425, 8192
        $region64: #{tpu_custom_call.1} parent=59 // pred_fallthru
          _
      $region60: #{tpu_custom_call.1} parent=5 // pred_fallthru
        _
    $region6: #{tpu_custom_call.1} parent=1 // loop_footer
      %s22 = sadd.s32 1, %s18
    $region7: #{tpu_custom_call.1} parent=1 // loop_footer_branch
      %17 = sbr.rel target = $region3
    $region8: #{tpu_custom_call.1} parent=1 // loop_exit
      _
    %13430 = vsyncpa [#allocation5], 1
    %s13431 = scalar_lea.sflag [#allocation5], 1
    %13432 = vsyncpa %s13431, 1
    %13433 = vsyncpa [#allocation8], 1
    %13434 = vsyncpa [#allocation6], 1
    %s13435 = scalar_lea.sflag [#allocation6], 1
    %13436 = vsyncpa %s13435, 1

</llo_original>
